<compile_context>
chip_gen: v5e
topology: v5e:2x2
jax: 0.10.0
libtpu: 0.0.40
codegen_flags: <defaults>
</compile_context>

<pallas_src>
import jax
import jax.numpy as jnp
from jax.experimental import pallas as pl
from jax.experimental.pallas import tpu as pltpu

# ---- SMPL-like (synthetic, small) dimensions -------------------------------
V = 128                 # number of mesh vertices (real SMPL: 6890)
J = 24                  # number of joints (1 global + 23 body)
NB = 10                 # number of shape betas
P = (J - 1) * 9         # pose-feature length = 207
KF = 1 + NB + P         # fused feature length = 218  [ones | betas | pose]

assert (3 * V) % 128 == 0

SMPL_PARENTS = [-1, 0, 0, 0, 1, 2, 3, 4, 5, 6, 7, 8,
                9, 9, 9, 12, 13, 14, 16, 17, 18, 19, 20, 21]


def _round_up(x, m):
    return ((x + m - 1) // m) * m


# ---------------------------------------------------------------------------
# Fused Pallas kernel (one batch tile of TB columns per grid step, batch on
# lanes everywhere):
#   featT_ref : (KF, TB)   rows [1 | betas | pose_feature]
#   rotT_ref  : (9J, TB)   rows 9*j + 3*r + c  of rot_mats[b, j, r, c]
#   wblend_ref: (3V, KF)   bf16, rows c*V + v, cols [vt | shapedirs | posedirs]
#   wjrest_ref: (3J, KF)   f32 low-rank rest-joint regressor, rows 3*j + c
#   wskin_ref : (V, J)     f32 lbs_weights
#   vertsT_ref: (3V, TB)   rows c*V + v
#   jointsT_ref:(3J, TB)   rows 3*j + r
# ---------------------------------------------------------------------------
def _smpl_lbs_kernel(featT_ref, rotT_ref, wblend_ref, wjrest_ref, wskin_ref,
                     vertsT_ref, jointsT_ref):
    feat = featT_ref[...]                                         # (KF, TB) f32

    # Fused blendshape matmul (bf16 MXU, f32 accumulation): vposed, rows c*V+v.
    vposedT = jnp.dot(wblend_ref[...], feat.astype(wblend_ref.dtype),
                      preferred_element_type=jnp.float32)         # (3V, TB)

    # Low-rank rest-joint regression (f32): jrest, rows 3*j + c.
    jrestT = jnp.dot(wjrest_ref[...], feat,
                     preferred_element_type=jnp.float32)          # (3J, TB)

    rot = rotT_ref[...]                                           # (9J, TB) f32

    def rrow(j, r, c):                      # rot_mats[b, j, r, c] over the batch tile
        m = 9 * j + 3 * r + c
        return rot[m:m + 1, :]                                    # (1, TB)

    def jrow(j, c):                         # jrest[b, j, c] over the batch tile
        m = 3 * j + c
        return jrestT[m:m + 1, :]                                 # (1, TB)

    # --- kinematic chain (unrolled over 24 joints, vectorized over batch) ---
    Rw = [None] * J          # world rotation per joint: 9 x (1, TB), row-major
    tw = [None] * J          # world translation per joint: 3 x (1, TB)
    Rw[0] = [rrow(0, r, c) for r in range(3) for c in range(3)]
    tw[0] = [jrow(0, c) for c in range(3)]
    for j in range(1, J):
        p = SMPL_PARENTS[j]
        Rp, tp = Rw[p], tw[p]
        Rj = [rrow(j, r, c) for r in range(3) for c in range(3)]
        rel = [jrow(j, c) - jrow(p, c) for c in range(3)]
        Rw[j] = [Rp[3 * r + 0] * Rj[0 + c]
                 + Rp[3 * r + 1] * Rj[3 + c]
                 + Rp[3 * r + 2] * Rj[6 + c]
                 for r in range(3) for c in range(3)]
        tw[j] = [Rp[3 * r + 0] * rel[0] + Rp[3 * r + 1] * rel[1]
                 + Rp[3 * r + 2] * rel[2] + tp[r]
                 for r in range(3)]

    # Posed joints output, rows 3*j + r.
    jointsT_ref[...] = jnp.concatenate(
        [tw[j][r] for j in range(J) for r in range(3)], axis=0)   # (3J, TB)

    # --- linear blend skinning ----------------------------------------------
    # Relative transform A[b, j] (12 used components, bottom row dropped):
    #   rotation    A[r, c] = Rw[j][r, c]
    #   translation A[r, 3] = tw[j][r] - Rw[j][r, :] @ jrest[b, j, :]
    # Per component k = 4*r + c:  T_k (V, TB) = lbs_weights (V, J) @ A_k (J, TB).
    wskin = wskin_ref[...]                                        # (V, J) f32
    T = []
    for r in range(3):
        for c in range(3):
            a_rc = jnp.concatenate([Rw[j][3 * r + c] for j in range(J)], axis=0)
            T.append(jnp.dot(wskin, a_rc, preferred_element_type=jnp.float32))
        a_rt = jnp.concatenate(
            [tw[j][r] - (Rw[j][3 * r + 0] * jrow(j, 0)
                         + Rw[j][3 * r + 1] * jrow(j, 1)
                         + Rw[j][3 * r + 2] * jrow(j, 2))
             for j in range(J)], axis=0)
        T.append(jnp.dot(wskin, a_rt, preferred_element_type=jnp.float32))

    # Homogeneous apply on the VPU (all 128-sublane-aligned row slabs).
    px = vposedT[0 * V:1 * V, :]
    py = vposedT[1 * V:2 * V, :]
    pz = vposedT[2 * V:3 * V, :]
    for r in range(3):
        vertsT_ref[r * V:(r + 1) * V, :] = (T[4 * r + 0] * px + T[4 * r + 1] * py
                                            + T[4 * r + 2] * pz + T[4 * r + 3])


def smpl_lbs_pallas(featT, rotT, w_blend, w_jrest, w_skin, tb):
    BP = featT.shape[1]
    grid = (BP // tb,)
    return pl.pallas_call(
        _smpl_lbs_kernel,
        out_shape=(jax.ShapeDtypeStruct((3 * V, BP), jnp.float32),
                   jax.ShapeDtypeStruct((3 * J, BP), jnp.float32)),
        grid=grid,
        in_specs=[
            pl.BlockSpec((KF, tb), lambda b: (0, b)),
            pl.BlockSpec((9 * J, tb), lambda b: (0, b)),
            # TODO(synk): at real SMPL size, single-buffer these grid-invariant
            # weights (pipeline_mode=pl.Buffered(1)) and tile the 3V rows with a
            # second "parallel" grid axis + explicit vmem_limit_bytes.
            pl.BlockSpec((3 * V, KF), lambda b: (0, 0)),
            pl.BlockSpec((3 * J, KF), lambda b: (0, 0)),
            pl.BlockSpec((V, J), lambda b: (0, 0)),
        ],
        out_specs=(pl.BlockSpec((3 * V, tb), lambda b: (0, b)),
                   pl.BlockSpec((3 * J, tb), lambda b: (0, b))),
        compiler_params=pltpu.CompilerParams(dimension_semantics=("parallel",)),
    )(featT, rotT, w_blend, w_jrest, w_skin)


# ---------------------------------------------------------------------------
# SMPLHead wrapper (deterministic synthetic SMPL parameters, no file loading).
# ---------------------------------------------------------------------------
class SMPLHeadPallas:
    def __init__(self, focal_length=5000.0, img_res=224, seed=42,
                 use_bf16_blend_weights=True, max_batch_tile=128):
        self.focal_length = focal_length
        self.img_res = img_res
        # MXU N-width per grid step; 128 suits v5e, raise to 256 on v6e/v7x when
        # B >= 256 and the per-tile VMEM budget allows.
        self.max_batch_tile = max_batch_tile

        k1, k2, k3, k4, k5 = jax.random.split(jax.random.PRNGKey(seed), 5)
        self.v_template = jax.random.normal(k1, (3, V), jnp.float32) * 0.1
        self.shapedirs = jax.random.normal(k2, (3, NB, V), jnp.float32) * 0.01
        self.posedirs = jax.random.normal(k3, (3, P, V), jnp.float32) * 0.001
        self.J_regressor = jax.nn.softmax(
            jax.random.normal(k4, (J, V), jnp.float32), axis=-1)       # (J, V)
        self.lbs_weights = jax.nn.softmax(
            jax.random.normal(k5, (V, J), jnp.float32), axis=-1)       # (V, J)
        self.parents = SMPL_PARENTS

        # ---- precomputed kernel-layout constants ---------------------------
        wdt = jnp.bfloat16 if use_bf16_blend_weights else jnp.float32
        # Fused blendshape weight (3V, KF): rows c*V + v, cols [1 | betas | pose].
        vt_col = self.v_template.reshape(3 * V, 1)
        sd_cols = jnp.transpose(self.shapedirs, (0, 2, 1)).reshape(3 * V, NB)
        pd_cols = jnp.transpose(self.posedirs, (0, 2, 1)).reshape(3 * V, P)
        self.w_blend = jnp.concatenate([vt_col, sd_cols, pd_cols],
                                       axis=1).astype(wdt)             # (384, 218)
        # Low-rank rest-joint regressor (3J, KF) f32: rows 3*j + c.
        jt = jnp.einsum('jv,cv->jc', self.J_regressor, self.v_template)    # (J, 3)
        wsh = jnp.einsum('jv,clv->jcl', self.J_regressor, self.shapedirs)  # (J, 3, NB)
        w_jrest = jnp.zeros((3 * J, KF), jnp.float32)
        w_jrest = w_jrest.at[:, 0].set(jt.reshape(3 * J))
        w_jrest = w_jrest.at[:, 1:1 + NB].set(wsh.reshape(3 * J, NB))
        self.w_jrest = w_jrest                                          # (72, 218)
        self.w_skin = self.lbs_weights                                  # (V, J) f32

    def __call__(self, global_orient, body_pose, betas, cam=None,
                 normalize_joints2d=False):
        # global_orient: (B, 1, 3, 3), body_pose: (B, 23, 3, 3), betas: (B, 10)
        # (pose2rot=False path of smplx SMPL)
        B = betas.shape[0]
        rot_mats = jnp.concatenate([global_orient, body_pose],
                                   axis=1).astype(jnp.float32)          # (B, J, 3, 3)
        ident = jnp.eye(3, dtype=jnp.float32)
        pose_feature = (rot_mats[:, 1:] - ident).reshape(B, P)          # (B, 207)

        # Batch tile: multiple of 8 (sublane/lane fill), capped at max_batch_tile.
        tb = min(self.max_batch_tile, _round_up(max(B, 1), 8))
        BP = _round_up(B, tb)
        pad = BP - B

        feat = jnp.concatenate(
            [jnp.ones((B, 1), jnp.float32), betas.astype(jnp.float32),
             pose_feature], axis=1)                                      # (B, 218)
        featT = jnp.pad(feat.T, ((0, 0), (0, pad)))                      # (218, BP)
        rotT = jnp.pad(rot_mats.reshape(B, 9 * J).T, ((0, 0), (0, pad))) # (216, BP)

        vertsT, jointsT = smpl_lbs_pallas(
            featT, rotT, self.w_blend, self.w_jrest, self.w_skin, tb)

        vertices = jnp.transpose(vertsT[:, :B].reshape(3, V, B), (2, 1, 0))  # (B, V, 3)
        joints = jnp.transpose(jointsT[:, :B].reshape(J, 3, B), (2, 0, 1))   # (B, J, 3)

        # TODO(synk): smplx vertex_joint_selector / joint_mapper extra regressed
        # joints and the camera projection (cam / normalize_joints2d) are omitted.
        smpl_output = {'vertices': vertices, 'joints': joints,
                       'betas': betas, 'full_pose': rot_mats}
        output = {'smpl_betas': betas,
                  'smpl_thetas': rot_mats,     # cat([global_orient, body_pose], dim=1)
                  'smpl_vertices': vertices,
                  'smpl_joints3d': joints}
        return smpl_output, output


# ---------------------------------------------------------------------------
def _reference_lbs(head, rot_mats, betas):
    """Plain-JAX f32 reference of the same forward (tolerance check only)."""
    B = betas.shape[0]
    v_shaped = head.v_template[None] + jnp.einsum('bl,clv->bcv', betas, head.shapedirs)
    j_rest = jnp.einsum('jv,bcv->bjc', head.J_regressor, v_shaped)       # (B, J, 3)
    ident = jnp.eye(3, dtype=jnp.float32)
    pose_feat = (rot_mats[:, 1:] - ident).reshape(B, P)
    v_posed = v_shaped + jnp.einsum('bp,cpv->bcv', pose_feat, head.posedirs)
    parents = head.parents
    rel = j_rest.at[:, 1:].add(-j_rest[:, jnp.asarray(parents[1:])])
    top = jnp.concatenate([rot_mats, rel[..., None]], axis=-1)           # (B, J, 3, 4)
    bottom = jnp.broadcast_to(jnp.array([0., 0., 0., 1.], jnp.float32), (B, J, 1, 4))
    tmat = jnp.concatenate([top, bottom], axis=-2)                       # (B, J, 4, 4)
    chain = [tmat[:, 0]]
    for i in range(1, J):
        chain.append(chain[parents[i]] @ tmat[:, i])
    G = jnp.stack(chain, axis=1)                                         # (B, J, 4, 4)
    joints = G[:, :, :3, 3]
    jh = jnp.concatenate([j_rest, jnp.zeros((B, J, 1), jnp.float32)],
                         axis=-1)[..., None]
    A = G - jnp.pad(G @ jh, ((0, 0), (0, 0), (0, 0), (3, 0)))
    T = jnp.einsum('vj,bjrc->bvrc', head.lbs_weights, A)                 # (B, V, 4, 4)
    vp = jnp.transpose(v_posed, (0, 2, 1))                               # (B, V, 3)
    verts = jnp.einsum('bvrc,bvc->bvr', T[:, :, :3, :3], vp) + T[:, :, :3, 3]
    return verts, joints


def aa_to_rotmat(aa):
    """Rodrigues: axis-angle (..., 3) -> rotation matrices (..., 3, 3)."""
    angle = jnp.linalg.norm(aa, axis=-1, keepdims=True)
    axis = aa / jnp.maximum(angle, 1e-8)
    x, y, z = axis[..., 0], axis[..., 1], axis[..., 2]
    c = jnp.cos(angle[..., 0])
    s = jnp.sin(angle[..., 0])
    C = 1.0 - c
    R = jnp.stack([
        jnp.stack([c + x * x * C, x * y * C - z * s, x * z * C + y * s], axis=-1),
        jnp.stack([y * x * C + z * s, c + y * y * C, y * z * C - x * s], axis=-1),
        jnp.stack([z * x * C - y * s, z * y * C + x * s, c + z * z * C], axis=-1),
    ], axis=-2)
    return R.astype(jnp.float32)


if __name__ == "__main__":
    key = jax.random.PRNGKey(0)
    kg, kb, ks = jax.random.split(key, 3)
    B = 2
    global_orient = aa_to_rotmat(jax.random.normal(kg, (B, 1, 3), jnp.float32) * 0.2)
    body_pose = aa_to_rotmat(jax.random.normal(kb, (B, J - 1, 3), jnp.float32) * 0.2)
    betas = jax.random.normal(ks, (B, NB), jnp.float32) * 0.5

    head = SMPLHeadPallas()
    smpl_output, output = head(global_orient, body_pose, betas)

    jax.block_until_ready(output['smpl_vertices'])
    jax.block_until_ready(output['smpl_joints3d'])

    assert output['smpl_vertices'].shape == (B, V, 3)
    assert output['smpl_joints3d'].shape == (B, J, 3)
    assert output['smpl_thetas'].shape == (B, J, 3, 3)

    # Correctness sanity check against a pure-JAX f32 reference (loose tolerance:
    # blendshape weights are bf16 inside the kernel).
    ref_verts, ref_joints = _reference_lbs(
        head, jnp.concatenate([global_orient, body_pose], axis=1), betas)
    jerr = float(jnp.max(jnp.abs(output['smpl_joints3d'] - ref_joints)))
    verr = float(jnp.max(jnp.abs(output['smpl_vertices'] - ref_verts)))
    assert jerr < 5e-3, f"joint error too large: {jerr}"
    assert verr < 2e-2, f"vertex error too large: {verr}"
    print("KERNEL_OK")
</pallas_src>

<mosaic_0001>
module attributes {stable_mosaic.version = 11 : i64} {
  func.func @_smpl_lbs_kernel(%arg0: i32, %arg1: memref<218x8xf32, #tpu.memory_space<vmem>>, %arg2: memref<216x8xf32, #tpu.memory_space<vmem>>, %arg3: memref<384x218xbf16, #tpu.memory_space<vmem>>, %arg4: memref<72x218xf32, #tpu.memory_space<vmem>>, %arg5: memref<128x24xf32, #tpu.memory_space<vmem>>, %arg6: memref<384x8xf32, #tpu.memory_space<vmem>>, %arg7: memref<72x8xf32, #tpu.memory_space<vmem>>) attributes {dimension_semantics = [#tpu.dimension_semantics<parallel>], iteration_bounds = array<i64: 1>, scalar_prefetch = 0 : i64, scratch_operands = 0 : i64, tpu.core_type = #tpu.core_type<tc>, window_params = [{transform_indices = @transform_0, window_bounds = array<i64: 218, 8>}, {transform_indices = @transform_1, window_bounds = array<i64: 216, 8>}, {pipeline_mode = #tpu.pipeline_mode<synchronous>, transform_indices = @transform_2, window_bounds = array<i64: 384, 218>}, {pipeline_mode = #tpu.pipeline_mode<synchronous>, transform_indices = @transform_3, window_bounds = array<i64: 72, 218>}, {pipeline_mode = #tpu.pipeline_mode<synchronous>, transform_indices = @transform_4, window_bounds = array<i64: 128, 24>}, {transform_indices = @transform_5, window_bounds = array<i64: 384, 8>}, {transform_indices = @transform_6, window_bounds = array<i64: 72, 8>}]} {
    %c0 = arith.constant 0 : index
    %c0_0 = arith.constant 0 : index
    %0 = vector.load %arg1[%c0, %c0_0] : memref<218x8xf32, #tpu.memory_space<vmem>>, vector<218x8xf32>
    %c0_1 = arith.constant 0 : index
    %c0_2 = arith.constant 0 : index
    %1 = vector.load %arg3[%c0_1, %c0_2] : memref<384x218xbf16, #tpu.memory_space<vmem>>, vector<384x218xbf16>
    %2 = arith.truncf %0 : vector<218x8xf32> to vector<218x8xbf16>
    %cst = arith.constant dense<0.000000e+00> : vector<384x8xf32>
    %3 = tpu.matmul %1, %2, %cst {dimension_numbers = #tpu.dot_dimension_numbers<[1], [0], [0], [1], [0, 0, 1, 1], [], []>} : vector<384x218xbf16>, vector<218x8xbf16>, vector<384x8xf32> -> vector<384x8xf32>
    %c0_3 = arith.constant 0 : index
    %c0_4 = arith.constant 0 : index
    %4 = vector.load %arg4[%c0_3, %c0_4] : memref<72x218xf32, #tpu.memory_space<vmem>>, vector<72x218xf32>
    %cst_5 = arith.constant dense<0.000000e+00> : vector<72x8xf32>
    %5 = tpu.matmul %4, %0, %cst_5 {dimension_numbers = #tpu.dot_dimension_numbers<[1], [0], [0], [1], [0, 0, 1, 1], [], []>} : vector<72x218xf32>, vector<218x8xf32>, vector<72x8xf32> -> vector<72x8xf32>
    %c0_6 = arith.constant 0 : index
    %c0_7 = arith.constant 0 : index
    %6 = vector.load %arg2[%c0_6, %c0_7] : memref<216x8xf32, #tpu.memory_space<vmem>>, vector<216x8xf32>
    %7 = vector.extract_strided_slice %6 {offsets = [0, 0], sizes = [1, 8], strides = [1, 1]} : vector<216x8xf32> to vector<1x8xf32>
    %8 = vector.extract_strided_slice %6 {offsets = [1, 0], sizes = [1, 8], strides = [1, 1]} : vector<216x8xf32> to vector<1x8xf32>
    %9 = vector.extract_strided_slice %6 {offsets = [2, 0], sizes = [1, 8], strides = [1, 1]} : vector<216x8xf32> to vector<1x8xf32>
    %10 = vector.extract_strided_slice %6 {offsets = [3, 0], sizes = [1, 8], strides = [1, 1]} : vector<216x8xf32> to vector<1x8xf32>
    %11 = vector.extract_strided_slice %6 {offsets = [4, 0], sizes = [1, 8], strides = [1, 1]} : vector<216x8xf32> to vector<1x8xf32>
    %12 = vector.extract_strided_slice %6 {offsets = [5, 0], sizes = [1, 8], strides = [1, 1]} : vector<216x8xf32> to vector<1x8xf32>
    %13 = vector.extract_strided_slice %6 {offsets = [6, 0], sizes = [1, 8], strides = [1, 1]} : vector<216x8xf32> to vector<1x8xf32>
    %14 = vector.extract_strided_slice %6 {offsets = [7, 0], sizes = [1, 8], strides = [1, 1]} : vector<216x8xf32> to vector<1x8xf32>
    %15 = vector.extract_strided_slice %6 {offsets = [8, 0], sizes = [1, 8], strides = [1, 1]} : vector<216x8xf32> to vector<1x8xf32>
    %16 = vector.extract_strided_slice %5 {offsets = [0, 0], sizes = [1, 8], strides = [1, 1]} : vector<72x8xf32> to vector<1x8xf32>
    %17 = vector.extract_strided_slice %5 {offsets = [1, 0], sizes = [1, 8], strides = [1, 1]} : vector<72x8xf32> to vector<1x8xf32>
    %18 = vector.extract_strided_slice %5 {offsets = [2, 0], sizes = [1, 8], strides = [1, 1]} : vector<72x8xf32> to vector<1x8xf32>
    %19 = vector.extract_strided_slice %6 {offsets = [9, 0], sizes = [1, 8], strides = [1, 1]} : vector<216x8xf32> to vector<1x8xf32>
    %20 = vector.extract_strided_slice %6 {offsets = [10, 0], sizes = [1, 8], strides = [1, 1]} : vector<216x8xf32> to vector<1x8xf32>
    %21 = vector.extract_strided_slice %6 {offsets = [11, 0], sizes = [1, 8], strides = [1, 1]} : vector<216x8xf32> to vector<1x8xf32>
    %22 = vector.extract_strided_slice %6 {offsets = [12, 0], sizes = [1, 8], strides = [1, 1]} : vector<216x8xf32> to vector<1x8xf32>
    %23 = vector.extract_strided_slice %6 {offsets = [13, 0], sizes = [1, 8], strides = [1, 1]} : vector<216x8xf32> to vector<1x8xf32>
    %24 = vector.extract_strided_slice %6 {offsets = [14, 0], sizes = [1, 8], strides = [1, 1]} : vector<216x8xf32> to vector<1x8xf32>
    %25 = vector.extract_strided_slice %6 {offsets = [15, 0], sizes = [1, 8], strides = [1, 1]} : vector<216x8xf32> to vector<1x8xf32>
    %26 = vector.extract_strided_slice %6 {offsets = [16, 0], sizes = [1, 8], strides = [1, 1]} : vector<216x8xf32> to vector<1x8xf32>
    %27 = vector.extract_strided_slice %6 {offsets = [17, 0], sizes = [1, 8], strides = [1, 1]} : vector<216x8xf32> to vector<1x8xf32>
    %28 = vector.extract_strided_slice %5 {offsets = [3, 0], sizes = [1, 8], strides = [1, 1]} : vector<72x8xf32> to vector<1x8xf32>
    %29 = vector.extract_strided_slice %5 {offsets = [0, 0], sizes = [1, 8], strides = [1, 1]} : vector<72x8xf32> to vector<1x8xf32>
    %30 = arith.subf %28, %29 : vector<1x8xf32>
    %31 = vector.extract_strided_slice %5 {offsets = [4, 0], sizes = [1, 8], strides = [1, 1]} : vector<72x8xf32> to vector<1x8xf32>
    %32 = vector.extract_strided_slice %5 {offsets = [1, 0], sizes = [1, 8], strides = [1, 1]} : vector<72x8xf32> to vector<1x8xf32>
    %33 = arith.subf %31, %32 : vector<1x8xf32>
    %34 = vector.extract_strided_slice %5 {offsets = [5, 0], sizes = [1, 8], strides = [1, 1]} : vector<72x8xf32> to vector<1x8xf32>
    %35 = vector.extract_strided_slice %5 {offsets = [2, 0], sizes = [1, 8], strides = [1, 1]} : vector<72x8xf32> to vector<1x8xf32>
    %36 = arith.subf %34, %35 : vector<1x8xf32>
    %37 = arith.mulf %7, %19 : vector<1x8xf32>
    %38 = arith.mulf %8, %22 : vector<1x8xf32>
    %39 = arith.addf %37, %38 : vector<1x8xf32>
    %40 = arith.mulf %9, %25 : vector<1x8xf32>
    %41 = arith.addf %39, %40 : vector<1x8xf32>
    %42 = arith.mulf %7, %20 : vector<1x8xf32>
    %43 = arith.mulf %8, %23 : vector<1x8xf32>
    %44 = arith.addf %42, %43 : vector<1x8xf32>
    %45 = arith.mulf %9, %26 : vector<1x8xf32>
    %46 = arith.addf %44, %45 : vector<1x8xf32>
    %47 = arith.mulf %7, %21 : vector<1x8xf32>
    %48 = arith.mulf %8, %24 : vector<1x8xf32>
    %49 = arith.addf %47, %48 : vector<1x8xf32>
    %50 = arith.mulf %9, %27 : vector<1x8xf32>
    %51 = arith.addf %49, %50 : vector<1x8xf32>
    %52 = arith.mulf %10, %19 : vector<1x8xf32>
    %53 = arith.mulf %11, %22 : vector<1x8xf32>
    %54 = arith.addf %52, %53 : vector<1x8xf32>
    %55 = arith.mulf %12, %25 : vector<1x8xf32>
    %56 = arith.addf %54, %55 : vector<1x8xf32>
    %57 = arith.mulf %10, %20 : vector<1x8xf32>
    %58 = arith.mulf %11, %23 : vector<1x8xf32>
    %59 = arith.addf %57, %58 : vector<1x8xf32>
    %60 = arith.mulf %12, %26 : vector<1x8xf32>
    %61 = arith.addf %59, %60 : vector<1x8xf32>
    %62 = arith.mulf %10, %21 : vector<1x8xf32>
    %63 = arith.mulf %11, %24 : vector<1x8xf32>
    %64 = arith.addf %62, %63 : vector<1x8xf32>
    %65 = arith.mulf %12, %27 : vector<1x8xf32>
    %66 = arith.addf %64, %65 : vector<1x8xf32>
    %67 = arith.mulf %13, %19 : vector<1x8xf32>
    %68 = arith.mulf %14, %22 : vector<1x8xf32>
    %69 = arith.addf %67, %68 : vector<1x8xf32>
    %70 = arith.mulf %15, %25 : vector<1x8xf32>
    %71 = arith.addf %69, %70 : vector<1x8xf32>
    %72 = arith.mulf %13, %20 : vector<1x8xf32>
    %73 = arith.mulf %14, %23 : vector<1x8xf32>
    %74 = arith.addf %72, %73 : vector<1x8xf32>
    %75 = arith.mulf %15, %26 : vector<1x8xf32>
    %76 = arith.addf %74, %75 : vector<1x8xf32>
    %77 = arith.mulf %13, %21 : vector<1x8xf32>
    %78 = arith.mulf %14, %24 : vector<1x8xf32>
    %79 = arith.addf %77, %78 : vector<1x8xf32>
    %80 = arith.mulf %15, %27 : vector<1x8xf32>
    %81 = arith.addf %79, %80 : vector<1x8xf32>
    %82 = arith.mulf %7, %30 : vector<1x8xf32>
    %83 = arith.mulf %8, %33 : vector<1x8xf32>
    %84 = arith.addf %82, %83 : vector<1x8xf32>
    %85 = arith.mulf %9, %36 : vector<1x8xf32>
    %86 = arith.addf %84, %85 : vector<1x8xf32>
    %87 = arith.addf %86, %16 : vector<1x8xf32>
    %88 = arith.mulf %10, %30 : vector<1x8xf32>
    %89 = arith.mulf %11, %33 : vector<1x8xf32>
    %90 = arith.addf %88, %89 : vector<1x8xf32>
    %91 = arith.mulf %12, %36 : vector<1x8xf32>
    %92 = arith.addf %90, %91 : vector<1x8xf32>
    %93 = arith.addf %92, %17 : vector<1x8xf32>
    %94 = arith.mulf %13, %30 : vector<1x8xf32>
    %95 = arith.mulf %14, %33 : vector<1x8xf32>
    %96 = arith.addf %94, %95 : vector<1x8xf32>
    %97 = arith.mulf %15, %36 : vector<1x8xf32>
    %98 = arith.addf %96, %97 : vector<1x8xf32>
    %99 = arith.addf %98, %18 : vector<1x8xf32>
    %100 = vector.extract_strided_slice %6 {offsets = [18, 0], sizes = [1, 8], strides = [1, 1]} : vector<216x8xf32> to vector<1x8xf32>
    %101 = vector.extract_strided_slice %6 {offsets = [19, 0], sizes = [1, 8], strides = [1, 1]} : vector<216x8xf32> to vector<1x8xf32>
    %102 = vector.extract_strided_slice %6 {offsets = [20, 0], sizes = [1, 8], strides = [1, 1]} : vector<216x8xf32> to vector<1x8xf32>
    %103 = vector.extract_strided_slice %6 {offsets = [21, 0], sizes = [1, 8], strides = [1, 1]} : vector<216x8xf32> to vector<1x8xf32>
    %104 = vector.extract_strided_slice %6 {offsets = [22, 0], sizes = [1, 8], strides = [1, 1]} : vector<216x8xf32> to vector<1x8xf32>
    %105 = vector.extract_strided_slice %6 {offsets = [23, 0], sizes = [1, 8], strides = [1, 1]} : vector<216x8xf32> to vector<1x8xf32>
    %106 = vector.extract_strided_slice %6 {offsets = [24, 0], sizes = [1, 8], strides = [1, 1]} : vector<216x8xf32> to vector<1x8xf32>
    %107 = vector.extract_strided_slice %6 {offsets = [25, 0], sizes = [1, 8], strides = [1, 1]} : vector<216x8xf32> to vector<1x8xf32>
    %108 = vector.extract_strided_slice %6 {offsets = [26, 0], sizes = [1, 8], strides = [1, 1]} : vector<216x8xf32> to vector<1x8xf32>
    %109 = vector.extract_strided_slice %5 {offsets = [6, 0], sizes = [1, 8], strides = [1, 1]} : vector<72x8xf32> to vector<1x8xf32>
    %110 = vector.extract_strided_slice %5 {offsets = [0, 0], sizes = [1, 8], strides = [1, 1]} : vector<72x8xf32> to vector<1x8xf32>
    %111 = arith.subf %109, %110 : vector<1x8xf32>
    %112 = vector.extract_strided_slice %5 {offsets = [7, 0], sizes = [1, 8], strides = [1, 1]} : vector<72x8xf32> to vector<1x8xf32>
    %113 = vector.extract_strided_slice %5 {offsets = [1, 0], sizes = [1, 8], strides = [1, 1]} : vector<72x8xf32> to vector<1x8xf32>
    %114 = arith.subf %112, %113 : vector<1x8xf32>
    %115 = vector.extract_strided_slice %5 {offsets = [8, 0], sizes = [1, 8], strides = [1, 1]} : vector<72x8xf32> to vector<1x8xf32>
    %116 = vector.extract_strided_slice %5 {offsets = [2, 0], sizes = [1, 8], strides = [1, 1]} : vector<72x8xf32> to vector<1x8xf32>
    %117 = arith.subf %115, %116 : vector<1x8xf32>
    %118 = arith.mulf %7, %100 : vector<1x8xf32>
    %119 = arith.mulf %8, %103 : vector<1x8xf32>
    %120 = arith.addf %118, %119 : vector<1x8xf32>
    %121 = arith.mulf %9, %106 : vector<1x8xf32>
    %122 = arith.addf %120, %121 : vector<1x8xf32>
    %123 = arith.mulf %7, %101 : vector<1x8xf32>
    %124 = arith.mulf %8, %104 : vector<1x8xf32>
    %125 = arith.addf %123, %124 : vector<1x8xf32>
    %126 = arith.mulf %9, %107 : vector<1x8xf32>
    %127 = arith.addf %125, %126 : vector<1x8xf32>
    %128 = arith.mulf %7, %102 : vector<1x8xf32>
    %129 = arith.mulf %8, %105 : vector<1x8xf32>
    %130 = arith.addf %128, %129 : vector<1x8xf32>
    %131 = arith.mulf %9, %108 : vector<1x8xf32>
    %132 = arith.addf %130, %131 : vector<1x8xf32>
    %133 = arith.mulf %10, %100 : vector<1x8xf32>
    %134 = arith.mulf %11, %103 : vector<1x8xf32>
    %135 = arith.addf %133, %134 : vector<1x8xf32>
    %136 = arith.mulf %12, %106 : vector<1x8xf32>
    %137 = arith.addf %135, %136 : vector<1x8xf32>
    %138 = arith.mulf %10, %101 : vector<1x8xf32>
    %139 = arith.mulf %11, %104 : vector<1x8xf32>
    %140 = arith.addf %138, %139 : vector<1x8xf32>
    %141 = arith.mulf %12, %107 : vector<1x8xf32>
    %142 = arith.addf %140, %141 : vector<1x8xf32>
    %143 = arith.mulf %10, %102 : vector<1x8xf32>
    %144 = arith.mulf %11, %105 : vector<1x8xf32>
    %145 = arith.addf %143, %144 : vector<1x8xf32>
    %146 = arith.mulf %12, %108 : vector<1x8xf32>
    %147 = arith.addf %145, %146 : vector<1x8xf32>
    %148 = arith.mulf %13, %100 : vector<1x8xf32>
    %149 = arith.mulf %14, %103 : vector<1x8xf32>
    %150 = arith.addf %148, %149 : vector<1x8xf32>
    %151 = arith.mulf %15, %106 : vector<1x8xf32>
    %152 = arith.addf %150, %151 : vector<1x8xf32>
    %153 = arith.mulf %13, %101 : vector<1x8xf32>
    %154 = arith.mulf %14, %104 : vector<1x8xf32>
    %155 = arith.addf %153, %154 : vector<1x8xf32>
    %156 = arith.mulf %15, %107 : vector<1x8xf32>
    %157 = arith.addf %155, %156 : vector<1x8xf32>
    %158 = arith.mulf %13, %102 : vector<1x8xf32>
    %159 = arith.mulf %14, %105 : vector<1x8xf32>
    %160 = arith.addf %158, %159 : vector<1x8xf32>
    %161 = arith.mulf %15, %108 : vector<1x8xf32>
    %162 = arith.addf %160, %161 : vector<1x8xf32>
    %163 = arith.mulf %7, %111 : vector<1x8xf32>
    %164 = arith.mulf %8, %114 : vector<1x8xf32>
    %165 = arith.addf %163, %164 : vector<1x8xf32>
    %166 = arith.mulf %9, %117 : vector<1x8xf32>
    %167 = arith.addf %165, %166 : vector<1x8xf32>
    %168 = arith.addf %167, %16 : vector<1x8xf32>
    %169 = arith.mulf %10, %111 : vector<1x8xf32>
    %170 = arith.mulf %11, %114 : vector<1x8xf32>
    %171 = arith.addf %169, %170 : vector<1x8xf32>
    %172 = arith.mulf %12, %117 : vector<1x8xf32>
    %173 = arith.addf %171, %172 : vector<1x8xf32>
    %174 = arith.addf %173, %17 : vector<1x8xf32>
    %175 = arith.mulf %13, %111 : vector<1x8xf32>
    %176 = arith.mulf %14, %114 : vector<1x8xf32>
    %177 = arith.addf %175, %176 : vector<1x8xf32>
    %178 = arith.mulf %15, %117 : vector<1x8xf32>
    %179 = arith.addf %177, %178 : vector<1x8xf32>
    %180 = arith.addf %179, %18 : vector<1x8xf32>
    %181 = vector.extract_strided_slice %6 {offsets = [27, 0], sizes = [1, 8], strides = [1, 1]} : vector<216x8xf32> to vector<1x8xf32>
    %182 = vector.extract_strided_slice %6 {offsets = [28, 0], sizes = [1, 8], strides = [1, 1]} : vector<216x8xf32> to vector<1x8xf32>
    %183 = vector.extract_strided_slice %6 {offsets = [29, 0], sizes = [1, 8], strides = [1, 1]} : vector<216x8xf32> to vector<1x8xf32>
    %184 = vector.extract_strided_slice %6 {offsets = [30, 0], sizes = [1, 8], strides = [1, 1]} : vector<216x8xf32> to vector<1x8xf32>
    %185 = vector.extract_strided_slice %6 {offsets = [31, 0], sizes = [1, 8], strides = [1, 1]} : vector<216x8xf32> to vector<1x8xf32>
    %186 = vector.extract_strided_slice %6 {offsets = [32, 0], sizes = [1, 8], strides = [1, 1]} : vector<216x8xf32> to vector<1x8xf32>
    %187 = vector.extract_strided_slice %6 {offsets = [33, 0], sizes = [1, 8], strides = [1, 1]} : vector<216x8xf32> to vector<1x8xf32>
    %188 = vector.extract_strided_slice %6 {offsets = [34, 0], sizes = [1, 8], strides = [1, 1]} : vector<216x8xf32> to vector<1x8xf32>
    %189 = vector.extract_strided_slice %6 {offsets = [35, 0], sizes = [1, 8], strides = [1, 1]} : vector<216x8xf32> to vector<1x8xf32>
    %190 = vector.extract_strided_slice %5 {offsets = [9, 0], sizes = [1, 8], strides = [1, 1]} : vector<72x8xf32> to vector<1x8xf32>
    %191 = vector.extract_strided_slice %5 {offsets = [0, 0], sizes = [1, 8], strides = [1, 1]} : vector<72x8xf32> to vector<1x8xf32>
    %192 = arith.subf %190, %191 : vector<1x8xf32>
    %193 = vector.extract_strided_slice %5 {offsets = [10, 0], sizes = [1, 8], strides = [1, 1]} : vector<72x8xf32> to vector<1x8xf32>
    %194 = vector.extract_strided_slice %5 {offsets = [1, 0], sizes = [1, 8], strides = [1, 1]} : vector<72x8xf32> to vector<1x8xf32>
    %195 = arith.subf %193, %194 : vector<1x8xf32>
    %196 = vector.extract_strided_slice %5 {offsets = [11, 0], sizes = [1, 8], strides = [1, 1]} : vector<72x8xf32> to vector<1x8xf32>
    %197 = vector.extract_strided_slice %5 {offsets = [2, 0], sizes = [1, 8], strides = [1, 1]} : vector<72x8xf32> to vector<1x8xf32>
    %198 = arith.subf %196, %197 : vector<1x8xf32>
    %199 = arith.mulf %7, %181 : vector<1x8xf32>
    %200 = arith.mulf %8, %184 : vector<1x8xf32>
    %201 = arith.addf %199, %200 : vector<1x8xf32>
    %202 = arith.mulf %9, %187 : vector<1x8xf32>
    %203 = arith.addf %201, %202 : vector<1x8xf32>
    %204 = arith.mulf %7, %182 : vector<1x8xf32>
    %205 = arith.mulf %8, %185 : vector<1x8xf32>
    %206 = arith.addf %204, %205 : vector<1x8xf32>
    %207 = arith.mulf %9, %188 : vector<1x8xf32>
    %208 = arith.addf %206, %207 : vector<1x8xf32>
    %209 = arith.mulf %7, %183 : vector<1x8xf32>
    %210 = arith.mulf %8, %186 : vector<1x8xf32>
    %211 = arith.addf %209, %210 : vector<1x8xf32>
    %212 = arith.mulf %9, %189 : vector<1x8xf32>
    %213 = arith.addf %211, %212 : vector<1x8xf32>
    %214 = arith.mulf %10, %181 : vector<1x8xf32>
    %215 = arith.mulf %11, %184 : vector<1x8xf32>
    %216 = arith.addf %214, %215 : vector<1x8xf32>
    %217 = arith.mulf %12, %187 : vector<1x8xf32>
    %218 = arith.addf %216, %217 : vector<1x8xf32>
    %219 = arith.mulf %10, %182 : vector<1x8xf32>
    %220 = arith.mulf %11, %185 : vector<1x8xf32>
    %221 = arith.addf %219, %220 : vector<1x8xf32>
    %222 = arith.mulf %12, %188 : vector<1x8xf32>
    %223 = arith.addf %221, %222 : vector<1x8xf32>
    %224 = arith.mulf %10, %183 : vector<1x8xf32>
    %225 = arith.mulf %11, %186 : vector<1x8xf32>
    %226 = arith.addf %224, %225 : vector<1x8xf32>
    %227 = arith.mulf %12, %189 : vector<1x8xf32>
    %228 = arith.addf %226, %227 : vector<1x8xf32>
    %229 = arith.mulf %13, %181 : vector<1x8xf32>
    %230 = arith.mulf %14, %184 : vector<1x8xf32>
    %231 = arith.addf %229, %230 : vector<1x8xf32>
    %232 = arith.mulf %15, %187 : vector<1x8xf32>
    %233 = arith.addf %231, %232 : vector<1x8xf32>
    %234 = arith.mulf %13, %182 : vector<1x8xf32>
    %235 = arith.mulf %14, %185 : vector<1x8xf32>
    %236 = arith.addf %234, %235 : vector<1x8xf32>
    %237 = arith.mulf %15, %188 : vector<1x8xf32>
    %238 = arith.addf %236, %237 : vector<1x8xf32>
    %239 = arith.mulf %13, %183 : vector<1x8xf32>
    %240 = arith.mulf %14, %186 : vector<1x8xf32>
    %241 = arith.addf %239, %240 : vector<1x8xf32>
    %242 = arith.mulf %15, %189 : vector<1x8xf32>
    %243 = arith.addf %241, %242 : vector<1x8xf32>
    %244 = arith.mulf %7, %192 : vector<1x8xf32>
    %245 = arith.mulf %8, %195 : vector<1x8xf32>
    %246 = arith.addf %244, %245 : vector<1x8xf32>
    %247 = arith.mulf %9, %198 : vector<1x8xf32>
    %248 = arith.addf %246, %247 : vector<1x8xf32>
    %249 = arith.addf %248, %16 : vector<1x8xf32>
    %250 = arith.mulf %10, %192 : vector<1x8xf32>
    %251 = arith.mulf %11, %195 : vector<1x8xf32>
    %252 = arith.addf %250, %251 : vector<1x8xf32>
    %253 = arith.mulf %12, %198 : vector<1x8xf32>
    %254 = arith.addf %252, %253 : vector<1x8xf32>
    %255 = arith.addf %254, %17 : vector<1x8xf32>
    %256 = arith.mulf %13, %192 : vector<1x8xf32>
    %257 = arith.mulf %14, %195 : vector<1x8xf32>
    %258 = arith.addf %256, %257 : vector<1x8xf32>
    %259 = arith.mulf %15, %198 : vector<1x8xf32>
    %260 = arith.addf %258, %259 : vector<1x8xf32>
    %261 = arith.addf %260, %18 : vector<1x8xf32>
    %262 = vector.extract_strided_slice %6 {offsets = [36, 0], sizes = [1, 8], strides = [1, 1]} : vector<216x8xf32> to vector<1x8xf32>
    %263 = vector.extract_strided_slice %6 {offsets = [37, 0], sizes = [1, 8], strides = [1, 1]} : vector<216x8xf32> to vector<1x8xf32>
    %264 = vector.extract_strided_slice %6 {offsets = [38, 0], sizes = [1, 8], strides = [1, 1]} : vector<216x8xf32> to vector<1x8xf32>
    %265 = vector.extract_strided_slice %6 {offsets = [39, 0], sizes = [1, 8], strides = [1, 1]} : vector<216x8xf32> to vector<1x8xf32>
    %266 = vector.extract_strided_slice %6 {offsets = [40, 0], sizes = [1, 8], strides = [1, 1]} : vector<216x8xf32> to vector<1x8xf32>
    %267 = vector.extract_strided_slice %6 {offsets = [41, 0], sizes = [1, 8], strides = [1, 1]} : vector<216x8xf32> to vector<1x8xf32>
    %268 = vector.extract_strided_slice %6 {offsets = [42, 0], sizes = [1, 8], strides = [1, 1]} : vector<216x8xf32> to vector<1x8xf32>
    %269 = vector.extract_strided_slice %6 {offsets = [43, 0], sizes = [1, 8], strides = [1, 1]} : vector<216x8xf32> to vector<1x8xf32>
    %270 = vector.extract_strided_slice %6 {offsets = [44, 0], sizes = [1, 8], strides = [1, 1]} : vector<216x8xf32> to vector<1x8xf32>
    %271 = vector.extract_strided_slice %5 {offsets = [12, 0], sizes = [1, 8], strides = [1, 1]} : vector<72x8xf32> to vector<1x8xf32>
    %272 = vector.extract_strided_slice %5 {offsets = [3, 0], sizes = [1, 8], strides = [1, 1]} : vector<72x8xf32> to vector<1x8xf32>
    %273 = arith.subf %271, %272 : vector<1x8xf32>
    %274 = vector.extract_strided_slice %5 {offsets = [13, 0], sizes = [1, 8], strides = [1, 1]} : vector<72x8xf32> to vector<1x8xf32>
    %275 = vector.extract_strided_slice %5 {offsets = [4, 0], sizes = [1, 8], strides = [1, 1]} : vector<72x8xf32> to vector<1x8xf32>
    %276 = arith.subf %274, %275 : vector<1x8xf32>
    %277 = vector.extract_strided_slice %5 {offsets = [14, 0], sizes = [1, 8], strides = [1, 1]} : vector<72x8xf32> to vector<1x8xf32>
    %278 = vector.extract_strided_slice %5 {offsets = [5, 0], sizes = [1, 8], strides = [1, 1]} : vector<72x8xf32> to vector<1x8xf32>
    %279 = arith.subf %277, %278 : vector<1x8xf32>
    %280 = arith.mulf %41, %262 : vector<1x8xf32>
    %281 = arith.mulf %46, %265 : vector<1x8xf32>
    %282 = arith.addf %280, %281 : vector<1x8xf32>
    %283 = arith.mulf %51, %268 : vector<1x8xf32>
    %284 = arith.addf %282, %283 : vector<1x8xf32>
    %285 = arith.mulf %41, %263 : vector<1x8xf32>
    %286 = arith.mulf %46, %266 : vector<1x8xf32>
    %287 = arith.addf %285, %286 : vector<1x8xf32>
    %288 = arith.mulf %51, %269 : vector<1x8xf32>
    %289 = arith.addf %287, %288 : vector<1x8xf32>
    %290 = arith.mulf %41, %264 : vector<1x8xf32>
    %291 = arith.mulf %46, %267 : vector<1x8xf32>
    %292 = arith.addf %290, %291 : vector<1x8xf32>
    %293 = arith.mulf %51, %270 : vector<1x8xf32>
    %294 = arith.addf %292, %293 : vector<1x8xf32>
    %295 = arith.mulf %56, %262 : vector<1x8xf32>
    %296 = arith.mulf %61, %265 : vector<1x8xf32>
    %297 = arith.addf %295, %296 : vector<1x8xf32>
    %298 = arith.mulf %66, %268 : vector<1x8xf32>
    %299 = arith.addf %297, %298 : vector<1x8xf32>
    %300 = arith.mulf %56, %263 : vector<1x8xf32>
    %301 = arith.mulf %61, %266 : vector<1x8xf32>
    %302 = arith.addf %300, %301 : vector<1x8xf32>
    %303 = arith.mulf %66, %269 : vector<1x8xf32>
    %304 = arith.addf %302, %303 : vector<1x8xf32>
    %305 = arith.mulf %56, %264 : vector<1x8xf32>
    %306 = arith.mulf %61, %267 : vector<1x8xf32>
    %307 = arith.addf %305, %306 : vector<1x8xf32>
    %308 = arith.mulf %66, %270 : vector<1x8xf32>
    %309 = arith.addf %307, %308 : vector<1x8xf32>
    %310 = arith.mulf %71, %262 : vector<1x8xf32>
    %311 = arith.mulf %76, %265 : vector<1x8xf32>
    %312 = arith.addf %310, %311 : vector<1x8xf32>
    %313 = arith.mulf %81, %268 : vector<1x8xf32>
    %314 = arith.addf %312, %313 : vector<1x8xf32>
    %315 = arith.mulf %71, %263 : vector<1x8xf32>
    %316 = arith.mulf %76, %266 : vector<1x8xf32>
    %317 = arith.addf %315, %316 : vector<1x8xf32>
    %318 = arith.mulf %81, %269 : vector<1x8xf32>
    %319 = arith.addf %317, %318 : vector<1x8xf32>
    %320 = arith.mulf %71, %264 : vector<1x8xf32>
    %321 = arith.mulf %76, %267 : vector<1x8xf32>
    %322 = arith.addf %320, %321 : vector<1x8xf32>
    %323 = arith.mulf %81, %270 : vector<1x8xf32>
    %324 = arith.addf %322, %323 : vector<1x8xf32>
    %325 = arith.mulf %41, %273 : vector<1x8xf32>
    %326 = arith.mulf %46, %276 : vector<1x8xf32>
    %327 = arith.addf %325, %326 : vector<1x8xf32>
    %328 = arith.mulf %51, %279 : vector<1x8xf32>
    %329 = arith.addf %327, %328 : vector<1x8xf32>
    %330 = arith.addf %329, %87 : vector<1x8xf32>
    %331 = arith.mulf %56, %273 : vector<1x8xf32>
    %332 = arith.mulf %61, %276 : vector<1x8xf32>
    %333 = arith.addf %331, %332 : vector<1x8xf32>
    %334 = arith.mulf %66, %279 : vector<1x8xf32>
    %335 = arith.addf %333, %334 : vector<1x8xf32>
    %336 = arith.addf %335, %93 : vector<1x8xf32>
    %337 = arith.mulf %71, %273 : vector<1x8xf32>
    %338 = arith.mulf %76, %276 : vector<1x8xf32>
    %339 = arith.addf %337, %338 : vector<1x8xf32>
    %340 = arith.mulf %81, %279 : vector<1x8xf32>
    %341 = arith.addf %339, %340 : vector<1x8xf32>
    %342 = arith.addf %341, %99 : vector<1x8xf32>
    %343 = vector.extract_strided_slice %6 {offsets = [45, 0], sizes = [1, 8], strides = [1, 1]} : vector<216x8xf32> to vector<1x8xf32>
    %344 = vector.extract_strided_slice %6 {offsets = [46, 0], sizes = [1, 8], strides = [1, 1]} : vector<216x8xf32> to vector<1x8xf32>
    %345 = vector.extract_strided_slice %6 {offsets = [47, 0], sizes = [1, 8], strides = [1, 1]} : vector<216x8xf32> to vector<1x8xf32>
    %346 = vector.extract_strided_slice %6 {offsets = [48, 0], sizes = [1, 8], strides = [1, 1]} : vector<216x8xf32> to vector<1x8xf32>
    %347 = vector.extract_strided_slice %6 {offsets = [49, 0], sizes = [1, 8], strides = [1, 1]} : vector<216x8xf32> to vector<1x8xf32>
    %348 = vector.extract_strided_slice %6 {offsets = [50, 0], sizes = [1, 8], strides = [1, 1]} : vector<216x8xf32> to vector<1x8xf32>
    %349 = vector.extract_strided_slice %6 {offsets = [51, 0], sizes = [1, 8], strides = [1, 1]} : vector<216x8xf32> to vector<1x8xf32>
    %350 = vector.extract_strided_slice %6 {offsets = [52, 0], sizes = [1, 8], strides = [1, 1]} : vector<216x8xf32> to vector<1x8xf32>
    %351 = vector.extract_strided_slice %6 {offsets = [53, 0], sizes = [1, 8], strides = [1, 1]} : vector<216x8xf32> to vector<1x8xf32>
    %352 = vector.extract_strided_slice %5 {offsets = [15, 0], sizes = [1, 8], strides = [1, 1]} : vector<72x8xf32> to vector<1x8xf32>
    %353 = vector.extract_strided_slice %5 {offsets = [6, 0], sizes = [1, 8], strides = [1, 1]} : vector<72x8xf32> to vector<1x8xf32>
    %354 = arith.subf %352, %353 : vector<1x8xf32>
    %355 = vector.extract_strided_slice %5 {offsets = [16, 0], sizes = [1, 8], strides = [1, 1]} : vector<72x8xf32> to vector<1x8xf32>
    %356 = vector.extract_strided_slice %5 {offsets = [7, 0], sizes = [1, 8], strides = [1, 1]} : vector<72x8xf32> to vector<1x8xf32>
    %357 = arith.subf %355, %356 : vector<1x8xf32>
    %358 = vector.extract_strided_slice %5 {offsets = [17, 0], sizes = [1, 8], strides = [1, 1]} : vector<72x8xf32> to vector<1x8xf32>
    %359 = vector.extract_strided_slice %5 {offsets = [8, 0], sizes = [1, 8], strides = [1, 1]} : vector<72x8xf32> to vector<1x8xf32>
    %360 = arith.subf %358, %359 : vector<1x8xf32>
    %361 = arith.mulf %122, %343 : vector<1x8xf32>
    %362 = arith.mulf %127, %346 : vector<1x8xf32>
    %363 = arith.addf %361, %362 : vector<1x8xf32>
    %364 = arith.mulf %132, %349 : vector<1x8xf32>
    %365 = arith.addf %363, %364 : vector<1x8xf32>
    %366 = arith.mulf %122, %344 : vector<1x8xf32>
    %367 = arith.mulf %127, %347 : vector<1x8xf32>
    %368 = arith.addf %366, %367 : vector<1x8xf32>
    %369 = arith.mulf %132, %350 : vector<1x8xf32>
    %370 = arith.addf %368, %369 : vector<1x8xf32>
    %371 = arith.mulf %122, %345 : vector<1x8xf32>
    %372 = arith.mulf %127, %348 : vector<1x8xf32>
    %373 = arith.addf %371, %372 : vector<1x8xf32>
    %374 = arith.mulf %132, %351 : vector<1x8xf32>
    %375 = arith.addf %373, %374 : vector<1x8xf32>
    %376 = arith.mulf %137, %343 : vector<1x8xf32>
    %377 = arith.mulf %142, %346 : vector<1x8xf32>
    %378 = arith.addf %376, %377 : vector<1x8xf32>
    %379 = arith.mulf %147, %349 : vector<1x8xf32>
    %380 = arith.addf %378, %379 : vector<1x8xf32>
    %381 = arith.mulf %137, %344 : vector<1x8xf32>
    %382 = arith.mulf %142, %347 : vector<1x8xf32>
    %383 = arith.addf %381, %382 : vector<1x8xf32>
    %384 = arith.mulf %147, %350 : vector<1x8xf32>
    %385 = arith.addf %383, %384 : vector<1x8xf32>
    %386 = arith.mulf %137, %345 : vector<1x8xf32>
    %387 = arith.mulf %142, %348 : vector<1x8xf32>
    %388 = arith.addf %386, %387 : vector<1x8xf32>
    %389 = arith.mulf %147, %351 : vector<1x8xf32>
    %390 = arith.addf %388, %389 : vector<1x8xf32>
    %391 = arith.mulf %152, %343 : vector<1x8xf32>
    %392 = arith.mulf %157, %346 : vector<1x8xf32>
    %393 = arith.addf %391, %392 : vector<1x8xf32>
    %394 = arith.mulf %162, %349 : vector<1x8xf32>
    %395 = arith.addf %393, %394 : vector<1x8xf32>
    %396 = arith.mulf %152, %344 : vector<1x8xf32>
    %397 = arith.mulf %157, %347 : vector<1x8xf32>
    %398 = arith.addf %396, %397 : vector<1x8xf32>
    %399 = arith.mulf %162, %350 : vector<1x8xf32>
    %400 = arith.addf %398, %399 : vector<1x8xf32>
    %401 = arith.mulf %152, %345 : vector<1x8xf32>
    %402 = arith.mulf %157, %348 : vector<1x8xf32>
    %403 = arith.addf %401, %402 : vector<1x8xf32>
    %404 = arith.mulf %162, %351 : vector<1x8xf32>
    %405 = arith.addf %403, %404 : vector<1x8xf32>
    %406 = arith.mulf %122, %354 : vector<1x8xf32>
    %407 = arith.mulf %127, %357 : vector<1x8xf32>
    %408 = arith.addf %406, %407 : vector<1x8xf32>
    %409 = arith.mulf %132, %360 : vector<1x8xf32>
    %410 = arith.addf %408, %409 : vector<1x8xf32>
    %411 = arith.addf %410, %168 : vector<1x8xf32>
    %412 = arith.mulf %137, %354 : vector<1x8xf32>
    %413 = arith.mulf %142, %357 : vector<1x8xf32>
    %414 = arith.addf %412, %413 : vector<1x8xf32>
    %415 = arith.mulf %147, %360 : vector<1x8xf32>
    %416 = arith.addf %414, %415 : vector<1x8xf32>
    %417 = arith.addf %416, %174 : vector<1x8xf32>
    %418 = arith.mulf %152, %354 : vector<1x8xf32>
    %419 = arith.mulf %157, %357 : vector<1x8xf32>
    %420 = arith.addf %418, %419 : vector<1x8xf32>
    %421 = arith.mulf %162, %360 : vector<1x8xf32>
    %422 = arith.addf %420, %421 : vector<1x8xf32>
    %423 = arith.addf %422, %180 : vector<1x8xf32>
    %424 = vector.extract_strided_slice %6 {offsets = [54, 0], sizes = [1, 8], strides = [1, 1]} : vector<216x8xf32> to vector<1x8xf32>
    %425 = vector.extract_strided_slice %6 {offsets = [55, 0], sizes = [1, 8], strides = [1, 1]} : vector<216x8xf32> to vector<1x8xf32>
    %426 = vector.extract_strided_slice %6 {offsets = [56, 0], sizes = [1, 8], strides = [1, 1]} : vector<216x8xf32> to vector<1x8xf32>
    %427 = vector.extract_strided_slice %6 {offsets = [57, 0], sizes = [1, 8], strides = [1, 1]} : vector<216x8xf32> to vector<1x8xf32>
    %428 = vector.extract_strided_slice %6 {offsets = [58, 0], sizes = [1, 8], strides = [1, 1]} : vector<216x8xf32> to vector<1x8xf32>
    %429 = vector.extract_strided_slice %6 {offsets = [59, 0], sizes = [1, 8], strides = [1, 1]} : vector<216x8xf32> to vector<1x8xf32>
    %430 = vector.extract_strided_slice %6 {offsets = [60, 0], sizes = [1, 8], strides = [1, 1]} : vector<216x8xf32> to vector<1x8xf32>
    %431 = vector.extract_strided_slice %6 {offsets = [61, 0], sizes = [1, 8], strides = [1, 1]} : vector<216x8xf32> to vector<1x8xf32>
    %432 = vector.extract_strided_slice %6 {offsets = [62, 0], sizes = [1, 8], strides = [1, 1]} : vector<216x8xf32> to vector<1x8xf32>
    %433 = vector.extract_strided_slice %5 {offsets = [18, 0], sizes = [1, 8], strides = [1, 1]} : vector<72x8xf32> to vector<1x8xf32>
    %434 = vector.extract_strided_slice %5 {offsets = [9, 0], sizes = [1, 8], strides = [1, 1]} : vector<72x8xf32> to vector<1x8xf32>
    %435 = arith.subf %433, %434 : vector<1x8xf32>
    %436 = vector.extract_strided_slice %5 {offsets = [19, 0], sizes = [1, 8], strides = [1, 1]} : vector<72x8xf32> to vector<1x8xf32>
    %437 = vector.extract_strided_slice %5 {offsets = [10, 0], sizes = [1, 8], strides = [1, 1]} : vector<72x8xf32> to vector<1x8xf32>
    %438 = arith.subf %436, %437 : vector<1x8xf32>
    %439 = vector.extract_strided_slice %5 {offsets = [20, 0], sizes = [1, 8], strides = [1, 1]} : vector<72x8xf32> to vector<1x8xf32>
    %440 = vector.extract_strided_slice %5 {offsets = [11, 0], sizes = [1, 8], strides = [1, 1]} : vector<72x8xf32> to vector<1x8xf32>
    %441 = arith.subf %439, %440 : vector<1x8xf32>
    %442 = arith.mulf %203, %424 : vector<1x8xf32>
    %443 = arith.mulf %208, %427 : vector<1x8xf32>
    %444 = arith.addf %442, %443 : vector<1x8xf32>
    %445 = arith.mulf %213, %430 : vector<1x8xf32>
    %446 = arith.addf %444, %445 : vector<1x8xf32>
    %447 = arith.mulf %203, %425 : vector<1x8xf32>
    %448 = arith.mulf %208, %428 : vector<1x8xf32>
    %449 = arith.addf %447, %448 : vector<1x8xf32>
    %450 = arith.mulf %213, %431 : vector<1x8xf32>
    %451 = arith.addf %449, %450 : vector<1x8xf32>
    %452 = arith.mulf %203, %426 : vector<1x8xf32>
    %453 = arith.mulf %208, %429 : vector<1x8xf32>
    %454 = arith.addf %452, %453 : vector<1x8xf32>
    %455 = arith.mulf %213, %432 : vector<1x8xf32>
    %456 = arith.addf %454, %455 : vector<1x8xf32>
    %457 = arith.mulf %218, %424 : vector<1x8xf32>
    %458 = arith.mulf %223, %427 : vector<1x8xf32>
    %459 = arith.addf %457, %458 : vector<1x8xf32>
    %460 = arith.mulf %228, %430 : vector<1x8xf32>
    %461 = arith.addf %459, %460 : vector<1x8xf32>
    %462 = arith.mulf %218, %425 : vector<1x8xf32>
    %463 = arith.mulf %223, %428 : vector<1x8xf32>
    %464 = arith.addf %462, %463 : vector<1x8xf32>
    %465 = arith.mulf %228, %431 : vector<1x8xf32>
    %466 = arith.addf %464, %465 : vector<1x8xf32>
    %467 = arith.mulf %218, %426 : vector<1x8xf32>
    %468 = arith.mulf %223, %429 : vector<1x8xf32>
    %469 = arith.addf %467, %468 : vector<1x8xf32>
    %470 = arith.mulf %228, %432 : vector<1x8xf32>
    %471 = arith.addf %469, %470 : vector<1x8xf32>
    %472 = arith.mulf %233, %424 : vector<1x8xf32>
    %473 = arith.mulf %238, %427 : vector<1x8xf32>
    %474 = arith.addf %472, %473 : vector<1x8xf32>
    %475 = arith.mulf %243, %430 : vector<1x8xf32>
    %476 = arith.addf %474, %475 : vector<1x8xf32>
    %477 = arith.mulf %233, %425 : vector<1x8xf32>
    %478 = arith.mulf %238, %428 : vector<1x8xf32>
    %479 = arith.addf %477, %478 : vector<1x8xf32>
    %480 = arith.mulf %243, %431 : vector<1x8xf32>
    %481 = arith.addf %479, %480 : vector<1x8xf32>
    %482 = arith.mulf %233, %426 : vector<1x8xf32>
    %483 = arith.mulf %238, %429 : vector<1x8xf32>
    %484 = arith.addf %482, %483 : vector<1x8xf32>
    %485 = arith.mulf %243, %432 : vector<1x8xf32>
    %486 = arith.addf %484, %485 : vector<1x8xf32>
    %487 = arith.mulf %203, %435 : vector<1x8xf32>
    %488 = arith.mulf %208, %438 : vector<1x8xf32>
    %489 = arith.addf %487, %488 : vector<1x8xf32>
    %490 = arith.mulf %213, %441 : vector<1x8xf32>
    %491 = arith.addf %489, %490 : vector<1x8xf32>
    %492 = arith.addf %491, %249 : vector<1x8xf32>
    %493 = arith.mulf %218, %435 : vector<1x8xf32>
    %494 = arith.mulf %223, %438 : vector<1x8xf32>
    %495 = arith.addf %493, %494 : vector<1x8xf32>
    %496 = arith.mulf %228, %441 : vector<1x8xf32>
    %497 = arith.addf %495, %496 : vector<1x8xf32>
    %498 = arith.addf %497, %255 : vector<1x8xf32>
    %499 = arith.mulf %233, %435 : vector<1x8xf32>
    %500 = arith.mulf %238, %438 : vector<1x8xf32>
    %501 = arith.addf %499, %500 : vector<1x8xf32>
    %502 = arith.mulf %243, %441 : vector<1x8xf32>
    %503 = arith.addf %501, %502 : vector<1x8xf32>
    %504 = arith.addf %503, %261 : vector<1x8xf32>
    %505 = vector.extract_strided_slice %6 {offsets = [63, 0], sizes = [1, 8], strides = [1, 1]} : vector<216x8xf32> to vector<1x8xf32>
    %506 = vector.extract_strided_slice %6 {offsets = [64, 0], sizes = [1, 8], strides = [1, 1]} : vector<216x8xf32> to vector<1x8xf32>
    %507 = vector.extract_strided_slice %6 {offsets = [65, 0], sizes = [1, 8], strides = [1, 1]} : vector<216x8xf32> to vector<1x8xf32>
    %508 = vector.extract_strided_slice %6 {offsets = [66, 0], sizes = [1, 8], strides = [1, 1]} : vector<216x8xf32> to vector<1x8xf32>
    %509 = vector.extract_strided_slice %6 {offsets = [67, 0], sizes = [1, 8], strides = [1, 1]} : vector<216x8xf32> to vector<1x8xf32>
    %510 = vector.extract_strided_slice %6 {offsets = [68, 0], sizes = [1, 8], strides = [1, 1]} : vector<216x8xf32> to vector<1x8xf32>
    %511 = vector.extract_strided_slice %6 {offsets = [69, 0], sizes = [1, 8], strides = [1, 1]} : vector<216x8xf32> to vector<1x8xf32>
    %512 = vector.extract_strided_slice %6 {offsets = [70, 0], sizes = [1, 8], strides = [1, 1]} : vector<216x8xf32> to vector<1x8xf32>
    %513 = vector.extract_strided_slice %6 {offsets = [71, 0], sizes = [1, 8], strides = [1, 1]} : vector<216x8xf32> to vector<1x8xf32>
    %514 = vector.extract_strided_slice %5 {offsets = [21, 0], sizes = [1, 8], strides = [1, 1]} : vector<72x8xf32> to vector<1x8xf32>
    %515 = vector.extract_strided_slice %5 {offsets = [12, 0], sizes = [1, 8], strides = [1, 1]} : vector<72x8xf32> to vector<1x8xf32>
    %516 = arith.subf %514, %515 : vector<1x8xf32>
    %517 = vector.extract_strided_slice %5 {offsets = [22, 0], sizes = [1, 8], strides = [1, 1]} : vector<72x8xf32> to vector<1x8xf32>
    %518 = vector.extract_strided_slice %5 {offsets = [13, 0], sizes = [1, 8], strides = [1, 1]} : vector<72x8xf32> to vector<1x8xf32>
    %519 = arith.subf %517, %518 : vector<1x8xf32>
    %520 = vector.extract_strided_slice %5 {offsets = [23, 0], sizes = [1, 8], strides = [1, 1]} : vector<72x8xf32> to vector<1x8xf32>
    %521 = vector.extract_strided_slice %5 {offsets = [14, 0], sizes = [1, 8], strides = [1, 1]} : vector<72x8xf32> to vector<1x8xf32>
    %522 = arith.subf %520, %521 : vector<1x8xf32>
    %523 = arith.mulf %284, %505 : vector<1x8xf32>
    %524 = arith.mulf %289, %508 : vector<1x8xf32>
    %525 = arith.addf %523, %524 : vector<1x8xf32>
    %526 = arith.mulf %294, %511 : vector<1x8xf32>
    %527 = arith.addf %525, %526 : vector<1x8xf32>
    %528 = arith.mulf %284, %506 : vector<1x8xf32>
    %529 = arith.mulf %289, %509 : vector<1x8xf32>
    %530 = arith.addf %528, %529 : vector<1x8xf32>
    %531 = arith.mulf %294, %512 : vector<1x8xf32>
    %532 = arith.addf %530, %531 : vector<1x8xf32>
    %533 = arith.mulf %284, %507 : vector<1x8xf32>
    %534 = arith.mulf %289, %510 : vector<1x8xf32>
    %535 = arith.addf %533, %534 : vector<1x8xf32>
    %536 = arith.mulf %294, %513 : vector<1x8xf32>
    %537 = arith.addf %535, %536 : vector<1x8xf32>
    %538 = arith.mulf %299, %505 : vector<1x8xf32>
    %539 = arith.mulf %304, %508 : vector<1x8xf32>
    %540 = arith.addf %538, %539 : vector<1x8xf32>
    %541 = arith.mulf %309, %511 : vector<1x8xf32>
    %542 = arith.addf %540, %541 : vector<1x8xf32>
    %543 = arith.mulf %299, %506 : vector<1x8xf32>
    %544 = arith.mulf %304, %509 : vector<1x8xf32>
    %545 = arith.addf %543, %544 : vector<1x8xf32>
    %546 = arith.mulf %309, %512 : vector<1x8xf32>
    %547 = arith.addf %545, %546 : vector<1x8xf32>
    %548 = arith.mulf %299, %507 : vector<1x8xf32>
    %549 = arith.mulf %304, %510 : vector<1x8xf32>
    %550 = arith.addf %548, %549 : vector<1x8xf32>
    %551 = arith.mulf %309, %513 : vector<1x8xf32>
    %552 = arith.addf %550, %551 : vector<1x8xf32>
    %553 = arith.mulf %314, %505 : vector<1x8xf32>
    %554 = arith.mulf %319, %508 : vector<1x8xf32>
    %555 = arith.addf %553, %554 : vector<1x8xf32>
    %556 = arith.mulf %324, %511 : vector<1x8xf32>
    %557 = arith.addf %555, %556 : vector<1x8xf32>
    %558 = arith.mulf %314, %506 : vector<1x8xf32>
    %559 = arith.mulf %319, %509 : vector<1x8xf32>
    %560 = arith.addf %558, %559 : vector<1x8xf32>
    %561 = arith.mulf %324, %512 : vector<1x8xf32>
    %562 = arith.addf %560, %561 : vector<1x8xf32>
    %563 = arith.mulf %314, %507 : vector<1x8xf32>
    %564 = arith.mulf %319, %510 : vector<1x8xf32>
    %565 = arith.addf %563, %564 : vector<1x8xf32>
    %566 = arith.mulf %324, %513 : vector<1x8xf32>
    %567 = arith.addf %565, %566 : vector<1x8xf32>
    %568 = arith.mulf %284, %516 : vector<1x8xf32>
    %569 = arith.mulf %289, %519 : vector<1x8xf32>
    %570 = arith.addf %568, %569 : vector<1x8xf32>
    %571 = arith.mulf %294, %522 : vector<1x8xf32>
    %572 = arith.addf %570, %571 : vector<1x8xf32>
    %573 = arith.addf %572, %330 : vector<1x8xf32>
    %574 = arith.mulf %299, %516 : vector<1x8xf32>
    %575 = arith.mulf %304, %519 : vector<1x8xf32>
    %576 = arith.addf %574, %575 : vector<1x8xf32>
    %577 = arith.mulf %309, %522 : vector<1x8xf32>
    %578 = arith.addf %576, %577 : vector<1x8xf32>
    %579 = arith.addf %578, %336 : vector<1x8xf32>
    %580 = arith.mulf %314, %516 : vector<1x8xf32>
    %581 = arith.mulf %319, %519 : vector<1x8xf32>
    %582 = arith.addf %580, %581 : vector<1x8xf32>
    %583 = arith.mulf %324, %522 : vector<1x8xf32>
    %584 = arith.addf %582, %583 : vector<1x8xf32>
    %585 = arith.addf %584, %342 : vector<1x8xf32>
    %586 = vector.extract_strided_slice %6 {offsets = [72, 0], sizes = [1, 8], strides = [1, 1]} : vector<216x8xf32> to vector<1x8xf32>
    %587 = vector.extract_strided_slice %6 {offsets = [73, 0], sizes = [1, 8], strides = [1, 1]} : vector<216x8xf32> to vector<1x8xf32>
    %588 = vector.extract_strided_slice %6 {offsets = [74, 0], sizes = [1, 8], strides = [1, 1]} : vector<216x8xf32> to vector<1x8xf32>
    %589 = vector.extract_strided_slice %6 {offsets = [75, 0], sizes = [1, 8], strides = [1, 1]} : vector<216x8xf32> to vector<1x8xf32>
    %590 = vector.extract_strided_slice %6 {offsets = [76, 0], sizes = [1, 8], strides = [1, 1]} : vector<216x8xf32> to vector<1x8xf32>
    %591 = vector.extract_strided_slice %6 {offsets = [77, 0], sizes = [1, 8], strides = [1, 1]} : vector<216x8xf32> to vector<1x8xf32>
    %592 = vector.extract_strided_slice %6 {offsets = [78, 0], sizes = [1, 8], strides = [1, 1]} : vector<216x8xf32> to vector<1x8xf32>
    %593 = vector.extract_strided_slice %6 {offsets = [79, 0], sizes = [1, 8], strides = [1, 1]} : vector<216x8xf32> to vector<1x8xf32>
    %594 = vector.extract_strided_slice %6 {offsets = [80, 0], sizes = [1, 8], strides = [1, 1]} : vector<216x8xf32> to vector<1x8xf32>
    %595 = vector.extract_strided_slice %5 {offsets = [24, 0], sizes = [1, 8], strides = [1, 1]} : vector<72x8xf32> to vector<1x8xf32>
    %596 = vector.extract_strided_slice %5 {offsets = [15, 0], sizes = [1, 8], strides = [1, 1]} : vector<72x8xf32> to vector<1x8xf32>
    %597 = arith.subf %595, %596 : vector<1x8xf32>
    %598 = vector.extract_strided_slice %5 {offsets = [25, 0], sizes = [1, 8], strides = [1, 1]} : vector<72x8xf32> to vector<1x8xf32>
    %599 = vector.extract_strided_slice %5 {offsets = [16, 0], sizes = [1, 8], strides = [1, 1]} : vector<72x8xf32> to vector<1x8xf32>
    %600 = arith.subf %598, %599 : vector<1x8xf32>
    %601 = vector.extract_strided_slice %5 {offsets = [26, 0], sizes = [1, 8], strides = [1, 1]} : vector<72x8xf32> to vector<1x8xf32>
    %602 = vector.extract_strided_slice %5 {offsets = [17, 0], sizes = [1, 8], strides = [1, 1]} : vector<72x8xf32> to vector<1x8xf32>
    %603 = arith.subf %601, %602 : vector<1x8xf32>
    %604 = arith.mulf %365, %586 : vector<1x8xf32>
    %605 = arith.mulf %370, %589 : vector<1x8xf32>
    %606 = arith.addf %604, %605 : vector<1x8xf32>
    %607 = arith.mulf %375, %592 : vector<1x8xf32>
    %608 = arith.addf %606, %607 : vector<1x8xf32>
    %609 = arith.mulf %365, %587 : vector<1x8xf32>
    %610 = arith.mulf %370, %590 : vector<1x8xf32>
    %611 = arith.addf %609, %610 : vector<1x8xf32>
    %612 = arith.mulf %375, %593 : vector<1x8xf32>
    %613 = arith.addf %611, %612 : vector<1x8xf32>
    %614 = arith.mulf %365, %588 : vector<1x8xf32>
    %615 = arith.mulf %370, %591 : vector<1x8xf32>
    %616 = arith.addf %614, %615 : vector<1x8xf32>
    %617 = arith.mulf %375, %594 : vector<1x8xf32>
    %618 = arith.addf %616, %617 : vector<1x8xf32>
    %619 = arith.mulf %380, %586 : vector<1x8xf32>
    %620 = arith.mulf %385, %589 : vector<1x8xf32>
    %621 = arith.addf %619, %620 : vector<1x8xf32>
    %622 = arith.mulf %390, %592 : vector<1x8xf32>
    %623 = arith.addf %621, %622 : vector<1x8xf32>
    %624 = arith.mulf %380, %587 : vector<1x8xf32>
    %625 = arith.mulf %385, %590 : vector<1x8xf32>
    %626 = arith.addf %624, %625 : vector<1x8xf32>
    %627 = arith.mulf %390, %593 : vector<1x8xf32>
    %628 = arith.addf %626, %627 : vector<1x8xf32>
    %629 = arith.mulf %380, %588 : vector<1x8xf32>
    %630 = arith.mulf %385, %591 : vector<1x8xf32>
    %631 = arith.addf %629, %630 : vector<1x8xf32>
    %632 = arith.mulf %390, %594 : vector<1x8xf32>
    %633 = arith.addf %631, %632 : vector<1x8xf32>
    %634 = arith.mulf %395, %586 : vector<1x8xf32>
    %635 = arith.mulf %400, %589 : vector<1x8xf32>
    %636 = arith.addf %634, %635 : vector<1x8xf32>
    %637 = arith.mulf %405, %592 : vector<1x8xf32>
    %638 = arith.addf %636, %637 : vector<1x8xf32>
    %639 = arith.mulf %395, %587 : vector<1x8xf32>
    %640 = arith.mulf %400, %590 : vector<1x8xf32>
    %641 = arith.addf %639, %640 : vector<1x8xf32>
    %642 = arith.mulf %405, %593 : vector<1x8xf32>
    %643 = arith.addf %641, %642 : vector<1x8xf32>
    %644 = arith.mulf %395, %588 : vector<1x8xf32>
    %645 = arith.mulf %400, %591 : vector<1x8xf32>
    %646 = arith.addf %644, %645 : vector<1x8xf32>
    %647 = arith.mulf %405, %594 : vector<1x8xf32>
    %648 = arith.addf %646, %647 : vector<1x8xf32>
    %649 = arith.mulf %365, %597 : vector<1x8xf32>
    %650 = arith.mulf %370, %600 : vector<1x8xf32>
    %651 = arith.addf %649, %650 : vector<1x8xf32>
    %652 = arith.mulf %375, %603 : vector<1x8xf32>
    %653 = arith.addf %651, %652 : vector<1x8xf32>
    %654 = arith.addf %653, %411 : vector<1x8xf32>
    %655 = arith.mulf %380, %597 : vector<1x8xf32>
    %656 = arith.mulf %385, %600 : vector<1x8xf32>
    %657 = arith.addf %655, %656 : vector<1x8xf32>
    %658 = arith.mulf %390, %603 : vector<1x8xf32>
    %659 = arith.addf %657, %658 : vector<1x8xf32>
    %660 = arith.addf %659, %417 : vector<1x8xf32>
    %661 = arith.mulf %395, %597 : vector<1x8xf32>
    %662 = arith.mulf %400, %600 : vector<1x8xf32>
    %663 = arith.addf %661, %662 : vector<1x8xf32>
    %664 = arith.mulf %405, %603 : vector<1x8xf32>
    %665 = arith.addf %663, %664 : vector<1x8xf32>
    %666 = arith.addf %665, %423 : vector<1x8xf32>
    %667 = vector.extract_strided_slice %6 {offsets = [81, 0], sizes = [1, 8], strides = [1, 1]} : vector<216x8xf32> to vector<1x8xf32>
    %668 = vector.extract_strided_slice %6 {offsets = [82, 0], sizes = [1, 8], strides = [1, 1]} : vector<216x8xf32> to vector<1x8xf32>
    %669 = vector.extract_strided_slice %6 {offsets = [83, 0], sizes = [1, 8], strides = [1, 1]} : vector<216x8xf32> to vector<1x8xf32>
    %670 = vector.extract_strided_slice %6 {offsets = [84, 0], sizes = [1, 8], strides = [1, 1]} : vector<216x8xf32> to vector<1x8xf32>
    %671 = vector.extract_strided_slice %6 {offsets = [85, 0], sizes = [1, 8], strides = [1, 1]} : vector<216x8xf32> to vector<1x8xf32>
    %672 = vector.extract_strided_slice %6 {offsets = [86, 0], sizes = [1, 8], strides = [1, 1]} : vector<216x8xf32> to vector<1x8xf32>
    %673 = vector.extract_strided_slice %6 {offsets = [87, 0], sizes = [1, 8], strides = [1, 1]} : vector<216x8xf32> to vector<1x8xf32>
    %674 = vector.extract_strided_slice %6 {offsets = [88, 0], sizes = [1, 8], strides = [1, 1]} : vector<216x8xf32> to vector<1x8xf32>
    %675 = vector.extract_strided_slice %6 {offsets = [89, 0], sizes = [1, 8], strides = [1, 1]} : vector<216x8xf32> to vector<1x8xf32>
    %676 = vector.extract_strided_slice %5 {offsets = [27, 0], sizes = [1, 8], strides = [1, 1]} : vector<72x8xf32> to vector<1x8xf32>
    %677 = vector.extract_strided_slice %5 {offsets = [18, 0], sizes = [1, 8], strides = [1, 1]} : vector<72x8xf32> to vector<1x8xf32>
    %678 = arith.subf %676, %677 : vector<1x8xf32>
    %679 = vector.extract_strided_slice %5 {offsets = [28, 0], sizes = [1, 8], strides = [1, 1]} : vector<72x8xf32> to vector<1x8xf32>
    %680 = vector.extract_strided_slice %5 {offsets = [19, 0], sizes = [1, 8], strides = [1, 1]} : vector<72x8xf32> to vector<1x8xf32>
    %681 = arith.subf %679, %680 : vector<1x8xf32>
    %682 = vector.extract_strided_slice %5 {offsets = [29, 0], sizes = [1, 8], strides = [1, 1]} : vector<72x8xf32> to vector<1x8xf32>
    %683 = vector.extract_strided_slice %5 {offsets = [20, 0], sizes = [1, 8], strides = [1, 1]} : vector<72x8xf32> to vector<1x8xf32>
    %684 = arith.subf %682, %683 : vector<1x8xf32>
    %685 = arith.mulf %446, %667 : vector<1x8xf32>
    %686 = arith.mulf %451, %670 : vector<1x8xf32>
    %687 = arith.addf %685, %686 : vector<1x8xf32>
    %688 = arith.mulf %456, %673 : vector<1x8xf32>
    %689 = arith.addf %687, %688 : vector<1x8xf32>
    %690 = arith.mulf %446, %668 : vector<1x8xf32>
    %691 = arith.mulf %451, %671 : vector<1x8xf32>
    %692 = arith.addf %690, %691 : vector<1x8xf32>
    %693 = arith.mulf %456, %674 : vector<1x8xf32>
    %694 = arith.addf %692, %693 : vector<1x8xf32>
    %695 = arith.mulf %446, %669 : vector<1x8xf32>
    %696 = arith.mulf %451, %672 : vector<1x8xf32>
    %697 = arith.addf %695, %696 : vector<1x8xf32>
    %698 = arith.mulf %456, %675 : vector<1x8xf32>
    %699 = arith.addf %697, %698 : vector<1x8xf32>
    %700 = arith.mulf %461, %667 : vector<1x8xf32>
    %701 = arith.mulf %466, %670 : vector<1x8xf32>
    %702 = arith.addf %700, %701 : vector<1x8xf32>
    %703 = arith.mulf %471, %673 : vector<1x8xf32>
    %704 = arith.addf %702, %703 : vector<1x8xf32>
    %705 = arith.mulf %461, %668 : vector<1x8xf32>
    %706 = arith.mulf %466, %671 : vector<1x8xf32>
    %707 = arith.addf %705, %706 : vector<1x8xf32>
    %708 = arith.mulf %471, %674 : vector<1x8xf32>
    %709 = arith.addf %707, %708 : vector<1x8xf32>
    %710 = arith.mulf %461, %669 : vector<1x8xf32>
    %711 = arith.mulf %466, %672 : vector<1x8xf32>
    %712 = arith.addf %710, %711 : vector<1x8xf32>
    %713 = arith.mulf %471, %675 : vector<1x8xf32>
    %714 = arith.addf %712, %713 : vector<1x8xf32>
    %715 = arith.mulf %476, %667 : vector<1x8xf32>
    %716 = arith.mulf %481, %670 : vector<1x8xf32>
    %717 = arith.addf %715, %716 : vector<1x8xf32>
    %718 = arith.mulf %486, %673 : vector<1x8xf32>
    %719 = arith.addf %717, %718 : vector<1x8xf32>
    %720 = arith.mulf %476, %668 : vector<1x8xf32>
    %721 = arith.mulf %481, %671 : vector<1x8xf32>
    %722 = arith.addf %720, %721 : vector<1x8xf32>
    %723 = arith.mulf %486, %674 : vector<1x8xf32>
    %724 = arith.addf %722, %723 : vector<1x8xf32>
    %725 = arith.mulf %476, %669 : vector<1x8xf32>
    %726 = arith.mulf %481, %672 : vector<1x8xf32>
    %727 = arith.addf %725, %726 : vector<1x8xf32>
    %728 = arith.mulf %486, %675 : vector<1x8xf32>
    %729 = arith.addf %727, %728 : vector<1x8xf32>
    %730 = arith.mulf %446, %678 : vector<1x8xf32>
    %731 = arith.mulf %451, %681 : vector<1x8xf32>
    %732 = arith.addf %730, %731 : vector<1x8xf32>
    %733 = arith.mulf %456, %684 : vector<1x8xf32>
    %734 = arith.addf %732, %733 : vector<1x8xf32>
    %735 = arith.addf %734, %492 : vector<1x8xf32>
    %736 = arith.mulf %461, %678 : vector<1x8xf32>
    %737 = arith.mulf %466, %681 : vector<1x8xf32>
    %738 = arith.addf %736, %737 : vector<1x8xf32>
    %739 = arith.mulf %471, %684 : vector<1x8xf32>
    %740 = arith.addf %738, %739 : vector<1x8xf32>
    %741 = arith.addf %740, %498 : vector<1x8xf32>
    %742 = arith.mulf %476, %678 : vector<1x8xf32>
    %743 = arith.mulf %481, %681 : vector<1x8xf32>
    %744 = arith.addf %742, %743 : vector<1x8xf32>
    %745 = arith.mulf %486, %684 : vector<1x8xf32>
    %746 = arith.addf %744, %745 : vector<1x8xf32>
    %747 = arith.addf %746, %504 : vector<1x8xf32>
    %748 = vector.extract_strided_slice %6 {offsets = [90, 0], sizes = [1, 8], strides = [1, 1]} : vector<216x8xf32> to vector<1x8xf32>
    %749 = vector.extract_strided_slice %6 {offsets = [91, 0], sizes = [1, 8], strides = [1, 1]} : vector<216x8xf32> to vector<1x8xf32>
    %750 = vector.extract_strided_slice %6 {offsets = [92, 0], sizes = [1, 8], strides = [1, 1]} : vector<216x8xf32> to vector<1x8xf32>
    %751 = vector.extract_strided_slice %6 {offsets = [93, 0], sizes = [1, 8], strides = [1, 1]} : vector<216x8xf32> to vector<1x8xf32>
    %752 = vector.extract_strided_slice %6 {offsets = [94, 0], sizes = [1, 8], strides = [1, 1]} : vector<216x8xf32> to vector<1x8xf32>
    %753 = vector.extract_strided_slice %6 {offsets = [95, 0], sizes = [1, 8], strides = [1, 1]} : vector<216x8xf32> to vector<1x8xf32>
    %754 = vector.extract_strided_slice %6 {offsets = [96, 0], sizes = [1, 8], strides = [1, 1]} : vector<216x8xf32> to vector<1x8xf32>
    %755 = vector.extract_strided_slice %6 {offsets = [97, 0], sizes = [1, 8], strides = [1, 1]} : vector<216x8xf32> to vector<1x8xf32>
    %756 = vector.extract_strided_slice %6 {offsets = [98, 0], sizes = [1, 8], strides = [1, 1]} : vector<216x8xf32> to vector<1x8xf32>
    %757 = vector.extract_strided_slice %5 {offsets = [30, 0], sizes = [1, 8], strides = [1, 1]} : vector<72x8xf32> to vector<1x8xf32>
    %758 = vector.extract_strided_slice %5 {offsets = [21, 0], sizes = [1, 8], strides = [1, 1]} : vector<72x8xf32> to vector<1x8xf32>
    %759 = arith.subf %757, %758 : vector<1x8xf32>
    %760 = vector.extract_strided_slice %5 {offsets = [31, 0], sizes = [1, 8], strides = [1, 1]} : vector<72x8xf32> to vector<1x8xf32>
    %761 = vector.extract_strided_slice %5 {offsets = [22, 0], sizes = [1, 8], strides = [1, 1]} : vector<72x8xf32> to vector<1x8xf32>
    %762 = arith.subf %760, %761 : vector<1x8xf32>
    %763 = vector.extract_strided_slice %5 {offsets = [32, 0], sizes = [1, 8], strides = [1, 1]} : vector<72x8xf32> to vector<1x8xf32>
    %764 = vector.extract_strided_slice %5 {offsets = [23, 0], sizes = [1, 8], strides = [1, 1]} : vector<72x8xf32> to vector<1x8xf32>
    %765 = arith.subf %763, %764 : vector<1x8xf32>
    %766 = arith.mulf %527, %748 : vector<1x8xf32>
    %767 = arith.mulf %532, %751 : vector<1x8xf32>
    %768 = arith.addf %766, %767 : vector<1x8xf32>
    %769 = arith.mulf %537, %754 : vector<1x8xf32>
    %770 = arith.addf %768, %769 : vector<1x8xf32>
    %771 = arith.mulf %527, %749 : vector<1x8xf32>
    %772 = arith.mulf %532, %752 : vector<1x8xf32>
    %773 = arith.addf %771, %772 : vector<1x8xf32>
    %774 = arith.mulf %537, %755 : vector<1x8xf32>
    %775 = arith.addf %773, %774 : vector<1x8xf32>
    %776 = arith.mulf %527, %750 : vector<1x8xf32>
    %777 = arith.mulf %532, %753 : vector<1x8xf32>
    %778 = arith.addf %776, %777 : vector<1x8xf32>
    %779 = arith.mulf %537, %756 : vector<1x8xf32>
    %780 = arith.addf %778, %779 : vector<1x8xf32>
    %781 = arith.mulf %542, %748 : vector<1x8xf32>
    %782 = arith.mulf %547, %751 : vector<1x8xf32>
    %783 = arith.addf %781, %782 : vector<1x8xf32>
    %784 = arith.mulf %552, %754 : vector<1x8xf32>
    %785 = arith.addf %783, %784 : vector<1x8xf32>
    %786 = arith.mulf %542, %749 : vector<1x8xf32>
    %787 = arith.mulf %547, %752 : vector<1x8xf32>
    %788 = arith.addf %786, %787 : vector<1x8xf32>
    %789 = arith.mulf %552, %755 : vector<1x8xf32>
    %790 = arith.addf %788, %789 : vector<1x8xf32>
    %791 = arith.mulf %542, %750 : vector<1x8xf32>
    %792 = arith.mulf %547, %753 : vector<1x8xf32>
    %793 = arith.addf %791, %792 : vector<1x8xf32>
    %794 = arith.mulf %552, %756 : vector<1x8xf32>
    %795 = arith.addf %793, %794 : vector<1x8xf32>
    %796 = arith.mulf %557, %748 : vector<1x8xf32>
    %797 = arith.mulf %562, %751 : vector<1x8xf32>
    %798 = arith.addf %796, %797 : vector<1x8xf32>
    %799 = arith.mulf %567, %754 : vector<1x8xf32>
    %800 = arith.addf %798, %799 : vector<1x8xf32>
    %801 = arith.mulf %557, %749 : vector<1x8xf32>
    %802 = arith.mulf %562, %752 : vector<1x8xf32>
    %803 = arith.addf %801, %802 : vector<1x8xf32>
    %804 = arith.mulf %567, %755 : vector<1x8xf32>
    %805 = arith.addf %803, %804 : vector<1x8xf32>
    %806 = arith.mulf %557, %750 : vector<1x8xf32>
    %807 = arith.mulf %562, %753 : vector<1x8xf32>
    %808 = arith.addf %806, %807 : vector<1x8xf32>
    %809 = arith.mulf %567, %756 : vector<1x8xf32>
    %810 = arith.addf %808, %809 : vector<1x8xf32>
    %811 = arith.mulf %527, %759 : vector<1x8xf32>
    %812 = arith.mulf %532, %762 : vector<1x8xf32>
    %813 = arith.addf %811, %812 : vector<1x8xf32>
    %814 = arith.mulf %537, %765 : vector<1x8xf32>
    %815 = arith.addf %813, %814 : vector<1x8xf32>
    %816 = arith.addf %815, %573 : vector<1x8xf32>
    %817 = arith.mulf %542, %759 : vector<1x8xf32>
    %818 = arith.mulf %547, %762 : vector<1x8xf32>
    %819 = arith.addf %817, %818 : vector<1x8xf32>
    %820 = arith.mulf %552, %765 : vector<1x8xf32>
    %821 = arith.addf %819, %820 : vector<1x8xf32>
    %822 = arith.addf %821, %579 : vector<1x8xf32>
    %823 = arith.mulf %557, %759 : vector<1x8xf32>
    %824 = arith.mulf %562, %762 : vector<1x8xf32>
    %825 = arith.addf %823, %824 : vector<1x8xf32>
    %826 = arith.mulf %567, %765 : vector<1x8xf32>
    %827 = arith.addf %825, %826 : vector<1x8xf32>
    %828 = arith.addf %827, %585 : vector<1x8xf32>
    %829 = vector.extract_strided_slice %6 {offsets = [99, 0], sizes = [1, 8], strides = [1, 1]} : vector<216x8xf32> to vector<1x8xf32>
    %830 = vector.extract_strided_slice %6 {offsets = [100, 0], sizes = [1, 8], strides = [1, 1]} : vector<216x8xf32> to vector<1x8xf32>
    %831 = vector.extract_strided_slice %6 {offsets = [101, 0], sizes = [1, 8], strides = [1, 1]} : vector<216x8xf32> to vector<1x8xf32>
    %832 = vector.extract_strided_slice %6 {offsets = [102, 0], sizes = [1, 8], strides = [1, 1]} : vector<216x8xf32> to vector<1x8xf32>
    %833 = vector.extract_strided_slice %6 {offsets = [103, 0], sizes = [1, 8], strides = [1, 1]} : vector<216x8xf32> to vector<1x8xf32>
    %834 = vector.extract_strided_slice %6 {offsets = [104, 0], sizes = [1, 8], strides = [1, 1]} : vector<216x8xf32> to vector<1x8xf32>
    %835 = vector.extract_strided_slice %6 {offsets = [105, 0], sizes = [1, 8], strides = [1, 1]} : vector<216x8xf32> to vector<1x8xf32>
    %836 = vector.extract_strided_slice %6 {offsets = [106, 0], sizes = [1, 8], strides = [1, 1]} : vector<216x8xf32> to vector<1x8xf32>
    %837 = vector.extract_strided_slice %6 {offsets = [107, 0], sizes = [1, 8], strides = [1, 1]} : vector<216x8xf32> to vector<1x8xf32>
    %838 = vector.extract_strided_slice %5 {offsets = [33, 0], sizes = [1, 8], strides = [1, 1]} : vector<72x8xf32> to vector<1x8xf32>
    %839 = vector.extract_strided_slice %5 {offsets = [24, 0], sizes = [1, 8], strides = [1, 1]} : vector<72x8xf32> to vector<1x8xf32>
    %840 = arith.subf %838, %839 : vector<1x8xf32>
    %841 = vector.extract_strided_slice %5 {offsets = [34, 0], sizes = [1, 8], strides = [1, 1]} : vector<72x8xf32> to vector<1x8xf32>
    %842 = vector.extract_strided_slice %5 {offsets = [25, 0], sizes = [1, 8], strides = [1, 1]} : vector<72x8xf32> to vector<1x8xf32>
    %843 = arith.subf %841, %842 : vector<1x8xf32>
    %844 = vector.extract_strided_slice %5 {offsets = [35, 0], sizes = [1, 8], strides = [1, 1]} : vector<72x8xf32> to vector<1x8xf32>
    %845 = vector.extract_strided_slice %5 {offsets = [26, 0], sizes = [1, 8], strides = [1, 1]} : vector<72x8xf32> to vector<1x8xf32>
    %846 = arith.subf %844, %845 : vector<1x8xf32>
    %847 = arith.mulf %608, %829 : vector<1x8xf32>
    %848 = arith.mulf %613, %832 : vector<1x8xf32>
    %849 = arith.addf %847, %848 : vector<1x8xf32>
    %850 = arith.mulf %618, %835 : vector<1x8xf32>
    %851 = arith.addf %849, %850 : vector<1x8xf32>
    %852 = arith.mulf %608, %830 : vector<1x8xf32>
    %853 = arith.mulf %613, %833 : vector<1x8xf32>
    %854 = arith.addf %852, %853 : vector<1x8xf32>
    %855 = arith.mulf %618, %836 : vector<1x8xf32>
    %856 = arith.addf %854, %855 : vector<1x8xf32>
    %857 = arith.mulf %608, %831 : vector<1x8xf32>
    %858 = arith.mulf %613, %834 : vector<1x8xf32>
    %859 = arith.addf %857, %858 : vector<1x8xf32>
    %860 = arith.mulf %618, %837 : vector<1x8xf32>
    %861 = arith.addf %859, %860 : vector<1x8xf32>
    %862 = arith.mulf %623, %829 : vector<1x8xf32>
    %863 = arith.mulf %628, %832 : vector<1x8xf32>
    %864 = arith.addf %862, %863 : vector<1x8xf32>
    %865 = arith.mulf %633, %835 : vector<1x8xf32>
    %866 = arith.addf %864, %865 : vector<1x8xf32>
    %867 = arith.mulf %623, %830 : vector<1x8xf32>
    %868 = arith.mulf %628, %833 : vector<1x8xf32>
    %869 = arith.addf %867, %868 : vector<1x8xf32>
    %870 = arith.mulf %633, %836 : vector<1x8xf32>
    %871 = arith.addf %869, %870 : vector<1x8xf32>
    %872 = arith.mulf %623, %831 : vector<1x8xf32>
    %873 = arith.mulf %628, %834 : vector<1x8xf32>
    %874 = arith.addf %872, %873 : vector<1x8xf32>
    %875 = arith.mulf %633, %837 : vector<1x8xf32>
    %876 = arith.addf %874, %875 : vector<1x8xf32>
    %877 = arith.mulf %638, %829 : vector<1x8xf32>
    %878 = arith.mulf %643, %832 : vector<1x8xf32>
    %879 = arith.addf %877, %878 : vector<1x8xf32>
    %880 = arith.mulf %648, %835 : vector<1x8xf32>
    %881 = arith.addf %879, %880 : vector<1x8xf32>
    %882 = arith.mulf %638, %830 : vector<1x8xf32>
    %883 = arith.mulf %643, %833 : vector<1x8xf32>
    %884 = arith.addf %882, %883 : vector<1x8xf32>
    %885 = arith.mulf %648, %836 : vector<1x8xf32>
    %886 = arith.addf %884, %885 : vector<1x8xf32>
    %887 = arith.mulf %638, %831 : vector<1x8xf32>
    %888 = arith.mulf %643, %834 : vector<1x8xf32>
    %889 = arith.addf %887, %888 : vector<1x8xf32>
    %890 = arith.mulf %648, %837 : vector<1x8xf32>
    %891 = arith.addf %889, %890 : vector<1x8xf32>
    %892 = arith.mulf %608, %840 : vector<1x8xf32>
    %893 = arith.mulf %613, %843 : vector<1x8xf32>
    %894 = arith.addf %892, %893 : vector<1x8xf32>
    %895 = arith.mulf %618, %846 : vector<1x8xf32>
    %896 = arith.addf %894, %895 : vector<1x8xf32>
    %897 = arith.addf %896, %654 : vector<1x8xf32>
    %898 = arith.mulf %623, %840 : vector<1x8xf32>
    %899 = arith.mulf %628, %843 : vector<1x8xf32>
    %900 = arith.addf %898, %899 : vector<1x8xf32>
    %901 = arith.mulf %633, %846 : vector<1x8xf32>
    %902 = arith.addf %900, %901 : vector<1x8xf32>
    %903 = arith.addf %902, %660 : vector<1x8xf32>
    %904 = arith.mulf %638, %840 : vector<1x8xf32>
    %905 = arith.mulf %643, %843 : vector<1x8xf32>
    %906 = arith.addf %904, %905 : vector<1x8xf32>
    %907 = arith.mulf %648, %846 : vector<1x8xf32>
    %908 = arith.addf %906, %907 : vector<1x8xf32>
    %909 = arith.addf %908, %666 : vector<1x8xf32>
    %910 = vector.extract_strided_slice %6 {offsets = [108, 0], sizes = [1, 8], strides = [1, 1]} : vector<216x8xf32> to vector<1x8xf32>
    %911 = vector.extract_strided_slice %6 {offsets = [109, 0], sizes = [1, 8], strides = [1, 1]} : vector<216x8xf32> to vector<1x8xf32>
    %912 = vector.extract_strided_slice %6 {offsets = [110, 0], sizes = [1, 8], strides = [1, 1]} : vector<216x8xf32> to vector<1x8xf32>
    %913 = vector.extract_strided_slice %6 {offsets = [111, 0], sizes = [1, 8], strides = [1, 1]} : vector<216x8xf32> to vector<1x8xf32>
    %914 = vector.extract_strided_slice %6 {offsets = [112, 0], sizes = [1, 8], strides = [1, 1]} : vector<216x8xf32> to vector<1x8xf32>
    %915 = vector.extract_strided_slice %6 {offsets = [113, 0], sizes = [1, 8], strides = [1, 1]} : vector<216x8xf32> to vector<1x8xf32>
    %916 = vector.extract_strided_slice %6 {offsets = [114, 0], sizes = [1, 8], strides = [1, 1]} : vector<216x8xf32> to vector<1x8xf32>
    %917 = vector.extract_strided_slice %6 {offsets = [115, 0], sizes = [1, 8], strides = [1, 1]} : vector<216x8xf32> to vector<1x8xf32>
    %918 = vector.extract_strided_slice %6 {offsets = [116, 0], sizes = [1, 8], strides = [1, 1]} : vector<216x8xf32> to vector<1x8xf32>
    %919 = vector.extract_strided_slice %5 {offsets = [36, 0], sizes = [1, 8], strides = [1, 1]} : vector<72x8xf32> to vector<1x8xf32>
    %920 = vector.extract_strided_slice %5 {offsets = [27, 0], sizes = [1, 8], strides = [1, 1]} : vector<72x8xf32> to vector<1x8xf32>
    %921 = arith.subf %919, %920 : vector<1x8xf32>
    %922 = vector.extract_strided_slice %5 {offsets = [37, 0], sizes = [1, 8], strides = [1, 1]} : vector<72x8xf32> to vector<1x8xf32>
    %923 = vector.extract_strided_slice %5 {offsets = [28, 0], sizes = [1, 8], strides = [1, 1]} : vector<72x8xf32> to vector<1x8xf32>
    %924 = arith.subf %922, %923 : vector<1x8xf32>
    %925 = vector.extract_strided_slice %5 {offsets = [38, 0], sizes = [1, 8], strides = [1, 1]} : vector<72x8xf32> to vector<1x8xf32>
    %926 = vector.extract_strided_slice %5 {offsets = [29, 0], sizes = [1, 8], strides = [1, 1]} : vector<72x8xf32> to vector<1x8xf32>
    %927 = arith.subf %925, %926 : vector<1x8xf32>
    %928 = arith.mulf %689, %910 : vector<1x8xf32>
    %929 = arith.mulf %694, %913 : vector<1x8xf32>
    %930 = arith.addf %928, %929 : vector<1x8xf32>
    %931 = arith.mulf %699, %916 : vector<1x8xf32>
    %932 = arith.addf %930, %931 : vector<1x8xf32>
    %933 = arith.mulf %689, %911 : vector<1x8xf32>
    %934 = arith.mulf %694, %914 : vector<1x8xf32>
    %935 = arith.addf %933, %934 : vector<1x8xf32>
    %936 = arith.mulf %699, %917 : vector<1x8xf32>
    %937 = arith.addf %935, %936 : vector<1x8xf32>
    %938 = arith.mulf %689, %912 : vector<1x8xf32>
    %939 = arith.mulf %694, %915 : vector<1x8xf32>
    %940 = arith.addf %938, %939 : vector<1x8xf32>
    %941 = arith.mulf %699, %918 : vector<1x8xf32>
    %942 = arith.addf %940, %941 : vector<1x8xf32>
    %943 = arith.mulf %704, %910 : vector<1x8xf32>
    %944 = arith.mulf %709, %913 : vector<1x8xf32>
    %945 = arith.addf %943, %944 : vector<1x8xf32>
    %946 = arith.mulf %714, %916 : vector<1x8xf32>
    %947 = arith.addf %945, %946 : vector<1x8xf32>
    %948 = arith.mulf %704, %911 : vector<1x8xf32>
    %949 = arith.mulf %709, %914 : vector<1x8xf32>
    %950 = arith.addf %948, %949 : vector<1x8xf32>
    %951 = arith.mulf %714, %917 : vector<1x8xf32>
    %952 = arith.addf %950, %951 : vector<1x8xf32>
    %953 = arith.mulf %704, %912 : vector<1x8xf32>
    %954 = arith.mulf %709, %915 : vector<1x8xf32>
    %955 = arith.addf %953, %954 : vector<1x8xf32>
    %956 = arith.mulf %714, %918 : vector<1x8xf32>
    %957 = arith.addf %955, %956 : vector<1x8xf32>
    %958 = arith.mulf %719, %910 : vector<1x8xf32>
    %959 = arith.mulf %724, %913 : vector<1x8xf32>
    %960 = arith.addf %958, %959 : vector<1x8xf32>
    %961 = arith.mulf %729, %916 : vector<1x8xf32>
    %962 = arith.addf %960, %961 : vector<1x8xf32>
    %963 = arith.mulf %719, %911 : vector<1x8xf32>
    %964 = arith.mulf %724, %914 : vector<1x8xf32>
    %965 = arith.addf %963, %964 : vector<1x8xf32>
    %966 = arith.mulf %729, %917 : vector<1x8xf32>
    %967 = arith.addf %965, %966 : vector<1x8xf32>
    %968 = arith.mulf %719, %912 : vector<1x8xf32>
    %969 = arith.mulf %724, %915 : vector<1x8xf32>
    %970 = arith.addf %968, %969 : vector<1x8xf32>
    %971 = arith.mulf %729, %918 : vector<1x8xf32>
    %972 = arith.addf %970, %971 : vector<1x8xf32>
    %973 = arith.mulf %689, %921 : vector<1x8xf32>
    %974 = arith.mulf %694, %924 : vector<1x8xf32>
    %975 = arith.addf %973, %974 : vector<1x8xf32>
    %976 = arith.mulf %699, %927 : vector<1x8xf32>
    %977 = arith.addf %975, %976 : vector<1x8xf32>
    %978 = arith.addf %977, %735 : vector<1x8xf32>
    %979 = arith.mulf %704, %921 : vector<1x8xf32>
    %980 = arith.mulf %709, %924 : vector<1x8xf32>
    %981 = arith.addf %979, %980 : vector<1x8xf32>
    %982 = arith.mulf %714, %927 : vector<1x8xf32>
    %983 = arith.addf %981, %982 : vector<1x8xf32>
    %984 = arith.addf %983, %741 : vector<1x8xf32>
    %985 = arith.mulf %719, %921 : vector<1x8xf32>
    %986 = arith.mulf %724, %924 : vector<1x8xf32>
    %987 = arith.addf %985, %986 : vector<1x8xf32>
    %988 = arith.mulf %729, %927 : vector<1x8xf32>
    %989 = arith.addf %987, %988 : vector<1x8xf32>
    %990 = arith.addf %989, %747 : vector<1x8xf32>
    %991 = vector.extract_strided_slice %6 {offsets = [117, 0], sizes = [1, 8], strides = [1, 1]} : vector<216x8xf32> to vector<1x8xf32>
    %992 = vector.extract_strided_slice %6 {offsets = [118, 0], sizes = [1, 8], strides = [1, 1]} : vector<216x8xf32> to vector<1x8xf32>
    %993 = vector.extract_strided_slice %6 {offsets = [119, 0], sizes = [1, 8], strides = [1, 1]} : vector<216x8xf32> to vector<1x8xf32>
    %994 = vector.extract_strided_slice %6 {offsets = [120, 0], sizes = [1, 8], strides = [1, 1]} : vector<216x8xf32> to vector<1x8xf32>
    %995 = vector.extract_strided_slice %6 {offsets = [121, 0], sizes = [1, 8], strides = [1, 1]} : vector<216x8xf32> to vector<1x8xf32>
    %996 = vector.extract_strided_slice %6 {offsets = [122, 0], sizes = [1, 8], strides = [1, 1]} : vector<216x8xf32> to vector<1x8xf32>
    %997 = vector.extract_strided_slice %6 {offsets = [123, 0], sizes = [1, 8], strides = [1, 1]} : vector<216x8xf32> to vector<1x8xf32>
    %998 = vector.extract_strided_slice %6 {offsets = [124, 0], sizes = [1, 8], strides = [1, 1]} : vector<216x8xf32> to vector<1x8xf32>
    %999 = vector.extract_strided_slice %6 {offsets = [125, 0], sizes = [1, 8], strides = [1, 1]} : vector<216x8xf32> to vector<1x8xf32>
    %1000 = vector.extract_strided_slice %5 {offsets = [39, 0], sizes = [1, 8], strides = [1, 1]} : vector<72x8xf32> to vector<1x8xf32>
    %1001 = vector.extract_strided_slice %5 {offsets = [27, 0], sizes = [1, 8], strides = [1, 1]} : vector<72x8xf32> to vector<1x8xf32>
    %1002 = arith.subf %1000, %1001 : vector<1x8xf32>
    %1003 = vector.extract_strided_slice %5 {offsets = [40, 0], sizes = [1, 8], strides = [1, 1]} : vector<72x8xf32> to vector<1x8xf32>
    %1004 = vector.extract_strided_slice %5 {offsets = [28, 0], sizes = [1, 8], strides = [1, 1]} : vector<72x8xf32> to vector<1x8xf32>
    %1005 = arith.subf %1003, %1004 : vector<1x8xf32>
    %1006 = vector.extract_strided_slice %5 {offsets = [41, 0], sizes = [1, 8], strides = [1, 1]} : vector<72x8xf32> to vector<1x8xf32>
    %1007 = vector.extract_strided_slice %5 {offsets = [29, 0], sizes = [1, 8], strides = [1, 1]} : vector<72x8xf32> to vector<1x8xf32>
    %1008 = arith.subf %1006, %1007 : vector<1x8xf32>
    %1009 = arith.mulf %689, %991 : vector<1x8xf32>
    %1010 = arith.mulf %694, %994 : vector<1x8xf32>
    %1011 = arith.addf %1009, %1010 : vector<1x8xf32>
    %1012 = arith.mulf %699, %997 : vector<1x8xf32>
    %1013 = arith.addf %1011, %1012 : vector<1x8xf32>
    %1014 = arith.mulf %689, %992 : vector<1x8xf32>
    %1015 = arith.mulf %694, %995 : vector<1x8xf32>
    %1016 = arith.addf %1014, %1015 : vector<1x8xf32>
    %1017 = arith.mulf %699, %998 : vector<1x8xf32>
    %1018 = arith.addf %1016, %1017 : vector<1x8xf32>
    %1019 = arith.mulf %689, %993 : vector<1x8xf32>
    %1020 = arith.mulf %694, %996 : vector<1x8xf32>
    %1021 = arith.addf %1019, %1020 : vector<1x8xf32>
    %1022 = arith.mulf %699, %999 : vector<1x8xf32>
    %1023 = arith.addf %1021, %1022 : vector<1x8xf32>
    %1024 = arith.mulf %704, %991 : vector<1x8xf32>
    %1025 = arith.mulf %709, %994 : vector<1x8xf32>
    %1026 = arith.addf %1024, %1025 : vector<1x8xf32>
    %1027 = arith.mulf %714, %997 : vector<1x8xf32>
    %1028 = arith.addf %1026, %1027 : vector<1x8xf32>
    %1029 = arith.mulf %704, %992 : vector<1x8xf32>
    %1030 = arith.mulf %709, %995 : vector<1x8xf32>
    %1031 = arith.addf %1029, %1030 : vector<1x8xf32>
    %1032 = arith.mulf %714, %998 : vector<1x8xf32>
    %1033 = arith.addf %1031, %1032 : vector<1x8xf32>
    %1034 = arith.mulf %704, %993 : vector<1x8xf32>
    %1035 = arith.mulf %709, %996 : vector<1x8xf32>
    %1036 = arith.addf %1034, %1035 : vector<1x8xf32>
    %1037 = arith.mulf %714, %999 : vector<1x8xf32>
    %1038 = arith.addf %1036, %1037 : vector<1x8xf32>
    %1039 = arith.mulf %719, %991 : vector<1x8xf32>
    %1040 = arith.mulf %724, %994 : vector<1x8xf32>
    %1041 = arith.addf %1039, %1040 : vector<1x8xf32>
    %1042 = arith.mulf %729, %997 : vector<1x8xf32>
    %1043 = arith.addf %1041, %1042 : vector<1x8xf32>
    %1044 = arith.mulf %719, %992 : vector<1x8xf32>
    %1045 = arith.mulf %724, %995 : vector<1x8xf32>
    %1046 = arith.addf %1044, %1045 : vector<1x8xf32>
    %1047 = arith.mulf %729, %998 : vector<1x8xf32>
    %1048 = arith.addf %1046, %1047 : vector<1x8xf32>
    %1049 = arith.mulf %719, %993 : vector<1x8xf32>
    %1050 = arith.mulf %724, %996 : vector<1x8xf32>
    %1051 = arith.addf %1049, %1050 : vector<1x8xf32>
    %1052 = arith.mulf %729, %999 : vector<1x8xf32>
    %1053 = arith.addf %1051, %1052 : vector<1x8xf32>
    %1054 = arith.mulf %689, %1002 : vector<1x8xf32>
    %1055 = arith.mulf %694, %1005 : vector<1x8xf32>
    %1056 = arith.addf %1054, %1055 : vector<1x8xf32>
    %1057 = arith.mulf %699, %1008 : vector<1x8xf32>
    %1058 = arith.addf %1056, %1057 : vector<1x8xf32>
    %1059 = arith.addf %1058, %735 : vector<1x8xf32>
    %1060 = arith.mulf %704, %1002 : vector<1x8xf32>
    %1061 = arith.mulf %709, %1005 : vector<1x8xf32>
    %1062 = arith.addf %1060, %1061 : vector<1x8xf32>
    %1063 = arith.mulf %714, %1008 : vector<1x8xf32>
    %1064 = arith.addf %1062, %1063 : vector<1x8xf32>
    %1065 = arith.addf %1064, %741 : vector<1x8xf32>
    %1066 = arith.mulf %719, %1002 : vector<1x8xf32>
    %1067 = arith.mulf %724, %1005 : vector<1x8xf32>
    %1068 = arith.addf %1066, %1067 : vector<1x8xf32>
    %1069 = arith.mulf %729, %1008 : vector<1x8xf32>
    %1070 = arith.addf %1068, %1069 : vector<1x8xf32>
    %1071 = arith.addf %1070, %747 : vector<1x8xf32>
    %1072 = vector.extract_strided_slice %6 {offsets = [126, 0], sizes = [1, 8], strides = [1, 1]} : vector<216x8xf32> to vector<1x8xf32>
    %1073 = vector.extract_strided_slice %6 {offsets = [127, 0], sizes = [1, 8], strides = [1, 1]} : vector<216x8xf32> to vector<1x8xf32>
    %1074 = vector.extract_strided_slice %6 {offsets = [128, 0], sizes = [1, 8], strides = [1, 1]} : vector<216x8xf32> to vector<1x8xf32>
    %1075 = vector.extract_strided_slice %6 {offsets = [129, 0], sizes = [1, 8], strides = [1, 1]} : vector<216x8xf32> to vector<1x8xf32>
    %1076 = vector.extract_strided_slice %6 {offsets = [130, 0], sizes = [1, 8], strides = [1, 1]} : vector<216x8xf32> to vector<1x8xf32>
    %1077 = vector.extract_strided_slice %6 {offsets = [131, 0], sizes = [1, 8], strides = [1, 1]} : vector<216x8xf32> to vector<1x8xf32>
    %1078 = vector.extract_strided_slice %6 {offsets = [132, 0], sizes = [1, 8], strides = [1, 1]} : vector<216x8xf32> to vector<1x8xf32>
    %1079 = vector.extract_strided_slice %6 {offsets = [133, 0], sizes = [1, 8], strides = [1, 1]} : vector<216x8xf32> to vector<1x8xf32>
    %1080 = vector.extract_strided_slice %6 {offsets = [134, 0], sizes = [1, 8], strides = [1, 1]} : vector<216x8xf32> to vector<1x8xf32>
    %1081 = vector.extract_strided_slice %5 {offsets = [42, 0], sizes = [1, 8], strides = [1, 1]} : vector<72x8xf32> to vector<1x8xf32>
    %1082 = vector.extract_strided_slice %5 {offsets = [27, 0], sizes = [1, 8], strides = [1, 1]} : vector<72x8xf32> to vector<1x8xf32>
    %1083 = arith.subf %1081, %1082 : vector<1x8xf32>
    %1084 = vector.extract_strided_slice %5 {offsets = [43, 0], sizes = [1, 8], strides = [1, 1]} : vector<72x8xf32> to vector<1x8xf32>
    %1085 = vector.extract_strided_slice %5 {offsets = [28, 0], sizes = [1, 8], strides = [1, 1]} : vector<72x8xf32> to vector<1x8xf32>
    %1086 = arith.subf %1084, %1085 : vector<1x8xf32>
    %1087 = vector.extract_strided_slice %5 {offsets = [44, 0], sizes = [1, 8], strides = [1, 1]} : vector<72x8xf32> to vector<1x8xf32>
    %1088 = vector.extract_strided_slice %5 {offsets = [29, 0], sizes = [1, 8], strides = [1, 1]} : vector<72x8xf32> to vector<1x8xf32>
    %1089 = arith.subf %1087, %1088 : vector<1x8xf32>
    %1090 = arith.mulf %689, %1072 : vector<1x8xf32>
    %1091 = arith.mulf %694, %1075 : vector<1x8xf32>
    %1092 = arith.addf %1090, %1091 : vector<1x8xf32>
    %1093 = arith.mulf %699, %1078 : vector<1x8xf32>
    %1094 = arith.addf %1092, %1093 : vector<1x8xf32>
    %1095 = arith.mulf %689, %1073 : vector<1x8xf32>
    %1096 = arith.mulf %694, %1076 : vector<1x8xf32>
    %1097 = arith.addf %1095, %1096 : vector<1x8xf32>
    %1098 = arith.mulf %699, %1079 : vector<1x8xf32>
    %1099 = arith.addf %1097, %1098 : vector<1x8xf32>
    %1100 = arith.mulf %689, %1074 : vector<1x8xf32>
    %1101 = arith.mulf %694, %1077 : vector<1x8xf32>
    %1102 = arith.addf %1100, %1101 : vector<1x8xf32>
    %1103 = arith.mulf %699, %1080 : vector<1x8xf32>
    %1104 = arith.addf %1102, %1103 : vector<1x8xf32>
    %1105 = arith.mulf %704, %1072 : vector<1x8xf32>
    %1106 = arith.mulf %709, %1075 : vector<1x8xf32>
    %1107 = arith.addf %1105, %1106 : vector<1x8xf32>
    %1108 = arith.mulf %714, %1078 : vector<1x8xf32>
    %1109 = arith.addf %1107, %1108 : vector<1x8xf32>
    %1110 = arith.mulf %704, %1073 : vector<1x8xf32>
    %1111 = arith.mulf %709, %1076 : vector<1x8xf32>
    %1112 = arith.addf %1110, %1111 : vector<1x8xf32>
    %1113 = arith.mulf %714, %1079 : vector<1x8xf32>
    %1114 = arith.addf %1112, %1113 : vector<1x8xf32>
    %1115 = arith.mulf %704, %1074 : vector<1x8xf32>
    %1116 = arith.mulf %709, %1077 : vector<1x8xf32>
    %1117 = arith.addf %1115, %1116 : vector<1x8xf32>
    %1118 = arith.mulf %714, %1080 : vector<1x8xf32>
    %1119 = arith.addf %1117, %1118 : vector<1x8xf32>
    %1120 = arith.mulf %719, %1072 : vector<1x8xf32>
    %1121 = arith.mulf %724, %1075 : vector<1x8xf32>
    %1122 = arith.addf %1120, %1121 : vector<1x8xf32>
    %1123 = arith.mulf %729, %1078 : vector<1x8xf32>
    %1124 = arith.addf %1122, %1123 : vector<1x8xf32>
    %1125 = arith.mulf %719, %1073 : vector<1x8xf32>
    %1126 = arith.mulf %724, %1076 : vector<1x8xf32>
    %1127 = arith.addf %1125, %1126 : vector<1x8xf32>
    %1128 = arith.mulf %729, %1079 : vector<1x8xf32>
    %1129 = arith.addf %1127, %1128 : vector<1x8xf32>
    %1130 = arith.mulf %719, %1074 : vector<1x8xf32>
    %1131 = arith.mulf %724, %1077 : vector<1x8xf32>
    %1132 = arith.addf %1130, %1131 : vector<1x8xf32>
    %1133 = arith.mulf %729, %1080 : vector<1x8xf32>
    %1134 = arith.addf %1132, %1133 : vector<1x8xf32>
    %1135 = arith.mulf %689, %1083 : vector<1x8xf32>
    %1136 = arith.mulf %694, %1086 : vector<1x8xf32>
    %1137 = arith.addf %1135, %1136 : vector<1x8xf32>
    %1138 = arith.mulf %699, %1089 : vector<1x8xf32>
    %1139 = arith.addf %1137, %1138 : vector<1x8xf32>
    %1140 = arith.addf %1139, %735 : vector<1x8xf32>
    %1141 = arith.mulf %704, %1083 : vector<1x8xf32>
    %1142 = arith.mulf %709, %1086 : vector<1x8xf32>
    %1143 = arith.addf %1141, %1142 : vector<1x8xf32>
    %1144 = arith.mulf %714, %1089 : vector<1x8xf32>
    %1145 = arith.addf %1143, %1144 : vector<1x8xf32>
    %1146 = arith.addf %1145, %741 : vector<1x8xf32>
    %1147 = arith.mulf %719, %1083 : vector<1x8xf32>
    %1148 = arith.mulf %724, %1086 : vector<1x8xf32>
    %1149 = arith.addf %1147, %1148 : vector<1x8xf32>
    %1150 = arith.mulf %729, %1089 : vector<1x8xf32>
    %1151 = arith.addf %1149, %1150 : vector<1x8xf32>
    %1152 = arith.addf %1151, %747 : vector<1x8xf32>
    %1153 = vector.extract_strided_slice %6 {offsets = [135, 0], sizes = [1, 8], strides = [1, 1]} : vector<216x8xf32> to vector<1x8xf32>
    %1154 = vector.extract_strided_slice %6 {offsets = [136, 0], sizes = [1, 8], strides = [1, 1]} : vector<216x8xf32> to vector<1x8xf32>
    %1155 = vector.extract_strided_slice %6 {offsets = [137, 0], sizes = [1, 8], strides = [1, 1]} : vector<216x8xf32> to vector<1x8xf32>
    %1156 = vector.extract_strided_slice %6 {offsets = [138, 0], sizes = [1, 8], strides = [1, 1]} : vector<216x8xf32> to vector<1x8xf32>
    %1157 = vector.extract_strided_slice %6 {offsets = [139, 0], sizes = [1, 8], strides = [1, 1]} : vector<216x8xf32> to vector<1x8xf32>
    %1158 = vector.extract_strided_slice %6 {offsets = [140, 0], sizes = [1, 8], strides = [1, 1]} : vector<216x8xf32> to vector<1x8xf32>
    %1159 = vector.extract_strided_slice %6 {offsets = [141, 0], sizes = [1, 8], strides = [1, 1]} : vector<216x8xf32> to vector<1x8xf32>
    %1160 = vector.extract_strided_slice %6 {offsets = [142, 0], sizes = [1, 8], strides = [1, 1]} : vector<216x8xf32> to vector<1x8xf32>
    %1161 = vector.extract_strided_slice %6 {offsets = [143, 0], sizes = [1, 8], strides = [1, 1]} : vector<216x8xf32> to vector<1x8xf32>
    %1162 = vector.extract_strided_slice %5 {offsets = [45, 0], sizes = [1, 8], strides = [1, 1]} : vector<72x8xf32> to vector<1x8xf32>
    %1163 = vector.extract_strided_slice %5 {offsets = [36, 0], sizes = [1, 8], strides = [1, 1]} : vector<72x8xf32> to vector<1x8xf32>
    %1164 = arith.subf %1162, %1163 : vector<1x8xf32>
    %1165 = vector.extract_strided_slice %5 {offsets = [46, 0], sizes = [1, 8], strides = [1, 1]} : vector<72x8xf32> to vector<1x8xf32>
    %1166 = vector.extract_strided_slice %5 {offsets = [37, 0], sizes = [1, 8], strides = [1, 1]} : vector<72x8xf32> to vector<1x8xf32>
    %1167 = arith.subf %1165, %1166 : vector<1x8xf32>
    %1168 = vector.extract_strided_slice %5 {offsets = [47, 0], sizes = [1, 8], strides = [1, 1]} : vector<72x8xf32> to vector<1x8xf32>
    %1169 = vector.extract_strided_slice %5 {offsets = [38, 0], sizes = [1, 8], strides = [1, 1]} : vector<72x8xf32> to vector<1x8xf32>
    %1170 = arith.subf %1168, %1169 : vector<1x8xf32>
    %1171 = arith.mulf %932, %1153 : vector<1x8xf32>
    %1172 = arith.mulf %937, %1156 : vector<1x8xf32>
    %1173 = arith.addf %1171, %1172 : vector<1x8xf32>
    %1174 = arith.mulf %942, %1159 : vector<1x8xf32>
    %1175 = arith.addf %1173, %1174 : vector<1x8xf32>
    %1176 = arith.mulf %932, %1154 : vector<1x8xf32>
    %1177 = arith.mulf %937, %1157 : vector<1x8xf32>
    %1178 = arith.addf %1176, %1177 : vector<1x8xf32>
    %1179 = arith.mulf %942, %1160 : vector<1x8xf32>
    %1180 = arith.addf %1178, %1179 : vector<1x8xf32>
    %1181 = arith.mulf %932, %1155 : vector<1x8xf32>
    %1182 = arith.mulf %937, %1158 : vector<1x8xf32>
    %1183 = arith.addf %1181, %1182 : vector<1x8xf32>
    %1184 = arith.mulf %942, %1161 : vector<1x8xf32>
    %1185 = arith.addf %1183, %1184 : vector<1x8xf32>
    %1186 = arith.mulf %947, %1153 : vector<1x8xf32>
    %1187 = arith.mulf %952, %1156 : vector<1x8xf32>
    %1188 = arith.addf %1186, %1187 : vector<1x8xf32>
    %1189 = arith.mulf %957, %1159 : vector<1x8xf32>
    %1190 = arith.addf %1188, %1189 : vector<1x8xf32>
    %1191 = arith.mulf %947, %1154 : vector<1x8xf32>
    %1192 = arith.mulf %952, %1157 : vector<1x8xf32>
    %1193 = arith.addf %1191, %1192 : vector<1x8xf32>
    %1194 = arith.mulf %957, %1160 : vector<1x8xf32>
    %1195 = arith.addf %1193, %1194 : vector<1x8xf32>
    %1196 = arith.mulf %947, %1155 : vector<1x8xf32>
    %1197 = arith.mulf %952, %1158 : vector<1x8xf32>
    %1198 = arith.addf %1196, %1197 : vector<1x8xf32>
    %1199 = arith.mulf %957, %1161 : vector<1x8xf32>
    %1200 = arith.addf %1198, %1199 : vector<1x8xf32>
    %1201 = arith.mulf %962, %1153 : vector<1x8xf32>
    %1202 = arith.mulf %967, %1156 : vector<1x8xf32>
    %1203 = arith.addf %1201, %1202 : vector<1x8xf32>
    %1204 = arith.mulf %972, %1159 : vector<1x8xf32>
    %1205 = arith.addf %1203, %1204 : vector<1x8xf32>
    %1206 = arith.mulf %962, %1154 : vector<1x8xf32>
    %1207 = arith.mulf %967, %1157 : vector<1x8xf32>
    %1208 = arith.addf %1206, %1207 : vector<1x8xf32>
    %1209 = arith.mulf %972, %1160 : vector<1x8xf32>
    %1210 = arith.addf %1208, %1209 : vector<1x8xf32>
    %1211 = arith.mulf %962, %1155 : vector<1x8xf32>
    %1212 = arith.mulf %967, %1158 : vector<1x8xf32>
    %1213 = arith.addf %1211, %1212 : vector<1x8xf32>
    %1214 = arith.mulf %972, %1161 : vector<1x8xf32>
    %1215 = arith.addf %1213, %1214 : vector<1x8xf32>
    %1216 = arith.mulf %932, %1164 : vector<1x8xf32>
    %1217 = arith.mulf %937, %1167 : vector<1x8xf32>
    %1218 = arith.addf %1216, %1217 : vector<1x8xf32>
    %1219 = arith.mulf %942, %1170 : vector<1x8xf32>
    %1220 = arith.addf %1218, %1219 : vector<1x8xf32>
    %1221 = arith.addf %1220, %978 : vector<1x8xf32>
    %1222 = arith.mulf %947, %1164 : vector<1x8xf32>
    %1223 = arith.mulf %952, %1167 : vector<1x8xf32>
    %1224 = arith.addf %1222, %1223 : vector<1x8xf32>
    %1225 = arith.mulf %957, %1170 : vector<1x8xf32>
    %1226 = arith.addf %1224, %1225 : vector<1x8xf32>
    %1227 = arith.addf %1226, %984 : vector<1x8xf32>
    %1228 = arith.mulf %962, %1164 : vector<1x8xf32>
    %1229 = arith.mulf %967, %1167 : vector<1x8xf32>
    %1230 = arith.addf %1228, %1229 : vector<1x8xf32>
    %1231 = arith.mulf %972, %1170 : vector<1x8xf32>
    %1232 = arith.addf %1230, %1231 : vector<1x8xf32>
    %1233 = arith.addf %1232, %990 : vector<1x8xf32>
    %1234 = vector.extract_strided_slice %6 {offsets = [144, 0], sizes = [1, 8], strides = [1, 1]} : vector<216x8xf32> to vector<1x8xf32>
    %1235 = vector.extract_strided_slice %6 {offsets = [145, 0], sizes = [1, 8], strides = [1, 1]} : vector<216x8xf32> to vector<1x8xf32>
    %1236 = vector.extract_strided_slice %6 {offsets = [146, 0], sizes = [1, 8], strides = [1, 1]} : vector<216x8xf32> to vector<1x8xf32>
    %1237 = vector.extract_strided_slice %6 {offsets = [147, 0], sizes = [1, 8], strides = [1, 1]} : vector<216x8xf32> to vector<1x8xf32>
    %1238 = vector.extract_strided_slice %6 {offsets = [148, 0], sizes = [1, 8], strides = [1, 1]} : vector<216x8xf32> to vector<1x8xf32>
    %1239 = vector.extract_strided_slice %6 {offsets = [149, 0], sizes = [1, 8], strides = [1, 1]} : vector<216x8xf32> to vector<1x8xf32>
    %1240 = vector.extract_strided_slice %6 {offsets = [150, 0], sizes = [1, 8], strides = [1, 1]} : vector<216x8xf32> to vector<1x8xf32>
    %1241 = vector.extract_strided_slice %6 {offsets = [151, 0], sizes = [1, 8], strides = [1, 1]} : vector<216x8xf32> to vector<1x8xf32>
    %1242 = vector.extract_strided_slice %6 {offsets = [152, 0], sizes = [1, 8], strides = [1, 1]} : vector<216x8xf32> to vector<1x8xf32>
    %1243 = vector.extract_strided_slice %5 {offsets = [48, 0], sizes = [1, 8], strides = [1, 1]} : vector<72x8xf32> to vector<1x8xf32>
    %1244 = vector.extract_strided_slice %5 {offsets = [39, 0], sizes = [1, 8], strides = [1, 1]} : vector<72x8xf32> to vector<1x8xf32>
    %1245 = arith.subf %1243, %1244 : vector<1x8xf32>
    %1246 = vector.extract_strided_slice %5 {offsets = [49, 0], sizes = [1, 8], strides = [1, 1]} : vector<72x8xf32> to vector<1x8xf32>
    %1247 = vector.extract_strided_slice %5 {offsets = [40, 0], sizes = [1, 8], strides = [1, 1]} : vector<72x8xf32> to vector<1x8xf32>
    %1248 = arith.subf %1246, %1247 : vector<1x8xf32>
    %1249 = vector.extract_strided_slice %5 {offsets = [50, 0], sizes = [1, 8], strides = [1, 1]} : vector<72x8xf32> to vector<1x8xf32>
    %1250 = vector.extract_strided_slice %5 {offsets = [41, 0], sizes = [1, 8], strides = [1, 1]} : vector<72x8xf32> to vector<1x8xf32>
    %1251 = arith.subf %1249, %1250 : vector<1x8xf32>
    %1252 = arith.mulf %1013, %1234 : vector<1x8xf32>
    %1253 = arith.mulf %1018, %1237 : vector<1x8xf32>
    %1254 = arith.addf %1252, %1253 : vector<1x8xf32>
    %1255 = arith.mulf %1023, %1240 : vector<1x8xf32>
    %1256 = arith.addf %1254, %1255 : vector<1x8xf32>
    %1257 = arith.mulf %1013, %1235 : vector<1x8xf32>
    %1258 = arith.mulf %1018, %1238 : vector<1x8xf32>
    %1259 = arith.addf %1257, %1258 : vector<1x8xf32>
    %1260 = arith.mulf %1023, %1241 : vector<1x8xf32>
    %1261 = arith.addf %1259, %1260 : vector<1x8xf32>
    %1262 = arith.mulf %1013, %1236 : vector<1x8xf32>
    %1263 = arith.mulf %1018, %1239 : vector<1x8xf32>
    %1264 = arith.addf %1262, %1263 : vector<1x8xf32>
    %1265 = arith.mulf %1023, %1242 : vector<1x8xf32>
    %1266 = arith.addf %1264, %1265 : vector<1x8xf32>
    %1267 = arith.mulf %1028, %1234 : vector<1x8xf32>
    %1268 = arith.mulf %1033, %1237 : vector<1x8xf32>
    %1269 = arith.addf %1267, %1268 : vector<1x8xf32>
    %1270 = arith.mulf %1038, %1240 : vector<1x8xf32>
    %1271 = arith.addf %1269, %1270 : vector<1x8xf32>
    %1272 = arith.mulf %1028, %1235 : vector<1x8xf32>
    %1273 = arith.mulf %1033, %1238 : vector<1x8xf32>
    %1274 = arith.addf %1272, %1273 : vector<1x8xf32>
    %1275 = arith.mulf %1038, %1241 : vector<1x8xf32>
    %1276 = arith.addf %1274, %1275 : vector<1x8xf32>
    %1277 = arith.mulf %1028, %1236 : vector<1x8xf32>
    %1278 = arith.mulf %1033, %1239 : vector<1x8xf32>
    %1279 = arith.addf %1277, %1278 : vector<1x8xf32>
    %1280 = arith.mulf %1038, %1242 : vector<1x8xf32>
    %1281 = arith.addf %1279, %1280 : vector<1x8xf32>
    %1282 = arith.mulf %1043, %1234 : vector<1x8xf32>
    %1283 = arith.mulf %1048, %1237 : vector<1x8xf32>
    %1284 = arith.addf %1282, %1283 : vector<1x8xf32>
    %1285 = arith.mulf %1053, %1240 : vector<1x8xf32>
    %1286 = arith.addf %1284, %1285 : vector<1x8xf32>
    %1287 = arith.mulf %1043, %1235 : vector<1x8xf32>
    %1288 = arith.mulf %1048, %1238 : vector<1x8xf32>
    %1289 = arith.addf %1287, %1288 : vector<1x8xf32>
    %1290 = arith.mulf %1053, %1241 : vector<1x8xf32>
    %1291 = arith.addf %1289, %1290 : vector<1x8xf32>
    %1292 = arith.mulf %1043, %1236 : vector<1x8xf32>
    %1293 = arith.mulf %1048, %1239 : vector<1x8xf32>
    %1294 = arith.addf %1292, %1293 : vector<1x8xf32>
    %1295 = arith.mulf %1053, %1242 : vector<1x8xf32>
    %1296 = arith.addf %1294, %1295 : vector<1x8xf32>
    %1297 = arith.mulf %1013, %1245 : vector<1x8xf32>
    %1298 = arith.mulf %1018, %1248 : vector<1x8xf32>
    %1299 = arith.addf %1297, %1298 : vector<1x8xf32>
    %1300 = arith.mulf %1023, %1251 : vector<1x8xf32>
    %1301 = arith.addf %1299, %1300 : vector<1x8xf32>
    %1302 = arith.addf %1301, %1059 : vector<1x8xf32>
    %1303 = arith.mulf %1028, %1245 : vector<1x8xf32>
    %1304 = arith.mulf %1033, %1248 : vector<1x8xf32>
    %1305 = arith.addf %1303, %1304 : vector<1x8xf32>
    %1306 = arith.mulf %1038, %1251 : vector<1x8xf32>
    %1307 = arith.addf %1305, %1306 : vector<1x8xf32>
    %1308 = arith.addf %1307, %1065 : vector<1x8xf32>
    %1309 = arith.mulf %1043, %1245 : vector<1x8xf32>
    %1310 = arith.mulf %1048, %1248 : vector<1x8xf32>
    %1311 = arith.addf %1309, %1310 : vector<1x8xf32>
    %1312 = arith.mulf %1053, %1251 : vector<1x8xf32>
    %1313 = arith.addf %1311, %1312 : vector<1x8xf32>
    %1314 = arith.addf %1313, %1071 : vector<1x8xf32>
    %1315 = vector.extract_strided_slice %6 {offsets = [153, 0], sizes = [1, 8], strides = [1, 1]} : vector<216x8xf32> to vector<1x8xf32>
    %1316 = vector.extract_strided_slice %6 {offsets = [154, 0], sizes = [1, 8], strides = [1, 1]} : vector<216x8xf32> to vector<1x8xf32>
    %1317 = vector.extract_strided_slice %6 {offsets = [155, 0], sizes = [1, 8], strides = [1, 1]} : vector<216x8xf32> to vector<1x8xf32>
    %1318 = vector.extract_strided_slice %6 {offsets = [156, 0], sizes = [1, 8], strides = [1, 1]} : vector<216x8xf32> to vector<1x8xf32>
    %1319 = vector.extract_strided_slice %6 {offsets = [157, 0], sizes = [1, 8], strides = [1, 1]} : vector<216x8xf32> to vector<1x8xf32>
    %1320 = vector.extract_strided_slice %6 {offsets = [158, 0], sizes = [1, 8], strides = [1, 1]} : vector<216x8xf32> to vector<1x8xf32>
    %1321 = vector.extract_strided_slice %6 {offsets = [159, 0], sizes = [1, 8], strides = [1, 1]} : vector<216x8xf32> to vector<1x8xf32>
    %1322 = vector.extract_strided_slice %6 {offsets = [160, 0], sizes = [1, 8], strides = [1, 1]} : vector<216x8xf32> to vector<1x8xf32>
    %1323 = vector.extract_strided_slice %6 {offsets = [161, 0], sizes = [1, 8], strides = [1, 1]} : vector<216x8xf32> to vector<1x8xf32>
    %1324 = vector.extract_strided_slice %5 {offsets = [51, 0], sizes = [1, 8], strides = [1, 1]} : vector<72x8xf32> to vector<1x8xf32>
    %1325 = vector.extract_strided_slice %5 {offsets = [42, 0], sizes = [1, 8], strides = [1, 1]} : vector<72x8xf32> to vector<1x8xf32>
    %1326 = arith.subf %1324, %1325 : vector<1x8xf32>
    %1327 = vector.extract_strided_slice %5 {offsets = [52, 0], sizes = [1, 8], strides = [1, 1]} : vector<72x8xf32> to vector<1x8xf32>
    %1328 = vector.extract_strided_slice %5 {offsets = [43, 0], sizes = [1, 8], strides = [1, 1]} : vector<72x8xf32> to vector<1x8xf32>
    %1329 = arith.subf %1327, %1328 : vector<1x8xf32>
    %1330 = vector.extract_strided_slice %5 {offsets = [53, 0], sizes = [1, 8], strides = [1, 1]} : vector<72x8xf32> to vector<1x8xf32>
    %1331 = vector.extract_strided_slice %5 {offsets = [44, 0], sizes = [1, 8], strides = [1, 1]} : vector<72x8xf32> to vector<1x8xf32>
    %1332 = arith.subf %1330, %1331 : vector<1x8xf32>
    %1333 = arith.mulf %1094, %1315 : vector<1x8xf32>
    %1334 = arith.mulf %1099, %1318 : vector<1x8xf32>
    %1335 = arith.addf %1333, %1334 : vector<1x8xf32>
    %1336 = arith.mulf %1104, %1321 : vector<1x8xf32>
    %1337 = arith.addf %1335, %1336 : vector<1x8xf32>
    %1338 = arith.mulf %1094, %1316 : vector<1x8xf32>
    %1339 = arith.mulf %1099, %1319 : vector<1x8xf32>
    %1340 = arith.addf %1338, %1339 : vector<1x8xf32>
    %1341 = arith.mulf %1104, %1322 : vector<1x8xf32>
    %1342 = arith.addf %1340, %1341 : vector<1x8xf32>
    %1343 = arith.mulf %1094, %1317 : vector<1x8xf32>
    %1344 = arith.mulf %1099, %1320 : vector<1x8xf32>
    %1345 = arith.addf %1343, %1344 : vector<1x8xf32>
    %1346 = arith.mulf %1104, %1323 : vector<1x8xf32>
    %1347 = arith.addf %1345, %1346 : vector<1x8xf32>
    %1348 = arith.mulf %1109, %1315 : vector<1x8xf32>
    %1349 = arith.mulf %1114, %1318 : vector<1x8xf32>
    %1350 = arith.addf %1348, %1349 : vector<1x8xf32>
    %1351 = arith.mulf %1119, %1321 : vector<1x8xf32>
    %1352 = arith.addf %1350, %1351 : vector<1x8xf32>
    %1353 = arith.mulf %1109, %1316 : vector<1x8xf32>
    %1354 = arith.mulf %1114, %1319 : vector<1x8xf32>
    %1355 = arith.addf %1353, %1354 : vector<1x8xf32>
    %1356 = arith.mulf %1119, %1322 : vector<1x8xf32>
    %1357 = arith.addf %1355, %1356 : vector<1x8xf32>
    %1358 = arith.mulf %1109, %1317 : vector<1x8xf32>
    %1359 = arith.mulf %1114, %1320 : vector<1x8xf32>
    %1360 = arith.addf %1358, %1359 : vector<1x8xf32>
    %1361 = arith.mulf %1119, %1323 : vector<1x8xf32>
    %1362 = arith.addf %1360, %1361 : vector<1x8xf32>
    %1363 = arith.mulf %1124, %1315 : vector<1x8xf32>
    %1364 = arith.mulf %1129, %1318 : vector<1x8xf32>
    %1365 = arith.addf %1363, %1364 : vector<1x8xf32>
    %1366 = arith.mulf %1134, %1321 : vector<1x8xf32>
    %1367 = arith.addf %1365, %1366 : vector<1x8xf32>
    %1368 = arith.mulf %1124, %1316 : vector<1x8xf32>
    %1369 = arith.mulf %1129, %1319 : vector<1x8xf32>
    %1370 = arith.addf %1368, %1369 : vector<1x8xf32>
    %1371 = arith.mulf %1134, %1322 : vector<1x8xf32>
    %1372 = arith.addf %1370, %1371 : vector<1x8xf32>
    %1373 = arith.mulf %1124, %1317 : vector<1x8xf32>
    %1374 = arith.mulf %1129, %1320 : vector<1x8xf32>
    %1375 = arith.addf %1373, %1374 : vector<1x8xf32>
    %1376 = arith.mulf %1134, %1323 : vector<1x8xf32>
    %1377 = arith.addf %1375, %1376 : vector<1x8xf32>
    %1378 = arith.mulf %1094, %1326 : vector<1x8xf32>
    %1379 = arith.mulf %1099, %1329 : vector<1x8xf32>
    %1380 = arith.addf %1378, %1379 : vector<1x8xf32>
    %1381 = arith.mulf %1104, %1332 : vector<1x8xf32>
    %1382 = arith.addf %1380, %1381 : vector<1x8xf32>
    %1383 = arith.addf %1382, %1140 : vector<1x8xf32>
    %1384 = arith.mulf %1109, %1326 : vector<1x8xf32>
    %1385 = arith.mulf %1114, %1329 : vector<1x8xf32>
    %1386 = arith.addf %1384, %1385 : vector<1x8xf32>
    %1387 = arith.mulf %1119, %1332 : vector<1x8xf32>
    %1388 = arith.addf %1386, %1387 : vector<1x8xf32>
    %1389 = arith.addf %1388, %1146 : vector<1x8xf32>
    %1390 = arith.mulf %1124, %1326 : vector<1x8xf32>
    %1391 = arith.mulf %1129, %1329 : vector<1x8xf32>
    %1392 = arith.addf %1390, %1391 : vector<1x8xf32>
    %1393 = arith.mulf %1134, %1332 : vector<1x8xf32>
    %1394 = arith.addf %1392, %1393 : vector<1x8xf32>
    %1395 = arith.addf %1394, %1152 : vector<1x8xf32>
    %1396 = vector.extract_strided_slice %6 {offsets = [162, 0], sizes = [1, 8], strides = [1, 1]} : vector<216x8xf32> to vector<1x8xf32>
    %1397 = vector.extract_strided_slice %6 {offsets = [163, 0], sizes = [1, 8], strides = [1, 1]} : vector<216x8xf32> to vector<1x8xf32>
    %1398 = vector.extract_strided_slice %6 {offsets = [164, 0], sizes = [1, 8], strides = [1, 1]} : vector<216x8xf32> to vector<1x8xf32>
    %1399 = vector.extract_strided_slice %6 {offsets = [165, 0], sizes = [1, 8], strides = [1, 1]} : vector<216x8xf32> to vector<1x8xf32>
    %1400 = vector.extract_strided_slice %6 {offsets = [166, 0], sizes = [1, 8], strides = [1, 1]} : vector<216x8xf32> to vector<1x8xf32>
    %1401 = vector.extract_strided_slice %6 {offsets = [167, 0], sizes = [1, 8], strides = [1, 1]} : vector<216x8xf32> to vector<1x8xf32>
    %1402 = vector.extract_strided_slice %6 {offsets = [168, 0], sizes = [1, 8], strides = [1, 1]} : vector<216x8xf32> to vector<1x8xf32>
    %1403 = vector.extract_strided_slice %6 {offsets = [169, 0], sizes = [1, 8], strides = [1, 1]} : vector<216x8xf32> to vector<1x8xf32>
    %1404 = vector.extract_strided_slice %6 {offsets = [170, 0], sizes = [1, 8], strides = [1, 1]} : vector<216x8xf32> to vector<1x8xf32>
    %1405 = vector.extract_strided_slice %5 {offsets = [54, 0], sizes = [1, 8], strides = [1, 1]} : vector<72x8xf32> to vector<1x8xf32>
    %1406 = vector.extract_strided_slice %5 {offsets = [48, 0], sizes = [1, 8], strides = [1, 1]} : vector<72x8xf32> to vector<1x8xf32>
    %1407 = arith.subf %1405, %1406 : vector<1x8xf32>
    %1408 = vector.extract_strided_slice %5 {offsets = [55, 0], sizes = [1, 8], strides = [1, 1]} : vector<72x8xf32> to vector<1x8xf32>
    %1409 = vector.extract_strided_slice %5 {offsets = [49, 0], sizes = [1, 8], strides = [1, 1]} : vector<72x8xf32> to vector<1x8xf32>
    %1410 = arith.subf %1408, %1409 : vector<1x8xf32>
    %1411 = vector.extract_strided_slice %5 {offsets = [56, 0], sizes = [1, 8], strides = [1, 1]} : vector<72x8xf32> to vector<1x8xf32>
    %1412 = vector.extract_strided_slice %5 {offsets = [50, 0], sizes = [1, 8], strides = [1, 1]} : vector<72x8xf32> to vector<1x8xf32>
    %1413 = arith.subf %1411, %1412 : vector<1x8xf32>
    %1414 = arith.mulf %1256, %1396 : vector<1x8xf32>
    %1415 = arith.mulf %1261, %1399 : vector<1x8xf32>
    %1416 = arith.addf %1414, %1415 : vector<1x8xf32>
    %1417 = arith.mulf %1266, %1402 : vector<1x8xf32>
    %1418 = arith.addf %1416, %1417 : vector<1x8xf32>
    %1419 = arith.mulf %1256, %1397 : vector<1x8xf32>
    %1420 = arith.mulf %1261, %1400 : vector<1x8xf32>
    %1421 = arith.addf %1419, %1420 : vector<1x8xf32>
    %1422 = arith.mulf %1266, %1403 : vector<1x8xf32>
    %1423 = arith.addf %1421, %1422 : vector<1x8xf32>
    %1424 = arith.mulf %1256, %1398 : vector<1x8xf32>
    %1425 = arith.mulf %1261, %1401 : vector<1x8xf32>
    %1426 = arith.addf %1424, %1425 : vector<1x8xf32>
    %1427 = arith.mulf %1266, %1404 : vector<1x8xf32>
    %1428 = arith.addf %1426, %1427 : vector<1x8xf32>
    %1429 = arith.mulf %1271, %1396 : vector<1x8xf32>
    %1430 = arith.mulf %1276, %1399 : vector<1x8xf32>
    %1431 = arith.addf %1429, %1430 : vector<1x8xf32>
    %1432 = arith.mulf %1281, %1402 : vector<1x8xf32>
    %1433 = arith.addf %1431, %1432 : vector<1x8xf32>
    %1434 = arith.mulf %1271, %1397 : vector<1x8xf32>
    %1435 = arith.mulf %1276, %1400 : vector<1x8xf32>
    %1436 = arith.addf %1434, %1435 : vector<1x8xf32>
    %1437 = arith.mulf %1281, %1403 : vector<1x8xf32>
    %1438 = arith.addf %1436, %1437 : vector<1x8xf32>
    %1439 = arith.mulf %1271, %1398 : vector<1x8xf32>
    %1440 = arith.mulf %1276, %1401 : vector<1x8xf32>
    %1441 = arith.addf %1439, %1440 : vector<1x8xf32>
    %1442 = arith.mulf %1281, %1404 : vector<1x8xf32>
    %1443 = arith.addf %1441, %1442 : vector<1x8xf32>
    %1444 = arith.mulf %1286, %1396 : vector<1x8xf32>
    %1445 = arith.mulf %1291, %1399 : vector<1x8xf32>
    %1446 = arith.addf %1444, %1445 : vector<1x8xf32>
    %1447 = arith.mulf %1296, %1402 : vector<1x8xf32>
    %1448 = arith.addf %1446, %1447 : vector<1x8xf32>
    %1449 = arith.mulf %1286, %1397 : vector<1x8xf32>
    %1450 = arith.mulf %1291, %1400 : vector<1x8xf32>
    %1451 = arith.addf %1449, %1450 : vector<1x8xf32>
    %1452 = arith.mulf %1296, %1403 : vector<1x8xf32>
    %1453 = arith.addf %1451, %1452 : vector<1x8xf32>
    %1454 = arith.mulf %1286, %1398 : vector<1x8xf32>
    %1455 = arith.mulf %1291, %1401 : vector<1x8xf32>
    %1456 = arith.addf %1454, %1455 : vector<1x8xf32>
    %1457 = arith.mulf %1296, %1404 : vector<1x8xf32>
    %1458 = arith.addf %1456, %1457 : vector<1x8xf32>
    %1459 = arith.mulf %1256, %1407 : vector<1x8xf32>
    %1460 = arith.mulf %1261, %1410 : vector<1x8xf32>
    %1461 = arith.addf %1459, %1460 : vector<1x8xf32>
    %1462 = arith.mulf %1266, %1413 : vector<1x8xf32>
    %1463 = arith.addf %1461, %1462 : vector<1x8xf32>
    %1464 = arith.addf %1463, %1302 : vector<1x8xf32>
    %1465 = arith.mulf %1271, %1407 : vector<1x8xf32>
    %1466 = arith.mulf %1276, %1410 : vector<1x8xf32>
    %1467 = arith.addf %1465, %1466 : vector<1x8xf32>
    %1468 = arith.mulf %1281, %1413 : vector<1x8xf32>
    %1469 = arith.addf %1467, %1468 : vector<1x8xf32>
    %1470 = arith.addf %1469, %1308 : vector<1x8xf32>
    %1471 = arith.mulf %1286, %1407 : vector<1x8xf32>
    %1472 = arith.mulf %1291, %1410 : vector<1x8xf32>
    %1473 = arith.addf %1471, %1472 : vector<1x8xf32>
    %1474 = arith.mulf %1296, %1413 : vector<1x8xf32>
    %1475 = arith.addf %1473, %1474 : vector<1x8xf32>
    %1476 = arith.addf %1475, %1314 : vector<1x8xf32>
    %1477 = vector.extract_strided_slice %6 {offsets = [171, 0], sizes = [1, 8], strides = [1, 1]} : vector<216x8xf32> to vector<1x8xf32>
    %1478 = vector.extract_strided_slice %6 {offsets = [172, 0], sizes = [1, 8], strides = [1, 1]} : vector<216x8xf32> to vector<1x8xf32>
    %1479 = vector.extract_strided_slice %6 {offsets = [173, 0], sizes = [1, 8], strides = [1, 1]} : vector<216x8xf32> to vector<1x8xf32>
    %1480 = vector.extract_strided_slice %6 {offsets = [174, 0], sizes = [1, 8], strides = [1, 1]} : vector<216x8xf32> to vector<1x8xf32>
    %1481 = vector.extract_strided_slice %6 {offsets = [175, 0], sizes = [1, 8], strides = [1, 1]} : vector<216x8xf32> to vector<1x8xf32>
    %1482 = vector.extract_strided_slice %6 {offsets = [176, 0], sizes = [1, 8], strides = [1, 1]} : vector<216x8xf32> to vector<1x8xf32>
    %1483 = vector.extract_strided_slice %6 {offsets = [177, 0], sizes = [1, 8], strides = [1, 1]} : vector<216x8xf32> to vector<1x8xf32>
    %1484 = vector.extract_strided_slice %6 {offsets = [178, 0], sizes = [1, 8], strides = [1, 1]} : vector<216x8xf32> to vector<1x8xf32>
    %1485 = vector.extract_strided_slice %6 {offsets = [179, 0], sizes = [1, 8], strides = [1, 1]} : vector<216x8xf32> to vector<1x8xf32>
    %1486 = vector.extract_strided_slice %5 {offsets = [57, 0], sizes = [1, 8], strides = [1, 1]} : vector<72x8xf32> to vector<1x8xf32>
    %1487 = vector.extract_strided_slice %5 {offsets = [51, 0], sizes = [1, 8], strides = [1, 1]} : vector<72x8xf32> to vector<1x8xf32>
    %1488 = arith.subf %1486, %1487 : vector<1x8xf32>
    %1489 = vector.extract_strided_slice %5 {offsets = [58, 0], sizes = [1, 8], strides = [1, 1]} : vector<72x8xf32> to vector<1x8xf32>
    %1490 = vector.extract_strided_slice %5 {offsets = [52, 0], sizes = [1, 8], strides = [1, 1]} : vector<72x8xf32> to vector<1x8xf32>
    %1491 = arith.subf %1489, %1490 : vector<1x8xf32>
    %1492 = vector.extract_strided_slice %5 {offsets = [59, 0], sizes = [1, 8], strides = [1, 1]} : vector<72x8xf32> to vector<1x8xf32>
    %1493 = vector.extract_strided_slice %5 {offsets = [53, 0], sizes = [1, 8], strides = [1, 1]} : vector<72x8xf32> to vector<1x8xf32>
    %1494 = arith.subf %1492, %1493 : vector<1x8xf32>
    %1495 = arith.mulf %1337, %1477 : vector<1x8xf32>
    %1496 = arith.mulf %1342, %1480 : vector<1x8xf32>
    %1497 = arith.addf %1495, %1496 : vector<1x8xf32>
    %1498 = arith.mulf %1347, %1483 : vector<1x8xf32>
    %1499 = arith.addf %1497, %1498 : vector<1x8xf32>
    %1500 = arith.mulf %1337, %1478 : vector<1x8xf32>
    %1501 = arith.mulf %1342, %1481 : vector<1x8xf32>
    %1502 = arith.addf %1500, %1501 : vector<1x8xf32>
    %1503 = arith.mulf %1347, %1484 : vector<1x8xf32>
    %1504 = arith.addf %1502, %1503 : vector<1x8xf32>
    %1505 = arith.mulf %1337, %1479 : vector<1x8xf32>
    %1506 = arith.mulf %1342, %1482 : vector<1x8xf32>
    %1507 = arith.addf %1505, %1506 : vector<1x8xf32>
    %1508 = arith.mulf %1347, %1485 : vector<1x8xf32>
    %1509 = arith.addf %1507, %1508 : vector<1x8xf32>
    %1510 = arith.mulf %1352, %1477 : vector<1x8xf32>
    %1511 = arith.mulf %1357, %1480 : vector<1x8xf32>
    %1512 = arith.addf %1510, %1511 : vector<1x8xf32>
    %1513 = arith.mulf %1362, %1483 : vector<1x8xf32>
    %1514 = arith.addf %1512, %1513 : vector<1x8xf32>
    %1515 = arith.mulf %1352, %1478 : vector<1x8xf32>
    %1516 = arith.mulf %1357, %1481 : vector<1x8xf32>
    %1517 = arith.addf %1515, %1516 : vector<1x8xf32>
    %1518 = arith.mulf %1362, %1484 : vector<1x8xf32>
    %1519 = arith.addf %1517, %1518 : vector<1x8xf32>
    %1520 = arith.mulf %1352, %1479 : vector<1x8xf32>
    %1521 = arith.mulf %1357, %1482 : vector<1x8xf32>
    %1522 = arith.addf %1520, %1521 : vector<1x8xf32>
    %1523 = arith.mulf %1362, %1485 : vector<1x8xf32>
    %1524 = arith.addf %1522, %1523 : vector<1x8xf32>
    %1525 = arith.mulf %1367, %1477 : vector<1x8xf32>
    %1526 = arith.mulf %1372, %1480 : vector<1x8xf32>
    %1527 = arith.addf %1525, %1526 : vector<1x8xf32>
    %1528 = arith.mulf %1377, %1483 : vector<1x8xf32>
    %1529 = arith.addf %1527, %1528 : vector<1x8xf32>
    %1530 = arith.mulf %1367, %1478 : vector<1x8xf32>
    %1531 = arith.mulf %1372, %1481 : vector<1x8xf32>
    %1532 = arith.addf %1530, %1531 : vector<1x8xf32>
    %1533 = arith.mulf %1377, %1484 : vector<1x8xf32>
    %1534 = arith.addf %1532, %1533 : vector<1x8xf32>
    %1535 = arith.mulf %1367, %1479 : vector<1x8xf32>
    %1536 = arith.mulf %1372, %1482 : vector<1x8xf32>
    %1537 = arith.addf %1535, %1536 : vector<1x8xf32>
    %1538 = arith.mulf %1377, %1485 : vector<1x8xf32>
    %1539 = arith.addf %1537, %1538 : vector<1x8xf32>
    %1540 = arith.mulf %1337, %1488 : vector<1x8xf32>
    %1541 = arith.mulf %1342, %1491 : vector<1x8xf32>
    %1542 = arith.addf %1540, %1541 : vector<1x8xf32>
    %1543 = arith.mulf %1347, %1494 : vector<1x8xf32>
    %1544 = arith.addf %1542, %1543 : vector<1x8xf32>
    %1545 = arith.addf %1544, %1383 : vector<1x8xf32>
    %1546 = arith.mulf %1352, %1488 : vector<1x8xf32>
    %1547 = arith.mulf %1357, %1491 : vector<1x8xf32>
    %1548 = arith.addf %1546, %1547 : vector<1x8xf32>
    %1549 = arith.mulf %1362, %1494 : vector<1x8xf32>
    %1550 = arith.addf %1548, %1549 : vector<1x8xf32>
    %1551 = arith.addf %1550, %1389 : vector<1x8xf32>
    %1552 = arith.mulf %1367, %1488 : vector<1x8xf32>
    %1553 = arith.mulf %1372, %1491 : vector<1x8xf32>
    %1554 = arith.addf %1552, %1553 : vector<1x8xf32>
    %1555 = arith.mulf %1377, %1494 : vector<1x8xf32>
    %1556 = arith.addf %1554, %1555 : vector<1x8xf32>
    %1557 = arith.addf %1556, %1395 : vector<1x8xf32>
    %1558 = vector.extract_strided_slice %6 {offsets = [180, 0], sizes = [1, 8], strides = [1, 1]} : vector<216x8xf32> to vector<1x8xf32>
    %1559 = vector.extract_strided_slice %6 {offsets = [181, 0], sizes = [1, 8], strides = [1, 1]} : vector<216x8xf32> to vector<1x8xf32>
    %1560 = vector.extract_strided_slice %6 {offsets = [182, 0], sizes = [1, 8], strides = [1, 1]} : vector<216x8xf32> to vector<1x8xf32>
    %1561 = vector.extract_strided_slice %6 {offsets = [183, 0], sizes = [1, 8], strides = [1, 1]} : vector<216x8xf32> to vector<1x8xf32>
    %1562 = vector.extract_strided_slice %6 {offsets = [184, 0], sizes = [1, 8], strides = [1, 1]} : vector<216x8xf32> to vector<1x8xf32>
    %1563 = vector.extract_strided_slice %6 {offsets = [185, 0], sizes = [1, 8], strides = [1, 1]} : vector<216x8xf32> to vector<1x8xf32>
    %1564 = vector.extract_strided_slice %6 {offsets = [186, 0], sizes = [1, 8], strides = [1, 1]} : vector<216x8xf32> to vector<1x8xf32>
    %1565 = vector.extract_strided_slice %6 {offsets = [187, 0], sizes = [1, 8], strides = [1, 1]} : vector<216x8xf32> to vector<1x8xf32>
    %1566 = vector.extract_strided_slice %6 {offsets = [188, 0], sizes = [1, 8], strides = [1, 1]} : vector<216x8xf32> to vector<1x8xf32>
    %1567 = vector.extract_strided_slice %5 {offsets = [60, 0], sizes = [1, 8], strides = [1, 1]} : vector<72x8xf32> to vector<1x8xf32>
    %1568 = vector.extract_strided_slice %5 {offsets = [54, 0], sizes = [1, 8], strides = [1, 1]} : vector<72x8xf32> to vector<1x8xf32>
    %1569 = arith.subf %1567, %1568 : vector<1x8xf32>
    %1570 = vector.extract_strided_slice %5 {offsets = [61, 0], sizes = [1, 8], strides = [1, 1]} : vector<72x8xf32> to vector<1x8xf32>
    %1571 = vector.extract_strided_slice %5 {offsets = [55, 0], sizes = [1, 8], strides = [1, 1]} : vector<72x8xf32> to vector<1x8xf32>
    %1572 = arith.subf %1570, %1571 : vector<1x8xf32>
    %1573 = vector.extract_strided_slice %5 {offsets = [62, 0], sizes = [1, 8], strides = [1, 1]} : vector<72x8xf32> to vector<1x8xf32>
    %1574 = vector.extract_strided_slice %5 {offsets = [56, 0], sizes = [1, 8], strides = [1, 1]} : vector<72x8xf32> to vector<1x8xf32>
    %1575 = arith.subf %1573, %1574 : vector<1x8xf32>
    %1576 = arith.mulf %1418, %1558 : vector<1x8xf32>
    %1577 = arith.mulf %1423, %1561 : vector<1x8xf32>
    %1578 = arith.addf %1576, %1577 : vector<1x8xf32>
    %1579 = arith.mulf %1428, %1564 : vector<1x8xf32>
    %1580 = arith.addf %1578, %1579 : vector<1x8xf32>
    %1581 = arith.mulf %1418, %1559 : vector<1x8xf32>
    %1582 = arith.mulf %1423, %1562 : vector<1x8xf32>
    %1583 = arith.addf %1581, %1582 : vector<1x8xf32>
    %1584 = arith.mulf %1428, %1565 : vector<1x8xf32>
    %1585 = arith.addf %1583, %1584 : vector<1x8xf32>
    %1586 = arith.mulf %1418, %1560 : vector<1x8xf32>
    %1587 = arith.mulf %1423, %1563 : vector<1x8xf32>
    %1588 = arith.addf %1586, %1587 : vector<1x8xf32>
    %1589 = arith.mulf %1428, %1566 : vector<1x8xf32>
    %1590 = arith.addf %1588, %1589 : vector<1x8xf32>
    %1591 = arith.mulf %1433, %1558 : vector<1x8xf32>
    %1592 = arith.mulf %1438, %1561 : vector<1x8xf32>
    %1593 = arith.addf %1591, %1592 : vector<1x8xf32>
    %1594 = arith.mulf %1443, %1564 : vector<1x8xf32>
    %1595 = arith.addf %1593, %1594 : vector<1x8xf32>
    %1596 = arith.mulf %1433, %1559 : vector<1x8xf32>
    %1597 = arith.mulf %1438, %1562 : vector<1x8xf32>
    %1598 = arith.addf %1596, %1597 : vector<1x8xf32>
    %1599 = arith.mulf %1443, %1565 : vector<1x8xf32>
    %1600 = arith.addf %1598, %1599 : vector<1x8xf32>
    %1601 = arith.mulf %1433, %1560 : vector<1x8xf32>
    %1602 = arith.mulf %1438, %1563 : vector<1x8xf32>
    %1603 = arith.addf %1601, %1602 : vector<1x8xf32>
    %1604 = arith.mulf %1443, %1566 : vector<1x8xf32>
    %1605 = arith.addf %1603, %1604 : vector<1x8xf32>
    %1606 = arith.mulf %1448, %1558 : vector<1x8xf32>
    %1607 = arith.mulf %1453, %1561 : vector<1x8xf32>
    %1608 = arith.addf %1606, %1607 : vector<1x8xf32>
    %1609 = arith.mulf %1458, %1564 : vector<1x8xf32>
    %1610 = arith.addf %1608, %1609 : vector<1x8xf32>
    %1611 = arith.mulf %1448, %1559 : vector<1x8xf32>
    %1612 = arith.mulf %1453, %1562 : vector<1x8xf32>
    %1613 = arith.addf %1611, %1612 : vector<1x8xf32>
    %1614 = arith.mulf %1458, %1565 : vector<1x8xf32>
    %1615 = arith.addf %1613, %1614 : vector<1x8xf32>
    %1616 = arith.mulf %1448, %1560 : vector<1x8xf32>
    %1617 = arith.mulf %1453, %1563 : vector<1x8xf32>
    %1618 = arith.addf %1616, %1617 : vector<1x8xf32>
    %1619 = arith.mulf %1458, %1566 : vector<1x8xf32>
    %1620 = arith.addf %1618, %1619 : vector<1x8xf32>
    %1621 = arith.mulf %1418, %1569 : vector<1x8xf32>
    %1622 = arith.mulf %1423, %1572 : vector<1x8xf32>
    %1623 = arith.addf %1621, %1622 : vector<1x8xf32>
    %1624 = arith.mulf %1428, %1575 : vector<1x8xf32>
    %1625 = arith.addf %1623, %1624 : vector<1x8xf32>
    %1626 = arith.addf %1625, %1464 : vector<1x8xf32>
    %1627 = arith.mulf %1433, %1569 : vector<1x8xf32>
    %1628 = arith.mulf %1438, %1572 : vector<1x8xf32>
    %1629 = arith.addf %1627, %1628 : vector<1x8xf32>
    %1630 = arith.mulf %1443, %1575 : vector<1x8xf32>
    %1631 = arith.addf %1629, %1630 : vector<1x8xf32>
    %1632 = arith.addf %1631, %1470 : vector<1x8xf32>
    %1633 = arith.mulf %1448, %1569 : vector<1x8xf32>
    %1634 = arith.mulf %1453, %1572 : vector<1x8xf32>
    %1635 = arith.addf %1633, %1634 : vector<1x8xf32>
    %1636 = arith.mulf %1458, %1575 : vector<1x8xf32>
    %1637 = arith.addf %1635, %1636 : vector<1x8xf32>
    %1638 = arith.addf %1637, %1476 : vector<1x8xf32>
    %1639 = vector.extract_strided_slice %6 {offsets = [189, 0], sizes = [1, 8], strides = [1, 1]} : vector<216x8xf32> to vector<1x8xf32>
    %1640 = vector.extract_strided_slice %6 {offsets = [190, 0], sizes = [1, 8], strides = [1, 1]} : vector<216x8xf32> to vector<1x8xf32>
    %1641 = vector.extract_strided_slice %6 {offsets = [191, 0], sizes = [1, 8], strides = [1, 1]} : vector<216x8xf32> to vector<1x8xf32>
    %1642 = vector.extract_strided_slice %6 {offsets = [192, 0], sizes = [1, 8], strides = [1, 1]} : vector<216x8xf32> to vector<1x8xf32>
    %1643 = vector.extract_strided_slice %6 {offsets = [193, 0], sizes = [1, 8], strides = [1, 1]} : vector<216x8xf32> to vector<1x8xf32>
    %1644 = vector.extract_strided_slice %6 {offsets = [194, 0], sizes = [1, 8], strides = [1, 1]} : vector<216x8xf32> to vector<1x8xf32>
    %1645 = vector.extract_strided_slice %6 {offsets = [195, 0], sizes = [1, 8], strides = [1, 1]} : vector<216x8xf32> to vector<1x8xf32>
    %1646 = vector.extract_strided_slice %6 {offsets = [196, 0], sizes = [1, 8], strides = [1, 1]} : vector<216x8xf32> to vector<1x8xf32>
    %1647 = vector.extract_strided_slice %6 {offsets = [197, 0], sizes = [1, 8], strides = [1, 1]} : vector<216x8xf32> to vector<1x8xf32>
    %1648 = vector.extract_strided_slice %5 {offsets = [63, 0], sizes = [1, 8], strides = [1, 1]} : vector<72x8xf32> to vector<1x8xf32>
    %1649 = vector.extract_strided_slice %5 {offsets = [57, 0], sizes = [1, 8], strides = [1, 1]} : vector<72x8xf32> to vector<1x8xf32>
    %1650 = arith.subf %1648, %1649 : vector<1x8xf32>
    %1651 = vector.extract_strided_slice %5 {offsets = [64, 0], sizes = [1, 8], strides = [1, 1]} : vector<72x8xf32> to vector<1x8xf32>
    %1652 = vector.extract_strided_slice %5 {offsets = [58, 0], sizes = [1, 8], strides = [1, 1]} : vector<72x8xf32> to vector<1x8xf32>
    %1653 = arith.subf %1651, %1652 : vector<1x8xf32>
    %1654 = vector.extract_strided_slice %5 {offsets = [65, 0], sizes = [1, 8], strides = [1, 1]} : vector<72x8xf32> to vector<1x8xf32>
    %1655 = vector.extract_strided_slice %5 {offsets = [59, 0], sizes = [1, 8], strides = [1, 1]} : vector<72x8xf32> to vector<1x8xf32>
    %1656 = arith.subf %1654, %1655 : vector<1x8xf32>
    %1657 = arith.mulf %1499, %1639 : vector<1x8xf32>
    %1658 = arith.mulf %1504, %1642 : vector<1x8xf32>
    %1659 = arith.addf %1657, %1658 : vector<1x8xf32>
    %1660 = arith.mulf %1509, %1645 : vector<1x8xf32>
    %1661 = arith.addf %1659, %1660 : vector<1x8xf32>
    %1662 = arith.mulf %1499, %1640 : vector<1x8xf32>
    %1663 = arith.mulf %1504, %1643 : vector<1x8xf32>
    %1664 = arith.addf %1662, %1663 : vector<1x8xf32>
    %1665 = arith.mulf %1509, %1646 : vector<1x8xf32>
    %1666 = arith.addf %1664, %1665 : vector<1x8xf32>
    %1667 = arith.mulf %1499, %1641 : vector<1x8xf32>
    %1668 = arith.mulf %1504, %1644 : vector<1x8xf32>
    %1669 = arith.addf %1667, %1668 : vector<1x8xf32>
    %1670 = arith.mulf %1509, %1647 : vector<1x8xf32>
    %1671 = arith.addf %1669, %1670 : vector<1x8xf32>
    %1672 = arith.mulf %1514, %1639 : vector<1x8xf32>
    %1673 = arith.mulf %1519, %1642 : vector<1x8xf32>
    %1674 = arith.addf %1672, %1673 : vector<1x8xf32>
    %1675 = arith.mulf %1524, %1645 : vector<1x8xf32>
    %1676 = arith.addf %1674, %1675 : vector<1x8xf32>
    %1677 = arith.mulf %1514, %1640 : vector<1x8xf32>
    %1678 = arith.mulf %1519, %1643 : vector<1x8xf32>
    %1679 = arith.addf %1677, %1678 : vector<1x8xf32>
    %1680 = arith.mulf %1524, %1646 : vector<1x8xf32>
    %1681 = arith.addf %1679, %1680 : vector<1x8xf32>
    %1682 = arith.mulf %1514, %1641 : vector<1x8xf32>
    %1683 = arith.mulf %1519, %1644 : vector<1x8xf32>
    %1684 = arith.addf %1682, %1683 : vector<1x8xf32>
    %1685 = arith.mulf %1524, %1647 : vector<1x8xf32>
    %1686 = arith.addf %1684, %1685 : vector<1x8xf32>
    %1687 = arith.mulf %1529, %1639 : vector<1x8xf32>
    %1688 = arith.mulf %1534, %1642 : vector<1x8xf32>
    %1689 = arith.addf %1687, %1688 : vector<1x8xf32>
    %1690 = arith.mulf %1539, %1645 : vector<1x8xf32>
    %1691 = arith.addf %1689, %1690 : vector<1x8xf32>
    %1692 = arith.mulf %1529, %1640 : vector<1x8xf32>
    %1693 = arith.mulf %1534, %1643 : vector<1x8xf32>
    %1694 = arith.addf %1692, %1693 : vector<1x8xf32>
    %1695 = arith.mulf %1539, %1646 : vector<1x8xf32>
    %1696 = arith.addf %1694, %1695 : vector<1x8xf32>
    %1697 = arith.mulf %1529, %1641 : vector<1x8xf32>
    %1698 = arith.mulf %1534, %1644 : vector<1x8xf32>
    %1699 = arith.addf %1697, %1698 : vector<1x8xf32>
    %1700 = arith.mulf %1539, %1647 : vector<1x8xf32>
    %1701 = arith.addf %1699, %1700 : vector<1x8xf32>
    %1702 = arith.mulf %1499, %1650 : vector<1x8xf32>
    %1703 = arith.mulf %1504, %1653 : vector<1x8xf32>
    %1704 = arith.addf %1702, %1703 : vector<1x8xf32>
    %1705 = arith.mulf %1509, %1656 : vector<1x8xf32>
    %1706 = arith.addf %1704, %1705 : vector<1x8xf32>
    %1707 = arith.addf %1706, %1545 : vector<1x8xf32>
    %1708 = arith.mulf %1514, %1650 : vector<1x8xf32>
    %1709 = arith.mulf %1519, %1653 : vector<1x8xf32>
    %1710 = arith.addf %1708, %1709 : vector<1x8xf32>
    %1711 = arith.mulf %1524, %1656 : vector<1x8xf32>
    %1712 = arith.addf %1710, %1711 : vector<1x8xf32>
    %1713 = arith.addf %1712, %1551 : vector<1x8xf32>
    %1714 = arith.mulf %1529, %1650 : vector<1x8xf32>
    %1715 = arith.mulf %1534, %1653 : vector<1x8xf32>
    %1716 = arith.addf %1714, %1715 : vector<1x8xf32>
    %1717 = arith.mulf %1539, %1656 : vector<1x8xf32>
    %1718 = arith.addf %1716, %1717 : vector<1x8xf32>
    %1719 = arith.addf %1718, %1557 : vector<1x8xf32>
    %1720 = vector.extract_strided_slice %6 {offsets = [198, 0], sizes = [1, 8], strides = [1, 1]} : vector<216x8xf32> to vector<1x8xf32>
    %1721 = vector.extract_strided_slice %6 {offsets = [199, 0], sizes = [1, 8], strides = [1, 1]} : vector<216x8xf32> to vector<1x8xf32>
    %1722 = vector.extract_strided_slice %6 {offsets = [200, 0], sizes = [1, 8], strides = [1, 1]} : vector<216x8xf32> to vector<1x8xf32>
    %1723 = vector.extract_strided_slice %6 {offsets = [201, 0], sizes = [1, 8], strides = [1, 1]} : vector<216x8xf32> to vector<1x8xf32>
    %1724 = vector.extract_strided_slice %6 {offsets = [202, 0], sizes = [1, 8], strides = [1, 1]} : vector<216x8xf32> to vector<1x8xf32>
    %1725 = vector.extract_strided_slice %6 {offsets = [203, 0], sizes = [1, 8], strides = [1, 1]} : vector<216x8xf32> to vector<1x8xf32>
    %1726 = vector.extract_strided_slice %6 {offsets = [204, 0], sizes = [1, 8], strides = [1, 1]} : vector<216x8xf32> to vector<1x8xf32>
    %1727 = vector.extract_strided_slice %6 {offsets = [205, 0], sizes = [1, 8], strides = [1, 1]} : vector<216x8xf32> to vector<1x8xf32>
    %1728 = vector.extract_strided_slice %6 {offsets = [206, 0], sizes = [1, 8], strides = [1, 1]} : vector<216x8xf32> to vector<1x8xf32>
    %1729 = vector.extract_strided_slice %5 {offsets = [66, 0], sizes = [1, 8], strides = [1, 1]} : vector<72x8xf32> to vector<1x8xf32>
    %1730 = vector.extract_strided_slice %5 {offsets = [60, 0], sizes = [1, 8], strides = [1, 1]} : vector<72x8xf32> to vector<1x8xf32>
    %1731 = arith.subf %1729, %1730 : vector<1x8xf32>
    %1732 = vector.extract_strided_slice %5 {offsets = [67, 0], sizes = [1, 8], strides = [1, 1]} : vector<72x8xf32> to vector<1x8xf32>
    %1733 = vector.extract_strided_slice %5 {offsets = [61, 0], sizes = [1, 8], strides = [1, 1]} : vector<72x8xf32> to vector<1x8xf32>
    %1734 = arith.subf %1732, %1733 : vector<1x8xf32>
    %1735 = vector.extract_strided_slice %5 {offsets = [68, 0], sizes = [1, 8], strides = [1, 1]} : vector<72x8xf32> to vector<1x8xf32>
    %1736 = vector.extract_strided_slice %5 {offsets = [62, 0], sizes = [1, 8], strides = [1, 1]} : vector<72x8xf32> to vector<1x8xf32>
    %1737 = arith.subf %1735, %1736 : vector<1x8xf32>
    %1738 = arith.mulf %1580, %1720 : vector<1x8xf32>
    %1739 = arith.mulf %1585, %1723 : vector<1x8xf32>
    %1740 = arith.addf %1738, %1739 : vector<1x8xf32>
    %1741 = arith.mulf %1590, %1726 : vector<1x8xf32>
    %1742 = arith.addf %1740, %1741 : vector<1x8xf32>
    %1743 = arith.mulf %1580, %1721 : vector<1x8xf32>
    %1744 = arith.mulf %1585, %1724 : vector<1x8xf32>
    %1745 = arith.addf %1743, %1744 : vector<1x8xf32>
    %1746 = arith.mulf %1590, %1727 : vector<1x8xf32>
    %1747 = arith.addf %1745, %1746 : vector<1x8xf32>
    %1748 = arith.mulf %1580, %1722 : vector<1x8xf32>
    %1749 = arith.mulf %1585, %1725 : vector<1x8xf32>
    %1750 = arith.addf %1748, %1749 : vector<1x8xf32>
    %1751 = arith.mulf %1590, %1728 : vector<1x8xf32>
    %1752 = arith.addf %1750, %1751 : vector<1x8xf32>
    %1753 = arith.mulf %1595, %1720 : vector<1x8xf32>
    %1754 = arith.mulf %1600, %1723 : vector<1x8xf32>
    %1755 = arith.addf %1753, %1754 : vector<1x8xf32>
    %1756 = arith.mulf %1605, %1726 : vector<1x8xf32>
    %1757 = arith.addf %1755, %1756 : vector<1x8xf32>
    %1758 = arith.mulf %1595, %1721 : vector<1x8xf32>
    %1759 = arith.mulf %1600, %1724 : vector<1x8xf32>
    %1760 = arith.addf %1758, %1759 : vector<1x8xf32>
    %1761 = arith.mulf %1605, %1727 : vector<1x8xf32>
    %1762 = arith.addf %1760, %1761 : vector<1x8xf32>
    %1763 = arith.mulf %1595, %1722 : vector<1x8xf32>
    %1764 = arith.mulf %1600, %1725 : vector<1x8xf32>
    %1765 = arith.addf %1763, %1764 : vector<1x8xf32>
    %1766 = arith.mulf %1605, %1728 : vector<1x8xf32>
    %1767 = arith.addf %1765, %1766 : vector<1x8xf32>
    %1768 = arith.mulf %1610, %1720 : vector<1x8xf32>
    %1769 = arith.mulf %1615, %1723 : vector<1x8xf32>
    %1770 = arith.addf %1768, %1769 : vector<1x8xf32>
    %1771 = arith.mulf %1620, %1726 : vector<1x8xf32>
    %1772 = arith.addf %1770, %1771 : vector<1x8xf32>
    %1773 = arith.mulf %1610, %1721 : vector<1x8xf32>
    %1774 = arith.mulf %1615, %1724 : vector<1x8xf32>
    %1775 = arith.addf %1773, %1774 : vector<1x8xf32>
    %1776 = arith.mulf %1620, %1727 : vector<1x8xf32>
    %1777 = arith.addf %1775, %1776 : vector<1x8xf32>
    %1778 = arith.mulf %1610, %1722 : vector<1x8xf32>
    %1779 = arith.mulf %1615, %1725 : vector<1x8xf32>
    %1780 = arith.addf %1778, %1779 : vector<1x8xf32>
    %1781 = arith.mulf %1620, %1728 : vector<1x8xf32>
    %1782 = arith.addf %1780, %1781 : vector<1x8xf32>
    %1783 = arith.mulf %1580, %1731 : vector<1x8xf32>
    %1784 = arith.mulf %1585, %1734 : vector<1x8xf32>
    %1785 = arith.addf %1783, %1784 : vector<1x8xf32>
    %1786 = arith.mulf %1590, %1737 : vector<1x8xf32>
    %1787 = arith.addf %1785, %1786 : vector<1x8xf32>
    %1788 = arith.addf %1787, %1626 : vector<1x8xf32>
    %1789 = arith.mulf %1595, %1731 : vector<1x8xf32>
    %1790 = arith.mulf %1600, %1734 : vector<1x8xf32>
    %1791 = arith.addf %1789, %1790 : vector<1x8xf32>
    %1792 = arith.mulf %1605, %1737 : vector<1x8xf32>
    %1793 = arith.addf %1791, %1792 : vector<1x8xf32>
    %1794 = arith.addf %1793, %1632 : vector<1x8xf32>
    %1795 = arith.mulf %1610, %1731 : vector<1x8xf32>
    %1796 = arith.mulf %1615, %1734 : vector<1x8xf32>
    %1797 = arith.addf %1795, %1796 : vector<1x8xf32>
    %1798 = arith.mulf %1620, %1737 : vector<1x8xf32>
    %1799 = arith.addf %1797, %1798 : vector<1x8xf32>
    %1800 = arith.addf %1799, %1638 : vector<1x8xf32>
    %1801 = vector.extract_strided_slice %6 {offsets = [207, 0], sizes = [1, 8], strides = [1, 1]} : vector<216x8xf32> to vector<1x8xf32>
    %1802 = vector.extract_strided_slice %6 {offsets = [208, 0], sizes = [1, 8], strides = [1, 1]} : vector<216x8xf32> to vector<1x8xf32>
    %1803 = vector.extract_strided_slice %6 {offsets = [209, 0], sizes = [1, 8], strides = [1, 1]} : vector<216x8xf32> to vector<1x8xf32>
    %1804 = vector.extract_strided_slice %6 {offsets = [210, 0], sizes = [1, 8], strides = [1, 1]} : vector<216x8xf32> to vector<1x8xf32>
    %1805 = vector.extract_strided_slice %6 {offsets = [211, 0], sizes = [1, 8], strides = [1, 1]} : vector<216x8xf32> to vector<1x8xf32>
    %1806 = vector.extract_strided_slice %6 {offsets = [212, 0], sizes = [1, 8], strides = [1, 1]} : vector<216x8xf32> to vector<1x8xf32>
    %1807 = vector.extract_strided_slice %6 {offsets = [213, 0], sizes = [1, 8], strides = [1, 1]} : vector<216x8xf32> to vector<1x8xf32>
    %1808 = vector.extract_strided_slice %6 {offsets = [214, 0], sizes = [1, 8], strides = [1, 1]} : vector<216x8xf32> to vector<1x8xf32>
    %1809 = vector.extract_strided_slice %6 {offsets = [215, 0], sizes = [1, 8], strides = [1, 1]} : vector<216x8xf32> to vector<1x8xf32>
    %1810 = vector.extract_strided_slice %5 {offsets = [69, 0], sizes = [1, 8], strides = [1, 1]} : vector<72x8xf32> to vector<1x8xf32>
    %1811 = vector.extract_strided_slice %5 {offsets = [63, 0], sizes = [1, 8], strides = [1, 1]} : vector<72x8xf32> to vector<1x8xf32>
    %1812 = arith.subf %1810, %1811 : vector<1x8xf32>
    %1813 = vector.extract_strided_slice %5 {offsets = [70, 0], sizes = [1, 8], strides = [1, 1]} : vector<72x8xf32> to vector<1x8xf32>
    %1814 = vector.extract_strided_slice %5 {offsets = [64, 0], sizes = [1, 8], strides = [1, 1]} : vector<72x8xf32> to vector<1x8xf32>
    %1815 = arith.subf %1813, %1814 : vector<1x8xf32>
    %1816 = vector.extract_strided_slice %5 {offsets = [71, 0], sizes = [1, 8], strides = [1, 1]} : vector<72x8xf32> to vector<1x8xf32>
    %1817 = vector.extract_strided_slice %5 {offsets = [65, 0], sizes = [1, 8], strides = [1, 1]} : vector<72x8xf32> to vector<1x8xf32>
    %1818 = arith.subf %1816, %1817 : vector<1x8xf32>
    %1819 = arith.mulf %1661, %1801 : vector<1x8xf32>
    %1820 = arith.mulf %1666, %1804 : vector<1x8xf32>
    %1821 = arith.addf %1819, %1820 : vector<1x8xf32>
    %1822 = arith.mulf %1671, %1807 : vector<1x8xf32>
    %1823 = arith.addf %1821, %1822 : vector<1x8xf32>
    %1824 = arith.mulf %1661, %1802 : vector<1x8xf32>
    %1825 = arith.mulf %1666, %1805 : vector<1x8xf32>
    %1826 = arith.addf %1824, %1825 : vector<1x8xf32>
    %1827 = arith.mulf %1671, %1808 : vector<1x8xf32>
    %1828 = arith.addf %1826, %1827 : vector<1x8xf32>
    %1829 = arith.mulf %1661, %1803 : vector<1x8xf32>
    %1830 = arith.mulf %1666, %1806 : vector<1x8xf32>
    %1831 = arith.addf %1829, %1830 : vector<1x8xf32>
    %1832 = arith.mulf %1671, %1809 : vector<1x8xf32>
    %1833 = arith.addf %1831, %1832 : vector<1x8xf32>
    %1834 = arith.mulf %1676, %1801 : vector<1x8xf32>
    %1835 = arith.mulf %1681, %1804 : vector<1x8xf32>
    %1836 = arith.addf %1834, %1835 : vector<1x8xf32>
    %1837 = arith.mulf %1686, %1807 : vector<1x8xf32>
    %1838 = arith.addf %1836, %1837 : vector<1x8xf32>
    %1839 = arith.mulf %1676, %1802 : vector<1x8xf32>
    %1840 = arith.mulf %1681, %1805 : vector<1x8xf32>
    %1841 = arith.addf %1839, %1840 : vector<1x8xf32>
    %1842 = arith.mulf %1686, %1808 : vector<1x8xf32>
    %1843 = arith.addf %1841, %1842 : vector<1x8xf32>
    %1844 = arith.mulf %1676, %1803 : vector<1x8xf32>
    %1845 = arith.mulf %1681, %1806 : vector<1x8xf32>
    %1846 = arith.addf %1844, %1845 : vector<1x8xf32>
    %1847 = arith.mulf %1686, %1809 : vector<1x8xf32>
    %1848 = arith.addf %1846, %1847 : vector<1x8xf32>
    %1849 = arith.mulf %1691, %1801 : vector<1x8xf32>
    %1850 = arith.mulf %1696, %1804 : vector<1x8xf32>
    %1851 = arith.addf %1849, %1850 : vector<1x8xf32>
    %1852 = arith.mulf %1701, %1807 : vector<1x8xf32>
    %1853 = arith.addf %1851, %1852 : vector<1x8xf32>
    %1854 = arith.mulf %1691, %1802 : vector<1x8xf32>
    %1855 = arith.mulf %1696, %1805 : vector<1x8xf32>
    %1856 = arith.addf %1854, %1855 : vector<1x8xf32>
    %1857 = arith.mulf %1701, %1808 : vector<1x8xf32>
    %1858 = arith.addf %1856, %1857 : vector<1x8xf32>
    %1859 = arith.mulf %1691, %1803 : vector<1x8xf32>
    %1860 = arith.mulf %1696, %1806 : vector<1x8xf32>
    %1861 = arith.addf %1859, %1860 : vector<1x8xf32>
    %1862 = arith.mulf %1701, %1809 : vector<1x8xf32>
    %1863 = arith.addf %1861, %1862 : vector<1x8xf32>
    %1864 = arith.mulf %1661, %1812 : vector<1x8xf32>
    %1865 = arith.mulf %1666, %1815 : vector<1x8xf32>
    %1866 = arith.addf %1864, %1865 : vector<1x8xf32>
    %1867 = arith.mulf %1671, %1818 : vector<1x8xf32>
    %1868 = arith.addf %1866, %1867 : vector<1x8xf32>
    %1869 = arith.addf %1868, %1707 : vector<1x8xf32>
    %1870 = arith.mulf %1676, %1812 : vector<1x8xf32>
    %1871 = arith.mulf %1681, %1815 : vector<1x8xf32>
    %1872 = arith.addf %1870, %1871 : vector<1x8xf32>
    %1873 = arith.mulf %1686, %1818 : vector<1x8xf32>
    %1874 = arith.addf %1872, %1873 : vector<1x8xf32>
    %1875 = arith.addf %1874, %1713 : vector<1x8xf32>
    %1876 = arith.mulf %1691, %1812 : vector<1x8xf32>
    %1877 = arith.mulf %1696, %1815 : vector<1x8xf32>
    %1878 = arith.addf %1876, %1877 : vector<1x8xf32>
    %1879 = arith.mulf %1701, %1818 : vector<1x8xf32>
    %1880 = arith.addf %1878, %1879 : vector<1x8xf32>
    %1881 = arith.addf %1880, %1719 : vector<1x8xf32>
    %1882 = tpu.concatenate %16, %17, %18, %87, %93, %99, %168, %174, %180, %249, %255, %261, %330, %336, %342, %411 in 0 : vector<1x8xf32>, vector<1x8xf32>, vector<1x8xf32>, vector<1x8xf32>, vector<1x8xf32>, vector<1x8xf32>, vector<1x8xf32>, vector<1x8xf32>, vector<1x8xf32>, vector<1x8xf32>, vector<1x8xf32>, vector<1x8xf32>, vector<1x8xf32>, vector<1x8xf32>, vector<1x8xf32>, vector<1x8xf32> -> vector<16x8xf32>
    %1883 = tpu.concatenate %417, %423, %492, %498, %504, %573, %579, %585, %654, %660, %666, %735, %741, %747, %816, %822 in 0 : vector<1x8xf32>, vector<1x8xf32>, vector<1x8xf32>, vector<1x8xf32>, vector<1x8xf32>, vector<1x8xf32>, vector<1x8xf32>, vector<1x8xf32>, vector<1x8xf32>, vector<1x8xf32>, vector<1x8xf32>, vector<1x8xf32>, vector<1x8xf32>, vector<1x8xf32>, vector<1x8xf32>, vector<1x8xf32> -> vector<16x8xf32>
    %1884 = tpu.concatenate %828, %897, %903, %909, %978, %984, %990, %1059, %1065, %1071, %1140, %1146, %1152, %1221, %1227, %1233 in 0 : vector<1x8xf32>, vector<1x8xf32>, vector<1x8xf32>, vector<1x8xf32>, vector<1x8xf32>, vector<1x8xf32>, vector<1x8xf32>, vector<1x8xf32>, vector<1x8xf32>, vector<1x8xf32>, vector<1x8xf32>, vector<1x8xf32>, vector<1x8xf32>, vector<1x8xf32>, vector<1x8xf32>, vector<1x8xf32> -> vector<16x8xf32>
    %1885 = tpu.concatenate %1302, %1308, %1314, %1383, %1389, %1395, %1464, %1470, %1476, %1545, %1551, %1557, %1626, %1632, %1638, %1707 in 0 : vector<1x8xf32>, vector<1x8xf32>, vector<1x8xf32>, vector<1x8xf32>, vector<1x8xf32>, vector<1x8xf32>, vector<1x8xf32>, vector<1x8xf32>, vector<1x8xf32>, vector<1x8xf32>, vector<1x8xf32>, vector<1x8xf32>, vector<1x8xf32>, vector<1x8xf32>, vector<1x8xf32>, vector<1x8xf32> -> vector<16x8xf32>
    %1886 = tpu.concatenate %1713, %1719, %1788, %1794, %1800, %1869, %1875, %1881 in 0 : vector<1x8xf32>, vector<1x8xf32>, vector<1x8xf32>, vector<1x8xf32>, vector<1x8xf32>, vector<1x8xf32>, vector<1x8xf32>, vector<1x8xf32> -> vector<8x8xf32>
    %1887 = tpu.concatenate %1882, %1883, %1884, %1885, %1886 in 0 : vector<16x8xf32>, vector<16x8xf32>, vector<16x8xf32>, vector<16x8xf32>, vector<8x8xf32> -> vector<72x8xf32>
    %c0_8 = arith.constant 0 : index
    %c0_9 = arith.constant 0 : index
    %1888 = vector.load %arg7[%c0_8, %c0_9] : memref<72x8xf32, #tpu.memory_space<vmem>>, vector<72x8xf32>
    tpu.vector_store %arg7[%c0_8, %c0_9], %1887 {strides = array<i32>} : memref<72x8xf32, #tpu.memory_space<vmem>>, vector<72x8xf32>,
    %c0_10 = arith.constant 0 : index
    %c0_11 = arith.constant 0 : index
    %1889 = vector.load %arg5[%c0_10, %c0_11] : memref<128x24xf32, #tpu.memory_space<vmem>>, vector<128x24xf32>
    %1890 = tpu.concatenate %7, %41, %122, %203, %284, %365, %446, %527, %608, %689, %770, %851, %932, %1013, %1094, %1175 in 0 : vector<1x8xf32>, vector<1x8xf32>, vector<1x8xf32>, vector<1x8xf32>, vector<1x8xf32>, vector<1x8xf32>, vector<1x8xf32>, vector<1x8xf32>, vector<1x8xf32>, vector<1x8xf32>, vector<1x8xf32>, vector<1x8xf32>, vector<1x8xf32>, vector<1x8xf32>, vector<1x8xf32>, vector<1x8xf32> -> vector<16x8xf32>
    %1891 = tpu.concatenate %1256, %1337, %1418, %1499, %1580, %1661, %1742, %1823 in 0 : vector<1x8xf32>, vector<1x8xf32>, vector<1x8xf32>, vector<1x8xf32>, vector<1x8xf32>, vector<1x8xf32>, vector<1x8xf32>, vector<1x8xf32> -> vector<8x8xf32>
    %1892 = tpu.concatenate %1890, %1891 in 0 : vector<16x8xf32>, vector<8x8xf32> -> vector<24x8xf32>
    %cst_12 = arith.constant dense<0.000000e+00> : vector<128x8xf32>
    %1893 = tpu.matmul %1889, %1892, %cst_12 {dimension_numbers = #tpu.dot_dimension_numbers<[1], [0], [0], [1], [0, 0, 1, 1], [], []>} : vector<128x24xf32>, vector<24x8xf32>, vector<128x8xf32> -> vector<128x8xf32>
    %1894 = tpu.concatenate %8, %46, %127, %208, %289, %370, %451, %532, %613, %694, %775, %856, %937, %1018, %1099, %1180 in 0 : vector<1x8xf32>, vector<1x8xf32>, vector<1x8xf32>, vector<1x8xf32>, vector<1x8xf32>, vector<1x8xf32>, vector<1x8xf32>, vector<1x8xf32>, vector<1x8xf32>, vector<1x8xf32>, vector<1x8xf32>, vector<1x8xf32>, vector<1x8xf32>, vector<1x8xf32>, vector<1x8xf32>, vector<1x8xf32> -> vector<16x8xf32>
    %1895 = tpu.concatenate %1261, %1342, %1423, %1504, %1585, %1666, %1747, %1828 in 0 : vector<1x8xf32>, vector<1x8xf32>, vector<1x8xf32>, vector<1x8xf32>, vector<1x8xf32>, vector<1x8xf32>, vector<1x8xf32>, vector<1x8xf32> -> vector<8x8xf32>
    %1896 = tpu.concatenate %1894, %1895 in 0 : vector<16x8xf32>, vector<8x8xf32> -> vector<24x8xf32>
    %cst_13 = arith.constant dense<0.000000e+00> : vector<128x8xf32>
    %1897 = tpu.matmul %1889, %1896, %cst_13 {dimension_numbers = #tpu.dot_dimension_numbers<[1], [0], [0], [1], [0, 0, 1, 1], [], []>} : vector<128x24xf32>, vector<24x8xf32>, vector<128x8xf32> -> vector<128x8xf32>
    %1898 = tpu.concatenate %9, %51, %132, %213, %294, %375, %456, %537, %618, %699, %780, %861, %942, %1023, %1104, %1185 in 0 : vector<1x8xf32>, vector<1x8xf32>, vector<1x8xf32>, vector<1x8xf32>, vector<1x8xf32>, vector<1x8xf32>, vector<1x8xf32>, vector<1x8xf32>, vector<1x8xf32>, vector<1x8xf32>, vector<1x8xf32>, vector<1x8xf32>, vector<1x8xf32>, vector<1x8xf32>, vector<1x8xf32>, vector<1x8xf32> -> vector<16x8xf32>
    %1899 = tpu.concatenate %1266, %1347, %1428, %1509, %1590, %1671, %1752, %1833 in 0 : vector<1x8xf32>, vector<1x8xf32>, vector<1x8xf32>, vector<1x8xf32>, vector<1x8xf32>, vector<1x8xf32>, vector<1x8xf32>, vector<1x8xf32> -> vector<8x8xf32>
    %1900 = tpu.concatenate %1898, %1899 in 0 : vector<16x8xf32>, vector<8x8xf32> -> vector<24x8xf32>
    %cst_14 = arith.constant dense<0.000000e+00> : vector<128x8xf32>
    %1901 = tpu.matmul %1889, %1900, %cst_14 {dimension_numbers = #tpu.dot_dimension_numbers<[1], [0], [0], [1], [0, 0, 1, 1], [], []>} : vector<128x24xf32>, vector<24x8xf32>, vector<128x8xf32> -> vector<128x8xf32>
    %1902 = vector.extract_strided_slice %5 {offsets = [0, 0], sizes = [1, 8], strides = [1, 1]} : vector<72x8xf32> to vector<1x8xf32>
    %1903 = arith.mulf %7, %1902 : vector<1x8xf32>
    %1904 = vector.extract_strided_slice %5 {offsets = [1, 0], sizes = [1, 8], strides = [1, 1]} : vector<72x8xf32> to vector<1x8xf32>
    %1905 = arith.mulf %8, %1904 : vector<1x8xf32>
    %1906 = arith.addf %1903, %1905 : vector<1x8xf32>
    %1907 = vector.extract_strided_slice %5 {offsets = [2, 0], sizes = [1, 8], strides = [1, 1]} : vector<72x8xf32> to vector<1x8xf32>
    %1908 = arith.mulf %9, %1907 : vector<1x8xf32>
    %1909 = arith.addf %1906, %1908 : vector<1x8xf32>
    %1910 = arith.subf %16, %1909 : vector<1x8xf32>
    %1911 = vector.extract_strided_slice %5 {offsets = [3, 0], sizes = [1, 8], strides = [1, 1]} : vector<72x8xf32> to vector<1x8xf32>
    %1912 = arith.mulf %41, %1911 : vector<1x8xf32>
    %1913 = vector.extract_strided_slice %5 {offsets = [4, 0], sizes = [1, 8], strides = [1, 1]} : vector<72x8xf32> to vector<1x8xf32>
    %1914 = arith.mulf %46, %1913 : vector<1x8xf32>
    %1915 = arith.addf %1912, %1914 : vector<1x8xf32>
    %1916 = vector.extract_strided_slice %5 {offsets = [5, 0], sizes = [1, 8], strides = [1, 1]} : vector<72x8xf32> to vector<1x8xf32>
    %1917 = arith.mulf %51, %1916 : vector<1x8xf32>
    %1918 = arith.addf %1915, %1917 : vector<1x8xf32>
    %1919 = arith.subf %87, %1918 : vector<1x8xf32>
    %1920 = vector.extract_strided_slice %5 {offsets = [6, 0], sizes = [1, 8], strides = [1, 1]} : vector<72x8xf32> to vector<1x8xf32>
    %1921 = arith.mulf %122, %1920 : vector<1x8xf32>
    %1922 = vector.extract_strided_slice %5 {offsets = [7, 0], sizes = [1, 8], strides = [1, 1]} : vector<72x8xf32> to vector<1x8xf32>
    %1923 = arith.mulf %127, %1922 : vector<1x8xf32>
    %1924 = arith.addf %1921, %1923 : vector<1x8xf32>
    %1925 = vector.extract_strided_slice %5 {offsets = [8, 0], sizes = [1, 8], strides = [1, 1]} : vector<72x8xf32> to vector<1x8xf32>
    %1926 = arith.mulf %132, %1925 : vector<1x8xf32>
    %1927 = arith.addf %1924, %1926 : vector<1x8xf32>
    %1928 = arith.subf %168, %1927 : vector<1x8xf32>
    %1929 = vector.extract_strided_slice %5 {offsets = [9, 0], sizes = [1, 8], strides = [1, 1]} : vector<72x8xf32> to vector<1x8xf32>
    %1930 = arith.mulf %203, %1929 : vector<1x8xf32>
    %1931 = vector.extract_strided_slice %5 {offsets = [10, 0], sizes = [1, 8], strides = [1, 1]} : vector<72x8xf32> to vector<1x8xf32>
    %1932 = arith.mulf %208, %1931 : vector<1x8xf32>
    %1933 = arith.addf %1930, %1932 : vector<1x8xf32>
    %1934 = vector.extract_strided_slice %5 {offsets = [11, 0], sizes = [1, 8], strides = [1, 1]} : vector<72x8xf32> to vector<1x8xf32>
    %1935 = arith.mulf %213, %1934 : vector<1x8xf32>
    %1936 = arith.addf %1933, %1935 : vector<1x8xf32>
    %1937 = arith.subf %249, %1936 : vector<1x8xf32>
    %1938 = vector.extract_strided_slice %5 {offsets = [12, 0], sizes = [1, 8], strides = [1, 1]} : vector<72x8xf32> to vector<1x8xf32>
    %1939 = arith.mulf %284, %1938 : vector<1x8xf32>
    %1940 = vector.extract_strided_slice %5 {offsets = [13, 0], sizes = [1, 8], strides = [1, 1]} : vector<72x8xf32> to vector<1x8xf32>
    %1941 = arith.mulf %289, %1940 : vector<1x8xf32>
    %1942 = arith.addf %1939, %1941 : vector<1x8xf32>
    %1943 = vector.extract_strided_slice %5 {offsets = [14, 0], sizes = [1, 8], strides = [1, 1]} : vector<72x8xf32> to vector<1x8xf32>
    %1944 = arith.mulf %294, %1943 : vector<1x8xf32>
    %1945 = arith.addf %1942, %1944 : vector<1x8xf32>
    %1946 = arith.subf %330, %1945 : vector<1x8xf32>
    %1947 = vector.extract_strided_slice %5 {offsets = [15, 0], sizes = [1, 8], strides = [1, 1]} : vector<72x8xf32> to vector<1x8xf32>
    %1948 = arith.mulf %365, %1947 : vector<1x8xf32>
    %1949 = vector.extract_strided_slice %5 {offsets = [16, 0], sizes = [1, 8], strides = [1, 1]} : vector<72x8xf32> to vector<1x8xf32>
    %1950 = arith.mulf %370, %1949 : vector<1x8xf32>
    %1951 = arith.addf %1948, %1950 : vector<1x8xf32>
    %1952 = vector.extract_strided_slice %5 {offsets = [17, 0], sizes = [1, 8], strides = [1, 1]} : vector<72x8xf32> to vector<1x8xf32>
    %1953 = arith.mulf %375, %1952 : vector<1x8xf32>
    %1954 = arith.addf %1951, %1953 : vector<1x8xf32>
    %1955 = arith.subf %411, %1954 : vector<1x8xf32>
    %1956 = vector.extract_strided_slice %5 {offsets = [18, 0], sizes = [1, 8], strides = [1, 1]} : vector<72x8xf32> to vector<1x8xf32>
    %1957 = arith.mulf %446, %1956 : vector<1x8xf32>
    %1958 = vector.extract_strided_slice %5 {offsets = [19, 0], sizes = [1, 8], strides = [1, 1]} : vector<72x8xf32> to vector<1x8xf32>
    %1959 = arith.mulf %451, %1958 : vector<1x8xf32>
    %1960 = arith.addf %1957, %1959 : vector<1x8xf32>
    %1961 = vector.extract_strided_slice %5 {offsets = [20, 0], sizes = [1, 8], strides = [1, 1]} : vector<72x8xf32> to vector<1x8xf32>
    %1962 = arith.mulf %456, %1961 : vector<1x8xf32>
    %1963 = arith.addf %1960, %1962 : vector<1x8xf32>
    %1964 = arith.subf %492, %1963 : vector<1x8xf32>
    %1965 = vector.extract_strided_slice %5 {offsets = [21, 0], sizes = [1, 8], strides = [1, 1]} : vector<72x8xf32> to vector<1x8xf32>
    %1966 = arith.mulf %527, %1965 : vector<1x8xf32>
    %1967 = vector.extract_strided_slice %5 {offsets = [22, 0], sizes = [1, 8], strides = [1, 1]} : vector<72x8xf32> to vector<1x8xf32>
    %1968 = arith.mulf %532, %1967 : vector<1x8xf32>
    %1969 = arith.addf %1966, %1968 : vector<1x8xf32>
    %1970 = vector.extract_strided_slice %5 {offsets = [23, 0], sizes = [1, 8], strides = [1, 1]} : vector<72x8xf32> to vector<1x8xf32>
    %1971 = arith.mulf %537, %1970 : vector<1x8xf32>
    %1972 = arith.addf %1969, %1971 : vector<1x8xf32>
    %1973 = arith.subf %573, %1972 : vector<1x8xf32>
    %1974 = vector.extract_strided_slice %5 {offsets = [24, 0], sizes = [1, 8], strides = [1, 1]} : vector<72x8xf32> to vector<1x8xf32>
    %1975 = arith.mulf %608, %1974 : vector<1x8xf32>
    %1976 = vector.extract_strided_slice %5 {offsets = [25, 0], sizes = [1, 8], strides = [1, 1]} : vector<72x8xf32> to vector<1x8xf32>
    %1977 = arith.mulf %613, %1976 : vector<1x8xf32>
    %1978 = arith.addf %1975, %1977 : vector<1x8xf32>
    %1979 = vector.extract_strided_slice %5 {offsets = [26, 0], sizes = [1, 8], strides = [1, 1]} : vector<72x8xf32> to vector<1x8xf32>
    %1980 = arith.mulf %618, %1979 : vector<1x8xf32>
    %1981 = arith.addf %1978, %1980 : vector<1x8xf32>
    %1982 = arith.subf %654, %1981 : vector<1x8xf32>
    %1983 = vector.extract_strided_slice %5 {offsets = [27, 0], sizes = [1, 8], strides = [1, 1]} : vector<72x8xf32> to vector<1x8xf32>
    %1984 = arith.mulf %689, %1983 : vector<1x8xf32>
    %1985 = vector.extract_strided_slice %5 {offsets = [28, 0], sizes = [1, 8], strides = [1, 1]} : vector<72x8xf32> to vector<1x8xf32>
    %1986 = arith.mulf %694, %1985 : vector<1x8xf32>
    %1987 = arith.addf %1984, %1986 : vector<1x8xf32>
    %1988 = vector.extract_strided_slice %5 {offsets = [29, 0], sizes = [1, 8], strides = [1, 1]} : vector<72x8xf32> to vector<1x8xf32>
    %1989 = arith.mulf %699, %1988 : vector<1x8xf32>
    %1990 = arith.addf %1987, %1989 : vector<1x8xf32>
    %1991 = arith.subf %735, %1990 : vector<1x8xf32>
    %1992 = vector.extract_strided_slice %5 {offsets = [30, 0], sizes = [1, 8], strides = [1, 1]} : vector<72x8xf32> to vector<1x8xf32>
    %1993 = arith.mulf %770, %1992 : vector<1x8xf32>
    %1994 = vector.extract_strided_slice %5 {offsets = [31, 0], sizes = [1, 8], strides = [1, 1]} : vector<72x8xf32> to vector<1x8xf32>
    %1995 = arith.mulf %775, %1994 : vector<1x8xf32>
    %1996 = arith.addf %1993, %1995 : vector<1x8xf32>
    %1997 = vector.extract_strided_slice %5 {offsets = [32, 0], sizes = [1, 8], strides = [1, 1]} : vector<72x8xf32> to vector<1x8xf32>
    %1998 = arith.mulf %780, %1997 : vector<1x8xf32>
    %1999 = arith.addf %1996, %1998 : vector<1x8xf32>
    %2000 = arith.subf %816, %1999 : vector<1x8xf32>
    %2001 = vector.extract_strided_slice %5 {offsets = [33, 0], sizes = [1, 8], strides = [1, 1]} : vector<72x8xf32> to vector<1x8xf32>
    %2002 = arith.mulf %851, %2001 : vector<1x8xf32>
    %2003 = vector.extract_strided_slice %5 {offsets = [34, 0], sizes = [1, 8], strides = [1, 1]} : vector<72x8xf32> to vector<1x8xf32>
    %2004 = arith.mulf %856, %2003 : vector<1x8xf32>
    %2005 = arith.addf %2002, %2004 : vector<1x8xf32>
    %2006 = vector.extract_strided_slice %5 {offsets = [35, 0], sizes = [1, 8], strides = [1, 1]} : vector<72x8xf32> to vector<1x8xf32>
    %2007 = arith.mulf %861, %2006 : vector<1x8xf32>
    %2008 = arith.addf %2005, %2007 : vector<1x8xf32>
    %2009 = arith.subf %897, %2008 : vector<1x8xf32>
    %2010 = vector.extract_strided_slice %5 {offsets = [36, 0], sizes = [1, 8], strides = [1, 1]} : vector<72x8xf32> to vector<1x8xf32>
    %2011 = arith.mulf %932, %2010 : vector<1x8xf32>
    %2012 = vector.extract_strided_slice %5 {offsets = [37, 0], sizes = [1, 8], strides = [1, 1]} : vector<72x8xf32> to vector<1x8xf32>
    %2013 = arith.mulf %937, %2012 : vector<1x8xf32>
    %2014 = arith.addf %2011, %2013 : vector<1x8xf32>
    %2015 = vector.extract_strided_slice %5 {offsets = [38, 0], sizes = [1, 8], strides = [1, 1]} : vector<72x8xf32> to vector<1x8xf32>
    %2016 = arith.mulf %942, %2015 : vector<1x8xf32>
    %2017 = arith.addf %2014, %2016 : vector<1x8xf32>
    %2018 = arith.subf %978, %2017 : vector<1x8xf32>
    %2019 = vector.extract_strided_slice %5 {offsets = [39, 0], sizes = [1, 8], strides = [1, 1]} : vector<72x8xf32> to vector<1x8xf32>
    %2020 = arith.mulf %1013, %2019 : vector<1x8xf32>
    %2021 = vector.extract_strided_slice %5 {offsets = [40, 0], sizes = [1, 8], strides = [1, 1]} : vector<72x8xf32> to vector<1x8xf32>
    %2022 = arith.mulf %1018, %2021 : vector<1x8xf32>
    %2023 = arith.addf %2020, %2022 : vector<1x8xf32>
    %2024 = vector.extract_strided_slice %5 {offsets = [41, 0], sizes = [1, 8], strides = [1, 1]} : vector<72x8xf32> to vector<1x8xf32>
    %2025 = arith.mulf %1023, %2024 : vector<1x8xf32>
    %2026 = arith.addf %2023, %2025 : vector<1x8xf32>
    %2027 = arith.subf %1059, %2026 : vector<1x8xf32>
    %2028 = vector.extract_strided_slice %5 {offsets = [42, 0], sizes = [1, 8], strides = [1, 1]} : vector<72x8xf32> to vector<1x8xf32>
    %2029 = arith.mulf %1094, %2028 : vector<1x8xf32>
    %2030 = vector.extract_strided_slice %5 {offsets = [43, 0], sizes = [1, 8], strides = [1, 1]} : vector<72x8xf32> to vector<1x8xf32>
    %2031 = arith.mulf %1099, %2030 : vector<1x8xf32>
    %2032 = arith.addf %2029, %2031 : vector<1x8xf32>
    %2033 = vector.extract_strided_slice %5 {offsets = [44, 0], sizes = [1, 8], strides = [1, 1]} : vector<72x8xf32> to vector<1x8xf32>
    %2034 = arith.mulf %1104, %2033 : vector<1x8xf32>
    %2035 = arith.addf %2032, %2034 : vector<1x8xf32>
    %2036 = arith.subf %1140, %2035 : vector<1x8xf32>
    %2037 = vector.extract_strided_slice %5 {offsets = [45, 0], sizes = [1, 8], strides = [1, 1]} : vector<72x8xf32> to vector<1x8xf32>
    %2038 = arith.mulf %1175, %2037 : vector<1x8xf32>
    %2039 = vector.extract_strided_slice %5 {offsets = [46, 0], sizes = [1, 8], strides = [1, 1]} : vector<72x8xf32> to vector<1x8xf32>
    %2040 = arith.mulf %1180, %2039 : vector<1x8xf32>
    %2041 = arith.addf %2038, %2040 : vector<1x8xf32>
    %2042 = vector.extract_strided_slice %5 {offsets = [47, 0], sizes = [1, 8], strides = [1, 1]} : vector<72x8xf32> to vector<1x8xf32>
    %2043 = arith.mulf %1185, %2042 : vector<1x8xf32>
    %2044 = arith.addf %2041, %2043 : vector<1x8xf32>
    %2045 = arith.subf %1221, %2044 : vector<1x8xf32>
    %2046 = vector.extract_strided_slice %5 {offsets = [48, 0], sizes = [1, 8], strides = [1, 1]} : vector<72x8xf32> to vector<1x8xf32>
    %2047 = arith.mulf %1256, %2046 : vector<1x8xf32>
    %2048 = vector.extract_strided_slice %5 {offsets = [49, 0], sizes = [1, 8], strides = [1, 1]} : vector<72x8xf32> to vector<1x8xf32>
    %2049 = arith.mulf %1261, %2048 : vector<1x8xf32>
    %2050 = arith.addf %2047, %2049 : vector<1x8xf32>
    %2051 = vector.extract_strided_slice %5 {offsets = [50, 0], sizes = [1, 8], strides = [1, 1]} : vector<72x8xf32> to vector<1x8xf32>
    %2052 = arith.mulf %1266, %2051 : vector<1x8xf32>
    %2053 = arith.addf %2050, %2052 : vector<1x8xf32>
    %2054 = arith.subf %1302, %2053 : vector<1x8xf32>
    %2055 = vector.extract_strided_slice %5 {offsets = [51, 0], sizes = [1, 8], strides = [1, 1]} : vector<72x8xf32> to vector<1x8xf32>
    %2056 = arith.mulf %1337, %2055 : vector<1x8xf32>
    %2057 = vector.extract_strided_slice %5 {offsets = [52, 0], sizes = [1, 8], strides = [1, 1]} : vector<72x8xf32> to vector<1x8xf32>
    %2058 = arith.mulf %1342, %2057 : vector<1x8xf32>
    %2059 = arith.addf %2056, %2058 : vector<1x8xf32>
    %2060 = vector.extract_strided_slice %5 {offsets = [53, 0], sizes = [1, 8], strides = [1, 1]} : vector<72x8xf32> to vector<1x8xf32>
    %2061 = arith.mulf %1347, %2060 : vector<1x8xf32>
    %2062 = arith.addf %2059, %2061 : vector<1x8xf32>
    %2063 = arith.subf %1383, %2062 : vector<1x8xf32>
    %2064 = vector.extract_strided_slice %5 {offsets = [54, 0], sizes = [1, 8], strides = [1, 1]} : vector<72x8xf32> to vector<1x8xf32>
    %2065 = arith.mulf %1418, %2064 : vector<1x8xf32>
    %2066 = vector.extract_strided_slice %5 {offsets = [55, 0], sizes = [1, 8], strides = [1, 1]} : vector<72x8xf32> to vector<1x8xf32>
    %2067 = arith.mulf %1423, %2066 : vector<1x8xf32>
    %2068 = arith.addf %2065, %2067 : vector<1x8xf32>
    %2069 = vector.extract_strided_slice %5 {offsets = [56, 0], sizes = [1, 8], strides = [1, 1]} : vector<72x8xf32> to vector<1x8xf32>
    %2070 = arith.mulf %1428, %2069 : vector<1x8xf32>
    %2071 = arith.addf %2068, %2070 : vector<1x8xf32>
    %2072 = arith.subf %1464, %2071 : vector<1x8xf32>
    %2073 = vector.extract_strided_slice %5 {offsets = [57, 0], sizes = [1, 8], strides = [1, 1]} : vector<72x8xf32> to vector<1x8xf32>
    %2074 = arith.mulf %1499, %2073 : vector<1x8xf32>
    %2075 = vector.extract_strided_slice %5 {offsets = [58, 0], sizes = [1, 8], strides = [1, 1]} : vector<72x8xf32> to vector<1x8xf32>
    %2076 = arith.mulf %1504, %2075 : vector<1x8xf32>
    %2077 = arith.addf %2074, %2076 : vector<1x8xf32>
    %2078 = vector.extract_strided_slice %5 {offsets = [59, 0], sizes = [1, 8], strides = [1, 1]} : vector<72x8xf32> to vector<1x8xf32>
    %2079 = arith.mulf %1509, %2078 : vector<1x8xf32>
    %2080 = arith.addf %2077, %2079 : vector<1x8xf32>
    %2081 = arith.subf %1545, %2080 : vector<1x8xf32>
    %2082 = vector.extract_strided_slice %5 {offsets = [60, 0], sizes = [1, 8], strides = [1, 1]} : vector<72x8xf32> to vector<1x8xf32>
    %2083 = arith.mulf %1580, %2082 : vector<1x8xf32>
    %2084 = vector.extract_strided_slice %5 {offsets = [61, 0], sizes = [1, 8], strides = [1, 1]} : vector<72x8xf32> to vector<1x8xf32>
    %2085 = arith.mulf %1585, %2084 : vector<1x8xf32>
    %2086 = arith.addf %2083, %2085 : vector<1x8xf32>
    %2087 = vector.extract_strided_slice %5 {offsets = [62, 0], sizes = [1, 8], strides = [1, 1]} : vector<72x8xf32> to vector<1x8xf32>
    %2088 = arith.mulf %1590, %2087 : vector<1x8xf32>
    %2089 = arith.addf %2086, %2088 : vector<1x8xf32>
    %2090 = arith.subf %1626, %2089 : vector<1x8xf32>
    %2091 = vector.extract_strided_slice %5 {offsets = [63, 0], sizes = [1, 8], strides = [1, 1]} : vector<72x8xf32> to vector<1x8xf32>
    %2092 = arith.mulf %1661, %2091 : vector<1x8xf32>
    %2093 = vector.extract_strided_slice %5 {offsets = [64, 0], sizes = [1, 8], strides = [1, 1]} : vector<72x8xf32> to vector<1x8xf32>
    %2094 = arith.mulf %1666, %2093 : vector<1x8xf32>
    %2095 = arith.addf %2092, %2094 : vector<1x8xf32>
    %2096 = vector.extract_strided_slice %5 {offsets = [65, 0], sizes = [1, 8], strides = [1, 1]} : vector<72x8xf32> to vector<1x8xf32>
    %2097 = arith.mulf %1671, %2096 : vector<1x8xf32>
    %2098 = arith.addf %2095, %2097 : vector<1x8xf32>
    %2099 = arith.subf %1707, %2098 : vector<1x8xf32>
    %2100 = vector.extract_strided_slice %5 {offsets = [66, 0], sizes = [1, 8], strides = [1, 1]} : vector<72x8xf32> to vector<1x8xf32>
    %2101 = arith.mulf %1742, %2100 : vector<1x8xf32>
    %2102 = vector.extract_strided_slice %5 {offsets = [67, 0], sizes = [1, 8], strides = [1, 1]} : vector<72x8xf32> to vector<1x8xf32>
    %2103 = arith.mulf %1747, %2102 : vector<1x8xf32>
    %2104 = arith.addf %2101, %2103 : vector<1x8xf32>
    %2105 = vector.extract_strided_slice %5 {offsets = [68, 0], sizes = [1, 8], strides = [1, 1]} : vector<72x8xf32> to vector<1x8xf32>
    %2106 = arith.mulf %1752, %2105 : vector<1x8xf32>
    %2107 = arith.addf %2104, %2106 : vector<1x8xf32>
    %2108 = arith.subf %1788, %2107 : vector<1x8xf32>
    %2109 = vector.extract_strided_slice %5 {offsets = [69, 0], sizes = [1, 8], strides = [1, 1]} : vector<72x8xf32> to vector<1x8xf32>
    %2110 = arith.mulf %1823, %2109 : vector<1x8xf32>
    %2111 = vector.extract_strided_slice %5 {offsets = [70, 0], sizes = [1, 8], strides = [1, 1]} : vector<72x8xf32> to vector<1x8xf32>
    %2112 = arith.mulf %1828, %2111 : vector<1x8xf32>
    %2113 = arith.addf %2110, %2112 : vector<1x8xf32>
    %2114 = vector.extract_strided_slice %5 {offsets = [71, 0], sizes = [1, 8], strides = [1, 1]} : vector<72x8xf32> to vector<1x8xf32>
    %2115 = arith.mulf %1833, %2114 : vector<1x8xf32>
    %2116 = arith.addf %2113, %2115 : vector<1x8xf32>
    %2117 = arith.subf %1869, %2116 : vector<1x8xf32>
    %2118 = tpu.concatenate %1910, %1919, %1928, %1937, %1946, %1955, %1964, %1973, %1982, %1991, %2000, %2009, %2018, %2027, %2036, %2045 in 0 : vector<1x8xf32>, vector<1x8xf32>, vector<1x8xf32>, vector<1x8xf32>, vector<1x8xf32>, vector<1x8xf32>, vector<1x8xf32>, vector<1x8xf32>, vector<1x8xf32>, vector<1x8xf32>, vector<1x8xf32>, vector<1x8xf32>, vector<1x8xf32>, vector<1x8xf32>, vector<1x8xf32>, vector<1x8xf32> -> vector<16x8xf32>
    %2119 = tpu.concatenate %2054, %2063, %2072, %2081, %2090, %2099, %2108, %2117 in 0 : vector<1x8xf32>, vector<1x8xf32>, vector<1x8xf32>, vector<1x8xf32>, vector<1x8xf32>, vector<1x8xf32>, vector<1x8xf32>, vector<1x8xf32> -> vector<8x8xf32>
    %2120 = tpu.concatenate %2118, %2119 in 0 : vector<16x8xf32>, vector<8x8xf32> -> vector<24x8xf32>
    %cst_15 = arith.constant dense<0.000000e+00> : vector<128x8xf32>
    %2121 = tpu.matmul %1889, %2120, %cst_15 {dimension_numbers = #tpu.dot_dimension_numbers<[1], [0], [0], [1], [0, 0, 1, 1], [], []>} : vector<128x24xf32>, vector<24x8xf32>, vector<128x8xf32> -> vector<128x8xf32>
    %2122 = tpu.concatenate %10, %56, %137, %218, %299, %380, %461, %542, %623, %704, %785, %866, %947, %1028, %1109, %1190 in 0 : vector<1x8xf32>, vector<1x8xf32>, vector<1x8xf32>, vector<1x8xf32>, vector<1x8xf32>, vector<1x8xf32>, vector<1x8xf32>, vector<1x8xf32>, vector<1x8xf32>, vector<1x8xf32>, vector<1x8xf32>, vector<1x8xf32>, vector<1x8xf32>, vector<1x8xf32>, vector<1x8xf32>, vector<1x8xf32> -> vector<16x8xf32>
    %2123 = tpu.concatenate %1271, %1352, %1433, %1514, %1595, %1676, %1757, %1838 in 0 : vector<1x8xf32>, vector<1x8xf32>, vector<1x8xf32>, vector<1x8xf32>, vector<1x8xf32>, vector<1x8xf32>, vector<1x8xf32>, vector<1x8xf32> -> vector<8x8xf32>
    %2124 = tpu.concatenate %2122, %2123 in 0 : vector<16x8xf32>, vector<8x8xf32> -> vector<24x8xf32>
    %cst_16 = arith.constant dense<0.000000e+00> : vector<128x8xf32>
    %2125 = tpu.matmul %1889, %2124, %cst_16 {dimension_numbers = #tpu.dot_dimension_numbers<[1], [0], [0], [1], [0, 0, 1, 1], [], []>} : vector<128x24xf32>, vector<24x8xf32>, vector<128x8xf32> -> vector<128x8xf32>
    %2126 = tpu.concatenate %11, %61, %142, %223, %304, %385, %466, %547, %628, %709, %790, %871, %952, %1033, %1114, %1195 in 0 : vector<1x8xf32>, vector<1x8xf32>, vector<1x8xf32>, vector<1x8xf32>, vector<1x8xf32>, vector<1x8xf32>, vector<1x8xf32>, vector<1x8xf32>, vector<1x8xf32>, vector<1x8xf32>, vector<1x8xf32>, vector<1x8xf32>, vector<1x8xf32>, vector<1x8xf32>, vector<1x8xf32>, vector<1x8xf32> -> vector<16x8xf32>
    %2127 = tpu.concatenate %1276, %1357, %1438, %1519, %1600, %1681, %1762, %1843 in 0 : vector<1x8xf32>, vector<1x8xf32>, vector<1x8xf32>, vector<1x8xf32>, vector<1x8xf32>, vector<1x8xf32>, vector<1x8xf32>, vector<1x8xf32> -> vector<8x8xf32>
    %2128 = tpu.concatenate %2126, %2127 in 0 : vector<16x8xf32>, vector<8x8xf32> -> vector<24x8xf32>
    %cst_17 = arith.constant dense<0.000000e+00> : vector<128x8xf32>
    %2129 = tpu.matmul %1889, %2128, %cst_17 {dimension_numbers = #tpu.dot_dimension_numbers<[1], [0], [0], [1], [0, 0, 1, 1], [], []>} : vector<128x24xf32>, vector<24x8xf32>, vector<128x8xf32> -> vector<128x8xf32>
    %2130 = tpu.concatenate %12, %66, %147, %228, %309, %390, %471, %552, %633, %714, %795, %876, %957, %1038, %1119, %1200 in 0 : vector<1x8xf32>, vector<1x8xf32>, vector<1x8xf32>, vector<1x8xf32>, vector<1x8xf32>, vector<1x8xf32>, vector<1x8xf32>, vector<1x8xf32>, vector<1x8xf32>, vector<1x8xf32>, vector<1x8xf32>, vector<1x8xf32>, vector<1x8xf32>, vector<1x8xf32>, vector<1x8xf32>, vector<1x8xf32> -> vector<16x8xf32>
    %2131 = tpu.concatenate %1281, %1362, %1443, %1524, %1605, %1686, %1767, %1848 in 0 : vector<1x8xf32>, vector<1x8xf32>, vector<1x8xf32>, vector<1x8xf32>, vector<1x8xf32>, vector<1x8xf32>, vector<1x8xf32>, vector<1x8xf32> -> vector<8x8xf32>
    %2132 = tpu.concatenate %2130, %2131 in 0 : vector<16x8xf32>, vector<8x8xf32> -> vector<24x8xf32>
    %cst_18 = arith.constant dense<0.000000e+00> : vector<128x8xf32>
    %2133 = tpu.matmul %1889, %2132, %cst_18 {dimension_numbers = #tpu.dot_dimension_numbers<[1], [0], [0], [1], [0, 0, 1, 1], [], []>} : vector<128x24xf32>, vector<24x8xf32>, vector<128x8xf32> -> vector<128x8xf32>
    %2134 = vector.extract_strided_slice %5 {offsets = [0, 0], sizes = [1, 8], strides = [1, 1]} : vector<72x8xf32> to vector<1x8xf32>
    %2135 = arith.mulf %10, %2134 : vector<1x8xf32>
    %2136 = vector.extract_strided_slice %5 {offsets = [1, 0], sizes = [1, 8], strides = [1, 1]} : vector<72x8xf32> to vector<1x8xf32>
    %2137 = arith.mulf %11, %2136 : vector<1x8xf32>
    %2138 = arith.addf %2135, %2137 : vector<1x8xf32>
    %2139 = vector.extract_strided_slice %5 {offsets = [2, 0], sizes = [1, 8], strides = [1, 1]} : vector<72x8xf32> to vector<1x8xf32>
    %2140 = arith.mulf %12, %2139 : vector<1x8xf32>
    %2141 = arith.addf %2138, %2140 : vector<1x8xf32>
    %2142 = arith.subf %17, %2141 : vector<1x8xf32>
    %2143 = vector.extract_strided_slice %5 {offsets = [3, 0], sizes = [1, 8], strides = [1, 1]} : vector<72x8xf32> to vector<1x8xf32>
    %2144 = arith.mulf %56, %2143 : vector<1x8xf32>
    %2145 = vector.extract_strided_slice %5 {offsets = [4, 0], sizes = [1, 8], strides = [1, 1]} : vector<72x8xf32> to vector<1x8xf32>
    %2146 = arith.mulf %61, %2145 : vector<1x8xf32>
    %2147 = arith.addf %2144, %2146 : vector<1x8xf32>
    %2148 = vector.extract_strided_slice %5 {offsets = [5, 0], sizes = [1, 8], strides = [1, 1]} : vector<72x8xf32> to vector<1x8xf32>
    %2149 = arith.mulf %66, %2148 : vector<1x8xf32>
    %2150 = arith.addf %2147, %2149 : vector<1x8xf32>
    %2151 = arith.subf %93, %2150 : vector<1x8xf32>
    %2152 = vector.extract_strided_slice %5 {offsets = [6, 0], sizes = [1, 8], strides = [1, 1]} : vector<72x8xf32> to vector<1x8xf32>
    %2153 = arith.mulf %137, %2152 : vector<1x8xf32>
    %2154 = vector.extract_strided_slice %5 {offsets = [7, 0], sizes = [1, 8], strides = [1, 1]} : vector<72x8xf32> to vector<1x8xf32>
    %2155 = arith.mulf %142, %2154 : vector<1x8xf32>
    %2156 = arith.addf %2153, %2155 : vector<1x8xf32>
    %2157 = vector.extract_strided_slice %5 {offsets = [8, 0], sizes = [1, 8], strides = [1, 1]} : vector<72x8xf32> to vector<1x8xf32>
    %2158 = arith.mulf %147, %2157 : vector<1x8xf32>
    %2159 = arith.addf %2156, %2158 : vector<1x8xf32>
    %2160 = arith.subf %174, %2159 : vector<1x8xf32>
    %2161 = vector.extract_strided_slice %5 {offsets = [9, 0], sizes = [1, 8], strides = [1, 1]} : vector<72x8xf32> to vector<1x8xf32>
    %2162 = arith.mulf %218, %2161 : vector<1x8xf32>
    %2163 = vector.extract_strided_slice %5 {offsets = [10, 0], sizes = [1, 8], strides = [1, 1]} : vector<72x8xf32> to vector<1x8xf32>
    %2164 = arith.mulf %223, %2163 : vector<1x8xf32>
    %2165 = arith.addf %2162, %2164 : vector<1x8xf32>
    %2166 = vector.extract_strided_slice %5 {offsets = [11, 0], sizes = [1, 8], strides = [1, 1]} : vector<72x8xf32> to vector<1x8xf32>
    %2167 = arith.mulf %228, %2166 : vector<1x8xf32>
    %2168 = arith.addf %2165, %2167 : vector<1x8xf32>
    %2169 = arith.subf %255, %2168 : vector<1x8xf32>
    %2170 = vector.extract_strided_slice %5 {offsets = [12, 0], sizes = [1, 8], strides = [1, 1]} : vector<72x8xf32> to vector<1x8xf32>
    %2171 = arith.mulf %299, %2170 : vector<1x8xf32>
    %2172 = vector.extract_strided_slice %5 {offsets = [13, 0], sizes = [1, 8], strides = [1, 1]} : vector<72x8xf32> to vector<1x8xf32>
    %2173 = arith.mulf %304, %2172 : vector<1x8xf32>
    %2174 = arith.addf %2171, %2173 : vector<1x8xf32>
    %2175 = vector.extract_strided_slice %5 {offsets = [14, 0], sizes = [1, 8], strides = [1, 1]} : vector<72x8xf32> to vector<1x8xf32>
    %2176 = arith.mulf %309, %2175 : vector<1x8xf32>
    %2177 = arith.addf %2174, %2176 : vector<1x8xf32>
    %2178 = arith.subf %336, %2177 : vector<1x8xf32>
    %2179 = vector.extract_strided_slice %5 {offsets = [15, 0], sizes = [1, 8], strides = [1, 1]} : vector<72x8xf32> to vector<1x8xf32>
    %2180 = arith.mulf %380, %2179 : vector<1x8xf32>
    %2181 = vector.extract_strided_slice %5 {offsets = [16, 0], sizes = [1, 8], strides = [1, 1]} : vector<72x8xf32> to vector<1x8xf32>
    %2182 = arith.mulf %385, %2181 : vector<1x8xf32>
    %2183 = arith.addf %2180, %2182 : vector<1x8xf32>
    %2184 = vector.extract_strided_slice %5 {offsets = [17, 0], sizes = [1, 8], strides = [1, 1]} : vector<72x8xf32> to vector<1x8xf32>
    %2185 = arith.mulf %390, %2184 : vector<1x8xf32>
    %2186 = arith.addf %2183, %2185 : vector<1x8xf32>
    %2187 = arith.subf %417, %2186 : vector<1x8xf32>
    %2188 = vector.extract_strided_slice %5 {offsets = [18, 0], sizes = [1, 8], strides = [1, 1]} : vector<72x8xf32> to vector<1x8xf32>
    %2189 = arith.mulf %461, %2188 : vector<1x8xf32>
    %2190 = vector.extract_strided_slice %5 {offsets = [19, 0], sizes = [1, 8], strides = [1, 1]} : vector<72x8xf32> to vector<1x8xf32>
    %2191 = arith.mulf %466, %2190 : vector<1x8xf32>
    %2192 = arith.addf %2189, %2191 : vector<1x8xf32>
    %2193 = vector.extract_strided_slice %5 {offsets = [20, 0], sizes = [1, 8], strides = [1, 1]} : vector<72x8xf32> to vector<1x8xf32>
    %2194 = arith.mulf %471, %2193 : vector<1x8xf32>
    %2195 = arith.addf %2192, %2194 : vector<1x8xf32>
    %2196 = arith.subf %498, %2195 : vector<1x8xf32>
    %2197 = vector.extract_strided_slice %5 {offsets = [21, 0], sizes = [1, 8], strides = [1, 1]} : vector<72x8xf32> to vector<1x8xf32>
    %2198 = arith.mulf %542, %2197 : vector<1x8xf32>
    %2199 = vector.extract_strided_slice %5 {offsets = [22, 0], sizes = [1, 8], strides = [1, 1]} : vector<72x8xf32> to vector<1x8xf32>
    %2200 = arith.mulf %547, %2199 : vector<1x8xf32>
    %2201 = arith.addf %2198, %2200 : vector<1x8xf32>
    %2202 = vector.extract_strided_slice %5 {offsets = [23, 0], sizes = [1, 8], strides = [1, 1]} : vector<72x8xf32> to vector<1x8xf32>
    %2203 = arith.mulf %552, %2202 : vector<1x8xf32>
    %2204 = arith.addf %2201, %2203 : vector<1x8xf32>
    %2205 = arith.subf %579, %2204 : vector<1x8xf32>
    %2206 = vector.extract_strided_slice %5 {offsets = [24, 0], sizes = [1, 8], strides = [1, 1]} : vector<72x8xf32> to vector<1x8xf32>
    %2207 = arith.mulf %623, %2206 : vector<1x8xf32>
    %2208 = vector.extract_strided_slice %5 {offsets = [25, 0], sizes = [1, 8], strides = [1, 1]} : vector<72x8xf32> to vector<1x8xf32>
    %2209 = arith.mulf %628, %2208 : vector<1x8xf32>
    %2210 = arith.addf %2207, %2209 : vector<1x8xf32>
    %2211 = vector.extract_strided_slice %5 {offsets = [26, 0], sizes = [1, 8], strides = [1, 1]} : vector<72x8xf32> to vector<1x8xf32>
    %2212 = arith.mulf %633, %2211 : vector<1x8xf32>
    %2213 = arith.addf %2210, %2212 : vector<1x8xf32>
    %2214 = arith.subf %660, %2213 : vector<1x8xf32>
    %2215 = vector.extract_strided_slice %5 {offsets = [27, 0], sizes = [1, 8], strides = [1, 1]} : vector<72x8xf32> to vector<1x8xf32>
    %2216 = arith.mulf %704, %2215 : vector<1x8xf32>
    %2217 = vector.extract_strided_slice %5 {offsets = [28, 0], sizes = [1, 8], strides = [1, 1]} : vector<72x8xf32> to vector<1x8xf32>
    %2218 = arith.mulf %709, %2217 : vector<1x8xf32>
    %2219 = arith.addf %2216, %2218 : vector<1x8xf32>
    %2220 = vector.extract_strided_slice %5 {offsets = [29, 0], sizes = [1, 8], strides = [1, 1]} : vector<72x8xf32> to vector<1x8xf32>
    %2221 = arith.mulf %714, %2220 : vector<1x8xf32>
    %2222 = arith.addf %2219, %2221 : vector<1x8xf32>
    %2223 = arith.subf %741, %2222 : vector<1x8xf32>
    %2224 = vector.extract_strided_slice %5 {offsets = [30, 0], sizes = [1, 8], strides = [1, 1]} : vector<72x8xf32> to vector<1x8xf32>
    %2225 = arith.mulf %785, %2224 : vector<1x8xf32>
    %2226 = vector.extract_strided_slice %5 {offsets = [31, 0], sizes = [1, 8], strides = [1, 1]} : vector<72x8xf32> to vector<1x8xf32>
    %2227 = arith.mulf %790, %2226 : vector<1x8xf32>
    %2228 = arith.addf %2225, %2227 : vector<1x8xf32>
    %2229 = vector.extract_strided_slice %5 {offsets = [32, 0], sizes = [1, 8], strides = [1, 1]} : vector<72x8xf32> to vector<1x8xf32>
    %2230 = arith.mulf %795, %2229 : vector<1x8xf32>
    %2231 = arith.addf %2228, %2230 : vector<1x8xf32>
    %2232 = arith.subf %822, %2231 : vector<1x8xf32>
    %2233 = vector.extract_strided_slice %5 {offsets = [33, 0], sizes = [1, 8], strides = [1, 1]} : vector<72x8xf32> to vector<1x8xf32>
    %2234 = arith.mulf %866, %2233 : vector<1x8xf32>
    %2235 = vector.extract_strided_slice %5 {offsets = [34, 0], sizes = [1, 8], strides = [1, 1]} : vector<72x8xf32> to vector<1x8xf32>
    %2236 = arith.mulf %871, %2235 : vector<1x8xf32>
    %2237 = arith.addf %2234, %2236 : vector<1x8xf32>
    %2238 = vector.extract_strided_slice %5 {offsets = [35, 0], sizes = [1, 8], strides = [1, 1]} : vector<72x8xf32> to vector<1x8xf32>
    %2239 = arith.mulf %876, %2238 : vector<1x8xf32>
    %2240 = arith.addf %2237, %2239 : vector<1x8xf32>
    %2241 = arith.subf %903, %2240 : vector<1x8xf32>
    %2242 = vector.extract_strided_slice %5 {offsets = [36, 0], sizes = [1, 8], strides = [1, 1]} : vector<72x8xf32> to vector<1x8xf32>
    %2243 = arith.mulf %947, %2242 : vector<1x8xf32>
    %2244 = vector.extract_strided_slice %5 {offsets = [37, 0], sizes = [1, 8], strides = [1, 1]} : vector<72x8xf32> to vector<1x8xf32>
    %2245 = arith.mulf %952, %2244 : vector<1x8xf32>
    %2246 = arith.addf %2243, %2245 : vector<1x8xf32>
    %2247 = vector.extract_strided_slice %5 {offsets = [38, 0], sizes = [1, 8], strides = [1, 1]} : vector<72x8xf32> to vector<1x8xf32>
    %2248 = arith.mulf %957, %2247 : vector<1x8xf32>
    %2249 = arith.addf %2246, %2248 : vector<1x8xf32>
    %2250 = arith.subf %984, %2249 : vector<1x8xf32>
    %2251 = vector.extract_strided_slice %5 {offsets = [39, 0], sizes = [1, 8], strides = [1, 1]} : vector<72x8xf32> to vector<1x8xf32>
    %2252 = arith.mulf %1028, %2251 : vector<1x8xf32>
    %2253 = vector.extract_strided_slice %5 {offsets = [40, 0], sizes = [1, 8], strides = [1, 1]} : vector<72x8xf32> to vector<1x8xf32>
    %2254 = arith.mulf %1033, %2253 : vector<1x8xf32>
    %2255 = arith.addf %2252, %2254 : vector<1x8xf32>
    %2256 = vector.extract_strided_slice %5 {offsets = [41, 0], sizes = [1, 8], strides = [1, 1]} : vector<72x8xf32> to vector<1x8xf32>
    %2257 = arith.mulf %1038, %2256 : vector<1x8xf32>
    %2258 = arith.addf %2255, %2257 : vector<1x8xf32>
    %2259 = arith.subf %1065, %2258 : vector<1x8xf32>
    %2260 = vector.extract_strided_slice %5 {offsets = [42, 0], sizes = [1, 8], strides = [1, 1]} : vector<72x8xf32> to vector<1x8xf32>
    %2261 = arith.mulf %1109, %2260 : vector<1x8xf32>
    %2262 = vector.extract_strided_slice %5 {offsets = [43, 0], sizes = [1, 8], strides = [1, 1]} : vector<72x8xf32> to vector<1x8xf32>
    %2263 = arith.mulf %1114, %2262 : vector<1x8xf32>
    %2264 = arith.addf %2261, %2263 : vector<1x8xf32>
    %2265 = vector.extract_strided_slice %5 {offsets = [44, 0], sizes = [1, 8], strides = [1, 1]} : vector<72x8xf32> to vector<1x8xf32>
    %2266 = arith.mulf %1119, %2265 : vector<1x8xf32>
    %2267 = arith.addf %2264, %2266 : vector<1x8xf32>
    %2268 = arith.subf %1146, %2267 : vector<1x8xf32>
    %2269 = vector.extract_strided_slice %5 {offsets = [45, 0], sizes = [1, 8], strides = [1, 1]} : vector<72x8xf32> to vector<1x8xf32>
    %2270 = arith.mulf %1190, %2269 : vector<1x8xf32>
    %2271 = vector.extract_strided_slice %5 {offsets = [46, 0], sizes = [1, 8], strides = [1, 1]} : vector<72x8xf32> to vector<1x8xf32>
    %2272 = arith.mulf %1195, %2271 : vector<1x8xf32>
    %2273 = arith.addf %2270, %2272 : vector<1x8xf32>
    %2274 = vector.extract_strided_slice %5 {offsets = [47, 0], sizes = [1, 8], strides = [1, 1]} : vector<72x8xf32> to vector<1x8xf32>
    %2275 = arith.mulf %1200, %2274 : vector<1x8xf32>
    %2276 = arith.addf %2273, %2275 : vector<1x8xf32>
    %2277 = arith.subf %1227, %2276 : vector<1x8xf32>
    %2278 = vector.extract_strided_slice %5 {offsets = [48, 0], sizes = [1, 8], strides = [1, 1]} : vector<72x8xf32> to vector<1x8xf32>
    %2279 = arith.mulf %1271, %2278 : vector<1x8xf32>
    %2280 = vector.extract_strided_slice %5 {offsets = [49, 0], sizes = [1, 8], strides = [1, 1]} : vector<72x8xf32> to vector<1x8xf32>
    %2281 = arith.mulf %1276, %2280 : vector<1x8xf32>
    %2282 = arith.addf %2279, %2281 : vector<1x8xf32>
    %2283 = vector.extract_strided_slice %5 {offsets = [50, 0], sizes = [1, 8], strides = [1, 1]} : vector<72x8xf32> to vector<1x8xf32>
    %2284 = arith.mulf %1281, %2283 : vector<1x8xf32>
    %2285 = arith.addf %2282, %2284 : vector<1x8xf32>
    %2286 = arith.subf %1308, %2285 : vector<1x8xf32>
    %2287 = vector.extract_strided_slice %5 {offsets = [51, 0], sizes = [1, 8], strides = [1, 1]} : vector<72x8xf32> to vector<1x8xf32>
    %2288 = arith.mulf %1352, %2287 : vector<1x8xf32>
    %2289 = vector.extract_strided_slice %5 {offsets = [52, 0], sizes = [1, 8], strides = [1, 1]} : vector<72x8xf32> to vector<1x8xf32>
    %2290 = arith.mulf %1357, %2289 : vector<1x8xf32>
    %2291 = arith.addf %2288, %2290 : vector<1x8xf32>
    %2292 = vector.extract_strided_slice %5 {offsets = [53, 0], sizes = [1, 8], strides = [1, 1]} : vector<72x8xf32> to vector<1x8xf32>
    %2293 = arith.mulf %1362, %2292 : vector<1x8xf32>
    %2294 = arith.addf %2291, %2293 : vector<1x8xf32>
    %2295 = arith.subf %1389, %2294 : vector<1x8xf32>
    %2296 = vector.extract_strided_slice %5 {offsets = [54, 0], sizes = [1, 8], strides = [1, 1]} : vector<72x8xf32> to vector<1x8xf32>
    %2297 = arith.mulf %1433, %2296 : vector<1x8xf32>
    %2298 = vector.extract_strided_slice %5 {offsets = [55, 0], sizes = [1, 8], strides = [1, 1]} : vector<72x8xf32> to vector<1x8xf32>
    %2299 = arith.mulf %1438, %2298 : vector<1x8xf32>
    %2300 = arith.addf %2297, %2299 : vector<1x8xf32>
    %2301 = vector.extract_strided_slice %5 {offsets = [56, 0], sizes = [1, 8], strides = [1, 1]} : vector<72x8xf32> to vector<1x8xf32>
    %2302 = arith.mulf %1443, %2301 : vector<1x8xf32>
    %2303 = arith.addf %2300, %2302 : vector<1x8xf32>
    %2304 = arith.subf %1470, %2303 : vector<1x8xf32>
    %2305 = vector.extract_strided_slice %5 {offsets = [57, 0], sizes = [1, 8], strides = [1, 1]} : vector<72x8xf32> to vector<1x8xf32>
    %2306 = arith.mulf %1514, %2305 : vector<1x8xf32>
    %2307 = vector.extract_strided_slice %5 {offsets = [58, 0], sizes = [1, 8], strides = [1, 1]} : vector<72x8xf32> to vector<1x8xf32>
    %2308 = arith.mulf %1519, %2307 : vector<1x8xf32>
    %2309 = arith.addf %2306, %2308 : vector<1x8xf32>
    %2310 = vector.extract_strided_slice %5 {offsets = [59, 0], sizes = [1, 8], strides = [1, 1]} : vector<72x8xf32> to vector<1x8xf32>
    %2311 = arith.mulf %1524, %2310 : vector<1x8xf32>
    %2312 = arith.addf %2309, %2311 : vector<1x8xf32>
    %2313 = arith.subf %1551, %2312 : vector<1x8xf32>
    %2314 = vector.extract_strided_slice %5 {offsets = [60, 0], sizes = [1, 8], strides = [1, 1]} : vector<72x8xf32> to vector<1x8xf32>
    %2315 = arith.mulf %1595, %2314 : vector<1x8xf32>
    %2316 = vector.extract_strided_slice %5 {offsets = [61, 0], sizes = [1, 8], strides = [1, 1]} : vector<72x8xf32> to vector<1x8xf32>
    %2317 = arith.mulf %1600, %2316 : vector<1x8xf32>
    %2318 = arith.addf %2315, %2317 : vector<1x8xf32>
    %2319 = vector.extract_strided_slice %5 {offsets = [62, 0], sizes = [1, 8], strides = [1, 1]} : vector<72x8xf32> to vector<1x8xf32>
    %2320 = arith.mulf %1605, %2319 : vector<1x8xf32>
    %2321 = arith.addf %2318, %2320 : vector<1x8xf32>
    %2322 = arith.subf %1632, %2321 : vector<1x8xf32>
    %2323 = vector.extract_strided_slice %5 {offsets = [63, 0], sizes = [1, 8], strides = [1, 1]} : vector<72x8xf32> to vector<1x8xf32>
    %2324 = arith.mulf %1676, %2323 : vector<1x8xf32>
    %2325 = vector.extract_strided_slice %5 {offsets = [64, 0], sizes = [1, 8], strides = [1, 1]} : vector<72x8xf32> to vector<1x8xf32>
    %2326 = arith.mulf %1681, %2325 : vector<1x8xf32>
    %2327 = arith.addf %2324, %2326 : vector<1x8xf32>
    %2328 = vector.extract_strided_slice %5 {offsets = [65, 0], sizes = [1, 8], strides = [1, 1]} : vector<72x8xf32> to vector<1x8xf32>
    %2329 = arith.mulf %1686, %2328 : vector<1x8xf32>
    %2330 = arith.addf %2327, %2329 : vector<1x8xf32>
    %2331 = arith.subf %1713, %2330 : vector<1x8xf32>
    %2332 = vector.extract_strided_slice %5 {offsets = [66, 0], sizes = [1, 8], strides = [1, 1]} : vector<72x8xf32> to vector<1x8xf32>
    %2333 = arith.mulf %1757, %2332 : vector<1x8xf32>
    %2334 = vector.extract_strided_slice %5 {offsets = [67, 0], sizes = [1, 8], strides = [1, 1]} : vector<72x8xf32> to vector<1x8xf32>
    %2335 = arith.mulf %1762, %2334 : vector<1x8xf32>
    %2336 = arith.addf %2333, %2335 : vector<1x8xf32>
    %2337 = vector.extract_strided_slice %5 {offsets = [68, 0], sizes = [1, 8], strides = [1, 1]} : vector<72x8xf32> to vector<1x8xf32>
    %2338 = arith.mulf %1767, %2337 : vector<1x8xf32>
    %2339 = arith.addf %2336, %2338 : vector<1x8xf32>
    %2340 = arith.subf %1794, %2339 : vector<1x8xf32>
    %2341 = vector.extract_strided_slice %5 {offsets = [69, 0], sizes = [1, 8], strides = [1, 1]} : vector<72x8xf32> to vector<1x8xf32>
    %2342 = arith.mulf %1838, %2341 : vector<1x8xf32>
    %2343 = vector.extract_strided_slice %5 {offsets = [70, 0], sizes = [1, 8], strides = [1, 1]} : vector<72x8xf32> to vector<1x8xf32>
    %2344 = arith.mulf %1843, %2343 : vector<1x8xf32>
    %2345 = arith.addf %2342, %2344 : vector<1x8xf32>
    %2346 = vector.extract_strided_slice %5 {offsets = [71, 0], sizes = [1, 8], strides = [1, 1]} : vector<72x8xf32> to vector<1x8xf32>
    %2347 = arith.mulf %1848, %2346 : vector<1x8xf32>
    %2348 = arith.addf %2345, %2347 : vector<1x8xf32>
    %2349 = arith.subf %1875, %2348 : vector<1x8xf32>
    %2350 = tpu.concatenate %2142, %2151, %2160, %2169, %2178, %2187, %2196, %2205, %2214, %2223, %2232, %2241, %2250, %2259, %2268, %2277 in 0 : vector<1x8xf32>, vector<1x8xf32>, vector<1x8xf32>, vector<1x8xf32>, vector<1x8xf32>, vector<1x8xf32>, vector<1x8xf32>, vector<1x8xf32>, vector<1x8xf32>, vector<1x8xf32>, vector<1x8xf32>, vector<1x8xf32>, vector<1x8xf32>, vector<1x8xf32>, vector<1x8xf32>, vector<1x8xf32> -> vector<16x8xf32>
    %2351 = tpu.concatenate %2286, %2295, %2304, %2313, %2322, %2331, %2340, %2349 in 0 : vector<1x8xf32>, vector<1x8xf32>, vector<1x8xf32>, vector<1x8xf32>, vector<1x8xf32>, vector<1x8xf32>, vector<1x8xf32>, vector<1x8xf32> -> vector<8x8xf32>
    %2352 = tpu.concatenate %2350, %2351 in 0 : vector<16x8xf32>, vector<8x8xf32> -> vector<24x8xf32>
    %cst_19 = arith.constant dense<0.000000e+00> : vector<128x8xf32>
    %2353 = tpu.matmul %1889, %2352, %cst_19 {dimension_numbers = #tpu.dot_dimension_numbers<[1], [0], [0], [1], [0, 0, 1, 1], [], []>} : vector<128x24xf32>, vector<24x8xf32>, vector<128x8xf32> -> vector<128x8xf32>
    %2354 = tpu.concatenate %13, %71, %152, %233, %314, %395, %476, %557, %638, %719, %800, %881, %962, %1043, %1124, %1205 in 0 : vector<1x8xf32>, vector<1x8xf32>, vector<1x8xf32>, vector<1x8xf32>, vector<1x8xf32>, vector<1x8xf32>, vector<1x8xf32>, vector<1x8xf32>, vector<1x8xf32>, vector<1x8xf32>, vector<1x8xf32>, vector<1x8xf32>, vector<1x8xf32>, vector<1x8xf32>, vector<1x8xf32>, vector<1x8xf32> -> vector<16x8xf32>
    %2355 = tpu.concatenate %1286, %1367, %1448, %1529, %1610, %1691, %1772, %1853 in 0 : vector<1x8xf32>, vector<1x8xf32>, vector<1x8xf32>, vector<1x8xf32>, vector<1x8xf32>, vector<1x8xf32>, vector<1x8xf32>, vector<1x8xf32> -> vector<8x8xf32>
    %2356 = tpu.concatenate %2354, %2355 in 0 : vector<16x8xf32>, vector<8x8xf32> -> vector<24x8xf32>
    %cst_20 = arith.constant dense<0.000000e+00> : vector<128x8xf32>
    %2357 = tpu.matmul %1889, %2356, %cst_20 {dimension_numbers = #tpu.dot_dimension_numbers<[1], [0], [0], [1], [0, 0, 1, 1], [], []>} : vector<128x24xf32>, vector<24x8xf32>, vector<128x8xf32> -> vector<128x8xf32>
    %2358 = tpu.concatenate %14, %76, %157, %238, %319, %400, %481, %562, %643, %724, %805, %886, %967, %1048, %1129, %1210 in 0 : vector<1x8xf32>, vector<1x8xf32>, vector<1x8xf32>, vector<1x8xf32>, vector<1x8xf32>, vector<1x8xf32>, vector<1x8xf32>, vector<1x8xf32>, vector<1x8xf32>, vector<1x8xf32>, vector<1x8xf32>, vector<1x8xf32>, vector<1x8xf32>, vector<1x8xf32>, vector<1x8xf32>, vector<1x8xf32> -> vector<16x8xf32>
    %2359 = tpu.concatenate %1291, %1372, %1453, %1534, %1615, %1696, %1777, %1858 in 0 : vector<1x8xf32>, vector<1x8xf32>, vector<1x8xf32>, vector<1x8xf32>, vector<1x8xf32>, vector<1x8xf32>, vector<1x8xf32>, vector<1x8xf32> -> vector<8x8xf32>
    %2360 = tpu.concatenate %2358, %2359 in 0 : vector<16x8xf32>, vector<8x8xf32> -> vector<24x8xf32>
    %cst_21 = arith.constant dense<0.000000e+00> : vector<128x8xf32>
    %2361 = tpu.matmul %1889, %2360, %cst_21 {dimension_numbers = #tpu.dot_dimension_numbers<[1], [0], [0], [1], [0, 0, 1, 1], [], []>} : vector<128x24xf32>, vector<24x8xf32>, vector<128x8xf32> -> vector<128x8xf32>
    %2362 = tpu.concatenate %15, %81, %162, %243, %324, %405, %486, %567, %648, %729, %810, %891, %972, %1053, %1134, %1215 in 0 : vector<1x8xf32>, vector<1x8xf32>, vector<1x8xf32>, vector<1x8xf32>, vector<1x8xf32>, vector<1x8xf32>, vector<1x8xf32>, vector<1x8xf32>, vector<1x8xf32>, vector<1x8xf32>, vector<1x8xf32>, vector<1x8xf32>, vector<1x8xf32>, vector<1x8xf32>, vector<1x8xf32>, vector<1x8xf32> -> vector<16x8xf32>
    %2363 = tpu.concatenate %1296, %1377, %1458, %1539, %1620, %1701, %1782, %1863 in 0 : vector<1x8xf32>, vector<1x8xf32>, vector<1x8xf32>, vector<1x8xf32>, vector<1x8xf32>, vector<1x8xf32>, vector<1x8xf32>, vector<1x8xf32> -> vector<8x8xf32>
    %2364 = tpu.concatenate %2362, %2363 in 0 : vector<16x8xf32>, vector<8x8xf32> -> vector<24x8xf32>
    %cst_22 = arith.constant dense<0.000000e+00> : vector<128x8xf32>
    %2365 = tpu.matmul %1889, %2364, %cst_22 {dimension_numbers = #tpu.dot_dimension_numbers<[1], [0], [0], [1], [0, 0, 1, 1], [], []>} : vector<128x24xf32>, vector<24x8xf32>, vector<128x8xf32> -> vector<128x8xf32>
    %2366 = vector.extract_strided_slice %5 {offsets = [0, 0], sizes = [1, 8], strides = [1, 1]} : vector<72x8xf32> to vector<1x8xf32>
    %2367 = arith.mulf %13, %2366 : vector<1x8xf32>
    %2368 = vector.extract_strided_slice %5 {offsets = [1, 0], sizes = [1, 8], strides = [1, 1]} : vector<72x8xf32> to vector<1x8xf32>
    %2369 = arith.mulf %14, %2368 : vector<1x8xf32>
    %2370 = arith.addf %2367, %2369 : vector<1x8xf32>
    %2371 = vector.extract_strided_slice %5 {offsets = [2, 0], sizes = [1, 8], strides = [1, 1]} : vector<72x8xf32> to vector<1x8xf32>
    %2372 = arith.mulf %15, %2371 : vector<1x8xf32>
    %2373 = arith.addf %2370, %2372 : vector<1x8xf32>
    %2374 = arith.subf %18, %2373 : vector<1x8xf32>
    %2375 = vector.extract_strided_slice %5 {offsets = [3, 0], sizes = [1, 8], strides = [1, 1]} : vector<72x8xf32> to vector<1x8xf32>
    %2376 = arith.mulf %71, %2375 : vector<1x8xf32>
    %2377 = vector.extract_strided_slice %5 {offsets = [4, 0], sizes = [1, 8], strides = [1, 1]} : vector<72x8xf32> to vector<1x8xf32>
    %2378 = arith.mulf %76, %2377 : vector<1x8xf32>
    %2379 = arith.addf %2376, %2378 : vector<1x8xf32>
    %2380 = vector.extract_strided_slice %5 {offsets = [5, 0], sizes = [1, 8], strides = [1, 1]} : vector<72x8xf32> to vector<1x8xf32>
    %2381 = arith.mulf %81, %2380 : vector<1x8xf32>
    %2382 = arith.addf %2379, %2381 : vector<1x8xf32>
    %2383 = arith.subf %99, %2382 : vector<1x8xf32>
    %2384 = vector.extract_strided_slice %5 {offsets = [6, 0], sizes = [1, 8], strides = [1, 1]} : vector<72x8xf32> to vector<1x8xf32>
    %2385 = arith.mulf %152, %2384 : vector<1x8xf32>
    %2386 = vector.extract_strided_slice %5 {offsets = [7, 0], sizes = [1, 8], strides = [1, 1]} : vector<72x8xf32> to vector<1x8xf32>
    %2387 = arith.mulf %157, %2386 : vector<1x8xf32>
    %2388 = arith.addf %2385, %2387 : vector<1x8xf32>
    %2389 = vector.extract_strided_slice %5 {offsets = [8, 0], sizes = [1, 8], strides = [1, 1]} : vector<72x8xf32> to vector<1x8xf32>
    %2390 = arith.mulf %162, %2389 : vector<1x8xf32>
    %2391 = arith.addf %2388, %2390 : vector<1x8xf32>
    %2392 = arith.subf %180, %2391 : vector<1x8xf32>
    %2393 = vector.extract_strided_slice %5 {offsets = [9, 0], sizes = [1, 8], strides = [1, 1]} : vector<72x8xf32> to vector<1x8xf32>
    %2394 = arith.mulf %233, %2393 : vector<1x8xf32>
    %2395 = vector.extract_strided_slice %5 {offsets = [10, 0], sizes = [1, 8], strides = [1, 1]} : vector<72x8xf32> to vector<1x8xf32>
    %2396 = arith.mulf %238, %2395 : vector<1x8xf32>
    %2397 = arith.addf %2394, %2396 : vector<1x8xf32>
    %2398 = vector.extract_strided_slice %5 {offsets = [11, 0], sizes = [1, 8], strides = [1, 1]} : vector<72x8xf32> to vector<1x8xf32>
    %2399 = arith.mulf %243, %2398 : vector<1x8xf32>
    %2400 = arith.addf %2397, %2399 : vector<1x8xf32>
    %2401 = arith.subf %261, %2400 : vector<1x8xf32>
    %2402 = vector.extract_strided_slice %5 {offsets = [12, 0], sizes = [1, 8], strides = [1, 1]} : vector<72x8xf32> to vector<1x8xf32>
    %2403 = arith.mulf %314, %2402 : vector<1x8xf32>
    %2404 = vector.extract_strided_slice %5 {offsets = [13, 0], sizes = [1, 8], strides = [1, 1]} : vector<72x8xf32> to vector<1x8xf32>
    %2405 = arith.mulf %319, %2404 : vector<1x8xf32>
    %2406 = arith.addf %2403, %2405 : vector<1x8xf32>
    %2407 = vector.extract_strided_slice %5 {offsets = [14, 0], sizes = [1, 8], strides = [1, 1]} : vector<72x8xf32> to vector<1x8xf32>
    %2408 = arith.mulf %324, %2407 : vector<1x8xf32>
    %2409 = arith.addf %2406, %2408 : vector<1x8xf32>
    %2410 = arith.subf %342, %2409 : vector<1x8xf32>
    %2411 = vector.extract_strided_slice %5 {offsets = [15, 0], sizes = [1, 8], strides = [1, 1]} : vector<72x8xf32> to vector<1x8xf32>
    %2412 = arith.mulf %395, %2411 : vector<1x8xf32>
    %2413 = vector.extract_strided_slice %5 {offsets = [16, 0], sizes = [1, 8], strides = [1, 1]} : vector<72x8xf32> to vector<1x8xf32>
    %2414 = arith.mulf %400, %2413 : vector<1x8xf32>
    %2415 = arith.addf %2412, %2414 : vector<1x8xf32>
    %2416 = vector.extract_strided_slice %5 {offsets = [17, 0], sizes = [1, 8], strides = [1, 1]} : vector<72x8xf32> to vector<1x8xf32>
    %2417 = arith.mulf %405, %2416 : vector<1x8xf32>
    %2418 = arith.addf %2415, %2417 : vector<1x8xf32>
    %2419 = arith.subf %423, %2418 : vector<1x8xf32>
    %2420 = vector.extract_strided_slice %5 {offsets = [18, 0], sizes = [1, 8], strides = [1, 1]} : vector<72x8xf32> to vector<1x8xf32>
    %2421 = arith.mulf %476, %2420 : vector<1x8xf32>
    %2422 = vector.extract_strided_slice %5 {offsets = [19, 0], sizes = [1, 8], strides = [1, 1]} : vector<72x8xf32> to vector<1x8xf32>
    %2423 = arith.mulf %481, %2422 : vector<1x8xf32>
    %2424 = arith.addf %2421, %2423 : vector<1x8xf32>
    %2425 = vector.extract_strided_slice %5 {offsets = [20, 0], sizes = [1, 8], strides = [1, 1]} : vector<72x8xf32> to vector<1x8xf32>
    %2426 = arith.mulf %486, %2425 : vector<1x8xf32>
    %2427 = arith.addf %2424, %2426 : vector<1x8xf32>
    %2428 = arith.subf %504, %2427 : vector<1x8xf32>
    %2429 = vector.extract_strided_slice %5 {offsets = [21, 0], sizes = [1, 8], strides = [1, 1]} : vector<72x8xf32> to vector<1x8xf32>
    %2430 = arith.mulf %557, %2429 : vector<1x8xf32>
    %2431 = vector.extract_strided_slice %5 {offsets = [22, 0], sizes = [1, 8], strides = [1, 1]} : vector<72x8xf32> to vector<1x8xf32>
    %2432 = arith.mulf %562, %2431 : vector<1x8xf32>
    %2433 = arith.addf %2430, %2432 : vector<1x8xf32>
    %2434 = vector.extract_strided_slice %5 {offsets = [23, 0], sizes = [1, 8], strides = [1, 1]} : vector<72x8xf32> to vector<1x8xf32>
    %2435 = arith.mulf %567, %2434 : vector<1x8xf32>
    %2436 = arith.addf %2433, %2435 : vector<1x8xf32>
    %2437 = arith.subf %585, %2436 : vector<1x8xf32>
    %2438 = vector.extract_strided_slice %5 {offsets = [24, 0], sizes = [1, 8], strides = [1, 1]} : vector<72x8xf32> to vector<1x8xf32>
    %2439 = arith.mulf %638, %2438 : vector<1x8xf32>
    %2440 = vector.extract_strided_slice %5 {offsets = [25, 0], sizes = [1, 8], strides = [1, 1]} : vector<72x8xf32> to vector<1x8xf32>
    %2441 = arith.mulf %643, %2440 : vector<1x8xf32>
    %2442 = arith.addf %2439, %2441 : vector<1x8xf32>
    %2443 = vector.extract_strided_slice %5 {offsets = [26, 0], sizes = [1, 8], strides = [1, 1]} : vector<72x8xf32> to vector<1x8xf32>
    %2444 = arith.mulf %648, %2443 : vector<1x8xf32>
    %2445 = arith.addf %2442, %2444 : vector<1x8xf32>
    %2446 = arith.subf %666, %2445 : vector<1x8xf32>
    %2447 = vector.extract_strided_slice %5 {offsets = [27, 0], sizes = [1, 8], strides = [1, 1]} : vector<72x8xf32> to vector<1x8xf32>
    %2448 = arith.mulf %719, %2447 : vector<1x8xf32>
    %2449 = vector.extract_strided_slice %5 {offsets = [28, 0], sizes = [1, 8], strides = [1, 1]} : vector<72x8xf32> to vector<1x8xf32>
    %2450 = arith.mulf %724, %2449 : vector<1x8xf32>
    %2451 = arith.addf %2448, %2450 : vector<1x8xf32>
    %2452 = vector.extract_strided_slice %5 {offsets = [29, 0], sizes = [1, 8], strides = [1, 1]} : vector<72x8xf32> to vector<1x8xf32>
    %2453 = arith.mulf %729, %2452 : vector<1x8xf32>
    %2454 = arith.addf %2451, %2453 : vector<1x8xf32>
    %2455 = arith.subf %747, %2454 : vector<1x8xf32>
    %2456 = vector.extract_strided_slice %5 {offsets = [30, 0], sizes = [1, 8], strides = [1, 1]} : vector<72x8xf32> to vector<1x8xf32>
    %2457 = arith.mulf %800, %2456 : vector<1x8xf32>
    %2458 = vector.extract_strided_slice %5 {offsets = [31, 0], sizes = [1, 8], strides = [1, 1]} : vector<72x8xf32> to vector<1x8xf32>
    %2459 = arith.mulf %805, %2458 : vector<1x8xf32>
    %2460 = arith.addf %2457, %2459 : vector<1x8xf32>
    %2461 = vector.extract_strided_slice %5 {offsets = [32, 0], sizes = [1, 8], strides = [1, 1]} : vector<72x8xf32> to vector<1x8xf32>
    %2462 = arith.mulf %810, %2461 : vector<1x8xf32>
    %2463 = arith.addf %2460, %2462 : vector<1x8xf32>
    %2464 = arith.subf %828, %2463 : vector<1x8xf32>
    %2465 = vector.extract_strided_slice %5 {offsets = [33, 0], sizes = [1, 8], strides = [1, 1]} : vector<72x8xf32> to vector<1x8xf32>
    %2466 = arith.mulf %881, %2465 : vector<1x8xf32>
    %2467 = vector.extract_strided_slice %5 {offsets = [34, 0], sizes = [1, 8], strides = [1, 1]} : vector<72x8xf32> to vector<1x8xf32>
    %2468 = arith.mulf %886, %2467 : vector<1x8xf32>
    %2469 = arith.addf %2466, %2468 : vector<1x8xf32>
    %2470 = vector.extract_strided_slice %5 {offsets = [35, 0], sizes = [1, 8], strides = [1, 1]} : vector<72x8xf32> to vector<1x8xf32>
    %2471 = arith.mulf %891, %2470 : vector<1x8xf32>
    %2472 = arith.addf %2469, %2471 : vector<1x8xf32>
    %2473 = arith.subf %909, %2472 : vector<1x8xf32>
    %2474 = vector.extract_strided_slice %5 {offsets = [36, 0], sizes = [1, 8], strides = [1, 1]} : vector<72x8xf32> to vector<1x8xf32>
    %2475 = arith.mulf %962, %2474 : vector<1x8xf32>
    %2476 = vector.extract_strided_slice %5 {offsets = [37, 0], sizes = [1, 8], strides = [1, 1]} : vector<72x8xf32> to vector<1x8xf32>
    %2477 = arith.mulf %967, %2476 : vector<1x8xf32>
    %2478 = arith.addf %2475, %2477 : vector<1x8xf32>
    %2479 = vector.extract_strided_slice %5 {offsets = [38, 0], sizes = [1, 8], strides = [1, 1]} : vector<72x8xf32> to vector<1x8xf32>
    %2480 = arith.mulf %972, %2479 : vector<1x8xf32>
    %2481 = arith.addf %2478, %2480 : vector<1x8xf32>
    %2482 = arith.subf %990, %2481 : vector<1x8xf32>
    %2483 = vector.extract_strided_slice %5 {offsets = [39, 0], sizes = [1, 8], strides = [1, 1]} : vector<72x8xf32> to vector<1x8xf32>
    %2484 = arith.mulf %1043, %2483 : vector<1x8xf32>
    %2485 = vector.extract_strided_slice %5 {offsets = [40, 0], sizes = [1, 8], strides = [1, 1]} : vector<72x8xf32> to vector<1x8xf32>
    %2486 = arith.mulf %1048, %2485 : vector<1x8xf32>
    %2487 = arith.addf %2484, %2486 : vector<1x8xf32>
    %2488 = vector.extract_strided_slice %5 {offsets = [41, 0], sizes = [1, 8], strides = [1, 1]} : vector<72x8xf32> to vector<1x8xf32>
    %2489 = arith.mulf %1053, %2488 : vector<1x8xf32>
    %2490 = arith.addf %2487, %2489 : vector<1x8xf32>
    %2491 = arith.subf %1071, %2490 : vector<1x8xf32>
    %2492 = vector.extract_strided_slice %5 {offsets = [42, 0], sizes = [1, 8], strides = [1, 1]} : vector<72x8xf32> to vector<1x8xf32>
    %2493 = arith.mulf %1124, %2492 : vector<1x8xf32>
    %2494 = vector.extract_strided_slice %5 {offsets = [43, 0], sizes = [1, 8], strides = [1, 1]} : vector<72x8xf32> to vector<1x8xf32>
    %2495 = arith.mulf %1129, %2494 : vector<1x8xf32>
    %2496 = arith.addf %2493, %2495 : vector<1x8xf32>
    %2497 = vector.extract_strided_slice %5 {offsets = [44, 0], sizes = [1, 8], strides = [1, 1]} : vector<72x8xf32> to vector<1x8xf32>
    %2498 = arith.mulf %1134, %2497 : vector<1x8xf32>
    %2499 = arith.addf %2496, %2498 : vector<1x8xf32>
    %2500 = arith.subf %1152, %2499 : vector<1x8xf32>
    %2501 = vector.extract_strided_slice %5 {offsets = [45, 0], sizes = [1, 8], strides = [1, 1]} : vector<72x8xf32> to vector<1x8xf32>
    %2502 = arith.mulf %1205, %2501 : vector<1x8xf32>
    %2503 = vector.extract_strided_slice %5 {offsets = [46, 0], sizes = [1, 8], strides = [1, 1]} : vector<72x8xf32> to vector<1x8xf32>
    %2504 = arith.mulf %1210, %2503 : vector<1x8xf32>
    %2505 = arith.addf %2502, %2504 : vector<1x8xf32>
    %2506 = vector.extract_strided_slice %5 {offsets = [47, 0], sizes = [1, 8], strides = [1, 1]} : vector<72x8xf32> to vector<1x8xf32>
    %2507 = arith.mulf %1215, %2506 : vector<1x8xf32>
    %2508 = arith.addf %2505, %2507 : vector<1x8xf32>
    %2509 = arith.subf %1233, %2508 : vector<1x8xf32>
    %2510 = vector.extract_strided_slice %5 {offsets = [48, 0], sizes = [1, 8], strides = [1, 1]} : vector<72x8xf32> to vector<1x8xf32>
    %2511 = arith.mulf %1286, %2510 : vector<1x8xf32>
    %2512 = vector.extract_strided_slice %5 {offsets = [49, 0], sizes = [1, 8], strides = [1, 1]} : vector<72x8xf32> to vector<1x8xf32>
    %2513 = arith.mulf %1291, %2512 : vector<1x8xf32>
    %2514 = arith.addf %2511, %2513 : vector<1x8xf32>
    %2515 = vector.extract_strided_slice %5 {offsets = [50, 0], sizes = [1, 8], strides = [1, 1]} : vector<72x8xf32> to vector<1x8xf32>
    %2516 = arith.mulf %1296, %2515 : vector<1x8xf32>
    %2517 = arith.addf %2514, %2516 : vector<1x8xf32>
    %2518 = arith.subf %1314, %2517 : vector<1x8xf32>
    %2519 = vector.extract_strided_slice %5 {offsets = [51, 0], sizes = [1, 8], strides = [1, 1]} : vector<72x8xf32> to vector<1x8xf32>
    %2520 = arith.mulf %1367, %2519 : vector<1x8xf32>
    %2521 = vector.extract_strided_slice %5 {offsets = [52, 0], sizes = [1, 8], strides = [1, 1]} : vector<72x8xf32> to vector<1x8xf32>
    %2522 = arith.mulf %1372, %2521 : vector<1x8xf32>
    %2523 = arith.addf %2520, %2522 : vector<1x8xf32>
    %2524 = vector.extract_strided_slice %5 {offsets = [53, 0], sizes = [1, 8], strides = [1, 1]} : vector<72x8xf32> to vector<1x8xf32>
    %2525 = arith.mulf %1377, %2524 : vector<1x8xf32>
    %2526 = arith.addf %2523, %2525 : vector<1x8xf32>
    %2527 = arith.subf %1395, %2526 : vector<1x8xf32>
    %2528 = vector.extract_strided_slice %5 {offsets = [54, 0], sizes = [1, 8], strides = [1, 1]} : vector<72x8xf32> to vector<1x8xf32>
    %2529 = arith.mulf %1448, %2528 : vector<1x8xf32>
    %2530 = vector.extract_strided_slice %5 {offsets = [55, 0], sizes = [1, 8], strides = [1, 1]} : vector<72x8xf32> to vector<1x8xf32>
    %2531 = arith.mulf %1453, %2530 : vector<1x8xf32>
    %2532 = arith.addf %2529, %2531 : vector<1x8xf32>
    %2533 = vector.extract_strided_slice %5 {offsets = [56, 0], sizes = [1, 8], strides = [1, 1]} : vector<72x8xf32> to vector<1x8xf32>
    %2534 = arith.mulf %1458, %2533 : vector<1x8xf32>
    %2535 = arith.addf %2532, %2534 : vector<1x8xf32>
    %2536 = arith.subf %1476, %2535 : vector<1x8xf32>
    %2537 = vector.extract_strided_slice %5 {offsets = [57, 0], sizes = [1, 8], strides = [1, 1]} : vector<72x8xf32> to vector<1x8xf32>
    %2538 = arith.mulf %1529, %2537 : vector<1x8xf32>
    %2539 = vector.extract_strided_slice %5 {offsets = [58, 0], sizes = [1, 8], strides = [1, 1]} : vector<72x8xf32> to vector<1x8xf32>
    %2540 = arith.mulf %1534, %2539 : vector<1x8xf32>
    %2541 = arith.addf %2538, %2540 : vector<1x8xf32>
    %2542 = vector.extract_strided_slice %5 {offsets = [59, 0], sizes = [1, 8], strides = [1, 1]} : vector<72x8xf32> to vector<1x8xf32>
    %2543 = arith.mulf %1539, %2542 : vector<1x8xf32>
    %2544 = arith.addf %2541, %2543 : vector<1x8xf32>
    %2545 = arith.subf %1557, %2544 : vector<1x8xf32>
    %2546 = vector.extract_strided_slice %5 {offsets = [60, 0], sizes = [1, 8], strides = [1, 1]} : vector<72x8xf32> to vector<1x8xf32>
    %2547 = arith.mulf %1610, %2546 : vector<1x8xf32>
    %2548 = vector.extract_strided_slice %5 {offsets = [61, 0], sizes = [1, 8], strides = [1, 1]} : vector<72x8xf32> to vector<1x8xf32>
    %2549 = arith.mulf %1615, %2548 : vector<1x8xf32>
    %2550 = arith.addf %2547, %2549 : vector<1x8xf32>
    %2551 = vector.extract_strided_slice %5 {offsets = [62, 0], sizes = [1, 8], strides = [1, 1]} : vector<72x8xf32> to vector<1x8xf32>
    %2552 = arith.mulf %1620, %2551 : vector<1x8xf32>
    %2553 = arith.addf %2550, %2552 : vector<1x8xf32>
    %2554 = arith.subf %1638, %2553 : vector<1x8xf32>
    %2555 = vector.extract_strided_slice %5 {offsets = [63, 0], sizes = [1, 8], strides = [1, 1]} : vector<72x8xf32> to vector<1x8xf32>
    %2556 = arith.mulf %1691, %2555 : vector<1x8xf32>
    %2557 = vector.extract_strided_slice %5 {offsets = [64, 0], sizes = [1, 8], strides = [1, 1]} : vector<72x8xf32> to vector<1x8xf32>
    %2558 = arith.mulf %1696, %2557 : vector<1x8xf32>
    %2559 = arith.addf %2556, %2558 : vector<1x8xf32>
    %2560 = vector.extract_strided_slice %5 {offsets = [65, 0], sizes = [1, 8], strides = [1, 1]} : vector<72x8xf32> to vector<1x8xf32>
    %2561 = arith.mulf %1701, %2560 : vector<1x8xf32>
    %2562 = arith.addf %2559, %2561 : vector<1x8xf32>
    %2563 = arith.subf %1719, %2562 : vector<1x8xf32>
    %2564 = vector.extract_strided_slice %5 {offsets = [66, 0], sizes = [1, 8], strides = [1, 1]} : vector<72x8xf32> to vector<1x8xf32>
    %2565 = arith.mulf %1772, %2564 : vector<1x8xf32>
    %2566 = vector.extract_strided_slice %5 {offsets = [67, 0], sizes = [1, 8], strides = [1, 1]} : vector<72x8xf32> to vector<1x8xf32>
    %2567 = arith.mulf %1777, %2566 : vector<1x8xf32>
    %2568 = arith.addf %2565, %2567 : vector<1x8xf32>
    %2569 = vector.extract_strided_slice %5 {offsets = [68, 0], sizes = [1, 8], strides = [1, 1]} : vector<72x8xf32> to vector<1x8xf32>
    %2570 = arith.mulf %1782, %2569 : vector<1x8xf32>
    %2571 = arith.addf %2568, %2570 : vector<1x8xf32>
    %2572 = arith.subf %1800, %2571 : vector<1x8xf32>
    %2573 = vector.extract_strided_slice %5 {offsets = [69, 0], sizes = [1, 8], strides = [1, 1]} : vector<72x8xf32> to vector<1x8xf32>
    %2574 = arith.mulf %1853, %2573 : vector<1x8xf32>
    %2575 = vector.extract_strided_slice %5 {offsets = [70, 0], sizes = [1, 8], strides = [1, 1]} : vector<72x8xf32> to vector<1x8xf32>
    %2576 = arith.mulf %1858, %2575 : vector<1x8xf32>
    %2577 = arith.addf %2574, %2576 : vector<1x8xf32>
    %2578 = vector.extract_strided_slice %5 {offsets = [71, 0], sizes = [1, 8], strides = [1, 1]} : vector<72x8xf32> to vector<1x8xf32>
    %2579 = arith.mulf %1863, %2578 : vector<1x8xf32>
    %2580 = arith.addf %2577, %2579 : vector<1x8xf32>
    %2581 = arith.subf %1881, %2580 : vector<1x8xf32>
    %2582 = tpu.concatenate %2374, %2383, %2392, %2401, %2410, %2419, %2428, %2437, %2446, %2455, %2464, %2473, %2482, %2491, %2500, %2509 in 0 : vector<1x8xf32>, vector<1x8xf32>, vector<1x8xf32>, vector<1x8xf32>, vector<1x8xf32>, vector<1x8xf32>, vector<1x8xf32>, vector<1x8xf32>, vector<1x8xf32>, vector<1x8xf32>, vector<1x8xf32>, vector<1x8xf32>, vector<1x8xf32>, vector<1x8xf32>, vector<1x8xf32>, vector<1x8xf32> -> vector<16x8xf32>
    %2583 = tpu.concatenate %2518, %2527, %2536, %2545, %2554, %2563, %2572, %2581 in 0 : vector<1x8xf32>, vector<1x8xf32>, vector<1x8xf32>, vector<1x8xf32>, vector<1x8xf32>, vector<1x8xf32>, vector<1x8xf32>, vector<1x8xf32> -> vector<8x8xf32>
    %2584 = tpu.concatenate %2582, %2583 in 0 : vector<16x8xf32>, vector<8x8xf32> -> vector<24x8xf32>
    %cst_23 = arith.constant dense<0.000000e+00> : vector<128x8xf32>
    %2585 = tpu.matmul %1889, %2584, %cst_23 {dimension_numbers = #tpu.dot_dimension_numbers<[1], [0], [0], [1], [0, 0, 1, 1], [], []>} : vector<128x24xf32>, vector<24x8xf32>, vector<128x8xf32> -> vector<128x8xf32>
    %2586 = vector.extract_strided_slice %3 {offsets = [0, 0], sizes = [128, 8], strides = [1, 1]} : vector<384x8xf32> to vector<128x8xf32>
    %2587 = vector.extract_strided_slice %3 {offsets = [128, 0], sizes = [128, 8], strides = [1, 1]} : vector<384x8xf32> to vector<128x8xf32>
    %2588 = vector.extract_strided_slice %3 {offsets = [256, 0], sizes = [128, 8], strides = [1, 1]} : vector<384x8xf32> to vector<128x8xf32>
    %2589 = arith.mulf %1893, %2586 : vector<128x8xf32>
    %2590 = arith.mulf %1897, %2587 : vector<128x8xf32>
    %2591 = arith.addf %2589, %2590 : vector<128x8xf32>
    %2592 = arith.mulf %1901, %2588 : vector<128x8xf32>
    %2593 = arith.addf %2591, %2592 : vector<128x8xf32>
    %2594 = arith.addf %2593, %2121 : vector<128x8xf32>
    %c0_24 = arith.constant 0 : index
    %c0_25 = arith.constant 0 : index
    %2595 = vector.load %arg6[%c0_24, %c0_25] : memref<384x8xf32, #tpu.memory_space<vmem>>, vector<128x8xf32>
    tpu.vector_store %arg6[%c0_24, %c0_25], %2594 {strides = array<i32>} : memref<384x8xf32, #tpu.memory_space<vmem>>, vector<128x8xf32>,
    %2596 = arith.mulf %2125, %2586 : vector<128x8xf32>
    %2597 = arith.mulf %2129, %2587 : vector<128x8xf32>
    %2598 = arith.addf %2596, %2597 : vector<128x8xf32>
    %2599 = arith.mulf %2133, %2588 : vector<128x8xf32>
    %2600 = arith.addf %2598, %2599 : vector<128x8xf32>
    %2601 = arith.addf %2600, %2353 : vector<128x8xf32>
    %c128 = arith.constant 128 : index
    %c0_26 = arith.constant 0 : index
    %2602 = vector.load %arg6[%c128, %c0_26] : memref<384x8xf32, #tpu.memory_space<vmem>>, vector<128x8xf32>
    tpu.vector_store %arg6[%c128, %c0_26], %2601 {strides = array<i32>} : memref<384x8xf32, #tpu.memory_space<vmem>>, vector<128x8xf32>,
    %2603 = arith.mulf %2357, %2586 : vector<128x8xf32>
    %2604 = arith.mulf %2361, %2587 : vector<128x8xf32>
    %2605 = arith.addf %2603, %2604 : vector<128x8xf32>
    %2606 = arith.mulf %2365, %2588 : vector<128x8xf32>
    %2607 = arith.addf %2605, %2606 : vector<128x8xf32>
    %2608 = arith.addf %2607, %2585 : vector<128x8xf32>
    %c256 = arith.constant 256 : index
    %c0_27 = arith.constant 0 : index
    %2609 = vector.load %arg6[%c256, %c0_27] : memref<384x8xf32, #tpu.memory_space<vmem>>, vector<128x8xf32>
    tpu.vector_store %arg6[%c256, %c0_27], %2608 {strides = array<i32>} : memref<384x8xf32, #tpu.memory_space<vmem>>, vector<128x8xf32>,
    return
  }
  func.func @transform_0(%arg0: i32) -> (i32, i32) {
    %c0_i32 = arith.constant 0 : i32
    %c0_i32_0 = arith.constant 0 : i32
    return %c0_i32, %arg0 : i32, i32
  }
  func.func @transform_1(%arg0: i32) -> (i32, i32) {
    %c0_i32 = arith.constant 0 : i32
    %c0_i32_0 = arith.constant 0 : i32
    return %c0_i32, %arg0 : i32, i32
  }
  func.func @transform_2(%arg0: i32) -> (i32, i32) {
    %c0_i32 = arith.constant 0 : i32
    %c0_i32_0 = arith.constant 0 : i32
    %c0_i32_1 = arith.constant 0 : i32
    return %c0_i32, %c0_i32_0 : i32, i32
  }
  func.func @transform_3(%arg0: i32) -> (i32, i32) {
    %c0_i32 = arith.constant 0 : i32
    %c0_i32_0 = arith.constant 0 : i32
    %c0_i32_1 = arith.constant 0 : i32
    return %c0_i32, %c0_i32_0 : i32, i32
  }
  func.func @transform_4(%arg0: i32) -> (i32, i32) {
    %c0_i32 = arith.constant 0 : i32
    %c0_i32_0 = arith.constant 0 : i32
    %c0_i32_1 = arith.constant 0 : i32
    return %c0_i32, %c0_i32_0 : i32, i32
  }
  func.func @transform_5(%arg0: i32) -> (i32, i32) {
    %c0_i32 = arith.constant 0 : i32
    %c0_i32_0 = arith.constant 0 : i32
    return %c0_i32, %arg0 : i32, i32
  }
  func.func @transform_6(%arg0: i32) -> (i32, i32) {
    %c0_i32 = arith.constant 0 : i32
    %c0_i32_0 = arith.constant 0 : i32
    return %c0_i32, %arg0 : i32, i32
  }
}

</mosaic_0001>

<llo_original>
// kernel: tpu_custom_call.1
$region0: #{tpu_custom_call.1}
  #allocation0 [shape = 'u32[]', space=smem, size = 0x4, offset = 0x4, fixed_abs, tag = 'smem constant byte address 0x4 - core index']
  #allocation1 [shape = 'u32[72,128]{1,0:T(1,128)}', space=vmem, size = 0x9000, scoped, tag = 'internal scratch']
  %s0 = inlined_call_operand.vmem [shape: f32[218,8], index: 0, kind: input, shape index: {}]
  %s1 = inlined_call_operand.vmem [shape: f32[216,8], index: 1, kind: input, shape index: {}]
  %s2 = inlined_call_operand.vmem [shape: bf16[384,218], index: 2, kind: input, shape index: {}]
  %s3 = inlined_call_operand.vmem [shape: f32[72,218], index: 3, kind: input, shape index: {}]
  %s4 = inlined_call_operand.vmem [shape: f32[128,24], index: 4, kind: input, shape index: {}]
  %s5 = inlined_call_operand.vmem [shape: f32[384,8], index: 5, kind: output, shape index: {0}]
  %s6 = inlined_call_operand.vmem [shape: f32[72,8], index: 6, kind: output, shape index: {1}]
  %7 = xla_tuple %s5, %s6
  %s8 = sld [smem:[#allocation0]]
  $region38: #{tpu_custom_call.1} parent=0
    _
  %s10 = ssub.s32 1, %s8
  %s11 = scalar_select 0, %s10, %s8
  // Predicated region
  $region2: #{tpu_custom_call.1} parent=0 // pred_check
    _
  $region3: #{tpu_custom_call.1} parent=0 // pred_check_branch
    %13 = sbr.rel (0) target = $region5
  $region4: #{tpu_custom_call.1} parent=0 // pred_region
    _
  $region5: #{tpu_custom_call.1} parent=0 // pred_fallthru
    _
  // Predicated region
  $region6: #{tpu_custom_call.1} parent=0 // pred_check
    _
  $region7: #{tpu_custom_call.1} parent=0 // pred_check_branch
    %15 = sbr.rel (0) target = $region9
  $region8: #{tpu_custom_call.1} parent=0 // pred_region
    _
  $region9: #{tpu_custom_call.1} parent=0 // pred_fallthru
    _
  // Predicated region
  $region10: #{tpu_custom_call.1} parent=0 // pred_check
    _
  $region11: #{tpu_custom_call.1} parent=0 // pred_check_branch
    %17 = sbr.rel (0) target = $region13
  $region12: #{tpu_custom_call.1} parent=0 // pred_region
    _
  $region13: #{tpu_custom_call.1} parent=0 // pred_fallthru
    _
  // Predicated region
  $region14: #{tpu_custom_call.1} parent=0 // pred_check
    _
  $region15: #{tpu_custom_call.1} parent=0 // pred_check_branch
    %19 = sbr.rel (0) target = $region17
  $region16: #{tpu_custom_call.1} parent=0 // pred_region
    _
  $region17: #{tpu_custom_call.1} parent=0 // pred_fallthru
    _
  // Predicated region
  $region18: #{tpu_custom_call.1} parent=0 // pred_check
    _
  $region19: #{tpu_custom_call.1} parent=0 // pred_check_branch
    %21 = sbr.rel (0) target = $region21
  $region20: #{tpu_custom_call.1} parent=0 // pred_region
    _
  $region21: #{tpu_custom_call.1} parent=0 // pred_fallthru
    _
  %v23 = vld [vmem:[%s0] sm:$0xff]
  %v24 = vld [vmem:[%s0 + $0x8] sm:$0xff]
  %v25 = vld [vmem:[%s0 + $0x10] sm:$0xff]
  %v26 = vld [vmem:[%s0 + $0x18] sm:$0xff]
  %v27 = vld [vmem:[%s0 + $0x20] sm:$0xff]
  %v28 = vld [vmem:[%s0 + $0x28] sm:$0xff]
  %v29 = vld [vmem:[%s0 + $0x30] sm:$0xff]
  %v30 = vld [vmem:[%s0 + $0x38] sm:$0xff]
  %v31 = vld [vmem:[%s0 + $0x40] sm:$0xff]
  %v32 = vld [vmem:[%s0 + $0x48] sm:$0xff]
  %v33 = vld [vmem:[%s0 + $0x50] sm:$0xff]
  %v34 = vld [vmem:[%s0 + $0x58] sm:$0xff]
  %v35 = vld [vmem:[%s0 + $0x60] sm:$0xff]
  %v36 = vld [vmem:[%s0 + $0x68] sm:$0xff]
  %v37 = vld [vmem:[%s0 + $0x70] sm:$0xff]
  %v38 = vld [vmem:[%s0 + $0x78] sm:$0xff]
  %v39 = vld [vmem:[%s0 + $0x80] sm:$0xff]
  %v40 = vld [vmem:[%s0 + $0x88] sm:$0xff]
  %v41 = vld [vmem:[%s0 + $0x90] sm:$0xff]
  %v42 = vld [vmem:[%s0 + $0x98] sm:$0xff]
  %v43 = vld [vmem:[%s0 + $0xa0] sm:$0xff]
  %v44 = vld [vmem:[%s0 + $0xa8] sm:$0xff]
  %v45 = vld [vmem:[%s0 + $0xb0] sm:$0xff]
  %v46 = vld [vmem:[%s0 + $0xb8] sm:$0xff]
  %v47 = vld [vmem:[%s0 + $0xc0] sm:$0xff]
  %v48 = vld [vmem:[%s0 + $0xc8] sm:$0xff]
  %v49 = vld [vmem:[%s0 + $0xd0] sm:$0xff]
  %v50 = vld [vmem:[%s0 + $0xd8] sm:$0x3]
  %v51 = vld [vmem:[%s2] sm:$0xff]
  %v52 = vld [vmem:[%s2 + $0x8] sm:$0xff]
  %v53 = vld [vmem:[%s2 + $0x10] sm:$0xff]
  %v54 = vld [vmem:[%s2 + $0x18] sm:$0xff]
  %v55 = vld [vmem:[%s2 + $0x20] sm:$0xff]
  %v56 = vld [vmem:[%s2 + $0x28] sm:$0xff]
  %v57 = vld [vmem:[%s2 + $0x30] sm:$0xff]
  %v58 = vld [vmem:[%s2 + $0x38] sm:$0xff]
  %v59 = vld [vmem:[%s2 + $0x40] sm:$0xff]
  %v60 = vld [vmem:[%s2 + $0x48] sm:$0xff]
  %v61 = vld [vmem:[%s2 + $0x50] sm:$0xff]
  %v62 = vld [vmem:[%s2 + $0x58] sm:$0xff]
  %v63 = vld [vmem:[%s2 + $0x60] sm:$0xff]
  %v64 = vld [vmem:[%s2 + $0x68] sm:$0xff]
  %v65 = vld [vmem:[%s2 + $0x70] sm:$0xff]
  %v66 = vld [vmem:[%s2 + $0x78] sm:$0xff]
  %v67 = vld [vmem:[%s2 + $0x80] sm:$0xff]
  %v68 = vld [vmem:[%s2 + $0x88] sm:$0xff]
  %v69 = vld [vmem:[%s2 + $0x90] sm:$0xff]
  %v70 = vld [vmem:[%s2 + $0x98] sm:$0xff]
  %v71 = vld [vmem:[%s2 + $0xa0] sm:$0xff]
  %v72 = vld [vmem:[%s2 + $0xa8] sm:$0xff]
  %v73 = vld [vmem:[%s2 + $0xb0] sm:$0xff]
  %v74 = vld [vmem:[%s2 + $0xb8] sm:$0xff]
  %v75 = vld [vmem:[%s2 + $0xc0] sm:$0xff]
  %v76 = vld [vmem:[%s2 + $0xc8] sm:$0xff]
  %v77 = vld [vmem:[%s2 + $0xd0] sm:$0xff]
  %v78 = vld [vmem:[%s2 + $0xd8] sm:$0xff]
  %v79 = vld [vmem:[%s2 + $0xe0] sm:$0xff]
  %v80 = vld [vmem:[%s2 + $0xe8] sm:$0xff]
  %v81 = vld [vmem:[%s2 + $0xf0] sm:$0xff]
  %v82 = vld [vmem:[%s2 + $0xf8] sm:$0xff]
  %v83 = vld [vmem:[%s2 + $0x100] sm:$0xff]
  %v84 = vld [vmem:[%s2 + $0x108] sm:$0xff]
  %v85 = vld [vmem:[%s2 + $0x110] sm:$0xff]
  %v86 = vld [vmem:[%s2 + $0x118] sm:$0xff]
  %v87 = vld [vmem:[%s2 + $0x120] sm:$0xff]
  %v88 = vld [vmem:[%s2 + $0x128] sm:$0xff]
  %v89 = vld [vmem:[%s2 + $0x130] sm:$0xff]
  %v90 = vld [vmem:[%s2 + $0x138] sm:$0xff]
  %v91 = vld [vmem:[%s2 + $0x140] sm:$0xff]
  %v92 = vld [vmem:[%s2 + $0x148] sm:$0xff]
  %v93 = vld [vmem:[%s2 + $0x150] sm:$0xff]
  %v94 = vld [vmem:[%s2 + $0x158] sm:$0xff]
  %v95 = vld [vmem:[%s2 + $0x160] sm:$0xff]
  %v96 = vld [vmem:[%s2 + $0x168] sm:$0xff]
  %v97 = vld [vmem:[%s2 + $0x170] sm:$0xff]
  %v98 = vld [vmem:[%s2 + $0x178] sm:$0xff]
  %v99 = vpack.c.bf16 %v24, %v23
  %v100 = vpack.c.bf16 %v26, %v25
  %v101 = vpack.c.bf16 %v28, %v27
  %v102 = vpack.c.bf16 %v30, %v29
  %v103 = vpack.c.bf16 %v32, %v31
  %v104 = vpack.c.bf16 %v34, %v33
  %v105 = vpack.c.bf16 %v36, %v35
  %v106 = vpack.c.bf16 %v38, %v37
  %v107 = vpack.c.bf16 %v40, %v39
  %v108 = vpack.c.bf16 %v42, %v41
  %v109 = vpack.c.bf16 %v44, %v43
  %v110 = vpack.c.bf16 %v46, %v45
  %v111 = vpack.c.bf16 %v48, %v47
  %v112 = vpack.c.bf16 %v50, %v49
  %v161 = vunpack.c.l.b16 %v51
  %v162 = vunpack.c.h.b16 %v51
  %v163 = vunpack.c.l.b16 %v52
  %v164 = vunpack.c.h.b16 %v52
  %v165 = vunpack.c.l.b16 %v53
  %v166 = vunpack.c.h.b16 %v53
  %v167 = vunpack.c.l.b16 %v54
  %v168 = vunpack.c.h.b16 %v54
  %v169 = vunpack.c.l.b16 %v55
  %v170 = vunpack.c.h.b16 %v55
  %v171 = vunpack.c.l.b16 %v56
  %v172 = vunpack.c.h.b16 %v56
  %v173 = vunpack.c.l.b16 %v57
  %v174 = vunpack.c.h.b16 %v57
  %v175 = vunpack.c.l.b16 %v58
  %v176 = vunpack.c.h.b16 %v58
  %v177 = vunpack.c.l.b16 %v59
  %v178 = vunpack.c.h.b16 %v59
  %v179 = vunpack.c.l.b16 %v60
  %v180 = vunpack.c.h.b16 %v60
  %v181 = vunpack.c.l.b16 %v61
  %v182 = vunpack.c.h.b16 %v61
  %v183 = vunpack.c.l.b16 %v62
  %v184 = vunpack.c.h.b16 %v62
  %v185 = vunpack.c.l.b16 %v63
  %v186 = vunpack.c.h.b16 %v63
  %v187 = vunpack.c.l.b16 %v64
  %v188 = vunpack.c.h.b16 %v64
  %v189 = vunpack.c.l.b16 %v65
  %v190 = vunpack.c.h.b16 %v65
  %v191 = vunpack.c.l.b16 %v66
  %v192 = vunpack.c.h.b16 %v66
  %v193 = vunpack.c.l.b16 %v67
  %v194 = vunpack.c.h.b16 %v67
  %v195 = vunpack.c.l.b16 %v68
  %v196 = vunpack.c.h.b16 %v68
  %v197 = vunpack.c.l.b16 %v69
  %v198 = vunpack.c.h.b16 %v69
  %v199 = vunpack.c.l.b16 %v70
  %v200 = vunpack.c.h.b16 %v70
  %v201 = vunpack.c.l.b16 %v71
  %v202 = vunpack.c.h.b16 %v71
  %v203 = vunpack.c.l.b16 %v72
  %v204 = vunpack.c.h.b16 %v72
  %v205 = vunpack.c.l.b16 %v73
  %v206 = vunpack.c.h.b16 %v73
  %v207 = vunpack.c.l.b16 %v74
  %v208 = vunpack.c.h.b16 %v74
  %v209 = vunpack.c.l.b16 %v75
  %v210 = vunpack.c.h.b16 %v75
  %v211 = vunpack.c.l.b16 %v76
  %v212 = vunpack.c.h.b16 %v76
  %v213 = vunpack.c.l.b16 %v77
  %v214 = vunpack.c.h.b16 %v77
  %v215 = vunpack.c.l.b16 %v78
  %v216 = vunpack.c.h.b16 %v78
  %v217 = vunpack.c.l.b16 %v79
  %v218 = vunpack.c.h.b16 %v79
  %v219 = vunpack.c.l.b16 %v80
  %v220 = vunpack.c.h.b16 %v80
  %v221 = vunpack.c.l.b16 %v81
  %v222 = vunpack.c.h.b16 %v81
  %v223 = vunpack.c.l.b16 %v82
  %v224 = vunpack.c.h.b16 %v82
  %v225 = vunpack.c.l.b16 %v83
  %v226 = vunpack.c.h.b16 %v83
  %v227 = vunpack.c.l.b16 %v84
  %v228 = vunpack.c.h.b16 %v84
  %v229 = vunpack.c.l.b16 %v85
  %v230 = vunpack.c.h.b16 %v85
  %v231 = vunpack.c.l.b16 %v86
  %v232 = vunpack.c.h.b16 %v86
  %v233 = vunpack.c.l.b16 %v87
  %v234 = vunpack.c.h.b16 %v87
  %v235 = vunpack.c.l.b16 %v88
  %v236 = vunpack.c.h.b16 %v88
  %v237 = vunpack.c.l.b16 %v89
  %v238 = vunpack.c.h.b16 %v89
  %v239 = vunpack.c.l.b16 %v90
  %v240 = vunpack.c.h.b16 %v90
  %v241 = vunpack.c.l.b16 %v91
  %v242 = vunpack.c.h.b16 %v91
  %v243 = vunpack.c.l.b16 %v92
  %v244 = vunpack.c.h.b16 %v92
  %v245 = vunpack.c.l.b16 %v93
  %v246 = vunpack.c.h.b16 %v93
  %v247 = vunpack.c.l.b16 %v94
  %v248 = vunpack.c.h.b16 %v94
  %v249 = vunpack.c.l.b16 %v95
  %v250 = vunpack.c.h.b16 %v95
  %v251 = vunpack.c.l.b16 %v96
  %v252 = vunpack.c.h.b16 %v96
  %v253 = vunpack.c.l.b16 %v97
  %v254 = vunpack.c.h.b16 %v97
  %v255 = vunpack.c.l.b16 %v98
  %v256 = vunpack.c.h.b16 %v98
  %v257 = vpack.c.b16 %v163, %v161
  %v258 = vpack.c.b16 %v164, %v162
  %v259 = vpack.c.b16 %v167, %v165
  %v260 = vpack.c.b16 %v168, %v166
  %v261 = vpack.c.b16 %v171, %v169
  %v262 = vpack.c.b16 %v172, %v170
  %v263 = vpack.c.b16 %v175, %v173
  %v264 = vpack.c.b16 %v176, %v174
  %v265 = vpack.c.b16 %v179, %v177
  %v266 = vpack.c.b16 %v180, %v178
  %v267 = vpack.c.b16 %v183, %v181
  %v268 = vpack.c.b16 %v184, %v182
  %v269 = vpack.c.b16 %v187, %v185
  %v270 = vpack.c.b16 %v188, %v186
  %v271 = vpack.c.b16 %v191, %v189
  %v272 = vpack.c.b16 %v192, %v190
  %v273 = vpack.c.b16 %v195, %v193
  %v274 = vpack.c.b16 %v196, %v194
  %v275 = vpack.c.b16 %v199, %v197
  %v276 = vpack.c.b16 %v200, %v198
  %v277 = vpack.c.b16 %v203, %v201
  %v278 = vpack.c.b16 %v204, %v202
  %v279 = vpack.c.b16 %v207, %v205
  %v280 = vpack.c.b16 %v208, %v206
  %v281 = vpack.c.b16 %v211, %v209
  %v282 = vpack.c.b16 %v212, %v210
  %v283 = vpack.c.b16 %v215, %v213
  %v284 = vpack.c.b16 %v216, %v214
  %v285 = vpack.c.b16 %v219, %v217
  %v286 = vpack.c.b16 %v220, %v218
  %v287 = vpack.c.b16 %v223, %v221
  %v288 = vpack.c.b16 %v224, %v222
  %v289 = vpack.c.b16 %v227, %v225
  %v290 = vpack.c.b16 %v228, %v226
  %v291 = vpack.c.b16 %v231, %v229
  %v292 = vpack.c.b16 %v232, %v230
  %v293 = vpack.c.b16 %v235, %v233
  %v294 = vpack.c.b16 %v236, %v234
  %v295 = vpack.c.b16 %v239, %v237
  %v296 = vpack.c.b16 %v240, %v238
  %v297 = vpack.c.b16 %v243, %v241
  %v298 = vpack.c.b16 %v244, %v242
  %v299 = vpack.c.b16 %v247, %v245
  %v300 = vpack.c.b16 %v248, %v246
  %v301 = vpack.c.b16 %v251, %v249
  %v302 = vpack.c.b16 %v252, %v250
  %v303 = vpack.c.b16 %v255, %v253
  %v304 = vpack.c.b16 %v256, %v254
  %vm329 = vcmask 736256
  %v331 = vsel %vm329, %v258, 0
  %v334 = vsel %vm329, %v260, 0
  %v337 = vsel %vm329, %v262, 0
  %v340 = vsel %vm329, %v264, 0
  %v343 = vsel %vm329, %v266, 0
  %v346 = vsel %vm329, %v268, 0
  %v349 = vsel %vm329, %v270, 0
  %v352 = vsel %vm329, %v272, 0
  %v355 = vsel %vm329, %v274, 0
  %v358 = vsel %vm329, %v276, 0
  %v361 = vsel %vm329, %v278, 0
  %v364 = vsel %vm329, %v280, 0
  %v367 = vsel %vm329, %v282, 0
  %v370 = vsel %vm329, %v284, 0
  %v373 = vsel %vm329, %v286, 0
  %v376 = vsel %vm329, %v288, 0
  %v379 = vsel %vm329, %v290, 0
  %v382 = vsel %vm329, %v292, 0
  %v385 = vsel %vm329, %v294, 0
  %v388 = vsel %vm329, %v296, 0
  %v391 = vsel %vm329, %v298, 0
  %v394 = vsel %vm329, %v300, 0
  %v397 = vsel %vm329, %v302, 0
  %v400 = vsel %vm329, %v304, 0
  %vm402 = vcmask 1044480
  %v404 = vsel %vm402, %v112, 0
  %406 = vmatpush.bf16.msra.mxu0 %v106
  %407 = vmatpush.bf16.msra.mxu0 %v105
  %408 = vmatpush.bf16.msra.mxu0 %v104
  %409 = vmatpush.bf16.msra.mxu0 %v103
  %410 = vmatpush.bf16.msra.mxu0 %v102
  %411 = vmatpush.bf16.msra.mxu0 %v101
  %412 = vmatpush.bf16.msra.mxu0 %v100
  %413 = vmatpush.bf16.msra.mxu0 %v99
  %414 = vmatmul.bf16.gmra.mxu0 %v257
  %v415 = vpop.f32.mrf.mxu0
  %v416 = vadd.f32 0.0, %v415
  %v417 = vpop.f32.mrf.mxu0
  %v418 = vadd.f32 0.0, %v417
  %419 = vmatmul.bf16.gmra.mxu0 %v259
  %v420 = vpop.f32.mrf.mxu0
  %v421 = vadd.f32 0.0, %v420
  %v422 = vpop.f32.mrf.mxu0
  %v423 = vadd.f32 0.0, %v422
  %424 = vmatmul.bf16.gmra.mxu0 %v261
  %v425 = vpop.f32.mrf.mxu0
  %v426 = vadd.f32 0.0, %v425
  %v427 = vpop.f32.mrf.mxu0
  %v428 = vadd.f32 0.0, %v427
  %429 = vmatmul.bf16.gmra.mxu0 %v263
  %v430 = vpop.f32.mrf.mxu0
  %v431 = vadd.f32 0.0, %v430
  %v432 = vpop.f32.mrf.mxu0
  %v433 = vadd.f32 0.0, %v432
  %434 = vmatmul.bf16.gmra.mxu0 %v265
  %v435 = vpop.f32.mrf.mxu0
  %v436 = vadd.f32 0.0, %v435
  %v437 = vpop.f32.mrf.mxu0
  %v438 = vadd.f32 0.0, %v437
  %439 = vmatmul.bf16.gmra.mxu0 %v267
  %v440 = vpop.f32.mrf.mxu0
  %v441 = vadd.f32 0.0, %v440
  %v442 = vpop.f32.mrf.mxu0
  %v443 = vadd.f32 0.0, %v442
  %444 = vmatmul.bf16.gmra.mxu0 %v269
  %v445 = vpop.f32.mrf.mxu0
  %v446 = vadd.f32 0.0, %v445
  %v447 = vpop.f32.mrf.mxu0
  %v448 = vadd.f32 0.0, %v447
  %449 = vmatmul.bf16.gmra.mxu0 %v271
  %v450 = vpop.f32.mrf.mxu0
  %v451 = vadd.f32 0.0, %v450
  %v452 = vpop.f32.mrf.mxu0
  %v453 = vadd.f32 0.0, %v452
  %454 = vmatmul.bf16.gmra.mxu0 %v273
  %v455 = vpop.f32.mrf.mxu0
  %v456 = vadd.f32 0.0, %v455
  %v457 = vpop.f32.mrf.mxu0
  %v458 = vadd.f32 0.0, %v457
  %459 = vmatmul.bf16.gmra.mxu0 %v275
  %v460 = vpop.f32.mrf.mxu0
  %v461 = vadd.f32 0.0, %v460
  %v462 = vpop.f32.mrf.mxu0
  %v463 = vadd.f32 0.0, %v462
  %464 = vmatmul.bf16.gmra.mxu0 %v277
  %v465 = vpop.f32.mrf.mxu0
  %v466 = vadd.f32 0.0, %v465
  %v467 = vpop.f32.mrf.mxu0
  %v468 = vadd.f32 0.0, %v467
  %469 = vmatmul.bf16.gmra.mxu0 %v279
  %v470 = vpop.f32.mrf.mxu0
  %v471 = vadd.f32 0.0, %v470
  %v472 = vpop.f32.mrf.mxu0
  %v473 = vadd.f32 0.0, %v472
  %474 = vmatmul.bf16.gmra.mxu0 %v281
  %v475 = vpop.f32.mrf.mxu0
  %v476 = vadd.f32 0.0, %v475
  %v477 = vpop.f32.mrf.mxu0
  %v478 = vadd.f32 0.0, %v477
  %479 = vmatmul.bf16.gmra.mxu0 %v283
  %v480 = vpop.f32.mrf.mxu0
  %v481 = vadd.f32 0.0, %v480
  %v482 = vpop.f32.mrf.mxu0
  %v483 = vadd.f32 0.0, %v482
  %484 = vmatmul.bf16.gmra.mxu0 %v285
  %v485 = vpop.f32.mrf.mxu0
  %v486 = vadd.f32 0.0, %v485
  %v487 = vpop.f32.mrf.mxu0
  %v488 = vadd.f32 0.0, %v487
  %489 = vmatmul.bf16.gmra.mxu0 %v287
  %v490 = vpop.f32.mrf.mxu0
  %v491 = vadd.f32 0.0, %v490
  %v492 = vpop.f32.mrf.mxu0
  %v493 = vadd.f32 0.0, %v492
  %494 = vmatmul.bf16.gmra.mxu0 %v289
  %v495 = vpop.f32.mrf.mxu0
  %v496 = vadd.f32 0.0, %v495
  %v497 = vpop.f32.mrf.mxu0
  %v498 = vadd.f32 0.0, %v497
  %499 = vmatmul.bf16.gmra.mxu0 %v291
  %v500 = vpop.f32.mrf.mxu0
  %v501 = vadd.f32 0.0, %v500
  %v502 = vpop.f32.mrf.mxu0
  %v503 = vadd.f32 0.0, %v502
  %504 = vmatmul.bf16.gmra.mxu0 %v293
  %v505 = vpop.f32.mrf.mxu0
  %v506 = vadd.f32 0.0, %v505
  %v507 = vpop.f32.mrf.mxu0
  %v508 = vadd.f32 0.0, %v507
  %509 = vmatmul.bf16.gmra.mxu0 %v295
  %v510 = vpop.f32.mrf.mxu0
  %v511 = vadd.f32 0.0, %v510
  %v512 = vpop.f32.mrf.mxu0
  %v513 = vadd.f32 0.0, %v512
  %514 = vmatmul.bf16.gmra.mxu0 %v297
  %v515 = vpop.f32.mrf.mxu0
  %v516 = vadd.f32 0.0, %v515
  %v517 = vpop.f32.mrf.mxu0
  %v518 = vadd.f32 0.0, %v517
  %519 = vmatmul.bf16.gmra.mxu0 %v299
  %v520 = vpop.f32.mrf.mxu0
  %v521 = vadd.f32 0.0, %v520
  %v522 = vpop.f32.mrf.mxu0
  %v523 = vadd.f32 0.0, %v522
  %524 = vmatmul.bf16.gmra.mxu0 %v301
  %v525 = vpop.f32.mrf.mxu0
  %v526 = vadd.f32 0.0, %v525
  %v527 = vpop.f32.mrf.mxu0
  %v528 = vadd.f32 0.0, %v527
  %529 = vmatmul.bf16.gmra.mxu0 %v303
  %v530 = vpop.f32.mrf.mxu0
  %v531 = vadd.f32 0.0, %v530
  %v532 = vpop.f32.mrf.mxu0
  %v533 = vadd.f32 0.0, %v532
  %534 = vdwg.mxu0
  %535 = vmatpush.bf16.msra.mxu0 0
  %536 = vmatpush.bf16.msra.mxu0 0
  %537 = vmatpush.bf16.msra.mxu0 %v404
  %538 = vmatpush.bf16.msra.mxu0 %v111
  %539 = vmatpush.bf16.msra.mxu0 %v110
  %540 = vmatpush.bf16.msra.mxu0 %v109
  %541 = vmatpush.bf16.msra.mxu0 %v108
  %542 = vmatpush.bf16.msra.mxu0 %v107
  %543 = vmatmul.bf16.gmra.mxu0 %v331
  %v544 = vpop.f32.mrf.mxu0
  %v545 = vadd.f32 %v416, %v544
  %v546 = vpop.f32.mrf.mxu0
  %v547 = vadd.f32 %v418, %v546
  %548 = vmatmul.bf16.gmra.mxu0 %v334
  %v549 = vpop.f32.mrf.mxu0
  %v550 = vadd.f32 %v421, %v549
  %v551 = vpop.f32.mrf.mxu0
  %v552 = vadd.f32 %v423, %v551
  %553 = vmatmul.bf16.gmra.mxu0 %v337
  %v554 = vpop.f32.mrf.mxu0
  %v555 = vadd.f32 %v426, %v554
  %v556 = vpop.f32.mrf.mxu0
  %v557 = vadd.f32 %v428, %v556
  %558 = vmatmul.bf16.gmra.mxu0 %v340
  %v559 = vpop.f32.mrf.mxu0
  %v560 = vadd.f32 %v431, %v559
  %v561 = vpop.f32.mrf.mxu0
  %v562 = vadd.f32 %v433, %v561
  %563 = vmatmul.bf16.gmra.mxu0 %v343
  %v564 = vpop.f32.mrf.mxu0
  %v565 = vadd.f32 %v436, %v564
  %v566 = vpop.f32.mrf.mxu0
  %v567 = vadd.f32 %v438, %v566
  %568 = vmatmul.bf16.gmra.mxu0 %v346
  %v569 = vpop.f32.mrf.mxu0
  %v570 = vadd.f32 %v441, %v569
  %v571 = vpop.f32.mrf.mxu0
  %v572 = vadd.f32 %v443, %v571
  %573 = vmatmul.bf16.gmra.mxu0 %v349
  %v574 = vpop.f32.mrf.mxu0
  %v575 = vadd.f32 %v446, %v574
  %v576 = vpop.f32.mrf.mxu0
  %v577 = vadd.f32 %v448, %v576
  %578 = vmatmul.bf16.gmra.mxu0 %v352
  %v579 = vpop.f32.mrf.mxu0
  %v580 = vadd.f32 %v451, %v579
  %v581 = vpop.f32.mrf.mxu0
  %v582 = vadd.f32 %v453, %v581
  %583 = vmatmul.bf16.gmra.mxu0 %v355
  %v584 = vpop.f32.mrf.mxu0
  %v585 = vadd.f32 %v456, %v584
  %v586 = vpop.f32.mrf.mxu0
  %v587 = vadd.f32 %v458, %v586
  %588 = vmatmul.bf16.gmra.mxu0 %v358
  %v589 = vpop.f32.mrf.mxu0
  %v590 = vadd.f32 %v461, %v589
  %v591 = vpop.f32.mrf.mxu0
  %v592 = vadd.f32 %v463, %v591
  %593 = vmatmul.bf16.gmra.mxu0 %v361
  %v594 = vpop.f32.mrf.mxu0
  %v595 = vadd.f32 %v466, %v594
  %v596 = vpop.f32.mrf.mxu0
  %v597 = vadd.f32 %v468, %v596
  %598 = vmatmul.bf16.gmra.mxu0 %v364
  %v599 = vpop.f32.mrf.mxu0
  %v600 = vadd.f32 %v471, %v599
  %v601 = vpop.f32.mrf.mxu0
  %v602 = vadd.f32 %v473, %v601
  %603 = vmatmul.bf16.gmra.mxu0 %v367
  %v604 = vpop.f32.mrf.mxu0
  %v605 = vadd.f32 %v476, %v604
  %v606 = vpop.f32.mrf.mxu0
  %v607 = vadd.f32 %v478, %v606
  %608 = vmatmul.bf16.gmra.mxu0 %v370
  %v609 = vpop.f32.mrf.mxu0
  %v610 = vadd.f32 %v481, %v609
  %v611 = vpop.f32.mrf.mxu0
  %v612 = vadd.f32 %v483, %v611
  %613 = vmatmul.bf16.gmra.mxu0 %v373
  %v614 = vpop.f32.mrf.mxu0
  %v615 = vadd.f32 %v486, %v614
  %v616 = vpop.f32.mrf.mxu0
  %v617 = vadd.f32 %v488, %v616
  %618 = vmatmul.bf16.gmra.mxu0 %v376
  %v619 = vpop.f32.mrf.mxu0
  %v620 = vadd.f32 %v491, %v619
  %v621 = vpop.f32.mrf.mxu0
  %v622 = vadd.f32 %v493, %v621
  %623 = vmatmul.bf16.gmra.mxu0 %v379
  %v624 = vpop.f32.mrf.mxu0
  %v625 = vadd.f32 %v496, %v624
  %v626 = vpop.f32.mrf.mxu0
  %v627 = vadd.f32 %v498, %v626
  %628 = vmatmul.bf16.gmra.mxu0 %v382
  %v629 = vpop.f32.mrf.mxu0
  %v630 = vadd.f32 %v501, %v629
  %v631 = vpop.f32.mrf.mxu0
  %v632 = vadd.f32 %v503, %v631
  %633 = vmatmul.bf16.gmra.mxu0 %v385
  %v634 = vpop.f32.mrf.mxu0
  %v635 = vadd.f32 %v506, %v634
  %v636 = vpop.f32.mrf.mxu0
  %v637 = vadd.f32 %v508, %v636
  %638 = vmatmul.bf16.gmra.mxu0 %v388
  %v639 = vpop.f32.mrf.mxu0
  %v640 = vadd.f32 %v511, %v639
  %v641 = vpop.f32.mrf.mxu0
  %v642 = vadd.f32 %v513, %v641
  %643 = vmatmul.bf16.gmra.mxu0 %v391
  %v644 = vpop.f32.mrf.mxu0
  %v645 = vadd.f32 %v516, %v644
  %v646 = vpop.f32.mrf.mxu0
  %v647 = vadd.f32 %v518, %v646
  %648 = vmatmul.bf16.gmra.mxu0 %v394
  %v649 = vpop.f32.mrf.mxu0
  %v650 = vadd.f32 %v521, %v649
  %v651 = vpop.f32.mrf.mxu0
  %v652 = vadd.f32 %v523, %v651
  %653 = vmatmul.bf16.gmra.mxu0 %v397
  %v654 = vpop.f32.mrf.mxu0
  %v655 = vadd.f32 %v526, %v654
  %v656 = vpop.f32.mrf.mxu0
  %v657 = vadd.f32 %v528, %v656
  %658 = vmatmul.bf16.gmra.mxu0 %v400
  %v659 = vpop.f32.mrf.mxu0
  %v660 = vadd.f32 %v531, %v659
  %v661 = vpop.f32.mrf.mxu0
  %v662 = vadd.f32 %v533, %v661
  %663 = vdwg.mxu0
  %v664 = vld [vmem:[%s3] sm:$0xff]
  %v665 = vld [vmem:[%s3 + $0x8] sm:$0xff]
  %v666 = vld [vmem:[%s3 + $0x10] sm:$0xff]
  %v667 = vld [vmem:[%s3 + $0x18] sm:$0xff]
  %v668 = vld [vmem:[%s3 + $0x20] sm:$0xff]
  %v669 = vld [vmem:[%s3 + $0x28] sm:$0xff]
  %v670 = vld [vmem:[%s3 + $0x30] sm:$0xff]
  %v671 = vld [vmem:[%s3 + $0x38] sm:$0xff]
  %v672 = vld [vmem:[%s3 + $0x40] sm:$0xff]
  %v673 = vld [vmem:[%s3 + $0x48] sm:$0xff]
  %v674 = vld [vmem:[%s3 + $0x50] sm:$0xff]
  %v675 = vld [vmem:[%s3 + $0x58] sm:$0xff]
  %v676 = vld [vmem:[%s3 + $0x60] sm:$0xff]
  %v677 = vld [vmem:[%s3 + $0x68] sm:$0xff]
  %v678 = vld [vmem:[%s3 + $0x70] sm:$0xff]
  %v679 = vld [vmem:[%s3 + $0x78] sm:$0xff]
  %v680 = vld [vmem:[%s3 + $0x80] sm:$0xff]
  %v681 = vld [vmem:[%s3 + $0x88] sm:$0xff]
  %v683 = vsel %vm329, %v665, 0
  %v686 = vsel %vm329, %v667, 0
  %v689 = vsel %vm329, %v669, 0
  %v692 = vsel %vm329, %v671, 0
  %v695 = vsel %vm329, %v673, 0
  %v698 = vsel %vm329, %v675, 0
  %v701 = vsel %vm329, %v677, 0
  %v704 = vsel %vm329, %v679, 0
  %v707 = vsel %vm329, %v681, 0
  %vm709 = vcmask 1041408
  %v711 = vsel %vm709, %v50, 0
  %713 = vmatpush.msra.mxu0 %v38
  %714 = vmatpush.msra.mxu0 %v37
  %715 = vmatpush.msra.mxu0 %v36
  %716 = vmatpush.msra.mxu0 %v35
  %717 = vmatpush.msra.mxu0 %v34
  %718 = vmatpush.msra.mxu0 %v33
  %719 = vmatpush.msra.mxu0 %v32
  %720 = vmatpush.msra.mxu0 %v31
  %721 = vmatpush.msra.mxu0 %v30
  %722 = vmatpush.msra.mxu0 %v29
  %723 = vmatpush.msra.mxu0 %v28
  %724 = vmatpush.msra.mxu0 %v27
  %725 = vmatpush.msra.mxu0 %v26
  %726 = vmatpush.msra.mxu0 %v25
  %727 = vmatpush.msra.mxu0 %v24
  %728 = vmatpush.msra.mxu0 %v23
  %729 = vmatmul.f32.gmra.mxu0 %v664
  %v730 = vpop.f32.mrf.mxu0
  %v731 = vadd.f32 0.0, %v730
  %732 = vmatmul.f32.gmra.mxu0 %v666
  %v733 = vpop.f32.mrf.mxu0
  %v734 = vadd.f32 0.0, %v733
  %735 = vmatmul.f32.gmra.mxu0 %v668
  %v736 = vpop.f32.mrf.mxu0
  %v737 = vadd.f32 0.0, %v736
  %738 = vmatmul.f32.gmra.mxu0 %v670
  %v739 = vpop.f32.mrf.mxu0
  %v740 = vadd.f32 0.0, %v739
  %741 = vmatmul.f32.gmra.mxu0 %v672
  %v742 = vpop.f32.mrf.mxu0
  %v743 = vadd.f32 0.0, %v742
  %744 = vmatmul.f32.gmra.mxu0 %v674
  %v745 = vpop.f32.mrf.mxu0
  %v746 = vadd.f32 0.0, %v745
  %747 = vmatmul.f32.gmra.mxu0 %v676
  %v748 = vpop.f32.mrf.mxu0
  %v749 = vadd.f32 0.0, %v748
  %750 = vmatmul.f32.gmra.mxu0 %v678
  %v751 = vpop.f32.mrf.mxu0
  %v752 = vadd.f32 0.0, %v751
  %753 = vmatmul.f32.gmra.mxu0 %v680
  %v754 = vpop.f32.mrf.mxu0
  %v755 = vadd.f32 0.0, %v754
  %756 = vdwg.mxu0
  %757 = vmatpush.msra.mxu0 0.0
  %758 = vmatpush.msra.mxu0 0.0
  %759 = vmatpush.msra.mxu0 0.0
  %760 = vmatpush.msra.mxu0 0.0
  %761 = vmatpush.msra.mxu0 %v711
  %762 = vmatpush.msra.mxu0 %v49
  %763 = vmatpush.msra.mxu0 %v48
  %764 = vmatpush.msra.mxu0 %v47
  %765 = vmatpush.msra.mxu0 %v46
  %766 = vmatpush.msra.mxu0 %v45
  %767 = vmatpush.msra.mxu0 %v44
  %768 = vmatpush.msra.mxu0 %v43
  %769 = vmatpush.msra.mxu0 %v42
  %770 = vmatpush.msra.mxu0 %v41
  %771 = vmatpush.msra.mxu0 %v40
  %772 = vmatpush.msra.mxu0 %v39
  %773 = vmatmul.f32.gmra.mxu0 %v683
  %v774 = vpop.f32.mrf.mxu0
  %v775 = vadd.f32 %v731, %v774
  %776 = vmatmul.f32.gmra.mxu0 %v686
  %v777 = vpop.f32.mrf.mxu0
  %v778 = vadd.f32 %v734, %v777
  %779 = vmatmul.f32.gmra.mxu0 %v689
  %v780 = vpop.f32.mrf.mxu0
  %v781 = vadd.f32 %v737, %v780
  %782 = vmatmul.f32.gmra.mxu0 %v692
  %v783 = vpop.f32.mrf.mxu0
  %v784 = vadd.f32 %v740, %v783
  %785 = vmatmul.f32.gmra.mxu0 %v695
  %v786 = vpop.f32.mrf.mxu0
  %v787 = vadd.f32 %v743, %v786
  %788 = vmatmul.f32.gmra.mxu0 %v698
  %v789 = vpop.f32.mrf.mxu0
  %v790 = vadd.f32 %v746, %v789
  %791 = vmatmul.f32.gmra.mxu0 %v701
  %v792 = vpop.f32.mrf.mxu0
  %v793 = vadd.f32 %v749, %v792
  %794 = vmatmul.f32.gmra.mxu0 %v704
  %v795 = vpop.f32.mrf.mxu0
  %v796 = vadd.f32 %v752, %v795
  %797 = vmatmul.f32.gmra.mxu0 %v707
  %v798 = vpop.f32.mrf.mxu0
  %v799 = vadd.f32 %v755, %v798
  %800 = vdwg.mxu0
  %v801 = vld [vmem:[%s1] sm:$0xff]
  %v802 = vld [vmem:[%s1 + $0x8] sm:$0xff]
  %v803 = vld [vmem:[%s1 + $0x10] sm:$0xff]
  %v804 = vld [vmem:[%s1 + $0x18] sm:$0xff]
  %v805 = vld [vmem:[%s1 + $0x20] sm:$0xff]
  %v806 = vld [vmem:[%s1 + $0x28] sm:$0xff]
  %v807 = vld [vmem:[%s1 + $0x30] sm:$0xff]
  %v808 = vld [vmem:[%s1 + $0x38] sm:$0xff]
  %v809 = vld [vmem:[%s1 + $0x40] sm:$0xff]
  %v810 = vld [vmem:[%s1 + $0x48] sm:$0xff]
  %v811 = vld [vmem:[%s1 + $0x50] sm:$0xff]
  %v812 = vld [vmem:[%s1 + $0x58] sm:$0xff]
  %v813 = vld [vmem:[%s1 + $0x60] sm:$0xff]
  %v814 = vld [vmem:[%s1 + $0x68] sm:$0xff]
  %v815 = vld [vmem:[%s1 + $0x70] sm:$0xff]
  %v816 = vld [vmem:[%s1 + $0x78] sm:$0xff]
  %v817 = vld [vmem:[%s1 + $0x80] sm:$0xff]
  %v818 = vld [vmem:[%s1 + $0x88] sm:$0xff]
  %v819 = vld [vmem:[%s1 + $0x90] sm:$0xff]
  %v820 = vld [vmem:[%s1 + $0x98] sm:$0xff]
  %v821 = vld [vmem:[%s1 + $0xa0] sm:$0xff]
  %v822 = vld [vmem:[%s1 + $0xa8] sm:$0xff]
  %v823 = vld [vmem:[%s1 + $0xb0] sm:$0xff]
  %v824 = vld [vmem:[%s1 + $0xb8] sm:$0xff]
  %v825 = vld [vmem:[%s1 + $0xc0] sm:$0xff]
  %v826 = vld [vmem:[%s1 + $0xc8] sm:$0xff]
  %v827 = vld [vmem:[%s1 + $0xd0] sm:$0xff]
  %v829 = vrot.slane %v775, 5
  %v831 = vsub.f32 %v775, %v829
  %v833 = vrot.slane %v802, 1
  %v835 = vmul.f32 %v801, %v833
  %v836 = vrot.slane %v802, 3
  %v838 = vmul.f32 %v801, %v836
  %v840 = vrot.slane %v838, 1
  %v842 = vadd.f32 %v835, %v840
  %v843 = vrot.slane %v802, 5
  %v845 = vmul.f32 %v801, %v843
  %v847 = vrot.slane %v845, 2
  %v849 = vadd.f32 %v842, %v847
  %v850 = vrot.slane %v802, 2
  %v852 = vmul.f32 %v801, %v850
  %v853 = vrot.slane %v802, 4
  %v855 = vmul.f32 %v801, %v853
  %v857 = vrot.slane %v855, 1
  %v859 = vadd.f32 %v852, %v857
  %v861 = vrot.slane %v803, 6
  %v863 = vmul.f32 %v801, %v861
  %v865 = vrot.slane %v863, 2
  %v867 = vadd.f32 %v859, %v865
  %v868 = vrot.slane %v845, 1
  %v870 = vadd.f32 %v838, %v868
  %v871 = vrot.slane %v803, 7
  %v873 = vmul.f32 %v801, %v871
  %v875 = vrot.slane %v873, 2
  %v877 = vadd.f32 %v870, %v875
  %v878 = vrot.slane %v802, 6
  %v880 = vmul.f32 %v801, %v878
  %v881 = vmul.f32 %v801, %v802
  %v883 = vrot.slane %v881, 1
  %v885 = vadd.f32 %v880, %v883
  %v887 = vrot.slane %v852, 2
  %v889 = vadd.f32 %v885, %v887
  %v890 = vrot.slane %v802, 7
  %v892 = vmul.f32 %v801, %v890
  %v894 = vrot.slane %v835, 1
  %v896 = vadd.f32 %v892, %v894
  %v897 = vrot.slane %v803, 3
  %v899 = vmul.f32 %v801, %v897
  %v901 = vrot.slane %v899, 2
  %v903 = vadd.f32 %v896, %v901
  %v904 = vrot.slane %v852, 1
  %v906 = vadd.f32 %v881, %v904
  %v907 = vrot.slane %v803, 4
  %v909 = vmul.f32 %v801, %v907
  %v911 = vrot.slane %v909, 2
  %v913 = vadd.f32 %v906, %v911
  %v914 = vmul.f32 %v802, %v890
  %v916 = vrot.slane %v914, 2
  %v918 = vadd.f32 %v870, %v916
  %v920 = vrot.slane %v880, 1
  %v922 = vadd.f32 %v855, %v920
  %v923 = vmul.f32 %v802, %v803
  %v925 = vrot.slane %v923, 2
  %v927 = vadd.f32 %v922, %v925
  %v929 = vrot.slane %v892, 1
  %v931 = vadd.f32 %v845, %v929
  %v932 = vrot.slane %v803, 1
  %v934 = vmul.f32 %v802, %v932
  %v936 = vrot.slane %v934, 2
  %v938 = vadd.f32 %v931, %v936
  %v940 = vrot.slane %v831, 3
  %v942 = vmul.f32 %v801, %v940
  %v944 = vrot.slane %v942, 1
  %v946 = vadd.f32 %v942, %v944
  %v947 = vrot.slane %v942, 2
  %v949 = vadd.f32 %v946, %v947
  %v950 = vadd.f32 %v949, %v775
  %v951 = vmul.f32 %v801, %v831
  %v953 = vrot.slane %v951, 1
  %v955 = vadd.f32 %v951, %v953
  %v956 = vrot.slane %v951, 2
  %v958 = vadd.f32 %v955, %v956
  %v959 = vrot.slane %v775, 6
  %v961 = vadd.f32 %v958, %v959
  %v962 = vrot.slane %v831, 5
  %v964 = vmul.f32 %v801, %v962
  %v966 = vrot.slane %v964, 1
  %v968 = vadd.f32 %v964, %v966
  %v969 = vmul.f32 %v802, %v962
  %v971 = vrot.slane %v969, 2
  %v973 = vadd.f32 %v968, %v971
  %v974 = vrot.slane %v775, 4
  %v976 = vadd.f32 %v973, %v974
  %v977 = vrot.slane %v775, 2
  %v979 = vsub.f32 %v775, %v977
  %v980 = vsub.f32 %v778, %v977
  %v981 = vrot.slane %v803, 2
  %v983 = vmul.f32 %v801, %v981
  %v984 = vrot.slane %v909, 1
  %v986 = vadd.f32 %v983, %v984
  %v988 = vrot.slane %v804, 6
  %v990 = vmul.f32 %v801, %v988
  %v992 = vrot.slane %v990, 2
  %v994 = vadd.f32 %v986, %v992
  %v995 = vrot.slane %v803, 5
  %v997 = vmul.f32 %v801, %v995
  %v999 = vrot.slane %v997, 1
  %v1001 = vadd.f32 %v899, %v999
  %v1002 = vrot.slane %v804, 7
  %v1004 = vmul.f32 %v801, %v1002
  %v1006 = vrot.slane %v1004, 2
  %v1008 = vadd.f32 %v1001, %v1006
  %v1009 = vrot.slane %v863, 1
  %v1011 = vadd.f32 %v909, %v1009
  %v1012 = vmul.f32 %v801, %v804
  %v1014 = vrot.slane %v1012, 2
  %v1016 = vadd.f32 %v1011, %v1014
  %v1017 = vmul.f32 %v801, %v932
  %v1019 = vrot.slane %v1017, 1
  %v1021 = vadd.f32 %v873, %v1019
  %v1022 = vrot.slane %v804, 3
  %v1024 = vmul.f32 %v801, %v1022
  %v1026 = vrot.slane %v1024, 2
  %v1028 = vadd.f32 %v1021, %v1026
  %v1029 = vmul.f32 %v801, %v803
  %v1031 = vrot.slane %v983, 1
  %v1033 = vadd.f32 %v1029, %v1031
  %v1034 = vrot.slane %v804, 4
  %v1036 = vmul.f32 %v801, %v1034
  %v1038 = vrot.slane %v1036, 2
  %v1040 = vadd.f32 %v1033, %v1038
  %v1041 = vrot.slane %v899, 1
  %v1043 = vadd.f32 %v1017, %v1041
  %v1044 = vrot.slane %v804, 5
  %v1046 = vmul.f32 %v801, %v1044
  %v1048 = vrot.slane %v1046, 2
  %v1050 = vadd.f32 %v1043, %v1048
  %v1051 = vmul.f32 %v802, %v804
  %v1053 = vrot.slane %v1051, 2
  %v1055 = vadd.f32 %v1011, %v1053
  %v1056 = vrot.slane %v873, 1
  %v1058 = vadd.f32 %v997, %v1056
  %v1059 = vrot.slane %v804, 1
  %v1061 = vmul.f32 %v802, %v1059
  %v1063 = vrot.slane %v1061, 2
  %v1065 = vadd.f32 %v1058, %v1063
  %v1067 = vrot.slane %v1029, 1
  %v1069 = vadd.f32 %v863, %v1067
  %v1070 = vrot.slane %v804, 2
  %v1072 = vmul.f32 %v802, %v1070
  %v1074 = vrot.slane %v1072, 2
  %v1076 = vadd.f32 %v1069, %v1074
  %v1078 = vrot.slane %v979, 6
  %v1080 = vmul.f32 %v801, %v1078
  %v1082 = vrot.slane %v1080, 1
  %v1084 = vadd.f32 %v1080, %v1082
  %v1086 = vrot.slane %v980, 6
  %v1088 = vmul.f32 %v801, %v1086
  %v1090 = vrot.slane %v1088, 2
  %v1092 = vadd.f32 %v1084, %v1090
  %v1093 = vadd.f32 %v1092, %v775
  %v1094 = vrot.slane %v979, 3
  %v1096 = vmul.f32 %v801, %v1094
  %v1098 = vrot.slane %v1096, 1
  %v1100 = vadd.f32 %v1096, %v1098
  %v1101 = vrot.slane %v980, 3
  %v1103 = vmul.f32 %v801, %v1101
  %v1105 = vrot.slane %v1103, 2
  %v1107 = vadd.f32 %v1100, %v1105
  %v1108 = vadd.f32 %v1107, %v959
  %v1109 = vmul.f32 %v801, %v979
  %v1111 = vrot.slane %v1109, 1
  %v1113 = vadd.f32 %v1109, %v1111
  %v1114 = vmul.f32 %v802, %v980
  %v1116 = vrot.slane %v1114, 2
  %v1118 = vadd.f32 %v1113, %v1116
  %v1119 = vadd.f32 %v1118, %v974
  %v1120 = vrot.slane %v775, 7
  %v1122 = vsub.f32 %v778, %v1120
  %v1123 = vrot.slane %v1046, 1
  %v1125 = vadd.f32 %v1024, %v1123
  %v1127 = vrot.slane %v805, 7
  %v1129 = vmul.f32 %v801, %v1127
  %v1131 = vrot.slane %v1129, 2
  %v1133 = vadd.f32 %v1125, %v1131
  %v1134 = vrot.slane %v990, 1
  %v1136 = vadd.f32 %v1036, %v1134
  %v1137 = vmul.f32 %v801, %v805
  %v1139 = vrot.slane %v1137, 2
  %v1141 = vadd.f32 %v1136, %v1139
  %v1142 = vrot.slane %v1129, 1
  %v1144 = vadd.f32 %v1046, %v1142
  %v1145 = vrot.slane %v805, 1
  %v1147 = vmul.f32 %v801, %v1145
  %v1149 = vrot.slane %v1147, 2
  %v1151 = vadd.f32 %v1144, %v1149
  %v1152 = vmul.f32 %v801, %v1070
  %v1154 = vrot.slane %v1152, 1
  %v1156 = vadd.f32 %v1012, %v1154
  %v1157 = vrot.slane %v805, 4
  %v1159 = vmul.f32 %v801, %v1157
  %v1161 = vrot.slane %v1159, 2
  %v1163 = vadd.f32 %v1156, %v1161
  %v1164 = vmul.f32 %v801, %v1059
  %v1165 = vrot.slane %v1024, 1
  %v1167 = vadd.f32 %v1164, %v1165
  %v1168 = vrot.slane %v805, 5
  %v1170 = vmul.f32 %v801, %v1168
  %v1172 = vrot.slane %v1170, 2
  %v1174 = vadd.f32 %v1167, %v1172
  %v1175 = vrot.slane %v1159, 1
  %v1177 = vadd.f32 %v1152, %v1175
  %v1178 = vrot.slane %v805, 6
  %v1180 = vmul.f32 %v801, %v1178
  %v1182 = vrot.slane %v1180, 2
  %v1184 = vadd.f32 %v1177, %v1182
  %v1185 = vrot.slane %v1004, 1
  %v1187 = vadd.f32 %v1046, %v1185
  %v1188 = vmul.f32 %v802, %v1145
  %v1190 = vrot.slane %v1188, 2
  %v1192 = vadd.f32 %v1187, %v1190
  %v1193 = vrot.slane %v1012, 1
  %v1195 = vadd.f32 %v990, %v1193
  %v1196 = vrot.slane %v805, 2
  %v1198 = vmul.f32 %v802, %v1196
  %v1200 = vrot.slane %v1198, 2
  %v1202 = vadd.f32 %v1195, %v1200
  %v1203 = vrot.slane %v1147, 1
  %v1205 = vadd.f32 %v1004, %v1203
  %v1206 = vrot.slane %v805, 3
  %v1208 = vmul.f32 %v802, %v1206
  %v1210 = vrot.slane %v1208, 2
  %v1212 = vadd.f32 %v1205, %v1210
  %v1214 = vrot.slane %v1122, 1
  %v1216 = vmul.f32 %v801, %v1214
  %v1218 = vrot.slane %v1216, 1
  %v1220 = vadd.f32 %v1216, %v1218
  %v1221 = vrot.slane %v1216, 2
  %v1223 = vadd.f32 %v1220, %v1221
  %v1224 = vadd.f32 %v1223, %v775
  %v1225 = vrot.slane %v1122, 6
  %v1227 = vmul.f32 %v801, %v1225
  %v1229 = vrot.slane %v1227, 1
  %v1231 = vadd.f32 %v1227, %v1229
  %v1232 = vrot.slane %v1227, 2
  %v1234 = vadd.f32 %v1231, %v1232
  %v1235 = vadd.f32 %v1234, %v959
  %v1236 = vrot.slane %v1122, 3
  %v1238 = vmul.f32 %v801, %v1236
  %v1240 = vrot.slane %v1238, 1
  %v1242 = vadd.f32 %v1238, %v1240
  %v1243 = vmul.f32 %v802, %v1236
  %v1245 = vrot.slane %v1243, 2
  %v1247 = vadd.f32 %v1242, %v1245
  %v1248 = vadd.f32 %v1247, %v974
  %v1249 = vmul.f32 %v849, %v1157
  %v1250 = vmul.f32 %v867, %v1127
  %v1251 = vadd.f32 %v1249, %v1250
  %v1253 = vrot.slane %v806, 2
  %v1255 = vmul.f32 %v877, %v1253
  %v1256 = vadd.f32 %v1251, %v1255
  %v1257 = vmul.f32 %v849, %v1168
  %v1258 = vmul.f32 %v867, %v806
  %v1259 = vadd.f32 %v1257, %v1258
  %v1260 = vrot.slane %v806, 3
  %v1262 = vmul.f32 %v877, %v1260
  %v1263 = vadd.f32 %v1259, %v1262
  %v1264 = vmul.f32 %v849, %v1178
  %v1265 = vrot.slane %v806, 1
  %v1267 = vmul.f32 %v867, %v1265
  %v1268 = vadd.f32 %v1264, %v1267
  %v1269 = vrot.slane %v806, 4
  %v1271 = vmul.f32 %v877, %v1269
  %v1272 = vadd.f32 %v1268, %v1271
  %v1273 = vmul.f32 %v889, %v1145
  %v1274 = vmul.f32 %v903, %v1157
  %v1275 = vadd.f32 %v1273, %v1274
  %v1276 = vrot.slane %v806, 7
  %v1278 = vmul.f32 %v913, %v1276
  %v1279 = vadd.f32 %v1275, %v1278
  %v1280 = vmul.f32 %v889, %v1196
  %v1281 = vrot.slane %v806, 5
  %v1283 = vmul.f32 %v903, %v1281
  %v1284 = vadd.f32 %v1280, %v1283
  %v1285 = vmul.f32 %v913, %v806
  %v1286 = vadd.f32 %v1284, %v1285
  %v1287 = vmul.f32 %v889, %v1206
  %v1288 = vrot.slane %v806, 6
  %v1290 = vmul.f32 %v903, %v1288
  %v1291 = vadd.f32 %v1287, %v1290
  %v1292 = vmul.f32 %v913, %v1265
  %v1293 = vadd.f32 %v1291, %v1292
  %v1294 = vmul.f32 %v918, %v1178
  %v1295 = vmul.f32 %v927, %v1145
  %v1296 = vadd.f32 %v1294, %v1295
  %v1297 = vmul.f32 %v938, %v1269
  %v1298 = vadd.f32 %v1296, %v1297
  %v1299 = vmul.f32 %v918, %v1127
  %v1300 = vmul.f32 %v927, %v1253
  %v1301 = vadd.f32 %v1299, %v1300
  %v1302 = vmul.f32 %v938, %v1281
  %v1303 = vadd.f32 %v1301, %v1302
  %v1304 = vmul.f32 %v918, %v805
  %v1305 = vmul.f32 %v927, %v1260
  %v1306 = vadd.f32 %v1304, %v1305
  %v1307 = vmul.f32 %v938, %v1288
  %v1308 = vadd.f32 %v1306, %v1307
  %v1309 = vrot.slane %v1122, 4
  %v1311 = vmul.f32 %v849, %v1309
  %v1312 = vrot.slane %v1122, 5
  %v1314 = vmul.f32 %v867, %v1312
  %v1315 = vadd.f32 %v1311, %v1314
  %v1316 = vmul.f32 %v877, %v1225
  %v1317 = vadd.f32 %v1315, %v1316
  %v1318 = vadd.f32 %v1317, %v950
  %v1319 = vmul.f32 %v889, %v1214
  %v1320 = vrot.slane %v1122, 2
  %v1322 = vmul.f32 %v903, %v1320
  %v1323 = vadd.f32 %v1319, %v1322
  %v1324 = vmul.f32 %v913, %v1236
  %v1325 = vadd.f32 %v1323, %v1324
  %v1326 = vadd.f32 %v1325, %v961
  %v1327 = vmul.f32 %v918, %v1225
  %v1328 = vrot.slane %v1122, 7
  %v1330 = vmul.f32 %v927, %v1328
  %v1331 = vadd.f32 %v1327, %v1330
  %v1332 = vmul.f32 %v938, %v1122
  %v1333 = vadd.f32 %v1331, %v1332
  %v1334 = vadd.f32 %v1333, %v976
  %v1335 = vsub.f32 %v781, %v1120
  %v1337 = vrot.slane %v778, 7
  %v1339 = vsub.f32 %v781, %v1337
  %v1340 = vmul.f32 %v994, %v1281
  %v1341 = vmul.f32 %v1008, %v807
  %v1342 = vadd.f32 %v1340, %v1341
  %v1344 = vrot.slane %v807, 3
  %v1346 = vmul.f32 %v1016, %v1344
  %v1347 = vadd.f32 %v1342, %v1346
  %v1348 = vmul.f32 %v994, %v1288
  %v1349 = vrot.slane %v807, 1
  %v1351 = vmul.f32 %v1008, %v1349
  %v1352 = vadd.f32 %v1348, %v1351
  %v1353 = vrot.slane %v807, 4
  %v1355 = vmul.f32 %v1016, %v1353
  %v1356 = vadd.f32 %v1352, %v1355
  %v1357 = vmul.f32 %v994, %v1276
  %v1358 = vrot.slane %v807, 2
  %v1360 = vmul.f32 %v1008, %v1358
  %v1361 = vadd.f32 %v1357, %v1360
  %v1362 = vrot.slane %v807, 5
  %v1364 = vmul.f32 %v1016, %v1362
  %v1365 = vadd.f32 %v1361, %v1364
  %v1366 = vmul.f32 %v1028, %v1253
  %v1367 = vmul.f32 %v1040, %v1362
  %v1368 = vadd.f32 %v1366, %v1367
  %v1369 = vmul.f32 %v1050, %v807
  %v1370 = vadd.f32 %v1368, %v1369
  %v1371 = vmul.f32 %v1028, %v1260
  %v1372 = vrot.slane %v807, 6
  %v1374 = vmul.f32 %v1040, %v1372
  %v1375 = vadd.f32 %v1371, %v1374
  %v1376 = vmul.f32 %v1050, %v1349
  %v1377 = vadd.f32 %v1375, %v1376
  %v1378 = vmul.f32 %v1028, %v1269
  %v1379 = vrot.slane %v807, 7
  %v1381 = vmul.f32 %v1040, %v1379
  %v1382 = vadd.f32 %v1378, %v1381
  %v1383 = vmul.f32 %v1050, %v1358
  %v1384 = vadd.f32 %v1382, %v1383
  %v1385 = vmul.f32 %v1055, %v1276
  %v1386 = vmul.f32 %v1065, %v1358
  %v1387 = vadd.f32 %v1385, %v1386
  %v1388 = vmul.f32 %v1076, %v1362
  %v1389 = vadd.f32 %v1387, %v1388
  %v1390 = vmul.f32 %v1055, %v806
  %v1391 = vmul.f32 %v1065, %v1344
  %v1392 = vadd.f32 %v1390, %v1391
  %v1393 = vmul.f32 %v1076, %v1372
  %v1394 = vadd.f32 %v1392, %v1393
  %v1395 = vmul.f32 %v1055, %v1265
  %v1396 = vmul.f32 %v1065, %v1353
  %v1397 = vadd.f32 %v1395, %v1396
  %v1398 = vmul.f32 %v1076, %v1379
  %v1399 = vadd.f32 %v1397, %v1398
  %v1400 = vmul.f32 %v994, %v1328
  %v1401 = vmul.f32 %v1008, %v1335
  %v1402 = vadd.f32 %v1400, %v1401
  %v1404 = vrot.slane %v1339, 1
  %v1406 = vmul.f32 %v1016, %v1404
  %v1407 = vadd.f32 %v1402, %v1406
  %v1408 = vadd.f32 %v1407, %v1093
  %v1409 = vmul.f32 %v1028, %v1309
  %v1411 = vrot.slane %v1335, 5
  %v1413 = vmul.f32 %v1040, %v1411
  %v1414 = vadd.f32 %v1409, %v1413
  %v1415 = vrot.slane %v1339, 6
  %v1417 = vmul.f32 %v1050, %v1415
  %v1418 = vadd.f32 %v1414, %v1417
  %v1419 = vadd.f32 %v1418, %v1108
  %v1420 = vmul.f32 %v1055, %v1214
  %v1421 = vrot.slane %v1335, 2
  %v1423 = vmul.f32 %v1065, %v1421
  %v1424 = vadd.f32 %v1420, %v1423
  %v1425 = vrot.slane %v1339, 3
  %v1427 = vmul.f32 %v1076, %v1425
  %v1428 = vadd.f32 %v1424, %v1427
  %v1429 = vadd.f32 %v1428, %v1119
  %v1430 = vmul.f32 %v1133, %v1372
  %v1432 = vrot.slane %v808, 1
  %v1434 = vmul.f32 %v1141, %v1432
  %v1435 = vadd.f32 %v1430, %v1434
  %v1436 = vrot.slane %v808, 4
  %v1438 = vmul.f32 %v1151, %v1436
  %v1439 = vadd.f32 %v1435, %v1438
  %v1440 = vmul.f32 %v1133, %v1379
  %v1441 = vrot.slane %v808, 2
  %v1443 = vmul.f32 %v1141, %v1441
  %v1444 = vadd.f32 %v1440, %v1443
  %v1445 = vrot.slane %v808, 5
  %v1447 = vmul.f32 %v1151, %v1445
  %v1448 = vadd.f32 %v1444, %v1447
  %v1449 = vmul.f32 %v1133, %v808
  %v1450 = vrot.slane %v808, 3
  %v1452 = vmul.f32 %v1141, %v1450
  %v1453 = vadd.f32 %v1449, %v1452
  %v1454 = vrot.slane %v808, 6
  %v1456 = vmul.f32 %v1151, %v1454
  %v1457 = vadd.f32 %v1453, %v1456
  %v1458 = vmul.f32 %v1163, %v1344
  %v1459 = vmul.f32 %v1174, %v1454
  %v1460 = vadd.f32 %v1458, %v1459
  %v1461 = vmul.f32 %v1184, %v1432
  %v1462 = vadd.f32 %v1460, %v1461
  %v1463 = vmul.f32 %v1163, %v1353
  %v1464 = vrot.slane %v808, 7
  %v1466 = vmul.f32 %v1174, %v1464
  %v1467 = vadd.f32 %v1463, %v1466
  %v1468 = vmul.f32 %v1184, %v1441
  %v1469 = vadd.f32 %v1467, %v1468
  %v1470 = vmul.f32 %v1163, %v1445
  %v1471 = vmul.f32 %v1174, %v808
  %v1472 = vadd.f32 %v1470, %v1471
  %v1473 = vmul.f32 %v1184, %v1450
  %v1474 = vadd.f32 %v1472, %v1473
  %v1475 = vmul.f32 %v1192, %v807
  %v1476 = vmul.f32 %v1202, %v1450
  %v1477 = vadd.f32 %v1475, %v1476
  %v1478 = vmul.f32 %v1212, %v1454
  %v1479 = vadd.f32 %v1477, %v1478
  %v1480 = vmul.f32 %v1192, %v1349
  %v1481 = vmul.f32 %v1202, %v1436
  %v1482 = vadd.f32 %v1480, %v1481
  %v1483 = vmul.f32 %v1212, %v1464
  %v1484 = vadd.f32 %v1482, %v1483
  %v1485 = vmul.f32 %v1192, %v1441
  %v1486 = vmul.f32 %v1202, %v1445
  %v1487 = vadd.f32 %v1485, %v1486
  %v1488 = vmul.f32 %v1212, %v808
  %v1489 = vadd.f32 %v1487, %v1488
  %v1490 = vrot.slane %v1339, 2
  %v1492 = vmul.f32 %v1133, %v1490
  %v1493 = vmul.f32 %v1141, %v1425
  %v1494 = vadd.f32 %v1492, %v1493
  %v1495 = vrot.slane %v1339, 4
  %v1497 = vmul.f32 %v1151, %v1495
  %v1498 = vadd.f32 %v1494, %v1497
  %v1499 = vadd.f32 %v1498, %v1224
  %v1500 = vrot.slane %v1339, 7
  %v1502 = vmul.f32 %v1163, %v1500
  %v1503 = vmul.f32 %v1174, %v1339
  %v1504 = vadd.f32 %v1502, %v1503
  %v1505 = vmul.f32 %v1184, %v1404
  %v1506 = vadd.f32 %v1504, %v1505
  %v1507 = vadd.f32 %v1506, %v1235
  %v1508 = vmul.f32 %v1192, %v1495
  %v1509 = vrot.slane %v1339, 5
  %v1511 = vmul.f32 %v1202, %v1509
  %v1512 = vadd.f32 %v1508, %v1511
  %v1513 = vmul.f32 %v1212, %v1415
  %v1514 = vadd.f32 %v1512, %v1513
  %v1515 = vadd.f32 %v1514, %v1248
  %v1516 = vmul.f32 %v1256, %v1464
  %v1518 = vrot.slane %v809, 2
  %v1520 = vmul.f32 %v1263, %v1518
  %v1521 = vadd.f32 %v1516, %v1520
  %v1522 = vrot.slane %v809, 5
  %v1524 = vmul.f32 %v1272, %v1522
  %v1525 = vadd.f32 %v1521, %v1524
  %v1526 = vmul.f32 %v1256, %v809
  %v1527 = vrot.slane %v809, 3
  %v1529 = vmul.f32 %v1263, %v1527
  %v1530 = vadd.f32 %v1526, %v1529
  %v1531 = vrot.slane %v809, 6
  %v1533 = vmul.f32 %v1272, %v1531
  %v1534 = vadd.f32 %v1530, %v1533
  %v1535 = vrot.slane %v809, 1
  %v1537 = vmul.f32 %v1256, %v1535
  %v1538 = vrot.slane %v809, 4
  %v1540 = vmul.f32 %v1263, %v1538
  %v1541 = vadd.f32 %v1537, %v1540
  %v1542 = vrot.slane %v809, 7
  %v1544 = vmul.f32 %v1272, %v1542
  %v1545 = vadd.f32 %v1541, %v1544
  %v1546 = vmul.f32 %v1279, %v1436
  %v1547 = vmul.f32 %v1286, %v1542
  %v1548 = vadd.f32 %v1546, %v1547
  %v1549 = vmul.f32 %v1293, %v1518
  %v1550 = vadd.f32 %v1548, %v1549
  %v1551 = vmul.f32 %v1279, %v1522
  %v1552 = vmul.f32 %v1286, %v809
  %v1553 = vadd.f32 %v1551, %v1552
  %v1554 = vmul.f32 %v1293, %v1527
  %v1555 = vadd.f32 %v1553, %v1554
  %v1556 = vmul.f32 %v1279, %v1531
  %v1557 = vmul.f32 %v1286, %v1535
  %v1558 = vadd.f32 %v1556, %v1557
  %v1559 = vmul.f32 %v1293, %v1538
  %v1560 = vadd.f32 %v1558, %v1559
  %v1561 = vmul.f32 %v1298, %v1432
  %v1562 = vmul.f32 %v1303, %v1538
  %v1563 = vadd.f32 %v1561, %v1562
  %v1564 = vmul.f32 %v1308, %v1542
  %v1565 = vadd.f32 %v1563, %v1564
  %v1566 = vmul.f32 %v1298, %v1518
  %v1567 = vmul.f32 %v1303, %v1522
  %v1568 = vadd.f32 %v1566, %v1567
  %v1569 = vmul.f32 %v1308, %v809
  %v1570 = vadd.f32 %v1568, %v1569
  %v1571 = vmul.f32 %v1298, %v1527
  %v1572 = vmul.f32 %v1303, %v1531
  %v1573 = vadd.f32 %v1571, %v1572
  %v1574 = vmul.f32 %v1308, %v1535
  %v1575 = vadd.f32 %v1573, %v1574
  %v1576 = vmul.f32 %v1256, %v1509
  %v1577 = vmul.f32 %v1263, %v1415
  %v1578 = vadd.f32 %v1576, %v1577
  %v1579 = vmul.f32 %v1272, %v1500
  %v1580 = vadd.f32 %v1578, %v1579
  %v1581 = vadd.f32 %v1580, %v1318
  %v1582 = vmul.f32 %v1279, %v1490
  %v1583 = vmul.f32 %v1286, %v1425
  %v1584 = vadd.f32 %v1582, %v1583
  %v1585 = vmul.f32 %v1293, %v1495
  %v1586 = vadd.f32 %v1584, %v1585
  %v1587 = vadd.f32 %v1586, %v1326
  %v1588 = vmul.f32 %v1298, %v1500
  %v1589 = vmul.f32 %v1303, %v1339
  %v1590 = vadd.f32 %v1588, %v1589
  %v1591 = vmul.f32 %v1308, %v1404
  %v1592 = vadd.f32 %v1590, %v1591
  %v1593 = vadd.f32 %v1592, %v1334
  %v1594 = vsub.f32 %v784, %v1337
  %v1596 = vrot.slane %v781, 7
  %v1598 = vsub.f32 %v784, %v1596
  %v1599 = vmul.f32 %v1347, %v810
  %v1601 = vrot.slane %v810, 3
  %v1603 = vmul.f32 %v1356, %v1601
  %v1604 = vadd.f32 %v1599, %v1603
  %v1605 = vrot.slane %v810, 6
  %v1607 = vmul.f32 %v1365, %v1605
  %v1608 = vadd.f32 %v1604, %v1607
  %v1609 = vrot.slane %v810, 1
  %v1611 = vmul.f32 %v1347, %v1609
  %v1612 = vrot.slane %v810, 4
  %v1614 = vmul.f32 %v1356, %v1612
  %v1615 = vadd.f32 %v1611, %v1614
  %v1616 = vrot.slane %v810, 7
  %v1618 = vmul.f32 %v1365, %v1616
  %v1619 = vadd.f32 %v1615, %v1618
  %v1620 = vrot.slane %v810, 2
  %v1622 = vmul.f32 %v1347, %v1620
  %v1623 = vrot.slane %v810, 5
  %v1625 = vmul.f32 %v1356, %v1623
  %v1626 = vadd.f32 %v1622, %v1625
  %v1627 = vmul.f32 %v1365, %v811
  %v1628 = vadd.f32 %v1626, %v1627
  %v1629 = vmul.f32 %v1370, %v1623
  %v1630 = vmul.f32 %v1377, %v810
  %v1631 = vadd.f32 %v1629, %v1630
  %v1632 = vmul.f32 %v1384, %v1601
  %v1633 = vadd.f32 %v1631, %v1632
  %v1634 = vmul.f32 %v1370, %v1605
  %v1635 = vmul.f32 %v1377, %v1609
  %v1636 = vadd.f32 %v1634, %v1635
  %v1637 = vmul.f32 %v1384, %v1612
  %v1638 = vadd.f32 %v1636, %v1637
  %v1639 = vmul.f32 %v1370, %v1616
  %v1640 = vmul.f32 %v1377, %v1620
  %v1641 = vadd.f32 %v1639, %v1640
  %v1643 = vrot.slane %v811, 5
  %v1645 = vmul.f32 %v1384, %v1643
  %v1646 = vadd.f32 %v1641, %v1645
  %v1647 = vmul.f32 %v1389, %v1620
  %v1648 = vmul.f32 %v1394, %v1623
  %v1649 = vadd.f32 %v1647, %v1648
  %v1650 = vmul.f32 %v1399, %v810
  %v1651 = vadd.f32 %v1649, %v1650
  %v1652 = vmul.f32 %v1389, %v1601
  %v1653 = vmul.f32 %v1394, %v1605
  %v1654 = vadd.f32 %v1652, %v1653
  %v1655 = vmul.f32 %v1399, %v1609
  %v1656 = vadd.f32 %v1654, %v1655
  %v1657 = vmul.f32 %v1389, %v1612
  %v1658 = vmul.f32 %v1394, %v1616
  %v1659 = vadd.f32 %v1657, %v1658
  %v1660 = vrot.slane %v811, 2
  %v1662 = vmul.f32 %v1399, %v1660
  %v1663 = vadd.f32 %v1659, %v1662
  %v1664 = vmul.f32 %v1347, %v1594
  %v1666 = vrot.slane %v1598, 1
  %v1668 = vmul.f32 %v1356, %v1666
  %v1669 = vadd.f32 %v1664, %v1668
  %v1670 = vrot.slane %v1598, 2
  %v1672 = vmul.f32 %v1365, %v1670
  %v1673 = vadd.f32 %v1669, %v1672
  %v1674 = vadd.f32 %v1673, %v1408
  %v1676 = vrot.slane %v1594, 5
  %v1678 = vmul.f32 %v1370, %v1676
  %v1679 = vrot.slane %v1598, 6
  %v1681 = vmul.f32 %v1377, %v1679
  %v1682 = vadd.f32 %v1678, %v1681
  %v1683 = vrot.slane %v1598, 7
  %v1685 = vmul.f32 %v1384, %v1683
  %v1686 = vadd.f32 %v1682, %v1685
  %v1687 = vadd.f32 %v1686, %v1419
  %v1688 = vrot.slane %v1594, 2
  %v1690 = vmul.f32 %v1389, %v1688
  %v1691 = vrot.slane %v1598, 3
  %v1693 = vmul.f32 %v1394, %v1691
  %v1694 = vadd.f32 %v1690, %v1693
  %v1695 = vrot.slane %v1598, 4
  %v1697 = vmul.f32 %v1399, %v1695
  %v1698 = vadd.f32 %v1694, %v1697
  %v1699 = vadd.f32 %v1698, %v1429
  %v1700 = vrot.slane %v811, 1
  %v1702 = vmul.f32 %v1439, %v1700
  %v1703 = vrot.slane %v811, 4
  %v1705 = vmul.f32 %v1448, %v1703
  %v1706 = vadd.f32 %v1702, %v1705
  %v1707 = vrot.slane %v811, 7
  %v1709 = vmul.f32 %v1457, %v1707
  %v1710 = vadd.f32 %v1706, %v1709
  %v1711 = vmul.f32 %v1439, %v1660
  %v1712 = vmul.f32 %v1448, %v1643
  %v1713 = vadd.f32 %v1711, %v1712
  %v1714 = vmul.f32 %v1457, %v812
  %v1715 = vadd.f32 %v1713, %v1714
  %v1716 = vrot.slane %v811, 3
  %v1718 = vmul.f32 %v1439, %v1716
  %v1719 = vrot.slane %v811, 6
  %v1721 = vmul.f32 %v1448, %v1719
  %v1722 = vadd.f32 %v1718, %v1721
  %v1724 = vrot.slane %v812, 1
  %v1726 = vmul.f32 %v1457, %v1724
  %v1727 = vadd.f32 %v1722, %v1726
  %v1728 = vmul.f32 %v1462, %v1719
  %v1729 = vmul.f32 %v1469, %v1700
  %v1730 = vadd.f32 %v1728, %v1729
  %v1731 = vmul.f32 %v1474, %v1703
  %v1732 = vadd.f32 %v1730, %v1731
  %v1733 = vmul.f32 %v1462, %v1707
  %v1734 = vmul.f32 %v1469, %v1660
  %v1735 = vadd.f32 %v1733, %v1734
  %v1736 = vrot.slane %v812, 5
  %v1738 = vmul.f32 %v1474, %v1736
  %v1739 = vadd.f32 %v1735, %v1738
  %v1740 = vmul.f32 %v1462, %v811
  %v1741 = vmul.f32 %v1469, %v1716
  %v1742 = vadd.f32 %v1740, %v1741
  %v1743 = vrot.slane %v812, 6
  %v1745 = vmul.f32 %v1474, %v1743
  %v1746 = vadd.f32 %v1742, %v1745
  %v1747 = vmul.f32 %v1479, %v1716
  %v1748 = vmul.f32 %v1484, %v1719
  %v1749 = vadd.f32 %v1747, %v1748
  %v1750 = vmul.f32 %v1489, %v1700
  %v1751 = vadd.f32 %v1749, %v1750
  %v1752 = vmul.f32 %v1479, %v1703
  %v1753 = vmul.f32 %v1484, %v1707
  %v1754 = vadd.f32 %v1752, %v1753
  %v1755 = vrot.slane %v812, 2
  %v1757 = vmul.f32 %v1489, %v1755
  %v1758 = vadd.f32 %v1754, %v1757
  %v1759 = vmul.f32 %v1479, %v1643
  %v1760 = vmul.f32 %v1484, %v811
  %v1761 = vadd.f32 %v1759, %v1760
  %v1762 = vrot.slane %v812, 3
  %v1764 = vmul.f32 %v1489, %v1762
  %v1765 = vadd.f32 %v1761, %v1764
  %v1766 = vmul.f32 %v1439, %v1691
  %v1767 = vmul.f32 %v1448, %v1695
  %v1768 = vadd.f32 %v1766, %v1767
  %v1769 = vrot.slane %v1598, 5
  %v1771 = vmul.f32 %v1457, %v1769
  %v1772 = vadd.f32 %v1768, %v1771
  %v1773 = vadd.f32 %v1772, %v1499
  %v1774 = vmul.f32 %v1462, %v1598
  %v1775 = vmul.f32 %v1469, %v1666
  %v1776 = vadd.f32 %v1774, %v1775
  %v1777 = vmul.f32 %v1474, %v1670
  %v1778 = vadd.f32 %v1776, %v1777
  %v1779 = vadd.f32 %v1778, %v1507
  %v1780 = vmul.f32 %v1479, %v1769
  %v1781 = vmul.f32 %v1484, %v1679
  %v1782 = vadd.f32 %v1780, %v1781
  %v1783 = vmul.f32 %v1489, %v1683
  %v1784 = vadd.f32 %v1782, %v1783
  %v1785 = vadd.f32 %v1784, %v1515
  %v1786 = vsub.f32 %v787, %v1596
  %v1787 = vmul.f32 %v1525, %v1755
  %v1788 = vmul.f32 %v1534, %v1736
  %v1789 = vadd.f32 %v1787, %v1788
  %v1790 = vmul.f32 %v1545, %v813
  %v1791 = vadd.f32 %v1789, %v1790
  %v1792 = vmul.f32 %v1525, %v1762
  %v1793 = vmul.f32 %v1534, %v1743
  %v1794 = vadd.f32 %v1792, %v1793
  %v1796 = vrot.slane %v813, 1
  %v1798 = vmul.f32 %v1545, %v1796
  %v1799 = vadd.f32 %v1794, %v1798
  %v1800 = vrot.slane %v812, 4
  %v1802 = vmul.f32 %v1525, %v1800
  %v1803 = vrot.slane %v812, 7
  %v1805 = vmul.f32 %v1534, %v1803
  %v1806 = vadd.f32 %v1802, %v1805
  %v1807 = vrot.slane %v813, 2
  %v1809 = vmul.f32 %v1545, %v1807
  %v1810 = vadd.f32 %v1806, %v1809
  %v1811 = vmul.f32 %v1550, %v1803
  %v1812 = vmul.f32 %v1555, %v1755
  %v1813 = vadd.f32 %v1811, %v1812
  %v1814 = vrot.slane %v813, 5
  %v1816 = vmul.f32 %v1560, %v1814
  %v1817 = vadd.f32 %v1813, %v1816
  %v1818 = vmul.f32 %v1550, %v812
  %v1819 = vmul.f32 %v1555, %v1762
  %v1820 = vadd.f32 %v1818, %v1819
  %v1821 = vrot.slane %v813, 6
  %v1823 = vmul.f32 %v1560, %v1821
  %v1824 = vadd.f32 %v1820, %v1823
  %v1825 = vmul.f32 %v1550, %v1724
  %v1826 = vmul.f32 %v1555, %v1800
  %v1827 = vadd.f32 %v1825, %v1826
  %v1828 = vrot.slane %v813, 7
  %v1830 = vmul.f32 %v1560, %v1828
  %v1831 = vadd.f32 %v1827, %v1830
  %v1832 = vmul.f32 %v1565, %v1800
  %v1833 = vmul.f32 %v1570, %v1803
  %v1834 = vadd.f32 %v1832, %v1833
  %v1835 = vmul.f32 %v1575, %v1807
  %v1836 = vadd.f32 %v1834, %v1835
  %v1837 = vmul.f32 %v1565, %v1736
  %v1838 = vmul.f32 %v1570, %v812
  %v1839 = vadd.f32 %v1837, %v1838
  %v1840 = vrot.slane %v813, 3
  %v1842 = vmul.f32 %v1575, %v1840
  %v1843 = vadd.f32 %v1839, %v1842
  %v1844 = vmul.f32 %v1565, %v1743
  %v1845 = vmul.f32 %v1570, %v1724
  %v1846 = vadd.f32 %v1844, %v1845
  %v1847 = vrot.slane %v813, 4
  %v1849 = vmul.f32 %v1575, %v1847
  %v1850 = vadd.f32 %v1846, %v1849
  %v1851 = vmul.f32 %v1525, %v1679
  %v1852 = vmul.f32 %v1534, %v1683
  %v1853 = vadd.f32 %v1851, %v1852
  %v1854 = vmul.f32 %v1545, %v1786
  %v1855 = vadd.f32 %v1853, %v1854
  %v1856 = vadd.f32 %v1855, %v1581
  %v1857 = vmul.f32 %v1550, %v1691
  %v1858 = vmul.f32 %v1555, %v1695
  %v1859 = vadd.f32 %v1857, %v1858
  %v1861 = vrot.slane %v1786, 5
  %v1863 = vmul.f32 %v1560, %v1861
  %v1864 = vadd.f32 %v1859, %v1863
  %v1865 = vadd.f32 %v1864, %v1587
  %v1866 = vmul.f32 %v1565, %v1598
  %v1867 = vmul.f32 %v1570, %v1666
  %v1868 = vadd.f32 %v1866, %v1867
  %v1869 = vrot.slane %v1786, 2
  %v1871 = vmul.f32 %v1575, %v1869
  %v1872 = vadd.f32 %v1868, %v1871
  %v1873 = vadd.f32 %v1872, %v1593
  %v1875 = vrot.slane %v784, 7
  %v1877 = vsub.f32 %v787, %v1875
  %v1878 = vmul.f32 %v1608, %v1840
  %v1879 = vmul.f32 %v1619, %v1821
  %v1880 = vadd.f32 %v1878, %v1879
  %v1882 = vrot.slane %v814, 1
  %v1884 = vmul.f32 %v1628, %v1882
  %v1885 = vadd.f32 %v1880, %v1884
  %v1886 = vmul.f32 %v1608, %v1847
  %v1887 = vmul.f32 %v1619, %v1828
  %v1888 = vadd.f32 %v1886, %v1887
  %v1889 = vrot.slane %v814, 2
  %v1891 = vmul.f32 %v1628, %v1889
  %v1892 = vadd.f32 %v1888, %v1891
  %v1893 = vmul.f32 %v1608, %v1814
  %v1894 = vmul.f32 %v1619, %v814
  %v1895 = vadd.f32 %v1893, %v1894
  %v1896 = vrot.slane %v814, 3
  %v1898 = vmul.f32 %v1628, %v1896
  %v1899 = vadd.f32 %v1895, %v1898
  %v1900 = vmul.f32 %v1633, %v813
  %v1901 = vmul.f32 %v1638, %v1840
  %v1902 = vadd.f32 %v1900, %v1901
  %v1903 = vrot.slane %v814, 6
  %v1905 = vmul.f32 %v1646, %v1903
  %v1906 = vadd.f32 %v1902, %v1905
  %v1907 = vmul.f32 %v1633, %v1796
  %v1908 = vmul.f32 %v1638, %v1847
  %v1909 = vadd.f32 %v1907, %v1908
  %v1910 = vrot.slane %v814, 7
  %v1912 = vmul.f32 %v1646, %v1910
  %v1913 = vadd.f32 %v1909, %v1912
  %v1914 = vmul.f32 %v1633, %v1807
  %v1915 = vrot.slane %v814, 5
  %v1917 = vmul.f32 %v1638, %v1915
  %v1918 = vadd.f32 %v1914, %v1917
  %v1919 = vmul.f32 %v1646, %v814
  %v1920 = vadd.f32 %v1918, %v1919
  %v1921 = vmul.f32 %v1651, %v1814
  %v1922 = vmul.f32 %v1656, %v813
  %v1923 = vadd.f32 %v1921, %v1922
  %v1924 = vmul.f32 %v1663, %v1896
  %v1925 = vadd.f32 %v1923, %v1924
  %v1926 = vmul.f32 %v1651, %v1821
  %v1927 = vmul.f32 %v1656, %v1796
  %v1928 = vadd.f32 %v1926, %v1927
  %v1929 = vrot.slane %v814, 4
  %v1931 = vmul.f32 %v1663, %v1929
  %v1932 = vadd.f32 %v1928, %v1931
  %v1933 = vmul.f32 %v1651, %v1828
  %v1934 = vmul.f32 %v1656, %v1889
  %v1935 = vadd.f32 %v1933, %v1934
  %v1936 = vmul.f32 %v1663, %v1915
  %v1937 = vadd.f32 %v1935, %v1936
  %v1939 = vrot.slane %v1877, 1
  %v1941 = vmul.f32 %v1608, %v1939
  %v1942 = vrot.slane %v1877, 2
  %v1944 = vmul.f32 %v1619, %v1942
  %v1945 = vadd.f32 %v1941, %v1944
  %v1946 = vrot.slane %v1877, 3
  %v1948 = vmul.f32 %v1628, %v1946
  %v1949 = vadd.f32 %v1945, %v1948
  %v1950 = vadd.f32 %v1949, %v1674
  %v1951 = vrot.slane %v1877, 6
  %v1953 = vmul.f32 %v1633, %v1951
  %v1954 = vrot.slane %v1877, 7
  %v1956 = vmul.f32 %v1638, %v1954
  %v1957 = vadd.f32 %v1953, %v1956
  %v1958 = vmul.f32 %v1646, %v1877
  %v1959 = vadd.f32 %v1957, %v1958
  %v1960 = vadd.f32 %v1959, %v1687
  %v1961 = vmul.f32 %v1651, %v1946
  %v1962 = vrot.slane %v1877, 4
  %v1964 = vmul.f32 %v1656, %v1962
  %v1965 = vadd.f32 %v1961, %v1964
  %v1966 = vrot.slane %v1877, 5
  %v1968 = vmul.f32 %v1663, %v1966
  %v1969 = vadd.f32 %v1965, %v1968
  %v1970 = vadd.f32 %v1969, %v1699
  %v1971 = vmul.f32 %v1710, %v1929
  %v1972 = vmul.f32 %v1715, %v1910
  %v1973 = vadd.f32 %v1971, %v1972
  %v1975 = vrot.slane %v815, 2
  %v1977 = vmul.f32 %v1727, %v1975
  %v1978 = vadd.f32 %v1973, %v1977
  %v1979 = vmul.f32 %v1710, %v1915
  %v1980 = vmul.f32 %v1715, %v815
  %v1981 = vadd.f32 %v1979, %v1980
  %v1982 = vrot.slane %v815, 3
  %v1984 = vmul.f32 %v1727, %v1982
  %v1985 = vadd.f32 %v1981, %v1984
  %v1986 = vmul.f32 %v1710, %v1903
  %v1987 = vrot.slane %v815, 1
  %v1989 = vmul.f32 %v1715, %v1987
  %v1990 = vadd.f32 %v1986, %v1989
  %v1991 = vrot.slane %v815, 4
  %v1993 = vmul.f32 %v1727, %v1991
  %v1994 = vadd.f32 %v1990, %v1993
  %v1995 = vmul.f32 %v1732, %v1882
  %v1996 = vmul.f32 %v1739, %v1929
  %v1997 = vadd.f32 %v1995, %v1996
  %v1998 = vrot.slane %v815, 7
  %v2000 = vmul.f32 %v1746, %v1998
  %v2001 = vadd.f32 %v1997, %v2000
  %v2002 = vmul.f32 %v1732, %v1889
  %v2003 = vrot.slane %v815, 5
  %v2005 = vmul.f32 %v1739, %v2003
  %v2006 = vadd.f32 %v2002, %v2005
  %v2007 = vmul.f32 %v1746, %v815
  %v2008 = vadd.f32 %v2006, %v2007
  %v2009 = vmul.f32 %v1732, %v1896
  %v2010 = vrot.slane %v815, 6
  %v2012 = vmul.f32 %v1739, %v2010
  %v2013 = vadd.f32 %v2009, %v2012
  %v2014 = vmul.f32 %v1746, %v1987
  %v2015 = vadd.f32 %v2013, %v2014
  %v2016 = vmul.f32 %v1751, %v1903
  %v2017 = vmul.f32 %v1758, %v1882
  %v2018 = vadd.f32 %v2016, %v2017
  %v2019 = vmul.f32 %v1765, %v1991
  %v2020 = vadd.f32 %v2018, %v2019
  %v2021 = vmul.f32 %v1751, %v1910
  %v2022 = vmul.f32 %v1758, %v1975
  %v2023 = vadd.f32 %v2021, %v2022
  %v2024 = vmul.f32 %v1765, %v2003
  %v2025 = vadd.f32 %v2023, %v2024
  %v2026 = vmul.f32 %v1751, %v814
  %v2027 = vmul.f32 %v1758, %v1982
  %v2028 = vadd.f32 %v2026, %v2027
  %v2029 = vmul.f32 %v1765, %v2010
  %v2030 = vadd.f32 %v2028, %v2029
  %v2031 = vmul.f32 %v1710, %v1962
  %v2032 = vmul.f32 %v1715, %v1966
  %v2033 = vadd.f32 %v2031, %v2032
  %v2034 = vmul.f32 %v1727, %v1951
  %v2035 = vadd.f32 %v2033, %v2034
  %v2036 = vadd.f32 %v2035, %v1773
  %v2037 = vmul.f32 %v1732, %v1939
  %v2038 = vmul.f32 %v1739, %v1942
  %v2039 = vadd.f32 %v2037, %v2038
  %v2040 = vmul.f32 %v1746, %v1946
  %v2041 = vadd.f32 %v2039, %v2040
  %v2042 = vadd.f32 %v2041, %v1779
  %v2043 = vmul.f32 %v1751, %v1951
  %v2044 = vmul.f32 %v1758, %v1954
  %v2045 = vadd.f32 %v2043, %v2044
  %v2046 = vmul.f32 %v1765, %v1877
  %v2047 = vadd.f32 %v2045, %v2046
  %v2048 = vadd.f32 %v2047, %v1785
  %v2049 = vrot.slane %v784, 4
  %v2051 = vsub.f32 %v787, %v2049
  %v2052 = vsub.f32 %v790, %v2049
  %v2053 = vmul.f32 %v1710, %v2003
  %v2054 = vmul.f32 %v1715, %v816
  %v2055 = vadd.f32 %v2053, %v2054
  %v2057 = vrot.slane %v816, 3
  %v2059 = vmul.f32 %v1727, %v2057
  %v2060 = vadd.f32 %v2055, %v2059
  %v2061 = vmul.f32 %v1710, %v2010
  %v2062 = vrot.slane %v816, 1
  %v2064 = vmul.f32 %v1715, %v2062
  %v2065 = vadd.f32 %v2061, %v2064
  %v2066 = vrot.slane %v816, 4
  %v2068 = vmul.f32 %v1727, %v2066
  %v2069 = vadd.f32 %v2065, %v2068
  %v2070 = vmul.f32 %v1710, %v1998
  %v2071 = vrot.slane %v816, 2
  %v2073 = vmul.f32 %v1715, %v2071
  %v2074 = vadd.f32 %v2070, %v2073
  %v2075 = vrot.slane %v816, 5
  %v2077 = vmul.f32 %v1727, %v2075
  %v2078 = vadd.f32 %v2074, %v2077
  %v2079 = vmul.f32 %v1732, %v1975
  %v2080 = vmul.f32 %v1739, %v2075
  %v2081 = vadd.f32 %v2079, %v2080
  %v2082 = vmul.f32 %v1746, %v816
  %v2083 = vadd.f32 %v2081, %v2082
  %v2084 = vmul.f32 %v1732, %v1982
  %v2085 = vrot.slane %v816, 6
  %v2087 = vmul.f32 %v1739, %v2085
  %v2088 = vadd.f32 %v2084, %v2087
  %v2089 = vmul.f32 %v1746, %v2062
  %v2090 = vadd.f32 %v2088, %v2089
  %v2091 = vmul.f32 %v1732, %v1991
  %v2092 = vrot.slane %v816, 7
  %v2094 = vmul.f32 %v1739, %v2092
  %v2095 = vadd.f32 %v2091, %v2094
  %v2096 = vmul.f32 %v1746, %v2071
  %v2097 = vadd.f32 %v2095, %v2096
  %v2098 = vmul.f32 %v1751, %v1998
  %v2099 = vmul.f32 %v1758, %v2071
  %v2100 = vadd.f32 %v2098, %v2099
  %v2101 = vmul.f32 %v1765, %v2075
  %v2102 = vadd.f32 %v2100, %v2101
  %v2103 = vmul.f32 %v1751, %v815
  %v2104 = vmul.f32 %v1758, %v2057
  %v2105 = vadd.f32 %v2103, %v2104
  %v2106 = vmul.f32 %v1765, %v2085
  %v2107 = vadd.f32 %v2105, %v2106
  %v2108 = vmul.f32 %v1751, %v1987
  %v2109 = vmul.f32 %v1758, %v2066
  %v2110 = vadd.f32 %v2108, %v2109
  %v2111 = vmul.f32 %v1765, %v2092
  %v2112 = vadd.f32 %v2110, %v2111
  %v2114 = vrot.slane %v2051, 7
  %v2116 = vmul.f32 %v1710, %v2114
  %v2117 = vmul.f32 %v1715, %v2052
  %v2118 = vadd.f32 %v2116, %v2117
  %v2120 = vrot.slane %v2052, 1
  %v2122 = vmul.f32 %v1727, %v2120
  %v2123 = vadd.f32 %v2118, %v2122
  %v2124 = vadd.f32 %v2123, %v1773
  %v2125 = vrot.slane %v2051, 4
  %v2127 = vmul.f32 %v1732, %v2125
  %v2128 = vrot.slane %v2052, 5
  %v2130 = vmul.f32 %v1739, %v2128
  %v2131 = vadd.f32 %v2127, %v2130
  %v2132 = vrot.slane %v2052, 6
  %v2134 = vmul.f32 %v1746, %v2132
  %v2135 = vadd.f32 %v2131, %v2134
  %v2136 = vadd.f32 %v2135, %v1779
  %v2137 = vrot.slane %v2051, 1
  %v2139 = vmul.f32 %v1751, %v2137
  %v2140 = vrot.slane %v2052, 2
  %v2142 = vmul.f32 %v1758, %v2140
  %v2143 = vadd.f32 %v2139, %v2142
  %v2144 = vrot.slane %v2052, 3
  %v2146 = vmul.f32 %v1765, %v2144
  %v2147 = vadd.f32 %v2143, %v2146
  %v2148 = vadd.f32 %v2147, %v1785
  %v2149 = vrot.slane %v784, 1
  %v2151 = vsub.f32 %v790, %v2149
  %v2152 = vmul.f32 %v1710, %v2085
  %v2154 = vrot.slane %v817, 1
  %v2156 = vmul.f32 %v1715, %v2154
  %v2157 = vadd.f32 %v2152, %v2156
  %v2158 = vrot.slane %v817, 4
  %v2160 = vmul.f32 %v1727, %v2158
  %v2161 = vadd.f32 %v2157, %v2160
  %v2162 = vmul.f32 %v1710, %v2092
  %v2163 = vrot.slane %v817, 2
  %v2165 = vmul.f32 %v1715, %v2163
  %v2166 = vadd.f32 %v2162, %v2165
  %v2167 = vrot.slane %v817, 5
  %v2169 = vmul.f32 %v1727, %v2167
  %v2170 = vadd.f32 %v2166, %v2169
  %v2171 = vmul.f32 %v1710, %v817
  %v2172 = vrot.slane %v817, 3
  %v2174 = vmul.f32 %v1715, %v2172
  %v2175 = vadd.f32 %v2171, %v2174
  %v2176 = vrot.slane %v817, 6
  %v2178 = vmul.f32 %v1727, %v2176
  %v2179 = vadd.f32 %v2175, %v2178
  %v2180 = vmul.f32 %v1732, %v2057
  %v2181 = vmul.f32 %v1739, %v2176
  %v2182 = vadd.f32 %v2180, %v2181
  %v2183 = vmul.f32 %v1746, %v2154
  %v2184 = vadd.f32 %v2182, %v2183
  %v2185 = vmul.f32 %v1732, %v2066
  %v2186 = vrot.slane %v817, 7
  %v2188 = vmul.f32 %v1739, %v2186
  %v2189 = vadd.f32 %v2185, %v2188
  %v2190 = vmul.f32 %v1746, %v2163
  %v2191 = vadd.f32 %v2189, %v2190
  %v2192 = vmul.f32 %v1732, %v2167
  %v2193 = vmul.f32 %v1739, %v817
  %v2194 = vadd.f32 %v2192, %v2193
  %v2195 = vmul.f32 %v1746, %v2172
  %v2196 = vadd.f32 %v2194, %v2195
  %v2197 = vmul.f32 %v1751, %v816
  %v2198 = vmul.f32 %v1758, %v2172
  %v2199 = vadd.f32 %v2197, %v2198
  %v2200 = vmul.f32 %v1765, %v2176
  %v2201 = vadd.f32 %v2199, %v2200
  %v2202 = vmul.f32 %v1751, %v2062
  %v2203 = vmul.f32 %v1758, %v2158
  %v2204 = vadd.f32 %v2202, %v2203
  %v2205 = vmul.f32 %v1765, %v2186
  %v2206 = vadd.f32 %v2204, %v2205
  %v2207 = vmul.f32 %v1751, %v2163
  %v2208 = vmul.f32 %v1758, %v2167
  %v2209 = vadd.f32 %v2207, %v2208
  %v2210 = vmul.f32 %v1765, %v817
  %v2211 = vadd.f32 %v2209, %v2210
  %v2213 = vrot.slane %v2151, 2
  %v2215 = vmul.f32 %v1710, %v2213
  %v2216 = vrot.slane %v2151, 3
  %v2218 = vmul.f32 %v1715, %v2216
  %v2219 = vadd.f32 %v2215, %v2218
  %v2220 = vrot.slane %v2151, 4
  %v2222 = vmul.f32 %v1727, %v2220
  %v2223 = vadd.f32 %v2219, %v2222
  %v2224 = vadd.f32 %v2223, %v1773
  %v2225 = vrot.slane %v2151, 7
  %v2227 = vmul.f32 %v1732, %v2225
  %v2228 = vmul.f32 %v1739, %v2151
  %v2229 = vadd.f32 %v2227, %v2228
  %v2230 = vrot.slane %v2151, 1
  %v2232 = vmul.f32 %v1746, %v2230
  %v2233 = vadd.f32 %v2229, %v2232
  %v2234 = vadd.f32 %v2233, %v1779
  %v2235 = vmul.f32 %v1751, %v2220
  %v2236 = vrot.slane %v2151, 5
  %v2238 = vmul.f32 %v1758, %v2236
  %v2239 = vadd.f32 %v2235, %v2238
  %v2240 = vrot.slane %v2151, 6
  %v2242 = vmul.f32 %v1765, %v2240
  %v2243 = vadd.f32 %v2239, %v2242
  %v2244 = vadd.f32 %v2243, %v1785
  %v2246 = vrot.slane %v787, 7
  %v2248 = vsub.f32 %v790, %v2246
  %v2249 = vmul.f32 %v1978, %v2186
  %v2251 = vrot.slane %v818, 2
  %v2253 = vmul.f32 %v1985, %v2251
  %v2254 = vadd.f32 %v2249, %v2253
  %v2255 = vrot.slane %v818, 5
  %v2257 = vmul.f32 %v1994, %v2255
  %v2258 = vadd.f32 %v2254, %v2257
  %v2259 = vmul.f32 %v1978, %v818
  %v2260 = vrot.slane %v818, 3
  %v2262 = vmul.f32 %v1985, %v2260
  %v2263 = vadd.f32 %v2259, %v2262
  %v2264 = vrot.slane %v818, 6
  %v2266 = vmul.f32 %v1994, %v2264
  %v2267 = vadd.f32 %v2263, %v2266
  %v2268 = vrot.slane %v818, 1
  %v2270 = vmul.f32 %v1978, %v2268
  %v2271 = vrot.slane %v818, 4
  %v2273 = vmul.f32 %v1985, %v2271
  %v2274 = vadd.f32 %v2270, %v2273
  %v2275 = vrot.slane %v818, 7
  %v2277 = vmul.f32 %v1994, %v2275
  %v2278 = vadd.f32 %v2274, %v2277
  %v2279 = vmul.f32 %v2001, %v2158
  %v2280 = vmul.f32 %v2008, %v2275
  %v2281 = vadd.f32 %v2279, %v2280
  %v2282 = vmul.f32 %v2015, %v2251
  %v2283 = vadd.f32 %v2281, %v2282
  %v2284 = vmul.f32 %v2001, %v2255
  %v2285 = vmul.f32 %v2008, %v818
  %v2286 = vadd.f32 %v2284, %v2285
  %v2287 = vmul.f32 %v2015, %v2260
  %v2288 = vadd.f32 %v2286, %v2287
  %v2289 = vmul.f32 %v2001, %v2264
  %v2290 = vmul.f32 %v2008, %v2268
  %v2291 = vadd.f32 %v2289, %v2290
  %v2292 = vmul.f32 %v2015, %v2271
  %v2293 = vadd.f32 %v2291, %v2292
  %v2294 = vmul.f32 %v2020, %v2154
  %v2295 = vmul.f32 %v2025, %v2271
  %v2296 = vadd.f32 %v2294, %v2295
  %v2297 = vmul.f32 %v2030, %v2275
  %v2298 = vadd.f32 %v2296, %v2297
  %v2299 = vmul.f32 %v2020, %v2251
  %v2300 = vmul.f32 %v2025, %v2255
  %v2301 = vadd.f32 %v2299, %v2300
  %v2302 = vmul.f32 %v2030, %v818
  %v2303 = vadd.f32 %v2301, %v2302
  %v2304 = vmul.f32 %v2020, %v2260
  %v2305 = vmul.f32 %v2025, %v2264
  %v2306 = vadd.f32 %v2304, %v2305
  %v2307 = vmul.f32 %v2030, %v2268
  %v2308 = vadd.f32 %v2306, %v2307
  %v2310 = vrot.slane %v2248, 5
  %v2312 = vmul.f32 %v1978, %v2310
  %v2313 = vrot.slane %v2248, 6
  %v2315 = vmul.f32 %v1985, %v2313
  %v2316 = vadd.f32 %v2312, %v2315
  %v2317 = vrot.slane %v2248, 7
  %v2319 = vmul.f32 %v1994, %v2317
  %v2320 = vadd.f32 %v2316, %v2319
  %v2321 = vadd.f32 %v2320, %v2036
  %v2322 = vrot.slane %v2248, 2
  %v2324 = vmul.f32 %v2001, %v2322
  %v2325 = vrot.slane %v2248, 3
  %v2327 = vmul.f32 %v2008, %v2325
  %v2328 = vadd.f32 %v2324, %v2327
  %v2329 = vrot.slane %v2248, 4
  %v2331 = vmul.f32 %v2015, %v2329
  %v2332 = vadd.f32 %v2328, %v2331
  %v2333 = vadd.f32 %v2332, %v2042
  %v2334 = vmul.f32 %v2020, %v2317
  %v2335 = vmul.f32 %v2025, %v2248
  %v2336 = vadd.f32 %v2334, %v2335
  %v2337 = vrot.slane %v2248, 1
  %v2339 = vmul.f32 %v2030, %v2337
  %v2340 = vadd.f32 %v2336, %v2339
  %v2341 = vadd.f32 %v2340, %v2048
  %v2342 = vsub.f32 %v793, %v2246
  %v2344 = vrot.slane %v790, 7
  %v2346 = vsub.f32 %v793, %v2344
  %v2347 = vmul.f32 %v2060, %v819
  %v2349 = vrot.slane %v819, 3
  %v2351 = vmul.f32 %v2069, %v2349
  %v2352 = vadd.f32 %v2347, %v2351
  %v2353 = vrot.slane %v819, 6
  %v2355 = vmul.f32 %v2078, %v2353
  %v2356 = vadd.f32 %v2352, %v2355
  %v2357 = vrot.slane %v819, 1
  %v2359 = vmul.f32 %v2060, %v2357
  %v2360 = vrot.slane %v819, 4
  %v2362 = vmul.f32 %v2069, %v2360
  %v2363 = vadd.f32 %v2359, %v2362
  %v2364 = vrot.slane %v819, 7
  %v2366 = vmul.f32 %v2078, %v2364
  %v2367 = vadd.f32 %v2363, %v2366
  %v2368 = vrot.slane %v819, 2
  %v2370 = vmul.f32 %v2060, %v2368
  %v2371 = vrot.slane %v819, 5
  %v2373 = vmul.f32 %v2069, %v2371
  %v2374 = vadd.f32 %v2370, %v2373
  %v2375 = vmul.f32 %v2078, %v820
  %v2376 = vadd.f32 %v2374, %v2375
  %v2377 = vmul.f32 %v2083, %v2371
  %v2378 = vmul.f32 %v2090, %v819
  %v2379 = vadd.f32 %v2377, %v2378
  %v2380 = vmul.f32 %v2097, %v2349
  %v2381 = vadd.f32 %v2379, %v2380
  %v2382 = vmul.f32 %v2083, %v2353
  %v2383 = vmul.f32 %v2090, %v2357
  %v2384 = vadd.f32 %v2382, %v2383
  %v2385 = vmul.f32 %v2097, %v2360
  %v2386 = vadd.f32 %v2384, %v2385
  %v2387 = vmul.f32 %v2083, %v2364
  %v2388 = vmul.f32 %v2090, %v2368
  %v2389 = vadd.f32 %v2387, %v2388
  %v2391 = vrot.slane %v820, 5
  %v2393 = vmul.f32 %v2097, %v2391
  %v2394 = vadd.f32 %v2389, %v2393
  %v2395 = vmul.f32 %v2102, %v2368
  %v2396 = vmul.f32 %v2107, %v2371
  %v2397 = vadd.f32 %v2395, %v2396
  %v2398 = vmul.f32 %v2112, %v819
  %v2399 = vadd.f32 %v2397, %v2398
  %v2400 = vmul.f32 %v2102, %v2349
  %v2401 = vmul.f32 %v2107, %v2353
  %v2402 = vadd.f32 %v2400, %v2401
  %v2403 = vmul.f32 %v2112, %v2357
  %v2404 = vadd.f32 %v2402, %v2403
  %v2405 = vmul.f32 %v2102, %v2360
  %v2406 = vmul.f32 %v2107, %v2364
  %v2407 = vadd.f32 %v2405, %v2406
  %v2408 = vrot.slane %v820, 2
  %v2410 = vmul.f32 %v2112, %v2408
  %v2411 = vadd.f32 %v2407, %v2410
  %v2412 = vmul.f32 %v2060, %v2342
  %v2414 = vrot.slane %v2346, 1
  %v2416 = vmul.f32 %v2069, %v2414
  %v2417 = vadd.f32 %v2412, %v2416
  %v2418 = vrot.slane %v2346, 2
  %v2420 = vmul.f32 %v2078, %v2418
  %v2421 = vadd.f32 %v2417, %v2420
  %v2422 = vadd.f32 %v2421, %v2124
  %v2424 = vrot.slane %v2342, 5
  %v2426 = vmul.f32 %v2083, %v2424
  %v2427 = vrot.slane %v2346, 6
  %v2429 = vmul.f32 %v2090, %v2427
  %v2430 = vadd.f32 %v2426, %v2429
  %v2431 = vrot.slane %v2346, 7
  %v2433 = vmul.f32 %v2097, %v2431
  %v2434 = vadd.f32 %v2430, %v2433
  %v2435 = vadd.f32 %v2434, %v2136
  %v2436 = vrot.slane %v2342, 2
  %v2438 = vmul.f32 %v2102, %v2436
  %v2439 = vrot.slane %v2346, 3
  %v2441 = vmul.f32 %v2107, %v2439
  %v2442 = vadd.f32 %v2438, %v2441
  %v2443 = vrot.slane %v2346, 4
  %v2445 = vmul.f32 %v2112, %v2443
  %v2446 = vadd.f32 %v2442, %v2445
  %v2447 = vadd.f32 %v2446, %v2148
  %v2448 = vrot.slane %v820, 1
  %v2450 = vmul.f32 %v2161, %v2448
  %v2451 = vrot.slane %v820, 4
  %v2453 = vmul.f32 %v2170, %v2451
  %v2454 = vadd.f32 %v2450, %v2453
  %v2455 = vrot.slane %v820, 7
  %v2457 = vmul.f32 %v2179, %v2455
  %v2458 = vadd.f32 %v2454, %v2457
  %v2459 = vmul.f32 %v2161, %v2408
  %v2460 = vmul.f32 %v2170, %v2391
  %v2461 = vadd.f32 %v2459, %v2460
  %v2462 = vmul.f32 %v2179, %v821
  %v2463 = vadd.f32 %v2461, %v2462
  %v2464 = vrot.slane %v820, 3
  %v2466 = vmul.f32 %v2161, %v2464
  %v2467 = vrot.slane %v820, 6
  %v2469 = vmul.f32 %v2170, %v2467
  %v2470 = vadd.f32 %v2466, %v2469
  %v2472 = vrot.slane %v821, 1
  %v2474 = vmul.f32 %v2179, %v2472
  %v2475 = vadd.f32 %v2470, %v2474
  %v2476 = vmul.f32 %v2184, %v2467
  %v2477 = vmul.f32 %v2191, %v2448
  %v2478 = vadd.f32 %v2476, %v2477
  %v2479 = vmul.f32 %v2196, %v2451
  %v2480 = vadd.f32 %v2478, %v2479
  %v2481 = vmul.f32 %v2184, %v2455
  %v2482 = vmul.f32 %v2191, %v2408
  %v2483 = vadd.f32 %v2481, %v2482
  %v2484 = vrot.slane %v821, 5
  %v2486 = vmul.f32 %v2196, %v2484
  %v2487 = vadd.f32 %v2483, %v2486
  %v2488 = vmul.f32 %v2184, %v820
  %v2489 = vmul.f32 %v2191, %v2464
  %v2490 = vadd.f32 %v2488, %v2489
  %v2491 = vrot.slane %v821, 6
  %v2493 = vmul.f32 %v2196, %v2491
  %v2494 = vadd.f32 %v2490, %v2493
  %v2495 = vmul.f32 %v2201, %v2464
  %v2496 = vmul.f32 %v2206, %v2467
  %v2497 = vadd.f32 %v2495, %v2496
  %v2498 = vmul.f32 %v2211, %v2448
  %v2499 = vadd.f32 %v2497, %v2498
  %v2500 = vmul.f32 %v2201, %v2451
  %v2501 = vmul.f32 %v2206, %v2455
  %v2502 = vadd.f32 %v2500, %v2501
  %v2503 = vrot.slane %v821, 2
  %v2505 = vmul.f32 %v2211, %v2503
  %v2506 = vadd.f32 %v2502, %v2505
  %v2507 = vmul.f32 %v2201, %v2391
  %v2508 = vmul.f32 %v2206, %v820
  %v2509 = vadd.f32 %v2507, %v2508
  %v2510 = vrot.slane %v821, 3
  %v2512 = vmul.f32 %v2211, %v2510
  %v2513 = vadd.f32 %v2509, %v2512
  %v2514 = vmul.f32 %v2161, %v2439
  %v2515 = vmul.f32 %v2170, %v2443
  %v2516 = vadd.f32 %v2514, %v2515
  %v2517 = vrot.slane %v2346, 5
  %v2519 = vmul.f32 %v2179, %v2517
  %v2520 = vadd.f32 %v2516, %v2519
  %v2521 = vadd.f32 %v2520, %v2224
  %v2522 = vmul.f32 %v2184, %v2346
  %v2523 = vmul.f32 %v2191, %v2414
  %v2524 = vadd.f32 %v2522, %v2523
  %v2525 = vmul.f32 %v2196, %v2418
  %v2526 = vadd.f32 %v2524, %v2525
  %v2527 = vadd.f32 %v2526, %v2234
  %v2528 = vmul.f32 %v2201, %v2517
  %v2529 = vmul.f32 %v2206, %v2427
  %v2530 = vadd.f32 %v2528, %v2529
  %v2531 = vmul.f32 %v2211, %v2431
  %v2532 = vadd.f32 %v2530, %v2531
  %v2533 = vadd.f32 %v2532, %v2244
  %v2535 = vrot.slane %v793, 2
  %v2537 = vsub.f32 %v793, %v2535
  %v2538 = vsub.f32 %v796, %v2535
  %v2539 = vmul.f32 %v2356, %v2503
  %v2540 = vmul.f32 %v2367, %v2484
  %v2541 = vadd.f32 %v2539, %v2540
  %v2542 = vmul.f32 %v2376, %v822
  %v2543 = vadd.f32 %v2541, %v2542
  %v2544 = vmul.f32 %v2356, %v2510
  %v2545 = vmul.f32 %v2367, %v2491
  %v2546 = vadd.f32 %v2544, %v2545
  %v2548 = vrot.slane %v822, 1
  %v2550 = vmul.f32 %v2376, %v2548
  %v2551 = vadd.f32 %v2546, %v2550
  %v2552 = vrot.slane %v821, 4
  %v2554 = vmul.f32 %v2356, %v2552
  %v2555 = vrot.slane %v821, 7
  %v2557 = vmul.f32 %v2367, %v2555
  %v2558 = vadd.f32 %v2554, %v2557
  %v2559 = vrot.slane %v822, 2
  %v2561 = vmul.f32 %v2376, %v2559
  %v2562 = vadd.f32 %v2558, %v2561
  %v2563 = vmul.f32 %v2381, %v2555
  %v2564 = vmul.f32 %v2386, %v2503
  %v2565 = vadd.f32 %v2563, %v2564
  %v2566 = vrot.slane %v822, 5
  %v2568 = vmul.f32 %v2394, %v2566
  %v2569 = vadd.f32 %v2565, %v2568
  %v2570 = vmul.f32 %v2381, %v821
  %v2571 = vmul.f32 %v2386, %v2510
  %v2572 = vadd.f32 %v2570, %v2571
  %v2573 = vrot.slane %v822, 6
  %v2575 = vmul.f32 %v2394, %v2573
  %v2576 = vadd.f32 %v2572, %v2575
  %v2577 = vmul.f32 %v2381, %v2472
  %v2578 = vmul.f32 %v2386, %v2552
  %v2579 = vadd.f32 %v2577, %v2578
  %v2580 = vrot.slane %v822, 7
  %v2582 = vmul.f32 %v2394, %v2580
  %v2583 = vadd.f32 %v2579, %v2582
  %v2584 = vmul.f32 %v2399, %v2552
  %v2585 = vmul.f32 %v2404, %v2555
  %v2586 = vadd.f32 %v2584, %v2585
  %v2587 = vmul.f32 %v2411, %v2559
  %v2588 = vadd.f32 %v2586, %v2587
  %v2589 = vmul.f32 %v2399, %v2484
  %v2590 = vmul.f32 %v2404, %v821
  %v2591 = vadd.f32 %v2589, %v2590
  %v2592 = vrot.slane %v822, 3
  %v2594 = vmul.f32 %v2411, %v2592
  %v2595 = vadd.f32 %v2591, %v2594
  %v2596 = vmul.f32 %v2399, %v2491
  %v2597 = vmul.f32 %v2404, %v2472
  %v2598 = vadd.f32 %v2596, %v2597
  %v2599 = vrot.slane %v822, 4
  %v2601 = vmul.f32 %v2411, %v2599
  %v2602 = vadd.f32 %v2598, %v2601
  %v2604 = vrot.slane %v2537, 6
  %v2606 = vmul.f32 %v2356, %v2604
  %v2607 = vrot.slane %v2537, 7
  %v2609 = vmul.f32 %v2367, %v2607
  %v2610 = vadd.f32 %v2606, %v2609
  %v2611 = vmul.f32 %v2376, %v2538
  %v2612 = vadd.f32 %v2610, %v2611
  %v2613 = vadd.f32 %v2612, %v2422
  %v2614 = vrot.slane %v2537, 3
  %v2616 = vmul.f32 %v2381, %v2614
  %v2617 = vrot.slane %v2537, 4
  %v2619 = vmul.f32 %v2386, %v2617
  %v2620 = vadd.f32 %v2616, %v2619
  %v2622 = vrot.slane %v2538, 5
  %v2624 = vmul.f32 %v2394, %v2622
  %v2625 = vadd.f32 %v2620, %v2624
  %v2626 = vadd.f32 %v2625, %v2435
  %v2627 = vmul.f32 %v2399, %v2537
  %v2628 = vrot.slane %v2537, 1
  %v2630 = vmul.f32 %v2404, %v2628
  %v2631 = vadd.f32 %v2627, %v2630
  %v2632 = vrot.slane %v2538, 2
  %v2634 = vmul.f32 %v2411, %v2632
  %v2635 = vadd.f32 %v2631, %v2634
  %v2636 = vadd.f32 %v2635, %v2447
  %v2637 = vmul.f32 %v2458, %v2592
  %v2638 = vmul.f32 %v2463, %v2573
  %v2639 = vadd.f32 %v2637, %v2638
  %v2641 = vrot.slane %v823, 1
  %v2643 = vmul.f32 %v2475, %v2641
  %v2644 = vadd.f32 %v2639, %v2643
  %v2645 = vmul.f32 %v2458, %v2599
  %v2646 = vmul.f32 %v2463, %v2580
  %v2647 = vadd.f32 %v2645, %v2646
  %v2648 = vrot.slane %v823, 2
  %v2650 = vmul.f32 %v2475, %v2648
  %v2651 = vadd.f32 %v2647, %v2650
  %v2652 = vmul.f32 %v2458, %v2566
  %v2653 = vmul.f32 %v2463, %v823
  %v2654 = vadd.f32 %v2652, %v2653
  %v2655 = vrot.slane %v823, 3
  %v2657 = vmul.f32 %v2475, %v2655
  %v2658 = vadd.f32 %v2654, %v2657
  %v2659 = vmul.f32 %v2480, %v822
  %v2660 = vmul.f32 %v2487, %v2592
  %v2661 = vadd.f32 %v2659, %v2660
  %v2662 = vrot.slane %v823, 6
  %v2664 = vmul.f32 %v2494, %v2662
  %v2665 = vadd.f32 %v2661, %v2664
  %v2666 = vmul.f32 %v2480, %v2548
  %v2667 = vmul.f32 %v2487, %v2599
  %v2668 = vadd.f32 %v2666, %v2667
  %v2669 = vrot.slane %v823, 7
  %v2671 = vmul.f32 %v2494, %v2669
  %v2672 = vadd.f32 %v2668, %v2671
  %v2673 = vmul.f32 %v2480, %v2559
  %v2674 = vrot.slane %v823, 5
  %v2676 = vmul.f32 %v2487, %v2674
  %v2677 = vadd.f32 %v2673, %v2676
  %v2678 = vmul.f32 %v2494, %v823
  %v2679 = vadd.f32 %v2677, %v2678
  %v2680 = vmul.f32 %v2499, %v2566
  %v2681 = vmul.f32 %v2506, %v822
  %v2682 = vadd.f32 %v2680, %v2681
  %v2683 = vmul.f32 %v2513, %v2655
  %v2684 = vadd.f32 %v2682, %v2683
  %v2685 = vmul.f32 %v2499, %v2573
  %v2686 = vmul.f32 %v2506, %v2548
  %v2687 = vadd.f32 %v2685, %v2686
  %v2688 = vrot.slane %v823, 4
  %v2690 = vmul.f32 %v2513, %v2688
  %v2691 = vadd.f32 %v2687, %v2690
  %v2692 = vmul.f32 %v2499, %v2580
  %v2693 = vmul.f32 %v2506, %v2648
  %v2694 = vadd.f32 %v2692, %v2693
  %v2695 = vmul.f32 %v2513, %v2674
  %v2696 = vadd.f32 %v2694, %v2695
  %v2697 = vrot.slane %v2538, 1
  %v2699 = vmul.f32 %v2458, %v2697
  %v2700 = vmul.f32 %v2463, %v2632
  %v2701 = vadd.f32 %v2699, %v2700
  %v2702 = vrot.slane %v2538, 3
  %v2704 = vmul.f32 %v2475, %v2702
  %v2705 = vadd.f32 %v2701, %v2704
  %v2706 = vadd.f32 %v2705, %v2521
  %v2707 = vrot.slane %v2538, 6
  %v2709 = vmul.f32 %v2480, %v2707
  %v2710 = vrot.slane %v2538, 7
  %v2712 = vmul.f32 %v2487, %v2710
  %v2713 = vadd.f32 %v2709, %v2712
  %v2714 = vmul.f32 %v2494, %v2538
  %v2715 = vadd.f32 %v2713, %v2714
  %v2716 = vadd.f32 %v2715, %v2527
  %v2717 = vmul.f32 %v2499, %v2702
  %v2718 = vrot.slane %v2538, 4
  %v2720 = vmul.f32 %v2506, %v2718
  %v2721 = vadd.f32 %v2717, %v2720
  %v2722 = vmul.f32 %v2513, %v2622
  %v2723 = vadd.f32 %v2721, %v2722
  %v2724 = vadd.f32 %v2723, %v2533
  %v2726 = vrot.slane %v796, 2
  %v2728 = vsub.f32 %v796, %v2726
  %v2729 = vmul.f32 %v2543, %v2688
  %v2730 = vmul.f32 %v2551, %v2669
  %v2731 = vadd.f32 %v2729, %v2730
  %v2733 = vrot.slane %v824, 2
  %v2735 = vmul.f32 %v2562, %v2733
  %v2736 = vadd.f32 %v2731, %v2735
  %v2737 = vmul.f32 %v2543, %v2674
  %v2738 = vmul.f32 %v2551, %v824
  %v2739 = vadd.f32 %v2737, %v2738
  %v2740 = vrot.slane %v824, 3
  %v2742 = vmul.f32 %v2562, %v2740
  %v2743 = vadd.f32 %v2739, %v2742
  %v2744 = vmul.f32 %v2543, %v2662
  %v2745 = vrot.slane %v824, 1
  %v2747 = vmul.f32 %v2551, %v2745
  %v2748 = vadd.f32 %v2744, %v2747
  %v2749 = vrot.slane %v824, 4
  %v2751 = vmul.f32 %v2562, %v2749
  %v2752 = vadd.f32 %v2748, %v2751
  %v2753 = vmul.f32 %v2569, %v2641
  %v2754 = vmul.f32 %v2576, %v2688
  %v2755 = vadd.f32 %v2753, %v2754
  %v2756 = vrot.slane %v824, 7
  %v2758 = vmul.f32 %v2583, %v2756
  %v2759 = vadd.f32 %v2755, %v2758
  %v2760 = vmul.f32 %v2569, %v2648
  %v2761 = vrot.slane %v824, 5
  %v2763 = vmul.f32 %v2576, %v2761
  %v2764 = vadd.f32 %v2760, %v2763
  %v2765 = vmul.f32 %v2583, %v824
  %v2766 = vadd.f32 %v2764, %v2765
  %v2767 = vmul.f32 %v2569, %v2655
  %v2768 = vrot.slane %v824, 6
  %v2770 = vmul.f32 %v2576, %v2768
  %v2771 = vadd.f32 %v2767, %v2770
  %v2772 = vmul.f32 %v2583, %v2745
  %v2773 = vadd.f32 %v2771, %v2772
  %v2774 = vmul.f32 %v2588, %v2662
  %v2775 = vmul.f32 %v2595, %v2641
  %v2776 = vadd.f32 %v2774, %v2775
  %v2777 = vmul.f32 %v2602, %v2749
  %v2778 = vadd.f32 %v2776, %v2777
  %v2779 = vmul.f32 %v2588, %v2669
  %v2780 = vmul.f32 %v2595, %v2733
  %v2781 = vadd.f32 %v2779, %v2780
  %v2782 = vmul.f32 %v2602, %v2761
  %v2783 = vadd.f32 %v2781, %v2782
  %v2784 = vmul.f32 %v2588, %v823
  %v2785 = vmul.f32 %v2595, %v2740
  %v2786 = vadd.f32 %v2784, %v2785
  %v2787 = vmul.f32 %v2602, %v2768
  %v2788 = vadd.f32 %v2786, %v2787
  %v2789 = vmul.f32 %v2543, %v2718
  %v2790 = vmul.f32 %v2551, %v2622
  %v2791 = vadd.f32 %v2789, %v2790
  %v2793 = vrot.slane %v2728, 6
  %v2795 = vmul.f32 %v2562, %v2793
  %v2796 = vadd.f32 %v2791, %v2795
  %v2797 = vadd.f32 %v2796, %v2613
  %v2798 = vmul.f32 %v2569, %v2697
  %v2799 = vmul.f32 %v2576, %v2632
  %v2800 = vadd.f32 %v2798, %v2799
  %v2801 = vrot.slane %v2728, 3
  %v2803 = vmul.f32 %v2583, %v2801
  %v2804 = vadd.f32 %v2800, %v2803
  %v2805 = vadd.f32 %v2804, %v2626
  %v2806 = vmul.f32 %v2588, %v2707
  %v2807 = vmul.f32 %v2595, %v2710
  %v2808 = vadd.f32 %v2806, %v2807
  %v2809 = vmul.f32 %v2602, %v2728
  %v2810 = vadd.f32 %v2808, %v2809
  %v2811 = vadd.f32 %v2810, %v2636
  %v2812 = vsub.f32 %v799, %v2726
  %v2813 = vmul.f32 %v2644, %v2761
  %v2814 = vmul.f32 %v2651, %v825
  %v2815 = vadd.f32 %v2813, %v2814
  %v2817 = vrot.slane %v825, 3
  %v2819 = vmul.f32 %v2658, %v2817
  %v2820 = vadd.f32 %v2815, %v2819
  %v2821 = vmul.f32 %v2644, %v2768
  %v2822 = vrot.slane %v825, 1
  %v2824 = vmul.f32 %v2651, %v2822
  %v2825 = vadd.f32 %v2821, %v2824
  %v2826 = vrot.slane %v825, 4
  %v2828 = vmul.f32 %v2658, %v2826
  %v2829 = vadd.f32 %v2825, %v2828
  %v2830 = vmul.f32 %v2644, %v2756
  %v2831 = vrot.slane %v825, 2
  %v2833 = vmul.f32 %v2651, %v2831
  %v2834 = vadd.f32 %v2830, %v2833
  %v2835 = vrot.slane %v825, 5
  %v2837 = vmul.f32 %v2658, %v2835
  %v2838 = vadd.f32 %v2834, %v2837
  %v2839 = vmul.f32 %v2665, %v2733
  %v2840 = vmul.f32 %v2672, %v2835
  %v2841 = vadd.f32 %v2839, %v2840
  %v2842 = vmul.f32 %v2679, %v825
  %v2843 = vadd.f32 %v2841, %v2842
  %v2844 = vmul.f32 %v2665, %v2740
  %v2845 = vrot.slane %v825, 6
  %v2847 = vmul.f32 %v2672, %v2845
  %v2848 = vadd.f32 %v2844, %v2847
  %v2849 = vmul.f32 %v2679, %v2822
  %v2850 = vadd.f32 %v2848, %v2849
  %v2851 = vmul.f32 %v2665, %v2749
  %v2852 = vrot.slane %v825, 7
  %v2854 = vmul.f32 %v2672, %v2852
  %v2855 = vadd.f32 %v2851, %v2854
  %v2856 = vmul.f32 %v2679, %v2831
  %v2857 = vadd.f32 %v2855, %v2856
  %v2858 = vmul.f32 %v2684, %v2756
  %v2859 = vmul.f32 %v2691, %v2831
  %v2860 = vadd.f32 %v2858, %v2859
  %v2861 = vmul.f32 %v2696, %v2835
  %v2862 = vadd.f32 %v2860, %v2861
  %v2863 = vmul.f32 %v2684, %v824
  %v2864 = vmul.f32 %v2691, %v2817
  %v2865 = vadd.f32 %v2863, %v2864
  %v2866 = vmul.f32 %v2696, %v2845
  %v2867 = vadd.f32 %v2865, %v2866
  %v2868 = vmul.f32 %v2684, %v2745
  %v2869 = vmul.f32 %v2691, %v2826
  %v2870 = vadd.f32 %v2868, %v2869
  %v2871 = vmul.f32 %v2696, %v2852
  %v2872 = vadd.f32 %v2870, %v2871
  %v2873 = vrot.slane %v2728, 7
  %v2875 = vmul.f32 %v2644, %v2873
  %v2876 = vmul.f32 %v2651, %v2812
  %v2877 = vadd.f32 %v2875, %v2876
  %v2879 = vrot.slane %v2812, 1
  %v2881 = vmul.f32 %v2658, %v2879
  %v2882 = vadd.f32 %v2877, %v2881
  %v2883 = vadd.f32 %v2882, %v2706
  %v2884 = vrot.slane %v2728, 4
  %v2886 = vmul.f32 %v2665, %v2884
  %v2887 = vrot.slane %v2812, 5
  %v2889 = vmul.f32 %v2672, %v2887
  %v2890 = vadd.f32 %v2886, %v2889
  %v2891 = vrot.slane %v2812, 6
  %v2893 = vmul.f32 %v2679, %v2891
  %v2894 = vadd.f32 %v2890, %v2893
  %v2895 = vadd.f32 %v2894, %v2716
  %v2896 = vrot.slane %v2728, 1
  %v2898 = vmul.f32 %v2684, %v2896
  %v2899 = vrot.slane %v2812, 2
  %v2901 = vmul.f32 %v2691, %v2899
  %v2902 = vadd.f32 %v2898, %v2901
  %v2903 = vrot.slane %v2812, 3
  %v2905 = vmul.f32 %v2696, %v2903
  %v2906 = vadd.f32 %v2902, %v2905
  %v2907 = vadd.f32 %v2906, %v2724
  %v2908 = vmul.f32 %v2736, %v2845
  %v2910 = vrot.slane %v826, 1
  %v2912 = vmul.f32 %v2743, %v2910
  %v2913 = vadd.f32 %v2908, %v2912
  %v2914 = vrot.slane %v826, 4
  %v2916 = vmul.f32 %v2752, %v2914
  %v2917 = vadd.f32 %v2913, %v2916
  %v2918 = vmul.f32 %v2736, %v2852
  %v2919 = vrot.slane %v826, 2
  %v2921 = vmul.f32 %v2743, %v2919
  %v2922 = vadd.f32 %v2918, %v2921
  %v2923 = vrot.slane %v826, 5
  %v2925 = vmul.f32 %v2752, %v2923
  %v2926 = vadd.f32 %v2922, %v2925
  %v2927 = vmul.f32 %v2736, %v826
  %v2928 = vrot.slane %v826, 3
  %v2930 = vmul.f32 %v2743, %v2928
  %v2931 = vadd.f32 %v2927, %v2930
  %v2932 = vrot.slane %v826, 6
  %v2934 = vmul.f32 %v2752, %v2932
  %v2935 = vadd.f32 %v2931, %v2934
  %v2936 = vmul.f32 %v2759, %v2817
  %v2937 = vmul.f32 %v2766, %v2932
  %v2938 = vadd.f32 %v2936, %v2937
  %v2939 = vmul.f32 %v2773, %v2910
  %v2940 = vadd.f32 %v2938, %v2939
  %v2941 = vmul.f32 %v2759, %v2826
  %v2942 = vrot.slane %v826, 7
  %v2944 = vmul.f32 %v2766, %v2942
  %v2945 = vadd.f32 %v2941, %v2944
  %v2946 = vmul.f32 %v2773, %v2919
  %v2947 = vadd.f32 %v2945, %v2946
  %v2948 = vmul.f32 %v2759, %v2923
  %v2949 = vmul.f32 %v2766, %v826
  %v2950 = vadd.f32 %v2948, %v2949
  %v2951 = vmul.f32 %v2773, %v2928
  %v2952 = vadd.f32 %v2950, %v2951
  %v2953 = vmul.f32 %v2778, %v825
  %v2954 = vmul.f32 %v2783, %v2928
  %v2955 = vadd.f32 %v2953, %v2954
  %v2956 = vmul.f32 %v2788, %v2932
  %v2957 = vadd.f32 %v2955, %v2956
  %v2958 = vmul.f32 %v2778, %v2822
  %v2959 = vmul.f32 %v2783, %v2914
  %v2960 = vadd.f32 %v2958, %v2959
  %v2961 = vmul.f32 %v2788, %v2942
  %v2962 = vadd.f32 %v2960, %v2961
  %v2963 = vmul.f32 %v2778, %v2919
  %v2964 = vmul.f32 %v2783, %v2923
  %v2965 = vadd.f32 %v2963, %v2964
  %v2966 = vmul.f32 %v2788, %v826
  %v2967 = vadd.f32 %v2965, %v2966
  %v2968 = vmul.f32 %v2736, %v2899
  %v2969 = vmul.f32 %v2743, %v2903
  %v2970 = vadd.f32 %v2968, %v2969
  %v2971 = vrot.slane %v2812, 4
  %v2973 = vmul.f32 %v2752, %v2971
  %v2974 = vadd.f32 %v2970, %v2973
  %v2975 = vadd.f32 %v2974, %v2797
  %v2976 = vrot.slane %v2812, 7
  %v2978 = vmul.f32 %v2759, %v2976
  %v2979 = vmul.f32 %v2766, %v2812
  %v2980 = vadd.f32 %v2978, %v2979
  %v2981 = vmul.f32 %v2773, %v2879
  %v2982 = vadd.f32 %v2980, %v2981
  %v2983 = vadd.f32 %v2982, %v2805
  %v2984 = vmul.f32 %v2778, %v2971
  %v2985 = vmul.f32 %v2783, %v2887
  %v2986 = vadd.f32 %v2984, %v2985
  %v2987 = vmul.f32 %v2788, %v2891
  %v2988 = vadd.f32 %v2986, %v2987
  %v2989 = vadd.f32 %v2988, %v2811
  %v2991 = vrot.slane %v799, 2
  %v2993 = vsub.f32 %v799, %v2991
  %v2994 = vmul.f32 %v2820, %v2942
  %v2996 = vrot.slane %v827, 2
  %v2998 = vmul.f32 %v2829, %v2996
  %v2999 = vadd.f32 %v2994, %v2998
  %v3000 = vrot.slane %v827, 5
  %v3002 = vmul.f32 %v2838, %v3000
  %v3003 = vadd.f32 %v2999, %v3002
  %v3004 = vmul.f32 %v2820, %v827
  %v3005 = vrot.slane %v827, 3
  %v3007 = vmul.f32 %v2829, %v3005
  %v3008 = vadd.f32 %v3004, %v3007
  %v3009 = vrot.slane %v827, 6
  %v3011 = vmul.f32 %v2838, %v3009
  %v3012 = vadd.f32 %v3008, %v3011
  %v3013 = vrot.slane %v827, 1
  %v3015 = vmul.f32 %v2820, %v3013
  %v3016 = vrot.slane %v827, 4
  %v3018 = vmul.f32 %v2829, %v3016
  %v3019 = vadd.f32 %v3015, %v3018
  %v3020 = vrot.slane %v827, 7
  %v3022 = vmul.f32 %v2838, %v3020
  %v3023 = vadd.f32 %v3019, %v3022
  %v3024 = vmul.f32 %v2843, %v2914
  %v3025 = vmul.f32 %v2850, %v3020
  %v3026 = vadd.f32 %v3024, %v3025
  %v3027 = vmul.f32 %v2857, %v2996
  %v3028 = vadd.f32 %v3026, %v3027
  %v3029 = vmul.f32 %v2843, %v3000
  %v3030 = vmul.f32 %v2850, %v827
  %v3031 = vadd.f32 %v3029, %v3030
  %v3032 = vmul.f32 %v2857, %v3005
  %v3033 = vadd.f32 %v3031, %v3032
  %v3034 = vmul.f32 %v2843, %v3009
  %v3035 = vmul.f32 %v2850, %v3013
  %v3036 = vadd.f32 %v3034, %v3035
  %v3037 = vmul.f32 %v2857, %v3016
  %v3038 = vadd.f32 %v3036, %v3037
  %v3039 = vmul.f32 %v2862, %v2910
  %v3040 = vmul.f32 %v2867, %v3016
  %v3041 = vadd.f32 %v3039, %v3040
  %v3042 = vmul.f32 %v2872, %v3020
  %v3043 = vadd.f32 %v3041, %v3042
  %v3044 = vmul.f32 %v2862, %v2996
  %v3045 = vmul.f32 %v2867, %v3000
  %v3046 = vadd.f32 %v3044, %v3045
  %v3047 = vmul.f32 %v2872, %v827
  %v3048 = vadd.f32 %v3046, %v3047
  %v3049 = vmul.f32 %v2862, %v3005
  %v3050 = vmul.f32 %v2867, %v3009
  %v3051 = vadd.f32 %v3049, %v3050
  %v3052 = vmul.f32 %v2872, %v3013
  %v3053 = vadd.f32 %v3051, %v3052
  %v3054 = vmul.f32 %v2820, %v2887
  %v3056 = vrot.slane %v2993, 6
  %v3058 = vmul.f32 %v2829, %v3056
  %v3059 = vadd.f32 %v3054, %v3058
  %v3060 = vrot.slane %v2993, 7
  %v3062 = vmul.f32 %v2838, %v3060
  %v3063 = vadd.f32 %v3059, %v3062
  %v3064 = vadd.f32 %v3063, %v2883
  %v3065 = vmul.f32 %v2843, %v2899
  %v3066 = vrot.slane %v2993, 3
  %v3068 = vmul.f32 %v2850, %v3066
  %v3069 = vadd.f32 %v3065, %v3068
  %v3070 = vrot.slane %v2993, 4
  %v3072 = vmul.f32 %v2857, %v3070
  %v3073 = vadd.f32 %v3069, %v3072
  %v3074 = vadd.f32 %v3073, %v2895
  %v3075 = vmul.f32 %v2862, %v2976
  %v3076 = vmul.f32 %v2867, %v2993
  %v3077 = vadd.f32 %v3075, %v3076
  %v3078 = vrot.slane %v2993, 1
  %v3080 = vmul.f32 %v2872, %v3078
  %v3081 = vadd.f32 %v3077, %v3080
  %v3082 = vadd.f32 %v3081, %v2907
  %v3084 = vrot.slane %v950, 5
  %v3087 = vrot.slane %v961, 7
  %v3090 = vrot.slane %v976, 1
  %v3093 = vrot.slane %v1093, 2
  %v3096 = vrot.slane %v1108, 4
  %v3099 = vrot.slane %v1119, 6
  %v3102 = vrot.slane %v1224, 7
  %v3105 = vrot.slane %v1235, 1
  %v3108 = vrot.slane %v1248, 3
  %v3111 = vrot.slane %v1318, 4
  %v3114 = vrot.slane %v1326, 6
  %v3117 = vrot.slane %v1408, 1
  %vm3119 = vcmask 1042432
  %v3120 = vsel %vm3119, %v775, %v3084
  %vm3121 = vcmask 1043456
  %v3122 = vsel %vm3121, %v3120, %v3087
  %v3123 = vsel %vm402, %v3122, %v3090
  %vm3124 = vcmask 1045504
  %v3125 = vsel %vm3124, %v3123, %v3093
  %vm3126 = vcmask 1046528
  %v3127 = vsel %vm3126, %v3125, %v3096
  %vm3128 = vcmask 1040384
  %v3129 = vsel %vm3128, %v3099, %v3102
  %v3130 = vsel %vm709, %v3129, %v3105
  %v3131 = vsel %vm3119, %v3130, %v3108
  %v3132 = vsel %vm3121, %v3131, %v3111
  %v3133 = vsel %vm402, %v3132, %v3114
  %v3134 = vsel %vm3124, %v3133, %v1334
  %v3135 = vsel %vm3126, %v3134, %v3117
  %v3137 = vrot.slane %v1419, 3
  %v3140 = vrot.slane %v1429, 5
  %v3143 = vrot.slane %v1499, 6
  %v3146 = vrot.slane %v1515, 2
  %v3149 = vrot.slane %v1581, 3
  %v3152 = vrot.slane %v1587, 5
  %v3155 = vrot.slane %v1593, 7
  %v3158 = vrot.slane %v1687, 2
  %v3161 = vrot.slane %v1699, 4
  %v3164 = vrot.slane %v1773, 5
  %v3167 = vrot.slane %v1779, 7
  %v3170 = vrot.slane %v1785, 1
  %v3173 = vrot.slane %v1856, 2
  %v3176 = vrot.slane %v1865, 4
  %v3178 = vsel %vm3128, %v3137, %v3140
  %v3179 = vsel %vm709, %v3178, %v3143
  %v3180 = vsel %vm3119, %v3179, %v1507
  %v3181 = vsel %vm3121, %v3180, %v3146
  %v3182 = vsel %vm402, %v3181, %v3149
  %v3183 = vsel %vm3124, %v3182, %v3152
  %v3184 = vsel %vm3126, %v3183, %v3155
  %v3185 = vsel %vm3128, %v1674, %v3158
  %v3186 = vsel %vm709, %v3185, %v3161
  %v3187 = vsel %vm3119, %v3186, %v3164
  %v3188 = vsel %vm3121, %v3187, %v3167
  %v3189 = vsel %vm402, %v3188, %v3170
  %v3190 = vsel %vm3124, %v3189, %v3173
  %v3191 = vsel %vm3126, %v3190, %v3176
  %v3193 = vrot.slane %v1873, 6
  %v3196 = vrot.slane %v1950, 7
  %v3199 = vrot.slane %v1960, 1
  %v3202 = vrot.slane %v1970, 3
  %v3205 = vrot.slane %v2036, 4
  %v3208 = vrot.slane %v2042, 6
  %v3211 = vrot.slane %v2124, 1
  %v3214 = vrot.slane %v2136, 3
  %v3217 = vrot.slane %v2148, 5
  %v3220 = vrot.slane %v2224, 6
  %v3223 = vrot.slane %v2244, 2
  %v3226 = vrot.slane %v2321, 3
  %v3229 = vrot.slane %v2333, 5
  %v3232 = vrot.slane %v2341, 7
  %v3234 = vsel %vm3128, %v3193, %v3196
  %v3235 = vsel %vm709, %v3234, %v3199
  %v3236 = vsel %vm3119, %v3235, %v3202
  %v3237 = vsel %vm3121, %v3236, %v3205
  %v3238 = vsel %vm402, %v3237, %v3208
  %v3239 = vsel %vm3124, %v3238, %v2048
  %v3240 = vsel %vm3126, %v3239, %v3211
  %v3241 = vsel %vm3128, %v3214, %v3217
  %v3242 = vsel %vm709, %v3241, %v3220
  %v3243 = vsel %vm3119, %v3242, %v2234
  %v3244 = vsel %vm3121, %v3243, %v3223
  %v3245 = vsel %vm402, %v3244, %v3226
  %v3246 = vsel %vm3124, %v3245, %v3229
  %v3247 = vsel %vm3126, %v3246, %v3232
  %v3249 = vrot.slane %v2435, 2
  %v3252 = vrot.slane %v2447, 4
  %v3255 = vrot.slane %v2521, 5
  %v3258 = vrot.slane %v2527, 7
  %v3261 = vrot.slane %v2533, 1
  %v3264 = vrot.slane %v2613, 2
  %v3267 = vrot.slane %v2626, 4
  %v3270 = vrot.slane %v2636, 6
  %v3273 = vrot.slane %v2706, 7
  %v3276 = vrot.slane %v2716, 1
  %v3279 = vrot.slane %v2724, 3
  %v3282 = vrot.slane %v2797, 4
  %v3285 = vrot.slane %v2805, 6
  %v3288 = vrot.slane %v2883, 1
  %v3290 = vsel %vm3128, %v2422, %v3249
  %v3291 = vsel %vm709, %v3290, %v3252
  %v3292 = vsel %vm3119, %v3291, %v3255
  %v3293 = vsel %vm3121, %v3292, %v3258
  %v3294 = vsel %vm402, %v3293, %v3261
  %v3295 = vsel %vm3124, %v3294, %v3264
  %v3296 = vsel %vm3126, %v3295, %v3267
  %v3297 = vsel %vm3128, %v3270, %v3273
  %v3298 = vsel %vm709, %v3297, %v3276
  %v3299 = vsel %vm3119, %v3298, %v3279
  %v3300 = vsel %vm3121, %v3299, %v3282
  %v3301 = vsel %vm402, %v3300, %v3285
  %v3302 = vsel %vm3124, %v3301, %v2811
  %v3303 = vsel %vm3126, %v3302, %v3288
  %v3305 = vrot.slane %v2895, 3
  %v3308 = vrot.slane %v2907, 5
  %v3311 = vrot.slane %v2975, 6
  %v3314 = vrot.slane %v2989, 2
  %v3317 = vrot.slane %v3064, 3
  %v3320 = vrot.slane %v3074, 5
  %v3323 = vrot.slane %v3082, 7
  %v3325 = vsel %vm3128, %v3305, %v3308
  %v3326 = vsel %vm709, %v3325, %v3311
  %v3327 = vsel %vm3119, %v3326, %v2983
  %v3328 = vsel %vm3121, %v3327, %v3314
  %v3329 = vsel %vm402, %v3328, %v3317
  %v3330 = vsel %vm3124, %v3329, %v3320
  %v3331 = vsel %vm3126, %v3330, %v3323
  %vm3332 = vcmask 64512
  %3333 = vst.msk [vmem:[%s6] sm:$0xff] %vm3332, %v3127
  %3334 = vst.msk [vmem:[%s6 + $0x8] sm:$0xff] %vm3332, %v3135
  %3335 = vst.msk [vmem:[%s6 + $0x10] sm:$0xff] %vm3332, %v3184
  %3336 = vst.msk [vmem:[%s6 + $0x18] sm:$0xff] %vm3332, %v3191
  %3337 = vst.msk [vmem:[%s6 + $0x20] sm:$0xff] %vm3332, %v3240
  %3338 = vst.msk [vmem:[%s6 + $0x28] sm:$0xff] %vm3332, %v3247
  %3339 = vst.msk [vmem:[%s6 + $0x30] sm:$0xff] %vm3332, %v3296
  %3340 = vst.msk [vmem:[%s6 + $0x38] sm:$0xff] %vm3332, %v3303
  %3341 = vst.msk [vmem:[%s6 + $0x40] sm:$0xff] %vm3332, %v3331
  %v3342 = vld [vmem:[%s4] sm:$0xff]
  %v3343 = vld [vmem:[%s4 + $0x8] sm:$0xff]
  %v3344 = vld [vmem:[%s4 + $0x10] sm:$0xff]
  %v3345 = vld [vmem:[%s4 + $0x18] sm:$0xff]
  %v3346 = vld [vmem:[%s4 + $0x20] sm:$0xff]
  %v3347 = vld [vmem:[%s4 + $0x28] sm:$0xff]
  %v3348 = vld [vmem:[%s4 + $0x30] sm:$0xff]
  %v3349 = vld [vmem:[%s4 + $0x38] sm:$0xff]
  %v3350 = vld [vmem:[%s4 + $0x40] sm:$0xff]
  %v3351 = vld [vmem:[%s4 + $0x48] sm:$0xff]
  %v3352 = vld [vmem:[%s4 + $0x50] sm:$0xff]
  %v3353 = vld [vmem:[%s4 + $0x58] sm:$0xff]
  %v3354 = vld [vmem:[%s4 + $0x60] sm:$0xff]
  %v3355 = vld [vmem:[%s4 + $0x68] sm:$0xff]
  %v3356 = vld [vmem:[%s4 + $0x70] sm:$0xff]
  %v3357 = vld [vmem:[%s4 + $0x78] sm:$0xff]
  %v3359 = vrot.slane %v849, 7
  %v3362 = vrot.slane %v994, 6
  %v3365 = vrot.slane %v1133, 5
  %v3368 = vrot.slane %v1256, 4
  %v3371 = vrot.slane %v1347, 3
  %v3374 = vrot.slane %v1439, 2
  %v3377 = vrot.slane %v1525, 1
  %v3380 = vrot.slane %v1710, 7
  %v3383 = vrot.slane %v1791, 6
  %v3386 = vrot.slane %v1885, 5
  %v3389 = vrot.slane %v1978, 4
  %v3392 = vrot.slane %v2060, 3
  %v3395 = vrot.slane %v2161, 2
  %v3398 = vrot.slane %v2258, 1
  %v3400 = vsel %vm3128, %v801, %v3359
  %v3401 = vsel %vm709, %v3400, %v3362
  %v3402 = vsel %vm3119, %v3401, %v3365
  %v3403 = vsel %vm3121, %v3402, %v3368
  %v3404 = vsel %vm402, %v3403, %v3371
  %v3405 = vsel %vm3124, %v3404, %v3374
  %v3406 = vsel %vm3126, %v3405, %v3377
  %v3407 = vsel %vm3128, %v1608, %v3380
  %v3408 = vsel %vm709, %v3407, %v3383
  %v3409 = vsel %vm3119, %v3408, %v3386
  %v3410 = vsel %vm3121, %v3409, %v3389
  %v3411 = vsel %vm402, %v3410, %v3392
  %v3412 = vsel %vm3124, %v3411, %v3395
  %v3413 = vsel %vm3126, %v3412, %v3398
  %v3415 = vrot.slane %v2458, 7
  %v3418 = vrot.slane %v2543, 6
  %v3421 = vrot.slane %v2644, 5
  %v3424 = vrot.slane %v2736, 4
  %v3427 = vrot.slane %v2820, 3
  %v3430 = vrot.slane %v2917, 2
  %v3433 = vrot.slane %v3003, 1
  %v3435 = vsel %vm3128, %v2356, %v3415
  %v3436 = vsel %vm709, %v3435, %v3418
  %v3437 = vsel %vm3119, %v3436, %v3421
  %v3438 = vsel %vm3121, %v3437, %v3424
  %v3439 = vsel %vm402, %v3438, %v3427
  %v3440 = vsel %vm3124, %v3439, %v3430
  %v3441 = vsel %vm3126, %v3440, %v3433
  %vm3442 = vcmask 195584
  %v3444 = vsel %vm3442, %v3342, 0
  %v3447 = vsel %vm3442, %v3343, 0
  %v3450 = vsel %vm3442, %v3344, 0
  %v3453 = vsel %vm3442, %v3345, 0
  %v3456 = vsel %vm3442, %v3346, 0
  %v3459 = vsel %vm3442, %v3347, 0
  %v3462 = vsel %vm3442, %v3348, 0
  %v3465 = vsel %vm3442, %v3349, 0
  %v3468 = vsel %vm3442, %v3350, 0
  %v3471 = vsel %vm3442, %v3351, 0
  %v3474 = vsel %vm3442, %v3352, 0
  %v3477 = vsel %vm3442, %v3353, 0
  %v3480 = vsel %vm3442, %v3354, 0
  %v3483 = vsel %vm3442, %v3355, 0
  %v3486 = vsel %vm3442, %v3356, 0
  %v3489 = vsel %vm3442, %v3357, 0
  %3491 = vmatpush.msra.mxu0 0.0
  %3492 = vmatpush.msra.mxu0 0.0
  %3493 = vmatpush.msra.mxu0 0.0
  %3494 = vmatpush.msra.mxu0 0.0
  %3495 = vmatpush.msra.mxu0 0.0
  %3496 = vmatpush.msra.mxu0 0.0
  %3497 = vmatpush.msra.mxu0 0.0
  %3498 = vmatpush.msra.mxu0 0.0
  %3499 = vmatpush.msra.mxu0 0.0
  %3500 = vmatpush.msra.mxu0 0.0
  %3501 = vmatpush.msra.mxu0 0.0
  %3502 = vmatpush.msra.mxu0 0.0
  %3503 = vmatpush.msra.mxu0 0.0
  %3504 = vmatpush.msra.mxu0 %v3441
  %3505 = vmatpush.msra.mxu0 %v3413
  %3506 = vmatpush.msra.mxu0 %v3406
  %3507 = vmatmul.f32.gmra.mxu0 %v3444
  %v3508 = vpop.f32.mrf.mxu0
  %v3509 = vadd.f32 0.0, %v3508
  %3510 = vmatmul.f32.gmra.mxu0 %v3447
  %v3511 = vpop.f32.mrf.mxu0
  %v3512 = vadd.f32 0.0, %v3511
  %3513 = vmatmul.f32.gmra.mxu0 %v3450
  %v3514 = vpop.f32.mrf.mxu0
  %v3515 = vadd.f32 0.0, %v3514
  %3516 = vmatmul.f32.gmra.mxu0 %v3453
  %v3517 = vpop.f32.mrf.mxu0
  %v3518 = vadd.f32 0.0, %v3517
  %3519 = vmatmul.f32.gmra.mxu0 %v3456
  %v3520 = vpop.f32.mrf.mxu0
  %v3521 = vadd.f32 0.0, %v3520
  %3522 = vmatmul.f32.gmra.mxu0 %v3459
  %v3523 = vpop.f32.mrf.mxu0
  %v3524 = vadd.f32 0.0, %v3523
  %3525 = vmatmul.f32.gmra.mxu0 %v3462
  %v3526 = vpop.f32.mrf.mxu0
  %v3527 = vadd.f32 0.0, %v3526
  %3528 = vmatmul.f32.gmra.mxu0 %v3465
  %v3529 = vpop.f32.mrf.mxu0
  %v3530 = vadd.f32 0.0, %v3529
  %3531 = vmatmul.f32.gmra.mxu0 %v3468
  %v3532 = vpop.f32.mrf.mxu0
  %v3533 = vadd.f32 0.0, %v3532
  %3534 = vmatmul.f32.gmra.mxu0 %v3471
  %v3535 = vpop.f32.mrf.mxu0
  %v3536 = vadd.f32 0.0, %v3535
  %3537 = vmatmul.f32.gmra.mxu0 %v3474
  %v3538 = vpop.f32.mrf.mxu0
  %v3539 = vadd.f32 0.0, %v3538
  %3540 = vmatmul.f32.gmra.mxu0 %v3477
  %v3541 = vpop.f32.mrf.mxu0
  %v3542 = vadd.f32 0.0, %v3541
  %3543 = vmatmul.f32.gmra.mxu0 %v3480
  %v3544 = vpop.f32.mrf.mxu0
  %v3545 = vadd.f32 0.0, %v3544
  %3546 = vmatmul.f32.gmra.mxu0 %v3483
  %v3547 = vpop.f32.mrf.mxu0
  %v3548 = vadd.f32 0.0, %v3547
  %3549 = vmatmul.f32.gmra.mxu0 %v3486
  %v3550 = vpop.f32.mrf.mxu0
  %v3551 = vadd.f32 0.0, %v3550
  %3552 = vmatmul.f32.gmra.mxu0 %v3489
  %v3553 = vpop.f32.mrf.mxu0
  %v3554 = vadd.f32 0.0, %v3553
  %3555 = vdwg.mxu0
  %v3557 = vrot.slane %v801, 1
  %v3560 = vrot.slane %v867, 7
  %v3563 = vrot.slane %v1008, 6
  %v3566 = vrot.slane %v1141, 5
  %v3569 = vrot.slane %v1263, 4
  %v3572 = vrot.slane %v1356, 3
  %v3575 = vrot.slane %v1448, 2
  %v3578 = vrot.slane %v1534, 1
  %v3581 = vrot.slane %v1715, 7
  %v3584 = vrot.slane %v1799, 6
  %v3587 = vrot.slane %v1892, 5
  %v3590 = vrot.slane %v1985, 4
  %v3593 = vrot.slane %v2069, 3
  %v3596 = vrot.slane %v2170, 2
  %v3599 = vrot.slane %v2267, 1
  %v3601 = vsel %vm3128, %v3557, %v3560
  %v3602 = vsel %vm709, %v3601, %v3563
  %v3603 = vsel %vm3119, %v3602, %v3566
  %v3604 = vsel %vm3121, %v3603, %v3569
  %v3605 = vsel %vm402, %v3604, %v3572
  %v3606 = vsel %vm3124, %v3605, %v3575
  %v3607 = vsel %vm3126, %v3606, %v3578
  %v3608 = vsel %vm3128, %v1619, %v3581
  %v3609 = vsel %vm709, %v3608, %v3584
  %v3610 = vsel %vm3119, %v3609, %v3587
  %v3611 = vsel %vm3121, %v3610, %v3590
  %v3612 = vsel %vm402, %v3611, %v3593
  %v3613 = vsel %vm3124, %v3612, %v3596
  %v3614 = vsel %vm3126, %v3613, %v3599
  %v3616 = vrot.slane %v2463, 7
  %v3619 = vrot.slane %v2551, 6
  %v3622 = vrot.slane %v2651, 5
  %v3625 = vrot.slane %v2743, 4
  %v3628 = vrot.slane %v2829, 3
  %v3631 = vrot.slane %v2926, 2
  %v3634 = vrot.slane %v3012, 1
  %v3636 = vsel %vm3128, %v2367, %v3616
  %v3637 = vsel %vm709, %v3636, %v3619
  %v3638 = vsel %vm3119, %v3637, %v3622
  %v3639 = vsel %vm3121, %v3638, %v3625
  %v3640 = vsel %vm402, %v3639, %v3628
  %v3641 = vsel %vm3124, %v3640, %v3631
  %v3642 = vsel %vm3126, %v3641, %v3634
  %3643 = vmatpush.msra.mxu0 0.0
  %3644 = vmatpush.msra.mxu0 0.0
  %3645 = vmatpush.msra.mxu0 0.0
  %3646 = vmatpush.msra.mxu0 0.0
  %3647 = vmatpush.msra.mxu0 0.0
  %3648 = vmatpush.msra.mxu0 0.0
  %3649 = vmatpush.msra.mxu0 0.0
  %3650 = vmatpush.msra.mxu0 0.0
  %3651 = vmatpush.msra.mxu0 0.0
  %3652 = vmatpush.msra.mxu0 0.0
  %3653 = vmatpush.msra.mxu0 0.0
  %3654 = vmatpush.msra.mxu0 0.0
  %3655 = vmatpush.msra.mxu0 0.0
  %3656 = vmatpush.msra.mxu0 %v3642
  %3657 = vmatpush.msra.mxu0 %v3614
  %3658 = vmatpush.msra.mxu0 %v3607
  %3659 = vmatmul.f32.gmra.mxu0 %v3444
  %v3660 = vpop.f32.mrf.mxu0
  %v3661 = vadd.f32 0.0, %v3660
  %3662 = vmatmul.f32.gmra.mxu0 %v3447
  %v3663 = vpop.f32.mrf.mxu0
  %v3664 = vadd.f32 0.0, %v3663
  %3665 = vmatmul.f32.gmra.mxu0 %v3450
  %v3666 = vpop.f32.mrf.mxu0
  %v3667 = vadd.f32 0.0, %v3666
  %3668 = vmatmul.f32.gmra.mxu0 %v3453
  %v3669 = vpop.f32.mrf.mxu0
  %v3670 = vadd.f32 0.0, %v3669
  %3671 = vmatmul.f32.gmra.mxu0 %v3456
  %v3672 = vpop.f32.mrf.mxu0
  %v3673 = vadd.f32 0.0, %v3672
  %3674 = vmatmul.f32.gmra.mxu0 %v3459
  %v3675 = vpop.f32.mrf.mxu0
  %v3676 = vadd.f32 0.0, %v3675
  %3677 = vmatmul.f32.gmra.mxu0 %v3462
  %v3678 = vpop.f32.mrf.mxu0
  %v3679 = vadd.f32 0.0, %v3678
  %3680 = vmatmul.f32.gmra.mxu0 %v3465
  %v3681 = vpop.f32.mrf.mxu0
  %v3682 = vadd.f32 0.0, %v3681
  %3683 = vmatmul.f32.gmra.mxu0 %v3468
  %v3684 = vpop.f32.mrf.mxu0
  %v3685 = vadd.f32 0.0, %v3684
  %3686 = vmatmul.f32.gmra.mxu0 %v3471
  %v3687 = vpop.f32.mrf.mxu0
  %v3688 = vadd.f32 0.0, %v3687
  %3689 = vmatmul.f32.gmra.mxu0 %v3474
  %v3690 = vpop.f32.mrf.mxu0
  %v3691 = vadd.f32 0.0, %v3690
  %3692 = vmatmul.f32.gmra.mxu0 %v3477
  %v3693 = vpop.f32.mrf.mxu0
  %v3694 = vadd.f32 0.0, %v3693
  %3695 = vmatmul.f32.gmra.mxu0 %v3480
  %v3696 = vpop.f32.mrf.mxu0
  %v3697 = vadd.f32 0.0, %v3696
  %3698 = vmatmul.f32.gmra.mxu0 %v3483
  %v3699 = vpop.f32.mrf.mxu0
  %v3700 = vadd.f32 0.0, %v3699
  %3701 = vmatmul.f32.gmra.mxu0 %v3486
  %v3702 = vpop.f32.mrf.mxu0
  %v3703 = vadd.f32 0.0, %v3702
  %3704 = vmatmul.f32.gmra.mxu0 %v3489
  %v3705 = vpop.f32.mrf.mxu0
  %v3706 = vadd.f32 0.0, %v3705
  %3707 = vdwg.mxu0
  %v3708 = vrot.slane %v801, 2
  %v3711 = vrot.slane %v877, 7
  %v3714 = vrot.slane %v1016, 6
  %v3717 = vrot.slane %v1151, 5
  %v3720 = vrot.slane %v1272, 4
  %v3723 = vrot.slane %v1365, 3
  %v3726 = vrot.slane %v1457, 2
  %v3729 = vrot.slane %v1545, 1
  %v3732 = vrot.slane %v1727, 7
  %v3735 = vrot.slane %v1810, 6
  %v3738 = vrot.slane %v1899, 5
  %v3741 = vrot.slane %v1994, 4
  %v3744 = vrot.slane %v2078, 3
  %v3747 = vrot.slane %v2179, 2
  %v3750 = vrot.slane %v2278, 1
  %v3752 = vsel %vm3128, %v3708, %v3711
  %v3753 = vsel %vm709, %v3752, %v3714
  %v3754 = vsel %vm3119, %v3753, %v3717
  %v3755 = vsel %vm3121, %v3754, %v3720
  %v3756 = vsel %vm402, %v3755, %v3723
  %v3757 = vsel %vm3124, %v3756, %v3726
  %v3758 = vsel %vm3126, %v3757, %v3729
  %v3759 = vsel %vm3128, %v1628, %v3732
  %v3760 = vsel %vm709, %v3759, %v3735
  %v3761 = vsel %vm3119, %v3760, %v3738
  %v3762 = vsel %vm3121, %v3761, %v3741
  %v3763 = vsel %vm402, %v3762, %v3744
  %v3764 = vsel %vm3124, %v3763, %v3747
  %v3765 = vsel %vm3126, %v3764, %v3750
  %v3767 = vrot.slane %v2475, 7
  %v3770 = vrot.slane %v2562, 6
  %v3773 = vrot.slane %v2658, 5
  %v3776 = vrot.slane %v2752, 4
  %v3779 = vrot.slane %v2838, 3
  %v3782 = vrot.slane %v2935, 2
  %v3785 = vrot.slane %v3023, 1
  %v3787 = vsel %vm3128, %v2376, %v3767
  %v3788 = vsel %vm709, %v3787, %v3770
  %v3789 = vsel %vm3119, %v3788, %v3773
  %v3790 = vsel %vm3121, %v3789, %v3776
  %v3791 = vsel %vm402, %v3790, %v3779
  %v3792 = vsel %vm3124, %v3791, %v3782
  %v3793 = vsel %vm3126, %v3792, %v3785
  %3794 = vmatpush.msra.mxu0 0.0
  %3795 = vmatpush.msra.mxu0 0.0
  %3796 = vmatpush.msra.mxu0 0.0
  %3797 = vmatpush.msra.mxu0 0.0
  %3798 = vmatpush.msra.mxu0 0.0
  %3799 = vmatpush.msra.mxu0 0.0
  %3800 = vmatpush.msra.mxu0 0.0
  %3801 = vmatpush.msra.mxu0 0.0
  %3802 = vmatpush.msra.mxu0 0.0
  %3803 = vmatpush.msra.mxu0 0.0
  %3804 = vmatpush.msra.mxu0 0.0
  %3805 = vmatpush.msra.mxu0 0.0
  %3806 = vmatpush.msra.mxu0 0.0
  %3807 = vmatpush.msra.mxu0 %v3793
  %3808 = vmatpush.msra.mxu0 %v3765
  %3809 = vmatpush.msra.mxu0 %v3758
  %3810 = vmatmul.f32.gmra.mxu0 %v3444
  %v3811 = vpop.f32.mrf.mxu0
  %v3812 = vadd.f32 0.0, %v3811
  %3813 = vmatmul.f32.gmra.mxu0 %v3447
  %v3814 = vpop.f32.mrf.mxu0
  %v3815 = vadd.f32 0.0, %v3814
  %3816 = vmatmul.f32.gmra.mxu0 %v3450
  %v3817 = vpop.f32.mrf.mxu0
  %v3818 = vadd.f32 0.0, %v3817
  %3819 = vmatmul.f32.gmra.mxu0 %v3453
  %v3820 = vpop.f32.mrf.mxu0
  %v3821 = vadd.f32 0.0, %v3820
  %3822 = vmatmul.f32.gmra.mxu0 %v3456
  %v3823 = vpop.f32.mrf.mxu0
  %v3824 = vadd.f32 0.0, %v3823
  %3825 = vmatmul.f32.gmra.mxu0 %v3459
  %v3826 = vpop.f32.mrf.mxu0
  %v3827 = vadd.f32 0.0, %v3826
  %3828 = vmatmul.f32.gmra.mxu0 %v3462
  %v3829 = vpop.f32.mrf.mxu0
  %v3830 = vadd.f32 0.0, %v3829
  %3831 = vmatmul.f32.gmra.mxu0 %v3465
  %v3832 = vpop.f32.mrf.mxu0
  %v3833 = vadd.f32 0.0, %v3832
  %3834 = vmatmul.f32.gmra.mxu0 %v3468
  %v3835 = vpop.f32.mrf.mxu0
  %v3836 = vadd.f32 0.0, %v3835
  %3837 = vmatmul.f32.gmra.mxu0 %v3471
  %v3838 = vpop.f32.mrf.mxu0
  %v3839 = vadd.f32 0.0, %v3838
  %3840 = vmatmul.f32.gmra.mxu0 %v3474
  %v3841 = vpop.f32.mrf.mxu0
  %v3842 = vadd.f32 0.0, %v3841
  %3843 = vmatmul.f32.gmra.mxu0 %v3477
  %v3844 = vpop.f32.mrf.mxu0
  %v3845 = vadd.f32 0.0, %v3844
  %3846 = vmatmul.f32.gmra.mxu0 %v3480
  %v3847 = vpop.f32.mrf.mxu0
  %v3848 = vadd.f32 0.0, %v3847
  %3849 = vmatmul.f32.gmra.mxu0 %v3483
  %v3850 = vpop.f32.mrf.mxu0
  %v3851 = vadd.f32 0.0, %v3850
  %3852 = vmatmul.f32.gmra.mxu0 %v3486
  %v3853 = vpop.f32.mrf.mxu0
  %v3854 = vadd.f32 0.0, %v3853
  %3855 = vmatmul.f32.gmra.mxu0 %v3489
  %v3856 = vpop.f32.mrf.mxu0
  %v3857 = vadd.f32 0.0, %v3856
  %3858 = vdwg.mxu0
  %v3859 = vmul.f32 %v801, %v775
  %v3861 = vrot.slane %v3859, 1
  %v3863 = vadd.f32 %v3859, %v3861
  %v3864 = vrot.slane %v3859, 2
  %v3866 = vadd.f32 %v3863, %v3864
  %v3867 = vsub.f32 %v775, %v3866
  %v3868 = vrot.slane %v775, 3
  %v3870 = vmul.f32 %v849, %v3868
  %v3871 = vmul.f32 %v867, %v974
  %v3872 = vadd.f32 %v3870, %v3871
  %v3873 = vmul.f32 %v877, %v829
  %v3874 = vadd.f32 %v3872, %v3873
  %v3875 = vsub.f32 %v950, %v3874
  %v3876 = vmul.f32 %v994, %v959
  %v3877 = vmul.f32 %v1008, %v1120
  %v3878 = vadd.f32 %v3876, %v3877
  %v3879 = vmul.f32 %v1016, %v778
  %v3880 = vadd.f32 %v3878, %v3879
  %v3881 = vsub.f32 %v1093, %v3880
  %v3882 = vrot.slane %v778, 1
  %v3884 = vmul.f32 %v1133, %v3882
  %v3885 = vrot.slane %v778, 2
  %v3887 = vmul.f32 %v1141, %v3885
  %v3888 = vadd.f32 %v3884, %v3887
  %v3889 = vrot.slane %v778, 3
  %v3891 = vmul.f32 %v1151, %v3889
  %v3892 = vadd.f32 %v3888, %v3891
  %v3893 = vsub.f32 %v1224, %v3892
  %v3894 = vrot.slane %v778, 4
  %v3896 = vmul.f32 %v1256, %v3894
  %v3897 = vrot.slane %v778, 5
  %v3899 = vmul.f32 %v1263, %v3897
  %v3900 = vadd.f32 %v3896, %v3899
  %v3901 = vrot.slane %v778, 6
  %v3903 = vmul.f32 %v1272, %v3901
  %v3904 = vadd.f32 %v3900, %v3903
  %v3905 = vsub.f32 %v1318, %v3904
  %v3906 = vmul.f32 %v1347, %v1337
  %v3907 = vmul.f32 %v1356, %v781
  %v3908 = vadd.f32 %v3906, %v3907
  %v3909 = vrot.slane %v781, 1
  %v3911 = vmul.f32 %v1365, %v3909
  %v3912 = vadd.f32 %v3908, %v3911
  %v3913 = vsub.f32 %v1408, %v3912
  %v3914 = vrot.slane %v781, 2
  %v3916 = vmul.f32 %v1439, %v3914
  %v3917 = vrot.slane %v781, 3
  %v3919 = vmul.f32 %v1448, %v3917
  %v3920 = vadd.f32 %v3916, %v3919
  %v3921 = vrot.slane %v781, 4
  %v3923 = vmul.f32 %v1457, %v3921
  %v3924 = vadd.f32 %v3920, %v3923
  %v3925 = vsub.f32 %v1499, %v3924
  %v3926 = vrot.slane %v781, 5
  %v3928 = vmul.f32 %v1525, %v3926
  %v3929 = vrot.slane %v781, 6
  %v3931 = vmul.f32 %v1534, %v3929
  %v3932 = vadd.f32 %v3928, %v3931
  %v3933 = vmul.f32 %v1545, %v1596
  %v3934 = vadd.f32 %v3932, %v3933
  %v3935 = vsub.f32 %v1581, %v3934
  %v3936 = vmul.f32 %v1608, %v784
  %v3937 = vmul.f32 %v1619, %v2149
  %v3938 = vadd.f32 %v3936, %v3937
  %v3939 = vrot.slane %v784, 2
  %v3941 = vmul.f32 %v1628, %v3939
  %v3942 = vadd.f32 %v3938, %v3941
  %v3943 = vsub.f32 %v1674, %v3942
  %v3944 = vrot.slane %v784, 3
  %v3946 = vmul.f32 %v1710, %v3944
  %v3947 = vmul.f32 %v1715, %v2049
  %v3948 = vadd.f32 %v3946, %v3947
  %v3949 = vrot.slane %v784, 5
  %v3951 = vmul.f32 %v1727, %v3949
  %v3952 = vadd.f32 %v3948, %v3951
  %v3953 = vsub.f32 %v1773, %v3952
  %v3954 = vrot.slane %v784, 6
  %v3956 = vmul.f32 %v1791, %v3954
  %v3957 = vmul.f32 %v1799, %v1875
  %v3958 = vadd.f32 %v3956, %v3957
  %v3959 = vmul.f32 %v1810, %v787
  %v3960 = vadd.f32 %v3958, %v3959
  %v3961 = vsub.f32 %v1856, %v3960
  %v3962 = vrot.slane %v787, 1
  %v3964 = vmul.f32 %v1885, %v3962
  %v3965 = vrot.slane %v787, 2
  %v3967 = vmul.f32 %v1892, %v3965
  %v3968 = vadd.f32 %v3964, %v3967
  %v3969 = vrot.slane %v787, 3
  %v3971 = vmul.f32 %v1899, %v3969
  %v3972 = vadd.f32 %v3968, %v3971
  %v3973 = vsub.f32 %v1950, %v3972
  %v3974 = vrot.slane %v787, 4
  %v3976 = vmul.f32 %v1978, %v3974
  %v3977 = vrot.slane %v787, 5
  %v3979 = vmul.f32 %v1985, %v3977
  %v3980 = vadd.f32 %v3976, %v3979
  %v3981 = vrot.slane %v787, 6
  %v3983 = vmul.f32 %v1994, %v3981
  %v3984 = vadd.f32 %v3980, %v3983
  %v3985 = vsub.f32 %v2036, %v3984
  %v3986 = vmul.f32 %v2060, %v2246
  %v3987 = vmul.f32 %v2069, %v790
  %v3988 = vadd.f32 %v3986, %v3987
  %v3989 = vrot.slane %v790, 1
  %v3991 = vmul.f32 %v2078, %v3989
  %v3992 = vadd.f32 %v3988, %v3991
  %v3993 = vsub.f32 %v2124, %v3992
  %v3994 = vrot.slane %v790, 2
  %v3996 = vmul.f32 %v2161, %v3994
  %v3997 = vrot.slane %v790, 3
  %v3999 = vmul.f32 %v2170, %v3997
  %v4000 = vadd.f32 %v3996, %v3999
  %v4001 = vrot.slane %v790, 4
  %v4003 = vmul.f32 %v2179, %v4001
  %v4004 = vadd.f32 %v4000, %v4003
  %v4005 = vsub.f32 %v2224, %v4004
  %v4006 = vrot.slane %v790, 5
  %v4008 = vmul.f32 %v2258, %v4006
  %v4009 = vrot.slane %v790, 6
  %v4011 = vmul.f32 %v2267, %v4009
  %v4012 = vadd.f32 %v4008, %v4011
  %v4013 = vmul.f32 %v2278, %v2344
  %v4014 = vadd.f32 %v4012, %v4013
  %v4015 = vsub.f32 %v2321, %v4014
  %v4016 = vmul.f32 %v2356, %v793
  %v4017 = vrot.slane %v793, 1
  %v4019 = vmul.f32 %v2367, %v4017
  %v4020 = vadd.f32 %v4016, %v4019
  %v4021 = vmul.f32 %v2376, %v2535
  %v4022 = vadd.f32 %v4020, %v4021
  %v4023 = vsub.f32 %v2422, %v4022
  %v4024 = vrot.slane %v793, 3
  %v4026 = vmul.f32 %v2458, %v4024
  %v4027 = vrot.slane %v793, 4
  %v4029 = vmul.f32 %v2463, %v4027
  %v4030 = vadd.f32 %v4026, %v4029
  %v4031 = vrot.slane %v793, 5
  %v4033 = vmul.f32 %v2475, %v4031
  %v4034 = vadd.f32 %v4030, %v4033
  %v4035 = vsub.f32 %v2521, %v4034
  %v4036 = vrot.slane %v793, 6
  %v4038 = vmul.f32 %v2543, %v4036
  %v4039 = vrot.slane %v793, 7
  %v4041 = vmul.f32 %v2551, %v4039
  %v4042 = vadd.f32 %v4038, %v4041
  %v4043 = vmul.f32 %v2562, %v796
  %v4044 = vadd.f32 %v4042, %v4043
  %v4045 = vsub.f32 %v2613, %v4044
  %v4046 = vrot.slane %v796, 1
  %v4048 = vmul.f32 %v2644, %v4046
  %v4049 = vmul.f32 %v2651, %v2726
  %v4050 = vadd.f32 %v4048, %v4049
  %v4051 = vrot.slane %v796, 3
  %v4053 = vmul.f32 %v2658, %v4051
  %v4054 = vadd.f32 %v4050, %v4053
  %v4055 = vsub.f32 %v2706, %v4054
  %v4056 = vrot.slane %v796, 4
  %v4058 = vmul.f32 %v2736, %v4056
  %v4059 = vrot.slane %v796, 5
  %v4061 = vmul.f32 %v2743, %v4059
  %v4062 = vadd.f32 %v4058, %v4061
  %v4063 = vrot.slane %v796, 6
  %v4065 = vmul.f32 %v2752, %v4063
  %v4066 = vadd.f32 %v4062, %v4065
  %v4067 = vsub.f32 %v2797, %v4066
  %v4068 = vrot.slane %v796, 7
  %v4070 = vmul.f32 %v2820, %v4068
  %v4071 = vmul.f32 %v2829, %v799
  %v4072 = vadd.f32 %v4070, %v4071
  %v4073 = vrot.slane %v799, 1
  %v4075 = vmul.f32 %v2838, %v4073
  %v4076 = vadd.f32 %v4072, %v4075
  %v4077 = vsub.f32 %v2883, %v4076
  %v4078 = vmul.f32 %v2917, %v2991
  %v4079 = vrot.slane %v799, 3
  %v4081 = vmul.f32 %v2926, %v4079
  %v4082 = vadd.f32 %v4078, %v4081
  %v4083 = vrot.slane %v799, 4
  %v4085 = vmul.f32 %v2935, %v4083
  %v4086 = vadd.f32 %v4082, %v4085
  %v4087 = vsub.f32 %v2975, %v4086
  %v4088 = vrot.slane %v799, 5
  %v4090 = vmul.f32 %v3003, %v4088
  %v4091 = vrot.slane %v799, 6
  %v4093 = vmul.f32 %v3012, %v4091
  %v4094 = vadd.f32 %v4090, %v4093
  %v4095 = vrot.slane %v799, 7
  %v4097 = vmul.f32 %v3023, %v4095
  %v4098 = vadd.f32 %v4094, %v4097
  %v4099 = vsub.f32 %v3064, %v4098
  %v4101 = vrot.slane %v3875, 7
  %v4104 = vrot.slane %v3881, 6
  %v4107 = vrot.slane %v3893, 5
  %v4110 = vrot.slane %v3905, 4
  %v4113 = vrot.slane %v3913, 3
  %v4116 = vrot.slane %v3925, 2
  %v4119 = vrot.slane %v3935, 1
  %v4122 = vrot.slane %v3953, 7
  %v4125 = vrot.slane %v3961, 6
  %v4128 = vrot.slane %v3973, 5
  %v4131 = vrot.slane %v3985, 4
  %v4134 = vrot.slane %v3993, 3
  %v4137 = vrot.slane %v4005, 2
  %v4140 = vrot.slane %v4015, 1
  %v4142 = vsel %vm3128, %v3867, %v4101
  %v4143 = vsel %vm709, %v4142, %v4104
  %v4144 = vsel %vm3119, %v4143, %v4107
  %v4145 = vsel %vm3121, %v4144, %v4110
  %v4146 = vsel %vm402, %v4145, %v4113
  %v4147 = vsel %vm3124, %v4146, %v4116
  %v4148 = vsel %vm3126, %v4147, %v4119
  %v4149 = vsel %vm3128, %v3943, %v4122
  %v4150 = vsel %vm709, %v4149, %v4125
  %v4151 = vsel %vm3119, %v4150, %v4128
  %v4152 = vsel %vm3121, %v4151, %v4131
  %v4153 = vsel %vm402, %v4152, %v4134
  %v4154 = vsel %vm3124, %v4153, %v4137
  %v4155 = vsel %vm3126, %v4154, %v4140
  %v4157 = vrot.slane %v4035, 7
  %v4160 = vrot.slane %v4045, 6
  %v4163 = vrot.slane %v4055, 5
  %v4166 = vrot.slane %v4067, 4
  %v4169 = vrot.slane %v4077, 3
  %v4172 = vrot.slane %v4087, 2
  %v4175 = vrot.slane %v4099, 1
  %v4177 = vsel %vm3128, %v4023, %v4157
  %v4178 = vsel %vm709, %v4177, %v4160
  %v4179 = vsel %vm3119, %v4178, %v4163
  %v4180 = vsel %vm3121, %v4179, %v4166
  %v4181 = vsel %vm402, %v4180, %v4169
  %v4182 = vsel %vm3124, %v4181, %v4172
  %v4183 = vsel %vm3126, %v4182, %v4175
  %4184 = vmatpush.msra.mxu0 0.0
  %4185 = vmatpush.msra.mxu0 0.0
  %4186 = vmatpush.msra.mxu0 0.0
  %4187 = vmatpush.msra.mxu0 0.0
  %4188 = vmatpush.msra.mxu0 0.0
  %4189 = vmatpush.msra.mxu0 0.0
  %4190 = vmatpush.msra.mxu0 0.0
  %4191 = vmatpush.msra.mxu0 0.0
  %4192 = vmatpush.msra.mxu0 0.0
  %4193 = vmatpush.msra.mxu0 0.0
  %4194 = vmatpush.msra.mxu0 0.0
  %4195 = vmatpush.msra.mxu0 0.0
  %4196 = vmatpush.msra.mxu0 0.0
  %4197 = vmatpush.msra.mxu0 %v4183
  %4198 = vmatpush.msra.mxu0 %v4155
  %4199 = vmatpush.msra.mxu0 %v4148
  %4200 = vmatmul.f32.gmra.mxu0 %v3444
  %v4201 = vpop.f32.mrf.mxu0
  %v4202 = vadd.f32 0.0, %v4201
  %4203 = vmatmul.f32.gmra.mxu0 %v3447
  %v4204 = vpop.f32.mrf.mxu0
  %v4205 = vadd.f32 0.0, %v4204
  %4206 = vmatmul.f32.gmra.mxu0 %v3450
  %v4207 = vpop.f32.mrf.mxu0
  %v4208 = vadd.f32 0.0, %v4207
  %4209 = vmatmul.f32.gmra.mxu0 %v3453
  %v4210 = vpop.f32.mrf.mxu0
  %v4211 = vadd.f32 0.0, %v4210
  %4212 = vmatmul.f32.gmra.mxu0 %v3456
  %v4213 = vpop.f32.mrf.mxu0
  %v4214 = vadd.f32 0.0, %v4213
  %4215 = vmatmul.f32.gmra.mxu0 %v3459
  %v4216 = vpop.f32.mrf.mxu0
  %v4217 = vadd.f32 0.0, %v4216
  %4218 = vmatmul.f32.gmra.mxu0 %v3462
  %v4219 = vpop.f32.mrf.mxu0
  %v4220 = vadd.f32 0.0, %v4219
  %4221 = vmatmul.f32.gmra.mxu0 %v3465
  %v4222 = vpop.f32.mrf.mxu0
  %v4223 = vadd.f32 0.0, %v4222
  %4224 = vmatmul.f32.gmra.mxu0 %v3468
  %v4225 = vpop.f32.mrf.mxu0
  %v4226 = vadd.f32 0.0, %v4225
  %4227 = vmatmul.f32.gmra.mxu0 %v3471
  %v4228 = vpop.f32.mrf.mxu0
  %v4229 = vadd.f32 0.0, %v4228
  %4230 = vmatmul.f32.gmra.mxu0 %v3474
  %v4231 = vpop.f32.mrf.mxu0
  %v4232 = vadd.f32 0.0, %v4231
  %4233 = vmatmul.f32.gmra.mxu0 %v3477
  %v4234 = vpop.f32.mrf.mxu0
  %v4235 = vadd.f32 0.0, %v4234
  %4236 = vmatmul.f32.gmra.mxu0 %v3480
  %v4237 = vpop.f32.mrf.mxu0
  %v4238 = vadd.f32 0.0, %v4237
  %4239 = vmatmul.f32.gmra.mxu0 %v3483
  %v4240 = vpop.f32.mrf.mxu0
  %v4241 = vadd.f32 0.0, %v4240
  %4242 = vmatmul.f32.gmra.mxu0 %v3486
  %v4243 = vpop.f32.mrf.mxu0
  %v4244 = vadd.f32 0.0, %v4243
  %4245 = vmatmul.f32.gmra.mxu0 %v3489
  %v4246 = vpop.f32.mrf.mxu0
  %v4247 = vadd.f32 0.0, %v4246
  %4248 = vdwg.mxu0
  %v4249 = vrot.slane %v801, 3
  %v4252 = vrot.slane %v889, 2
  %v4255 = vrot.slane %v1028, 1
  %v4258 = vrot.slane %v1279, 7
  %v4261 = vrot.slane %v1370, 6
  %v4264 = vrot.slane %v1462, 5
  %v4267 = vrot.slane %v1550, 4
  %v4270 = vrot.slane %v1633, 3
  %v4273 = vrot.slane %v1732, 2
  %v4276 = vrot.slane %v1817, 1
  %v4279 = vrot.slane %v2001, 7
  %v4282 = vrot.slane %v2083, 6
  %v4285 = vrot.slane %v2184, 5
  %v4288 = vrot.slane %v2283, 4
  %v4290 = vsel %vm3128, %v4249, %v4252
  %v4291 = vsel %vm709, %v4290, %v4255
  %v4292 = vsel %vm3119, %v4291, %v1163
  %v4293 = vsel %vm3121, %v4292, %v4258
  %v4294 = vsel %vm402, %v4293, %v4261
  %v4295 = vsel %vm3124, %v4294, %v4264
  %v4296 = vsel %vm3126, %v4295, %v4267
  %v4297 = vsel %vm3128, %v4270, %v4273
  %v4298 = vsel %vm709, %v4297, %v4276
  %v4299 = vsel %vm3119, %v4298, %v1906
  %v4300 = vsel %vm3121, %v4299, %v4279
  %v4301 = vsel %vm402, %v4300, %v4282
  %v4302 = vsel %vm3124, %v4301, %v4285
  %v4303 = vsel %vm3126, %v4302, %v4288
  %v4305 = vrot.slane %v2381, 3
  %v4308 = vrot.slane %v2480, 2
  %v4311 = vrot.slane %v2569, 1
  %v4314 = vrot.slane %v2759, 7
  %v4317 = vrot.slane %v2843, 6
  %v4320 = vrot.slane %v2940, 5
  %v4323 = vrot.slane %v3028, 4
  %v4325 = vsel %vm3128, %v4305, %v4308
  %v4326 = vsel %vm709, %v4325, %v4311
  %v4327 = vsel %vm3119, %v4326, %v2665
  %v4328 = vsel %vm3121, %v4327, %v4314
  %v4329 = vsel %vm402, %v4328, %v4317
  %v4330 = vsel %vm3124, %v4329, %v4320
  %v4331 = vsel %vm3126, %v4330, %v4323
  %4332 = vmatpush.msra.mxu0 0.0
  %4333 = vmatpush.msra.mxu0 0.0
  %4334 = vmatpush.msra.mxu0 0.0
  %4335 = vmatpush.msra.mxu0 0.0
  %4336 = vmatpush.msra.mxu0 0.0
  %4337 = vmatpush.msra.mxu0 0.0
  %4338 = vmatpush.msra.mxu0 0.0
  %4339 = vmatpush.msra.mxu0 0.0
  %4340 = vmatpush.msra.mxu0 0.0
  %4341 = vmatpush.msra.mxu0 0.0
  %4342 = vmatpush.msra.mxu0 0.0
  %4343 = vmatpush.msra.mxu0 0.0
  %4344 = vmatpush.msra.mxu0 0.0
  %4345 = vmatpush.msra.mxu0 %v4331
  %4346 = vmatpush.msra.mxu0 %v4303
  %4347 = vmatpush.msra.mxu0 %v4296
  %4348 = vmatmul.f32.gmra.mxu0 %v3444
  %v4349 = vpop.f32.mrf.mxu0
  %v4350 = vadd.f32 0.0, %v4349
  %4351 = vmatmul.f32.gmra.mxu0 %v3447
  %v4352 = vpop.f32.mrf.mxu0
  %v4353 = vadd.f32 0.0, %v4352
  %4354 = vmatmul.f32.gmra.mxu0 %v3450
  %v4355 = vpop.f32.mrf.mxu0
  %v4356 = vadd.f32 0.0, %v4355
  %4357 = vmatmul.f32.gmra.mxu0 %v3453
  %v4358 = vpop.f32.mrf.mxu0
  %v4359 = vadd.f32 0.0, %v4358
  %4360 = vmatmul.f32.gmra.mxu0 %v3456
  %v4361 = vpop.f32.mrf.mxu0
  %v4362 = vadd.f32 0.0, %v4361
  %4363 = vmatmul.f32.gmra.mxu0 %v3459
  %v4364 = vpop.f32.mrf.mxu0
  %v4365 = vadd.f32 0.0, %v4364
  %4366 = vmatmul.f32.gmra.mxu0 %v3462
  %v4367 = vpop.f32.mrf.mxu0
  %v4368 = vadd.f32 0.0, %v4367
  %4369 = vmatmul.f32.gmra.mxu0 %v3465
  %v4370 = vpop.f32.mrf.mxu0
  %v4371 = vadd.f32 0.0, %v4370
  %4372 = vmatmul.f32.gmra.mxu0 %v3468
  %v4373 = vpop.f32.mrf.mxu0
  %v4374 = vadd.f32 0.0, %v4373
  %4375 = vmatmul.f32.gmra.mxu0 %v3471
  %v4376 = vpop.f32.mrf.mxu0
  %v4377 = vadd.f32 0.0, %v4376
  %4378 = vmatmul.f32.gmra.mxu0 %v3474
  %v4379 = vpop.f32.mrf.mxu0
  %v4380 = vadd.f32 0.0, %v4379
  %4381 = vmatmul.f32.gmra.mxu0 %v3477
  %v4382 = vpop.f32.mrf.mxu0
  %v4383 = vadd.f32 0.0, %v4382
  %4384 = vmatmul.f32.gmra.mxu0 %v3480
  %v4385 = vpop.f32.mrf.mxu0
  %v4386 = vadd.f32 0.0, %v4385
  %4387 = vmatmul.f32.gmra.mxu0 %v3483
  %v4388 = vpop.f32.mrf.mxu0
  %v4389 = vadd.f32 0.0, %v4388
  %4390 = vmatmul.f32.gmra.mxu0 %v3486
  %v4391 = vpop.f32.mrf.mxu0
  %v4392 = vadd.f32 0.0, %v4391
  %4393 = vmatmul.f32.gmra.mxu0 %v3489
  %v4394 = vpop.f32.mrf.mxu0
  %v4395 = vadd.f32 0.0, %v4394
  %4396 = vdwg.mxu0
  %v4397 = vrot.slane %v801, 4
  %v4400 = vrot.slane %v903, 2
  %v4403 = vrot.slane %v1040, 1
  %v4406 = vrot.slane %v1286, 7
  %v4409 = vrot.slane %v1377, 6
  %v4412 = vrot.slane %v1469, 5
  %v4415 = vrot.slane %v1555, 4
  %v4418 = vrot.slane %v1638, 3
  %v4421 = vrot.slane %v1739, 2
  %v4424 = vrot.slane %v1824, 1
  %v4427 = vrot.slane %v2008, 7
  %v4430 = vrot.slane %v2090, 6
  %v4433 = vrot.slane %v2191, 5
  %v4436 = vrot.slane %v2288, 4
  %v4438 = vsel %vm3128, %v4397, %v4400
  %v4439 = vsel %vm709, %v4438, %v4403
  %v4440 = vsel %vm3119, %v4439, %v1174
  %v4441 = vsel %vm3121, %v4440, %v4406
  %v4442 = vsel %vm402, %v4441, %v4409
  %v4443 = vsel %vm3124, %v4442, %v4412
  %v4444 = vsel %vm3126, %v4443, %v4415
  %v4445 = vsel %vm3128, %v4418, %v4421
  %v4446 = vsel %vm709, %v4445, %v4424
  %v4447 = vsel %vm3119, %v4446, %v1913
  %v4448 = vsel %vm3121, %v4447, %v4427
  %v4449 = vsel %vm402, %v4448, %v4430
  %v4450 = vsel %vm3124, %v4449, %v4433
  %v4451 = vsel %vm3126, %v4450, %v4436
  %v4453 = vrot.slane %v2386, 3
  %v4456 = vrot.slane %v2487, 2
  %v4459 = vrot.slane %v2576, 1
  %v4462 = vrot.slane %v2766, 7
  %v4465 = vrot.slane %v2850, 6
  %v4468 = vrot.slane %v2947, 5
  %v4471 = vrot.slane %v3033, 4
  %v4473 = vsel %vm3128, %v4453, %v4456
  %v4474 = vsel %vm709, %v4473, %v4459
  %v4475 = vsel %vm3119, %v4474, %v2672
  %v4476 = vsel %vm3121, %v4475, %v4462
  %v4477 = vsel %vm402, %v4476, %v4465
  %v4478 = vsel %vm3124, %v4477, %v4468
  %v4479 = vsel %vm3126, %v4478, %v4471
  %4480 = vmatpush.msra.mxu0 0.0
  %4481 = vmatpush.msra.mxu0 0.0
  %4482 = vmatpush.msra.mxu0 0.0
  %4483 = vmatpush.msra.mxu0 0.0
  %4484 = vmatpush.msra.mxu0 0.0
  %4485 = vmatpush.msra.mxu0 0.0
  %4486 = vmatpush.msra.mxu0 0.0
  %4487 = vmatpush.msra.mxu0 0.0
  %4488 = vmatpush.msra.mxu0 0.0
  %4489 = vmatpush.msra.mxu0 0.0
  %4490 = vmatpush.msra.mxu0 0.0
  %4491 = vmatpush.msra.mxu0 0.0
  %4492 = vmatpush.msra.mxu0 0.0
  %4493 = vmatpush.msra.mxu0 %v4479
  %4494 = vmatpush.msra.mxu0 %v4451
  %4495 = vmatpush.msra.mxu0 %v4444
  %4496 = vmatmul.f32.gmra.mxu0 %v3444
  %v4497 = vpop.f32.mrf.mxu0
  %v4498 = vadd.f32 0.0, %v4497
  %4499 = vmatmul.f32.gmra.mxu0 %v3447
  %v4500 = vpop.f32.mrf.mxu0
  %v4501 = vadd.f32 0.0, %v4500
  %4502 = vmatmul.f32.gmra.mxu0 %v3450
  %v4503 = vpop.f32.mrf.mxu0
  %v4504 = vadd.f32 0.0, %v4503
  %4505 = vmatmul.f32.gmra.mxu0 %v3453
  %v4506 = vpop.f32.mrf.mxu0
  %v4507 = vadd.f32 0.0, %v4506
  %4508 = vmatmul.f32.gmra.mxu0 %v3456
  %v4509 = vpop.f32.mrf.mxu0
  %v4510 = vadd.f32 0.0, %v4509
  %4511 = vmatmul.f32.gmra.mxu0 %v3459
  %v4512 = vpop.f32.mrf.mxu0
  %v4513 = vadd.f32 0.0, %v4512
  %4514 = vmatmul.f32.gmra.mxu0 %v3462
  %v4515 = vpop.f32.mrf.mxu0
  %v4516 = vadd.f32 0.0, %v4515
  %4517 = vmatmul.f32.gmra.mxu0 %v3465
  %v4518 = vpop.f32.mrf.mxu0
  %v4519 = vadd.f32 0.0, %v4518
  %4520 = vmatmul.f32.gmra.mxu0 %v3468
  %v4521 = vpop.f32.mrf.mxu0
  %v4522 = vadd.f32 0.0, %v4521
  %4523 = vmatmul.f32.gmra.mxu0 %v3471
  %v4524 = vpop.f32.mrf.mxu0
  %v4525 = vadd.f32 0.0, %v4524
  %4526 = vmatmul.f32.gmra.mxu0 %v3474
  %v4527 = vpop.f32.mrf.mxu0
  %v4528 = vadd.f32 0.0, %v4527
  %4529 = vmatmul.f32.gmra.mxu0 %v3477
  %v4530 = vpop.f32.mrf.mxu0
  %v4531 = vadd.f32 0.0, %v4530
  %4532 = vmatmul.f32.gmra.mxu0 %v3480
  %v4533 = vpop.f32.mrf.mxu0
  %v4534 = vadd.f32 0.0, %v4533
  %4535 = vmatmul.f32.gmra.mxu0 %v3483
  %v4536 = vpop.f32.mrf.mxu0
  %v4537 = vadd.f32 0.0, %v4536
  %4538 = vmatmul.f32.gmra.mxu0 %v3486
  %v4539 = vpop.f32.mrf.mxu0
  %v4540 = vadd.f32 0.0, %v4539
  %4541 = vmatmul.f32.gmra.mxu0 %v3489
  %v4542 = vpop.f32.mrf.mxu0
  %v4543 = vadd.f32 0.0, %v4542
  %4544 = vdwg.mxu0
  %v4545 = vrot.slane %v801, 5
  %v4548 = vrot.slane %v913, 2
  %v4551 = vrot.slane %v1050, 1
  %v4554 = vrot.slane %v1293, 7
  %v4557 = vrot.slane %v1384, 6
  %v4560 = vrot.slane %v1474, 5
  %v4563 = vrot.slane %v1560, 4
  %v4566 = vrot.slane %v1646, 3
  %v4569 = vrot.slane %v1746, 2
  %v4572 = vrot.slane %v1831, 1
  %v4575 = vrot.slane %v2015, 7
  %v4578 = vrot.slane %v2097, 6
  %v4581 = vrot.slane %v2196, 5
  %v4584 = vrot.slane %v2293, 4
  %v4586 = vsel %vm3128, %v4545, %v4548
  %v4587 = vsel %vm709, %v4586, %v4551
  %v4588 = vsel %vm3119, %v4587, %v1184
  %v4589 = vsel %vm3121, %v4588, %v4554
  %v4590 = vsel %vm402, %v4589, %v4557
  %v4591 = vsel %vm3124, %v4590, %v4560
  %v4592 = vsel %vm3126, %v4591, %v4563
  %v4593 = vsel %vm3128, %v4566, %v4569
  %v4594 = vsel %vm709, %v4593, %v4572
  %v4595 = vsel %vm3119, %v4594, %v1920
  %v4596 = vsel %vm3121, %v4595, %v4575
  %v4597 = vsel %vm402, %v4596, %v4578
  %v4598 = vsel %vm3124, %v4597, %v4581
  %v4599 = vsel %vm3126, %v4598, %v4584
  %v4601 = vrot.slane %v2394, 3
  %v4604 = vrot.slane %v2494, 2
  %v4607 = vrot.slane %v2583, 1
  %v4610 = vrot.slane %v2773, 7
  %v4613 = vrot.slane %v2857, 6
  %v4616 = vrot.slane %v2952, 5
  %v4619 = vrot.slane %v3038, 4
  %v4621 = vsel %vm3128, %v4601, %v4604
  %v4622 = vsel %vm709, %v4621, %v4607
  %v4623 = vsel %vm3119, %v4622, %v2679
  %v4624 = vsel %vm3121, %v4623, %v4610
  %v4625 = vsel %vm402, %v4624, %v4613
  %v4626 = vsel %vm3124, %v4625, %v4616
  %v4627 = vsel %vm3126, %v4626, %v4619
  %4628 = vmatpush.msra.mxu0 0.0
  %4629 = vmatpush.msra.mxu0 0.0
  %4630 = vmatpush.msra.mxu0 0.0
  %4631 = vmatpush.msra.mxu0 0.0
  %4632 = vmatpush.msra.mxu0 0.0
  %4633 = vmatpush.msra.mxu0 0.0
  %4634 = vmatpush.msra.mxu0 0.0
  %4635 = vmatpush.msra.mxu0 0.0
  %4636 = vmatpush.msra.mxu0 0.0
  %4637 = vmatpush.msra.mxu0 0.0
  %4638 = vmatpush.msra.mxu0 0.0
  %4639 = vmatpush.msra.mxu0 0.0
  %4640 = vmatpush.msra.mxu0 0.0
  %4641 = vmatpush.msra.mxu0 %v4627
  %4642 = vmatpush.msra.mxu0 %v4599
  %4643 = vmatpush.msra.mxu0 %v4592
  %4644 = vmatmul.f32.gmra.mxu0 %v3444
  %v4645 = vpop.f32.mrf.mxu0
  %v4646 = vadd.f32 0.0, %v4645
  %4647 = vmatmul.f32.gmra.mxu0 %v3447
  %v4648 = vpop.f32.mrf.mxu0
  %v4649 = vadd.f32 0.0, %v4648
  %4650 = vmatmul.f32.gmra.mxu0 %v3450
  %v4651 = vpop.f32.mrf.mxu0
  %v4652 = vadd.f32 0.0, %v4651
  %4653 = vmatmul.f32.gmra.mxu0 %v3453
  %v4654 = vpop.f32.mrf.mxu0
  %v4655 = vadd.f32 0.0, %v4654
  %4656 = vmatmul.f32.gmra.mxu0 %v3456
  %v4657 = vpop.f32.mrf.mxu0
  %v4658 = vadd.f32 0.0, %v4657
  %4659 = vmatmul.f32.gmra.mxu0 %v3459
  %v4660 = vpop.f32.mrf.mxu0
  %v4661 = vadd.f32 0.0, %v4660
  %4662 = vmatmul.f32.gmra.mxu0 %v3462
  %v4663 = vpop.f32.mrf.mxu0
  %v4664 = vadd.f32 0.0, %v4663
  %4665 = vmatmul.f32.gmra.mxu0 %v3465
  %v4666 = vpop.f32.mrf.mxu0
  %v4667 = vadd.f32 0.0, %v4666
  %4668 = vmatmul.f32.gmra.mxu0 %v3468
  %v4669 = vpop.f32.mrf.mxu0
  %v4670 = vadd.f32 0.0, %v4669
  %4671 = vmatmul.f32.gmra.mxu0 %v3471
  %v4672 = vpop.f32.mrf.mxu0
  %v4673 = vadd.f32 0.0, %v4672
  %4674 = vmatmul.f32.gmra.mxu0 %v3474
  %v4675 = vpop.f32.mrf.mxu0
  %v4676 = vadd.f32 0.0, %v4675
  %4677 = vmatmul.f32.gmra.mxu0 %v3477
  %v4678 = vpop.f32.mrf.mxu0
  %v4679 = vadd.f32 0.0, %v4678
  %4680 = vmatmul.f32.gmra.mxu0 %v3480
  %v4681 = vpop.f32.mrf.mxu0
  %v4682 = vadd.f32 0.0, %v4681
  %4683 = vmatmul.f32.gmra.mxu0 %v3483
  %v4684 = vpop.f32.mrf.mxu0
  %v4685 = vadd.f32 0.0, %v4684
  %4686 = vmatmul.f32.gmra.mxu0 %v3486
  %v4687 = vpop.f32.mrf.mxu0
  %v4688 = vadd.f32 0.0, %v4687
  %4689 = vmatmul.f32.gmra.mxu0 %v3489
  %v4690 = vpop.f32.mrf.mxu0
  %v4691 = vadd.f32 0.0, %v4690
  %4692 = vdwg.mxu0
  %v4693 = vmul.f32 %v801, %v829
  %v4695 = vrot.slane %v4693, 1
  %v4697 = vadd.f32 %v4693, %v4695
  %v4698 = vrot.slane %v4693, 2
  %v4700 = vadd.f32 %v4697, %v4698
  %v4702 = vrot.slane %v4700, 2
  %v4704 = vsub.f32 %v775, %v4702
  %v4705 = vmul.f32 %v889, %v775
  %v4706 = vrot.slane %v775, 1
  %v4708 = vmul.f32 %v903, %v4706
  %v4709 = vadd.f32 %v4705, %v4708
  %v4710 = vmul.f32 %v913, %v977
  %v4711 = vadd.f32 %v4709, %v4710
  %v4712 = vsub.f32 %v961, %v4711
  %v4713 = vmul.f32 %v1028, %v3868
  %v4714 = vmul.f32 %v1040, %v974
  %v4715 = vadd.f32 %v4713, %v4714
  %v4716 = vmul.f32 %v1050, %v3897
  %v4717 = vadd.f32 %v4715, %v4716
  %v4718 = vsub.f32 %v1108, %v4717
  %v4719 = vmul.f32 %v1163, %v3901
  %v4720 = vmul.f32 %v1174, %v1337
  %v4721 = vadd.f32 %v4719, %v4720
  %v4722 = vmul.f32 %v1184, %v778
  %v4723 = vadd.f32 %v4721, %v4722
  %v4724 = vsub.f32 %v1235, %v4723
  %v4725 = vmul.f32 %v1279, %v3882
  %v4726 = vmul.f32 %v1286, %v3885
  %v4727 = vadd.f32 %v4725, %v4726
  %v4728 = vmul.f32 %v1293, %v3889
  %v4729 = vadd.f32 %v4727, %v4728
  %v4730 = vsub.f32 %v1326, %v4729
  %v4731 = vmul.f32 %v1370, %v3894
  %v4732 = vmul.f32 %v1377, %v3926
  %v4733 = vadd.f32 %v4731, %v4732
  %v4734 = vmul.f32 %v1384, %v3929
  %v4735 = vadd.f32 %v4733, %v4734
  %v4736 = vsub.f32 %v1419, %v4735
  %v4737 = vmul.f32 %v1462, %v1596
  %v4738 = vmul.f32 %v1469, %v781
  %v4739 = vadd.f32 %v4737, %v4738
  %v4740 = vmul.f32 %v1474, %v3909
  %v4741 = vadd.f32 %v4739, %v4740
  %v4742 = vsub.f32 %v1507, %v4741
  %v4743 = vmul.f32 %v1550, %v3914
  %v4744 = vmul.f32 %v1555, %v3917
  %v4745 = vadd.f32 %v4743, %v4744
  %v4746 = vmul.f32 %v1560, %v3921
  %v4747 = vadd.f32 %v4745, %v4746
  %v4748 = vsub.f32 %v1587, %v4747
  %v4749 = vmul.f32 %v1633, %v3949
  %v4750 = vmul.f32 %v1638, %v3954
  %v4751 = vadd.f32 %v4749, %v4750
  %v4752 = vmul.f32 %v1646, %v1875
  %v4753 = vadd.f32 %v4751, %v4752
  %v4754 = vsub.f32 %v1687, %v4753
  %v4755 = vmul.f32 %v1732, %v784
  %v4756 = vmul.f32 %v1739, %v2149
  %v4757 = vadd.f32 %v4755, %v4756
  %v4758 = vmul.f32 %v1746, %v3939
  %v4759 = vadd.f32 %v4757, %v4758
  %v4760 = vsub.f32 %v1779, %v4759
  %v4761 = vmul.f32 %v1817, %v3944
  %v4762 = vmul.f32 %v1824, %v2049
  %v4763 = vadd.f32 %v4761, %v4762
  %v4764 = vmul.f32 %v1831, %v3977
  %v4765 = vadd.f32 %v4763, %v4764
  %v4766 = vsub.f32 %v1865, %v4765
  %v4767 = vmul.f32 %v1906, %v3981
  %v4768 = vmul.f32 %v1913, %v2246
  %v4769 = vadd.f32 %v4767, %v4768
  %v4770 = vmul.f32 %v1920, %v787
  %v4771 = vadd.f32 %v4769, %v4770
  %v4772 = vsub.f32 %v1960, %v4771
  %v4773 = vmul.f32 %v2001, %v3962
  %v4774 = vmul.f32 %v2008, %v3965
  %v4775 = vadd.f32 %v4773, %v4774
  %v4776 = vmul.f32 %v2015, %v3969
  %v4777 = vadd.f32 %v4775, %v4776
  %v4778 = vsub.f32 %v2042, %v4777
  %v4779 = vmul.f32 %v2083, %v3974
  %v4780 = vmul.f32 %v2090, %v4006
  %v4781 = vadd.f32 %v4779, %v4780
  %v4782 = vmul.f32 %v2097, %v4009
  %v4783 = vadd.f32 %v4781, %v4782
  %v4784 = vsub.f32 %v2136, %v4783
  %v4785 = vmul.f32 %v2184, %v2344
  %v4786 = vmul.f32 %v2191, %v790
  %v4787 = vadd.f32 %v4785, %v4786
  %v4788 = vmul.f32 %v2196, %v3989
  %v4789 = vadd.f32 %v4787, %v4788
  %v4790 = vsub.f32 %v2234, %v4789
  %v4791 = vmul.f32 %v2283, %v3994
  %v4792 = vmul.f32 %v2288, %v3997
  %v4793 = vadd.f32 %v4791, %v4792
  %v4794 = vmul.f32 %v2293, %v4001
  %v4795 = vadd.f32 %v4793, %v4794
  %v4796 = vsub.f32 %v2333, %v4795
  %v4797 = vmul.f32 %v2381, %v4031
  %v4798 = vmul.f32 %v2386, %v4036
  %v4799 = vadd.f32 %v4797, %v4798
  %v4800 = vmul.f32 %v2394, %v4039
  %v4801 = vadd.f32 %v4799, %v4800
  %v4802 = vsub.f32 %v2435, %v4801
  %v4803 = vmul.f32 %v2480, %v793
  %v4804 = vmul.f32 %v2487, %v4017
  %v4805 = vadd.f32 %v4803, %v4804
  %v4806 = vmul.f32 %v2494, %v2535
  %v4807 = vadd.f32 %v4805, %v4806
  %v4808 = vsub.f32 %v2527, %v4807
  %v4809 = vmul.f32 %v2569, %v4024
  %v4810 = vmul.f32 %v2576, %v4027
  %v4811 = vadd.f32 %v4809, %v4810
  %v4812 = vmul.f32 %v2583, %v4059
  %v4813 = vadd.f32 %v4811, %v4812
  %v4814 = vsub.f32 %v2626, %v4813
  %v4815 = vmul.f32 %v2665, %v4063
  %v4816 = vmul.f32 %v2672, %v4068
  %v4817 = vadd.f32 %v4815, %v4816
  %v4818 = vmul.f32 %v2679, %v796
  %v4819 = vadd.f32 %v4817, %v4818
  %v4820 = vsub.f32 %v2716, %v4819
  %v4821 = vmul.f32 %v2759, %v4046
  %v4822 = vmul.f32 %v2766, %v2726
  %v4823 = vadd.f32 %v4821, %v4822
  %v4824 = vmul.f32 %v2773, %v4051
  %v4825 = vadd.f32 %v4823, %v4824
  %v4826 = vsub.f32 %v2805, %v4825
  %v4827 = vmul.f32 %v2843, %v4056
  %v4828 = vmul.f32 %v2850, %v4088
  %v4829 = vadd.f32 %v4827, %v4828
  %v4830 = vmul.f32 %v2857, %v4091
  %v4831 = vadd.f32 %v4829, %v4830
  %v4832 = vsub.f32 %v2895, %v4831
  %v4833 = vmul.f32 %v2940, %v4095
  %v4834 = vmul.f32 %v2947, %v799
  %v4835 = vadd.f32 %v4833, %v4834
  %v4836 = vmul.f32 %v2952, %v4073
  %v4837 = vadd.f32 %v4835, %v4836
  %v4838 = vsub.f32 %v2983, %v4837
  %v4839 = vmul.f32 %v3028, %v2991
  %v4840 = vmul.f32 %v3033, %v4079
  %v4841 = vadd.f32 %v4839, %v4840
  %v4842 = vmul.f32 %v3038, %v4083
  %v4843 = vadd.f32 %v4841, %v4842
  %v4844 = vsub.f32 %v3074, %v4843
  %v4846 = vrot.slane %v4704, 1
  %v4849 = vrot.slane %v4712, 2
  %v4852 = vrot.slane %v4718, 1
  %v4855 = vrot.slane %v4730, 7
  %v4858 = vrot.slane %v4736, 6
  %v4861 = vrot.slane %v4742, 5
  %v4864 = vrot.slane %v4748, 4
  %v4867 = vrot.slane %v4754, 3
  %v4870 = vrot.slane %v4760, 2
  %v4873 = vrot.slane %v4766, 1
  %v4876 = vrot.slane %v4778, 7
  %v4879 = vrot.slane %v4784, 6
  %v4882 = vrot.slane %v4790, 5
  %v4885 = vrot.slane %v4796, 4
  %v4887 = vsel %vm3128, %v4846, %v4849
  %v4888 = vsel %vm709, %v4887, %v4852
  %v4889 = vsel %vm3119, %v4888, %v4724
  %v4890 = vsel %vm3121, %v4889, %v4855
  %v4891 = vsel %vm402, %v4890, %v4858
  %v4892 = vsel %vm3124, %v4891, %v4861
  %v4893 = vsel %vm3126, %v4892, %v4864
  %v4894 = vsel %vm3128, %v4867, %v4870
  %v4895 = vsel %vm709, %v4894, %v4873
  %v4896 = vsel %vm3119, %v4895, %v4772
  %v4897 = vsel %vm3121, %v4896, %v4876
  %v4898 = vsel %vm402, %v4897, %v4879
  %v4899 = vsel %vm3124, %v4898, %v4882
  %v4900 = vsel %vm3126, %v4899, %v4885
  %v4902 = vrot.slane %v4802, 3
  %v4905 = vrot.slane %v4808, 2
  %v4908 = vrot.slane %v4814, 1
  %v4911 = vrot.slane %v4826, 7
  %v4914 = vrot.slane %v4832, 6
  %v4917 = vrot.slane %v4838, 5
  %v4920 = vrot.slane %v4844, 4
  %v4922 = vsel %vm3128, %v4902, %v4905
  %v4923 = vsel %vm709, %v4922, %v4908
  %v4924 = vsel %vm3119, %v4923, %v4820
  %v4925 = vsel %vm3121, %v4924, %v4911
  %v4926 = vsel %vm402, %v4925, %v4914
  %v4927 = vsel %vm3124, %v4926, %v4917
  %v4928 = vsel %vm3126, %v4927, %v4920
  %4929 = vmatpush.msra.mxu0 0.0
  %4930 = vmatpush.msra.mxu0 0.0
  %4931 = vmatpush.msra.mxu0 0.0
  %4932 = vmatpush.msra.mxu0 0.0
  %4933 = vmatpush.msra.mxu0 0.0
  %4934 = vmatpush.msra.mxu0 0.0
  %4935 = vmatpush.msra.mxu0 0.0
  %4936 = vmatpush.msra.mxu0 0.0
  %4937 = vmatpush.msra.mxu0 0.0
  %4938 = vmatpush.msra.mxu0 0.0
  %4939 = vmatpush.msra.mxu0 0.0
  %4940 = vmatpush.msra.mxu0 0.0
  %4941 = vmatpush.msra.mxu0 0.0
  %4942 = vmatpush.msra.mxu0 %v4928
  %4943 = vmatpush.msra.mxu0 %v4900
  %4944 = vmatpush.msra.mxu0 %v4893
  %4945 = vmatmul.f32.gmra.mxu0 %v3444
  %v4946 = vpop.f32.mrf.mxu0
  %v4947 = vadd.f32 0.0, %v4946
  %4948 = vmatmul.f32.gmra.mxu0 %v3447
  %v4949 = vpop.f32.mrf.mxu0
  %v4950 = vadd.f32 0.0, %v4949
  %4951 = vmatmul.f32.gmra.mxu0 %v3450
  %v4952 = vpop.f32.mrf.mxu0
  %v4953 = vadd.f32 0.0, %v4952
  %4954 = vmatmul.f32.gmra.mxu0 %v3453
  %v4955 = vpop.f32.mrf.mxu0
  %v4956 = vadd.f32 0.0, %v4955
  %4957 = vmatmul.f32.gmra.mxu0 %v3456
  %v4958 = vpop.f32.mrf.mxu0
  %v4959 = vadd.f32 0.0, %v4958
  %4960 = vmatmul.f32.gmra.mxu0 %v3459
  %v4961 = vpop.f32.mrf.mxu0
  %v4962 = vadd.f32 0.0, %v4961
  %4963 = vmatmul.f32.gmra.mxu0 %v3462
  %v4964 = vpop.f32.mrf.mxu0
  %v4965 = vadd.f32 0.0, %v4964
  %4966 = vmatmul.f32.gmra.mxu0 %v3465
  %v4967 = vpop.f32.mrf.mxu0
  %v4968 = vadd.f32 0.0, %v4967
  %4969 = vmatmul.f32.gmra.mxu0 %v3468
  %v4970 = vpop.f32.mrf.mxu0
  %v4971 = vadd.f32 0.0, %v4970
  %4972 = vmatmul.f32.gmra.mxu0 %v3471
  %v4973 = vpop.f32.mrf.mxu0
  %v4974 = vadd.f32 0.0, %v4973
  %4975 = vmatmul.f32.gmra.mxu0 %v3474
  %v4976 = vpop.f32.mrf.mxu0
  %v4977 = vadd.f32 0.0, %v4976
  %4978 = vmatmul.f32.gmra.mxu0 %v3477
  %v4979 = vpop.f32.mrf.mxu0
  %v4980 = vadd.f32 0.0, %v4979
  %4981 = vmatmul.f32.gmra.mxu0 %v3480
  %v4982 = vpop.f32.mrf.mxu0
  %v4983 = vadd.f32 0.0, %v4982
  %4984 = vmatmul.f32.gmra.mxu0 %v3483
  %v4985 = vpop.f32.mrf.mxu0
  %v4986 = vadd.f32 0.0, %v4985
  %4987 = vmatmul.f32.gmra.mxu0 %v3486
  %v4988 = vpop.f32.mrf.mxu0
  %v4989 = vadd.f32 0.0, %v4988
  %4990 = vmatmul.f32.gmra.mxu0 %v3489
  %v4991 = vpop.f32.mrf.mxu0
  %v4992 = vadd.f32 0.0, %v4991
  %4993 = vdwg.mxu0
  %v4994 = vrot.slane %v801, 6
  %v4997 = vrot.slane %v918, 5
  %v5000 = vrot.slane %v1055, 4
  %v5003 = vrot.slane %v1192, 3
  %v5006 = vrot.slane %v1298, 2
  %v5009 = vrot.slane %v1389, 1
  %v5012 = vrot.slane %v1565, 7
  %v5015 = vrot.slane %v1651, 6
  %v5018 = vrot.slane %v1751, 5
  %v5021 = vrot.slane %v1836, 4
  %v5024 = vrot.slane %v1925, 3
  %v5027 = vrot.slane %v2020, 2
  %v5030 = vrot.slane %v2102, 1
  %v5033 = vrot.slane %v2298, 7
  %v5035 = vsel %vm3128, %v4994, %v4997
  %v5036 = vsel %vm709, %v5035, %v5000
  %v5037 = vsel %vm3119, %v5036, %v5003
  %v5038 = vsel %vm3121, %v5037, %v5006
  %v5039 = vsel %vm402, %v5038, %v5009
  %v5040 = vsel %vm3124, %v5039, %v1479
  %v5041 = vsel %vm3126, %v5040, %v5012
  %v5042 = vsel %vm3128, %v5015, %v5018
  %v5043 = vsel %vm709, %v5042, %v5021
  %v5044 = vsel %vm3119, %v5043, %v5024
  %v5045 = vsel %vm3121, %v5044, %v5027
  %v5046 = vsel %vm402, %v5045, %v5030
  %v5047 = vsel %vm3124, %v5046, %v2201
  %v5048 = vsel %vm3126, %v5047, %v5033
  %v5050 = vrot.slane %v2399, 6
  %v5053 = vrot.slane %v2499, 5
  %v5056 = vrot.slane %v2588, 4
  %v5059 = vrot.slane %v2684, 3
  %v5062 = vrot.slane %v2778, 2
  %v5065 = vrot.slane %v2862, 1
  %v5068 = vrot.slane %v3043, 7
  %v5070 = vsel %vm3128, %v5050, %v5053
  %v5071 = vsel %vm709, %v5070, %v5056
  %v5072 = vsel %vm3119, %v5071, %v5059
  %v5073 = vsel %vm3121, %v5072, %v5062
  %v5074 = vsel %vm402, %v5073, %v5065
  %v5075 = vsel %vm3124, %v5074, %v2957
  %v5076 = vsel %vm3126, %v5075, %v5068
  %5077 = vmatpush.msra.mxu0 0.0
  %5078 = vmatpush.msra.mxu0 0.0
  %5079 = vmatpush.msra.mxu0 0.0
  %5080 = vmatpush.msra.mxu0 0.0
  %5081 = vmatpush.msra.mxu0 0.0
  %5082 = vmatpush.msra.mxu0 0.0
  %5083 = vmatpush.msra.mxu0 0.0
  %5084 = vmatpush.msra.mxu0 0.0
  %5085 = vmatpush.msra.mxu0 0.0
  %5086 = vmatpush.msra.mxu0 0.0
  %5087 = vmatpush.msra.mxu0 0.0
  %5088 = vmatpush.msra.mxu0 0.0
  %5089 = vmatpush.msra.mxu0 0.0
  %5090 = vmatpush.msra.mxu0 %v5076
  %5091 = vmatpush.msra.mxu0 %v5048
  %5092 = vmatpush.msra.mxu0 %v5041
  %5093 = vmatmul.f32.gmra.mxu0 %v3444
  %v5094 = vpop.f32.mrf.mxu0
  %v5095 = vadd.f32 0.0, %v5094
  %5096 = vmatmul.f32.gmra.mxu0 %v3447
  %v5097 = vpop.f32.mrf.mxu0
  %v5098 = vadd.f32 0.0, %v5097
  %5099 = vmatmul.f32.gmra.mxu0 %v3450
  %v5100 = vpop.f32.mrf.mxu0
  %v5101 = vadd.f32 0.0, %v5100
  %5102 = vmatmul.f32.gmra.mxu0 %v3453
  %v5103 = vpop.f32.mrf.mxu0
  %v5104 = vadd.f32 0.0, %v5103
  %5105 = vmatmul.f32.gmra.mxu0 %v3456
  %v5106 = vpop.f32.mrf.mxu0
  %v5107 = vadd.f32 0.0, %v5106
  %5108 = vmatmul.f32.gmra.mxu0 %v3459
  %v5109 = vpop.f32.mrf.mxu0
  %v5110 = vadd.f32 0.0, %v5109
  %5111 = vmatmul.f32.gmra.mxu0 %v3462
  %v5112 = vpop.f32.mrf.mxu0
  %v5113 = vadd.f32 0.0, %v5112
  %5114 = vmatmul.f32.gmra.mxu0 %v3465
  %v5115 = vpop.f32.mrf.mxu0
  %v5116 = vadd.f32 0.0, %v5115
  %5117 = vmatmul.f32.gmra.mxu0 %v3468
  %v5118 = vpop.f32.mrf.mxu0
  %v5119 = vadd.f32 0.0, %v5118
  %5120 = vmatmul.f32.gmra.mxu0 %v3471
  %v5121 = vpop.f32.mrf.mxu0
  %v5122 = vadd.f32 0.0, %v5121
  %5123 = vmatmul.f32.gmra.mxu0 %v3474
  %v5124 = vpop.f32.mrf.mxu0
  %v5125 = vadd.f32 0.0, %v5124
  %5126 = vmatmul.f32.gmra.mxu0 %v3477
  %v5127 = vpop.f32.mrf.mxu0
  %v5128 = vadd.f32 0.0, %v5127
  %5129 = vmatmul.f32.gmra.mxu0 %v3480
  %v5130 = vpop.f32.mrf.mxu0
  %v5131 = vadd.f32 0.0, %v5130
  %5132 = vmatmul.f32.gmra.mxu0 %v3483
  %v5133 = vpop.f32.mrf.mxu0
  %v5134 = vadd.f32 0.0, %v5133
  %5135 = vmatmul.f32.gmra.mxu0 %v3486
  %v5136 = vpop.f32.mrf.mxu0
  %v5137 = vadd.f32 0.0, %v5136
  %5138 = vmatmul.f32.gmra.mxu0 %v3489
  %v5139 = vpop.f32.mrf.mxu0
  %v5140 = vadd.f32 0.0, %v5139
  %5141 = vdwg.mxu0
  %v5142 = vrot.slane %v801, 7
  %v5145 = vrot.slane %v927, 5
  %v5148 = vrot.slane %v1065, 4
  %v5151 = vrot.slane %v1202, 3
  %v5154 = vrot.slane %v1303, 2
  %v5157 = vrot.slane %v1394, 1
  %v5160 = vrot.slane %v1570, 7
  %v5163 = vrot.slane %v1656, 6
  %v5166 = vrot.slane %v1758, 5
  %v5169 = vrot.slane %v1843, 4
  %v5172 = vrot.slane %v1932, 3
  %v5175 = vrot.slane %v2025, 2
  %v5178 = vrot.slane %v2107, 1
  %v5181 = vrot.slane %v2303, 7
  %v5183 = vsel %vm3128, %v5142, %v5145
  %v5184 = vsel %vm709, %v5183, %v5148
  %v5185 = vsel %vm3119, %v5184, %v5151
  %v5186 = vsel %vm3121, %v5185, %v5154
  %v5187 = vsel %vm402, %v5186, %v5157
  %v5188 = vsel %vm3124, %v5187, %v1484
  %v5189 = vsel %vm3126, %v5188, %v5160
  %v5190 = vsel %vm3128, %v5163, %v5166
  %v5191 = vsel %vm709, %v5190, %v5169
  %v5192 = vsel %vm3119, %v5191, %v5172
  %v5193 = vsel %vm3121, %v5192, %v5175
  %v5194 = vsel %vm402, %v5193, %v5178
  %v5195 = vsel %vm3124, %v5194, %v2206
  %v5196 = vsel %vm3126, %v5195, %v5181
  %v5198 = vrot.slane %v2404, 6
  %v5201 = vrot.slane %v2506, 5
  %v5204 = vrot.slane %v2595, 4
  %v5207 = vrot.slane %v2691, 3
  %v5210 = vrot.slane %v2783, 2
  %v5213 = vrot.slane %v2867, 1
  %v5216 = vrot.slane %v3048, 7
  %v5218 = vsel %vm3128, %v5198, %v5201
  %v5219 = vsel %vm709, %v5218, %v5204
  %v5220 = vsel %vm3119, %v5219, %v5207
  %v5221 = vsel %vm3121, %v5220, %v5210
  %v5222 = vsel %vm402, %v5221, %v5213
  %v5223 = vsel %vm3124, %v5222, %v2962
  %v5224 = vsel %vm3126, %v5223, %v5216
  %5225 = vmatpush.msra.mxu0 0.0
  %5226 = vmatpush.msra.mxu0 0.0
  %5227 = vmatpush.msra.mxu0 0.0
  %5228 = vmatpush.msra.mxu0 0.0
  %5229 = vmatpush.msra.mxu0 0.0
  %5230 = vmatpush.msra.mxu0 0.0
  %5231 = vmatpush.msra.mxu0 0.0
  %5232 = vmatpush.msra.mxu0 0.0
  %5233 = vmatpush.msra.mxu0 0.0
  %5234 = vmatpush.msra.mxu0 0.0
  %5235 = vmatpush.msra.mxu0 0.0
  %5236 = vmatpush.msra.mxu0 0.0
  %5237 = vmatpush.msra.mxu0 0.0
  %5238 = vmatpush.msra.mxu0 %v5224
  %5239 = vmatpush.msra.mxu0 %v5196
  %5240 = vmatpush.msra.mxu0 %v5189
  %5241 = vmatmul.f32.gmra.mxu0 %v3444
  %v5242 = vpop.f32.mrf.mxu0
  %v5243 = vadd.f32 0.0, %v5242
  %5244 = vmatmul.f32.gmra.mxu0 %v3447
  %v5245 = vpop.f32.mrf.mxu0
  %v5246 = vadd.f32 0.0, %v5245
  %5247 = vmatmul.f32.gmra.mxu0 %v3450
  %v5248 = vpop.f32.mrf.mxu0
  %v5249 = vadd.f32 0.0, %v5248
  %5250 = vmatmul.f32.gmra.mxu0 %v3453
  %v5251 = vpop.f32.mrf.mxu0
  %v5252 = vadd.f32 0.0, %v5251
  %5253 = vmatmul.f32.gmra.mxu0 %v3456
  %v5254 = vpop.f32.mrf.mxu0
  %v5255 = vadd.f32 0.0, %v5254
  %5256 = vmatmul.f32.gmra.mxu0 %v3459
  %v5257 = vpop.f32.mrf.mxu0
  %v5258 = vadd.f32 0.0, %v5257
  %5259 = vmatmul.f32.gmra.mxu0 %v3462
  %v5260 = vpop.f32.mrf.mxu0
  %v5261 = vadd.f32 0.0, %v5260
  %5262 = vmatmul.f32.gmra.mxu0 %v3465
  %v5263 = vpop.f32.mrf.mxu0
  %v5264 = vadd.f32 0.0, %v5263
  %5265 = vmatmul.f32.gmra.mxu0 %v3468
  %v5266 = vpop.f32.mrf.mxu0
  %v5267 = vadd.f32 0.0, %v5266
  %5268 = vmatmul.f32.gmra.mxu0 %v3471
  %v5269 = vpop.f32.mrf.mxu0
  %v5270 = vadd.f32 0.0, %v5269
  %5271 = vmatmul.f32.gmra.mxu0 %v3474
  %v5272 = vpop.f32.mrf.mxu0
  %v5273 = vadd.f32 0.0, %v5272
  %5274 = vmatmul.f32.gmra.mxu0 %v3477
  %v5275 = vpop.f32.mrf.mxu0
  %v5276 = vadd.f32 0.0, %v5275
  %5277 = vmatmul.f32.gmra.mxu0 %v3480
  %v5278 = vpop.f32.mrf.mxu0
  %v5279 = vadd.f32 0.0, %v5278
  %5280 = vmatmul.f32.gmra.mxu0 %v3483
  %v5281 = vpop.f32.mrf.mxu0
  %v5282 = vadd.f32 0.0, %v5281
  %5283 = vmatmul.f32.gmra.mxu0 %v3486
  %v5284 = vpop.f32.mrf.mxu0
  %v5285 = vadd.f32 0.0, %v5284
  %5286 = vmatmul.f32.gmra.mxu0 %v3489
  %v5287 = vpop.f32.mrf.mxu0
  %v5288 = vadd.f32 0.0, %v5287
  %5289 = vdwg.mxu0
  %v5291 = vrot.slane %v938, 5
  %v5294 = vrot.slane %v1076, 4
  %v5297 = vrot.slane %v1212, 3
  %v5300 = vrot.slane %v1308, 2
  %v5303 = vrot.slane %v1399, 1
  %v5306 = vrot.slane %v1575, 7
  %v5309 = vrot.slane %v1663, 6
  %v5312 = vrot.slane %v1765, 5
  %v5315 = vrot.slane %v1850, 4
  %v5318 = vrot.slane %v1937, 3
  %v5321 = vrot.slane %v2030, 2
  %v5324 = vrot.slane %v2112, 1
  %v5327 = vrot.slane %v2308, 7
  %v5329 = vsel %vm3128, %v802, %v5291
  %v5330 = vsel %vm709, %v5329, %v5294
  %v5331 = vsel %vm3119, %v5330, %v5297
  %v5332 = vsel %vm3121, %v5331, %v5300
  %v5333 = vsel %vm402, %v5332, %v5303
  %v5334 = vsel %vm3124, %v5333, %v1489
  %v5335 = vsel %vm3126, %v5334, %v5306
  %v5336 = vsel %vm3128, %v5309, %v5312
  %v5337 = vsel %vm709, %v5336, %v5315
  %v5338 = vsel %vm3119, %v5337, %v5318
  %v5339 = vsel %vm3121, %v5338, %v5321
  %v5340 = vsel %vm402, %v5339, %v5324
  %v5341 = vsel %vm3124, %v5340, %v2211
  %v5342 = vsel %vm3126, %v5341, %v5327
  %v5344 = vrot.slane %v2411, 6
  %v5347 = vrot.slane %v2513, 5
  %v5350 = vrot.slane %v2602, 4
  %v5353 = vrot.slane %v2696, 3
  %v5356 = vrot.slane %v2788, 2
  %v5359 = vrot.slane %v2872, 1
  %v5362 = vrot.slane %v3053, 7
  %v5364 = vsel %vm3128, %v5344, %v5347
  %v5365 = vsel %vm709, %v5364, %v5350
  %v5366 = vsel %vm3119, %v5365, %v5353
  %v5367 = vsel %vm3121, %v5366, %v5356
  %v5368 = vsel %vm402, %v5367, %v5359
  %v5369 = vsel %vm3124, %v5368, %v2967
  %v5370 = vsel %vm3126, %v5369, %v5362
  %5371 = vmatpush.msra.mxu0 0.0
  %5372 = vmatpush.msra.mxu0 0.0
  %5373 = vmatpush.msra.mxu0 0.0
  %5374 = vmatpush.msra.mxu0 0.0
  %5375 = vmatpush.msra.mxu0 0.0
  %5376 = vmatpush.msra.mxu0 0.0
  %5377 = vmatpush.msra.mxu0 0.0
  %5378 = vmatpush.msra.mxu0 0.0
  %5379 = vmatpush.msra.mxu0 0.0
  %5380 = vmatpush.msra.mxu0 0.0
  %5381 = vmatpush.msra.mxu0 0.0
  %5382 = vmatpush.msra.mxu0 0.0
  %5383 = vmatpush.msra.mxu0 0.0
  %5384 = vmatpush.msra.mxu0 %v5370
  %5385 = vmatpush.msra.mxu0 %v5342
  %5386 = vmatpush.msra.mxu0 %v5335
  %5387 = vmatmul.f32.gmra.mxu0 %v3444
  %v5388 = vpop.f32.mrf.mxu0
  %v5389 = vadd.f32 0.0, %v5388
  %5390 = vmatmul.f32.gmra.mxu0 %v3447
  %v5391 = vpop.f32.mrf.mxu0
  %v5392 = vadd.f32 0.0, %v5391
  %5393 = vmatmul.f32.gmra.mxu0 %v3450
  %v5394 = vpop.f32.mrf.mxu0
  %v5395 = vadd.f32 0.0, %v5394
  %5396 = vmatmul.f32.gmra.mxu0 %v3453
  %v5397 = vpop.f32.mrf.mxu0
  %v5398 = vadd.f32 0.0, %v5397
  %5399 = vmatmul.f32.gmra.mxu0 %v3456
  %v5400 = vpop.f32.mrf.mxu0
  %v5401 = vadd.f32 0.0, %v5400
  %5402 = vmatmul.f32.gmra.mxu0 %v3459
  %v5403 = vpop.f32.mrf.mxu0
  %v5404 = vadd.f32 0.0, %v5403
  %5405 = vmatmul.f32.gmra.mxu0 %v3462
  %v5406 = vpop.f32.mrf.mxu0
  %v5407 = vadd.f32 0.0, %v5406
  %5408 = vmatmul.f32.gmra.mxu0 %v3465
  %v5409 = vpop.f32.mrf.mxu0
  %v5410 = vadd.f32 0.0, %v5409
  %5411 = vmatmul.f32.gmra.mxu0 %v3468
  %v5412 = vpop.f32.mrf.mxu0
  %v5413 = vadd.f32 0.0, %v5412
  %5414 = vmatmul.f32.gmra.mxu0 %v3471
  %v5415 = vpop.f32.mrf.mxu0
  %v5416 = vadd.f32 0.0, %v5415
  %5417 = vmatmul.f32.gmra.mxu0 %v3474
  %v5418 = vpop.f32.mrf.mxu0
  %v5419 = vadd.f32 0.0, %v5418
  %5420 = vmatmul.f32.gmra.mxu0 %v3477
  %v5421 = vpop.f32.mrf.mxu0
  %v5422 = vadd.f32 0.0, %v5421
  %5423 = vmatmul.f32.gmra.mxu0 %v3480
  %v5424 = vpop.f32.mrf.mxu0
  %v5425 = vadd.f32 0.0, %v5424
  %5426 = vmatmul.f32.gmra.mxu0 %v3483
  %v5427 = vpop.f32.mrf.mxu0
  %v5428 = vadd.f32 0.0, %v5427
  %5429 = vmatmul.f32.gmra.mxu0 %v3486
  %v5430 = vpop.f32.mrf.mxu0
  %v5431 = vadd.f32 0.0, %v5430
  %5432 = vmatmul.f32.gmra.mxu0 %v3489
  %v5433 = vpop.f32.mrf.mxu0
  %v5434 = vadd.f32 0.0, %v5433
  %5435 = vdwg.mxu0
  %v5436 = vmul.f32 %v801, %v977
  %v5438 = vrot.slane %v5436, 1
  %v5440 = vadd.f32 %v5436, %v5438
  %v5441 = vmul.f32 %v802, %v977
  %v5443 = vrot.slane %v5441, 2
  %v5445 = vadd.f32 %v5440, %v5443
  %v5447 = vrot.slane %v5445, 4
  %v5449 = vsub.f32 %v775, %v5447
  %v5450 = vmul.f32 %v918, %v829
  %v5451 = vmul.f32 %v927, %v959
  %v5452 = vadd.f32 %v5450, %v5451
  %v5453 = vmul.f32 %v938, %v1120
  %v5454 = vadd.f32 %v5452, %v5453
  %v5455 = vsub.f32 %v976, %v5454
  %v5456 = vmul.f32 %v1055, %v775
  %v5457 = vmul.f32 %v1065, %v4706
  %v5458 = vadd.f32 %v5456, %v5457
  %v5459 = vmul.f32 %v1076, %v3885
  %v5460 = vadd.f32 %v5458, %v5459
  %v5461 = vsub.f32 %v1119, %v5460
  %v5462 = vmul.f32 %v1192, %v3889
  %v5463 = vmul.f32 %v1202, %v3894
  %v5464 = vadd.f32 %v5462, %v5463
  %v5465 = vmul.f32 %v1212, %v3897
  %v5466 = vadd.f32 %v5464, %v5465
  %v5467 = vsub.f32 %v1248, %v5466
  %v5468 = vmul.f32 %v1298, %v3901
  %v5469 = vmul.f32 %v1303, %v1337
  %v5470 = vadd.f32 %v5468, %v5469
  %v5471 = vmul.f32 %v1308, %v778
  %v5472 = vadd.f32 %v5470, %v5471
  %v5473 = vsub.f32 %v1334, %v5472
  %v5474 = vmul.f32 %v1389, %v3882
  %v5475 = vmul.f32 %v1394, %v3914
  %v5476 = vadd.f32 %v5474, %v5475
  %v5477 = vmul.f32 %v1399, %v3917
  %v5478 = vadd.f32 %v5476, %v5477
  %v5479 = vsub.f32 %v1429, %v5478
  %v5480 = vmul.f32 %v1479, %v3921
  %v5481 = vmul.f32 %v1484, %v3926
  %v5482 = vadd.f32 %v5480, %v5481
  %v5483 = vmul.f32 %v1489, %v3929
  %v5484 = vadd.f32 %v5482, %v5483
  %v5485 = vsub.f32 %v1515, %v5484
  %v5486 = vmul.f32 %v1565, %v1596
  %v5487 = vmul.f32 %v1570, %v781
  %v5488 = vadd.f32 %v5486, %v5487
  %v5489 = vmul.f32 %v1575, %v3909
  %v5490 = vadd.f32 %v5488, %v5489
  %v5491 = vsub.f32 %v1593, %v5490
  %v5492 = vmul.f32 %v1651, %v3939
  %v5493 = vmul.f32 %v1656, %v3944
  %v5494 = vadd.f32 %v5492, %v5493
  %v5495 = vmul.f32 %v1663, %v2049
  %v5496 = vadd.f32 %v5494, %v5495
  %v5497 = vsub.f32 %v1699, %v5496
  %v5498 = vmul.f32 %v1751, %v3949
  %v5499 = vmul.f32 %v1758, %v3954
  %v5500 = vadd.f32 %v5498, %v5499
  %v5501 = vmul.f32 %v1765, %v1875
  %v5502 = vadd.f32 %v5500, %v5501
  %v5503 = vsub.f32 %v1785, %v5502
  %v5504 = vmul.f32 %v1836, %v784
  %v5505 = vmul.f32 %v1843, %v2149
  %v5506 = vadd.f32 %v5504, %v5505
  %v5507 = vmul.f32 %v1850, %v3965
  %v5508 = vadd.f32 %v5506, %v5507
  %v5509 = vsub.f32 %v1873, %v5508
  %v5510 = vmul.f32 %v1925, %v3969
  %v5511 = vmul.f32 %v1932, %v3974
  %v5512 = vadd.f32 %v5510, %v5511
  %v5513 = vmul.f32 %v1937, %v3977
  %v5514 = vadd.f32 %v5512, %v5513
  %v5515 = vsub.f32 %v1970, %v5514
  %v5516 = vmul.f32 %v2020, %v3981
  %v5517 = vmul.f32 %v2025, %v2246
  %v5518 = vadd.f32 %v5516, %v5517
  %v5519 = vmul.f32 %v2030, %v787
  %v5520 = vadd.f32 %v5518, %v5519
  %v5521 = vsub.f32 %v2048, %v5520
  %v5522 = vmul.f32 %v2102, %v3962
  %v5523 = vmul.f32 %v2107, %v3994
  %v5524 = vadd.f32 %v5522, %v5523
  %v5525 = vmul.f32 %v2112, %v3997
  %v5526 = vadd.f32 %v5524, %v5525
  %v5527 = vsub.f32 %v2148, %v5526
  %v5528 = vmul.f32 %v2201, %v4001
  %v5529 = vmul.f32 %v2206, %v4006
  %v5530 = vadd.f32 %v5528, %v5529
  %v5531 = vmul.f32 %v2211, %v4009
  %v5532 = vadd.f32 %v5530, %v5531
  %v5533 = vsub.f32 %v2244, %v5532
  %v5534 = vmul.f32 %v2298, %v2344
  %v5535 = vmul.f32 %v2303, %v790
  %v5536 = vadd.f32 %v5534, %v5535
  %v5537 = vmul.f32 %v2308, %v3989
  %v5538 = vadd.f32 %v5536, %v5537
  %v5539 = vsub.f32 %v2341, %v5538
  %v5540 = vmul.f32 %v2399, %v2535
  %v5541 = vmul.f32 %v2404, %v4024
  %v5542 = vadd.f32 %v5540, %v5541
  %v5543 = vmul.f32 %v2411, %v4027
  %v5544 = vadd.f32 %v5542, %v5543
  %v5545 = vsub.f32 %v2447, %v5544
  %v5546 = vmul.f32 %v2499, %v4031
  %v5547 = vmul.f32 %v2506, %v4036
  %v5548 = vadd.f32 %v5546, %v5547
  %v5549 = vmul.f32 %v2513, %v4039
  %v5550 = vadd.f32 %v5548, %v5549
  %v5551 = vsub.f32 %v2533, %v5550
  %v5552 = vmul.f32 %v2588, %v793
  %v5553 = vmul.f32 %v2595, %v4017
  %v5554 = vadd.f32 %v5552, %v5553
  %v5555 = vmul.f32 %v2602, %v2726
  %v5556 = vadd.f32 %v5554, %v5555
  %v5557 = vsub.f32 %v2636, %v5556
  %v5558 = vmul.f32 %v2684, %v4051
  %v5559 = vmul.f32 %v2691, %v4056
  %v5560 = vadd.f32 %v5558, %v5559
  %v5561 = vmul.f32 %v2696, %v4059
  %v5562 = vadd.f32 %v5560, %v5561
  %v5563 = vsub.f32 %v2724, %v5562
  %v5564 = vmul.f32 %v2778, %v4063
  %v5565 = vmul.f32 %v2783, %v4068
  %v5566 = vadd.f32 %v5564, %v5565
  %v5567 = vmul.f32 %v2788, %v796
  %v5568 = vadd.f32 %v5566, %v5567
  %v5569 = vsub.f32 %v2811, %v5568
  %v5570 = vmul.f32 %v2862, %v4046
  %v5571 = vmul.f32 %v2867, %v2991
  %v5572 = vadd.f32 %v5570, %v5571
  %v5573 = vmul.f32 %v2872, %v4079
  %v5574 = vadd.f32 %v5572, %v5573
  %v5575 = vsub.f32 %v2907, %v5574
  %v5576 = vmul.f32 %v2957, %v4083
  %v5577 = vmul.f32 %v2962, %v4088
  %v5578 = vadd.f32 %v5576, %v5577
  %v5579 = vmul.f32 %v2967, %v4091
  %v5580 = vadd.f32 %v5578, %v5579
  %v5581 = vsub.f32 %v2989, %v5580
  %v5582 = vmul.f32 %v3043, %v4095
  %v5583 = vmul.f32 %v3048, %v799
  %v5584 = vadd.f32 %v5582, %v5583
  %v5585 = vmul.f32 %v3053, %v4073
  %v5586 = vadd.f32 %v5584, %v5585
  %v5587 = vsub.f32 %v3082, %v5586
  %v5589 = vrot.slane %v5449, 2
  %v5592 = vrot.slane %v5455, 5
  %v5595 = vrot.slane %v5461, 4
  %v5598 = vrot.slane %v5467, 3
  %v5601 = vrot.slane %v5473, 2
  %v5604 = vrot.slane %v5479, 1
  %v5607 = vrot.slane %v5491, 7
  %v5610 = vrot.slane %v5497, 6
  %v5613 = vrot.slane %v5503, 5
  %v5616 = vrot.slane %v5509, 4
  %v5619 = vrot.slane %v5515, 3
  %v5622 = vrot.slane %v5521, 2
  %v5625 = vrot.slane %v5527, 1
  %v5628 = vrot.slane %v5539, 7
  %v5630 = vsel %vm3128, %v5589, %v5592
  %v5631 = vsel %vm709, %v5630, %v5595
  %v5632 = vsel %vm3119, %v5631, %v5598
  %v5633 = vsel %vm3121, %v5632, %v5601
  %v5634 = vsel %vm402, %v5633, %v5604
  %v5635 = vsel %vm3124, %v5634, %v5485
  %v5636 = vsel %vm3126, %v5635, %v5607
  %v5637 = vsel %vm3128, %v5610, %v5613
  %v5638 = vsel %vm709, %v5637, %v5616
  %v5639 = vsel %vm3119, %v5638, %v5619
  %v5640 = vsel %vm3121, %v5639, %v5622
  %v5641 = vsel %vm402, %v5640, %v5625
  %v5642 = vsel %vm3124, %v5641, %v5533
  %v5643 = vsel %vm3126, %v5642, %v5628
  %v5645 = vrot.slane %v5545, 6
  %v5648 = vrot.slane %v5551, 5
  %v5651 = vrot.slane %v5557, 4
  %v5654 = vrot.slane %v5563, 3
  %v5657 = vrot.slane %v5569, 2
  %v5660 = vrot.slane %v5575, 1
  %v5663 = vrot.slane %v5587, 7
  %v5665 = vsel %vm3128, %v5645, %v5648
  %v5666 = vsel %vm709, %v5665, %v5651
  %v5667 = vsel %vm3119, %v5666, %v5654
  %v5668 = vsel %vm3121, %v5667, %v5657
  %v5669 = vsel %vm402, %v5668, %v5660
  %v5670 = vsel %vm3124, %v5669, %v5581
  %v5671 = vsel %vm3126, %v5670, %v5663
  %5672 = vmatpush.msra.mxu0 0.0
  %5673 = vmatpush.msra.mxu0 0.0
  %5674 = vmatpush.msra.mxu0 0.0
  %5675 = vmatpush.msra.mxu0 0.0
  %5676 = vmatpush.msra.mxu0 0.0
  %5677 = vmatpush.msra.mxu0 0.0
  %5678 = vmatpush.msra.mxu0 0.0
  %5679 = vmatpush.msra.mxu0 0.0
  %5680 = vmatpush.msra.mxu0 0.0
  %5681 = vmatpush.msra.mxu0 0.0
  %5682 = vmatpush.msra.mxu0 0.0
  %5683 = vmatpush.msra.mxu0 0.0
  %5684 = vmatpush.msra.mxu0 0.0
  %5685 = vmatpush.msra.mxu0 %v5671
  %5686 = vmatpush.msra.mxu0 %v5643
  %5687 = vmatpush.msra.mxu0 %v5636
  %5688 = vmatmul.f32.gmra.mxu0 %v3444
  %v5689 = vpop.f32.mrf.mxu0
  %v5690 = vadd.f32 0.0, %v5689
  %5691 = vmatmul.f32.gmra.mxu0 %v3447
  %v5692 = vpop.f32.mrf.mxu0
  %v5693 = vadd.f32 0.0, %v5692
  %5694 = vmatmul.f32.gmra.mxu0 %v3450
  %v5695 = vpop.f32.mrf.mxu0
  %v5696 = vadd.f32 0.0, %v5695
  %5697 = vmatmul.f32.gmra.mxu0 %v3453
  %v5698 = vpop.f32.mrf.mxu0
  %v5699 = vadd.f32 0.0, %v5698
  %5700 = vmatmul.f32.gmra.mxu0 %v3456
  %v5701 = vpop.f32.mrf.mxu0
  %v5702 = vadd.f32 0.0, %v5701
  %5703 = vmatmul.f32.gmra.mxu0 %v3459
  %v5704 = vpop.f32.mrf.mxu0
  %v5705 = vadd.f32 0.0, %v5704
  %5706 = vmatmul.f32.gmra.mxu0 %v3462
  %v5707 = vpop.f32.mrf.mxu0
  %v5708 = vadd.f32 0.0, %v5707
  %5709 = vmatmul.f32.gmra.mxu0 %v3465
  %v5710 = vpop.f32.mrf.mxu0
  %v5711 = vadd.f32 0.0, %v5710
  %5712 = vmatmul.f32.gmra.mxu0 %v3468
  %v5713 = vpop.f32.mrf.mxu0
  %v5714 = vadd.f32 0.0, %v5713
  %5715 = vmatmul.f32.gmra.mxu0 %v3471
  %v5716 = vpop.f32.mrf.mxu0
  %v5717 = vadd.f32 0.0, %v5716
  %5718 = vmatmul.f32.gmra.mxu0 %v3474
  %v5719 = vpop.f32.mrf.mxu0
  %v5720 = vadd.f32 0.0, %v5719
  %5721 = vmatmul.f32.gmra.mxu0 %v3477
  %v5722 = vpop.f32.mrf.mxu0
  %v5723 = vadd.f32 0.0, %v5722
  %5724 = vmatmul.f32.gmra.mxu0 %v3480
  %v5725 = vpop.f32.mrf.mxu0
  %v5726 = vadd.f32 0.0, %v5725
  %5727 = vmatmul.f32.gmra.mxu0 %v3483
  %v5728 = vpop.f32.mrf.mxu0
  %v5729 = vadd.f32 0.0, %v5728
  %5730 = vmatmul.f32.gmra.mxu0 %v3486
  %v5731 = vpop.f32.mrf.mxu0
  %v5732 = vadd.f32 0.0, %v5731
  %5733 = vmatmul.f32.gmra.mxu0 %v3489
  %v5734 = vpop.f32.mrf.mxu0
  %v5735 = vadd.f32 0.0, %v5734
  %5736 = vdwg.mxu0
  %v5737 = vmul.f32 %v3509, %v545
  %v5738 = vmul.f32 %v3512, %v547
  %v5739 = vmul.f32 %v3515, %v550
  %v5740 = vmul.f32 %v3518, %v552
  %v5741 = vmul.f32 %v3521, %v555
  %v5742 = vmul.f32 %v3524, %v557
  %v5743 = vmul.f32 %v3527, %v560
  %v5744 = vmul.f32 %v3530, %v562
  %v5745 = vmul.f32 %v3533, %v565
  %v5746 = vmul.f32 %v3536, %v567
  %v5747 = vmul.f32 %v3539, %v570
  %v5748 = vmul.f32 %v3542, %v572
  %v5749 = vmul.f32 %v3545, %v575
  %v5750 = vmul.f32 %v3548, %v577
  %v5751 = vmul.f32 %v3551, %v580
  %v5752 = vmul.f32 %v3554, %v582
  %v5753 = vmul.f32 %v3661, %v585
  %v5754 = vmul.f32 %v3664, %v587
  %v5755 = vmul.f32 %v3667, %v590
  %v5756 = vmul.f32 %v3670, %v592
  %v5757 = vmul.f32 %v3673, %v595
  %v5758 = vmul.f32 %v3676, %v597
  %v5759 = vmul.f32 %v3679, %v600
  %v5760 = vmul.f32 %v3682, %v602
  %v5761 = vmul.f32 %v3685, %v605
  %v5762 = vmul.f32 %v3688, %v607
  %v5763 = vmul.f32 %v3691, %v610
  %v5764 = vmul.f32 %v3694, %v612
  %v5765 = vmul.f32 %v3697, %v615
  %v5766 = vmul.f32 %v3700, %v617
  %v5767 = vmul.f32 %v3703, %v620
  %v5768 = vmul.f32 %v3706, %v622
  %v5769 = vadd.f32 %v5737, %v5753
  %v5770 = vadd.f32 %v5738, %v5754
  %v5771 = vadd.f32 %v5739, %v5755
  %v5772 = vadd.f32 %v5740, %v5756
  %v5773 = vadd.f32 %v5741, %v5757
  %v5774 = vadd.f32 %v5742, %v5758
  %v5775 = vadd.f32 %v5743, %v5759
  %v5776 = vadd.f32 %v5744, %v5760
  %v5777 = vadd.f32 %v5745, %v5761
  %v5778 = vadd.f32 %v5746, %v5762
  %v5779 = vadd.f32 %v5747, %v5763
  %v5780 = vadd.f32 %v5748, %v5764
  %v5781 = vadd.f32 %v5749, %v5765
  %v5782 = vadd.f32 %v5750, %v5766
  %v5783 = vadd.f32 %v5751, %v5767
  %v5784 = vadd.f32 %v5752, %v5768
  %v5785 = vmul.f32 %v3812, %v625
  %v5786 = vmul.f32 %v3815, %v627
  %v5787 = vmul.f32 %v3818, %v630
  %v5788 = vmul.f32 %v3821, %v632
  %v5789 = vmul.f32 %v3824, %v635
  %v5790 = vmul.f32 %v3827, %v637
  %v5791 = vmul.f32 %v3830, %v640
  %v5792 = vmul.f32 %v3833, %v642
  %v5793 = vmul.f32 %v3836, %v645
  %v5794 = vmul.f32 %v3839, %v647
  %v5795 = vmul.f32 %v3842, %v650
  %v5796 = vmul.f32 %v3845, %v652
  %v5797 = vmul.f32 %v3848, %v655
  %v5798 = vmul.f32 %v3851, %v657
  %v5799 = vmul.f32 %v3854, %v660
  %v5800 = vmul.f32 %v3857, %v662
  %v5801 = vadd.f32 %v5769, %v5785
  %v5802 = vadd.f32 %v5770, %v5786
  %v5803 = vadd.f32 %v5771, %v5787
  %v5804 = vadd.f32 %v5772, %v5788
  %v5805 = vadd.f32 %v5773, %v5789
  %v5806 = vadd.f32 %v5774, %v5790
  %v5807 = vadd.f32 %v5775, %v5791
  %v5808 = vadd.f32 %v5776, %v5792
  %v5809 = vadd.f32 %v5777, %v5793
  %v5810 = vadd.f32 %v5778, %v5794
  %v5811 = vadd.f32 %v5779, %v5795
  %v5812 = vadd.f32 %v5780, %v5796
  %v5813 = vadd.f32 %v5781, %v5797
  %v5814 = vadd.f32 %v5782, %v5798
  %v5815 = vadd.f32 %v5783, %v5799
  %v5816 = vadd.f32 %v5784, %v5800
  %v5817 = vadd.f32 %v5801, %v4202
  %v5818 = vadd.f32 %v5802, %v4205
  %v5819 = vadd.f32 %v5803, %v4208
  %v5820 = vadd.f32 %v5804, %v4211
  %v5821 = vadd.f32 %v5805, %v4214
  %v5822 = vadd.f32 %v5806, %v4217
  %v5823 = vadd.f32 %v5807, %v4220
  %v5824 = vadd.f32 %v5808, %v4223
  %v5825 = vadd.f32 %v5809, %v4226
  %v5826 = vadd.f32 %v5810, %v4229
  %v5827 = vadd.f32 %v5811, %v4232
  %v5828 = vadd.f32 %v5812, %v4235
  %v5829 = vadd.f32 %v5813, %v4238
  %v5830 = vadd.f32 %v5814, %v4241
  %v5831 = vadd.f32 %v5815, %v4244
  %v5832 = vadd.f32 %v5816, %v4247
  %5833 = vst.msk [vmem:[%s5] sm:$0xff] %vm3332, %v5817
  %5834 = vst.msk [vmem:[%s5 + $0x8] sm:$0xff] %vm3332, %v5818
  %5835 = vst.msk [vmem:[%s5 + $0x10] sm:$0xff] %vm3332, %v5819
  %5836 = vst.msk [vmem:[%s5 + $0x18] sm:$0xff] %vm3332, %v5820
  %5837 = vst.msk [vmem:[%s5 + $0x20] sm:$0xff] %vm3332, %v5821
  %5838 = vst.msk [vmem:[%s5 + $0x28] sm:$0xff] %vm3332, %v5822
  %5839 = vst.msk [vmem:[%s5 + $0x30] sm:$0xff] %vm3332, %v5823
  %5840 = vst.msk [vmem:[%s5 + $0x38] sm:$0xff] %vm3332, %v5824
  %5841 = vst.msk [vmem:[%s5 + $0x40] sm:$0xff] %vm3332, %v5825
  %5842 = vst.msk [vmem:[%s5 + $0x48] sm:$0xff] %vm3332, %v5826
  %5843 = vst.msk [vmem:[%s5 + $0x50] sm:$0xff] %vm3332, %v5827
  %5844 = vst.msk [vmem:[%s5 + $0x58] sm:$0xff] %vm3332, %v5828
  %5845 = vst.msk [vmem:[%s5 + $0x60] sm:$0xff] %vm3332, %v5829
  %5846 = vst.msk [vmem:[%s5 + $0x68] sm:$0xff] %vm3332, %v5830
  %5847 = vst.msk [vmem:[%s5 + $0x70] sm:$0xff] %vm3332, %v5831
  %5848 = vst.msk [vmem:[%s5 + $0x78] sm:$0xff] %vm3332, %v5832
  %v5849 = vmul.f32 %v4350, %v545
  %v5850 = vmul.f32 %v4353, %v547
  %v5851 = vmul.f32 %v4356, %v550
  %v5852 = vmul.f32 %v4359, %v552
  %v5853 = vmul.f32 %v4362, %v555
  %v5854 = vmul.f32 %v4365, %v557
  %v5855 = vmul.f32 %v4368, %v560
  %v5856 = vmul.f32 %v4371, %v562
  %v5857 = vmul.f32 %v4374, %v565
  %v5858 = vmul.f32 %v4377, %v567
  %v5859 = vmul.f32 %v4380, %v570
  %v5860 = vmul.f32 %v4383, %v572
  %v5861 = vmul.f32 %v4386, %v575
  %v5862 = vmul.f32 %v4389, %v577
  %v5863 = vmul.f32 %v4392, %v580
  %v5864 = vmul.f32 %v4395, %v582
  %v5865 = vmul.f32 %v4498, %v585
  %v5866 = vmul.f32 %v4501, %v587
  %v5867 = vmul.f32 %v4504, %v590
  %v5868 = vmul.f32 %v4507, %v592
  %v5869 = vmul.f32 %v4510, %v595
  %v5870 = vmul.f32 %v4513, %v597
  %v5871 = vmul.f32 %v4516, %v600
  %v5872 = vmul.f32 %v4519, %v602
  %v5873 = vmul.f32 %v4522, %v605
  %v5874 = vmul.f32 %v4525, %v607
  %v5875 = vmul.f32 %v4528, %v610
  %v5876 = vmul.f32 %v4531, %v612
  %v5877 = vmul.f32 %v4534, %v615
  %v5878 = vmul.f32 %v4537, %v617
  %v5879 = vmul.f32 %v4540, %v620
  %v5880 = vmul.f32 %v4543, %v622
  %v5881 = vadd.f32 %v5849, %v5865
  %v5882 = vadd.f32 %v5850, %v5866
  %v5883 = vadd.f32 %v5851, %v5867
  %v5884 = vadd.f32 %v5852, %v5868
  %v5885 = vadd.f32 %v5853, %v5869
  %v5886 = vadd.f32 %v5854, %v5870
  %v5887 = vadd.f32 %v5855, %v5871
  %v5888 = vadd.f32 %v5856, %v5872
  %v5889 = vadd.f32 %v5857, %v5873
  %v5890 = vadd.f32 %v5858, %v5874
  %v5891 = vadd.f32 %v5859, %v5875
  %v5892 = vadd.f32 %v5860, %v5876
  %v5893 = vadd.f32 %v5861, %v5877
  %v5894 = vadd.f32 %v5862, %v5878
  %v5895 = vadd.f32 %v5863, %v5879
  %v5896 = vadd.f32 %v5864, %v5880
  %v5897 = vmul.f32 %v4646, %v625
  %v5898 = vmul.f32 %v4649, %v627
  %v5899 = vmul.f32 %v4652, %v630
  %v5900 = vmul.f32 %v4655, %v632
  %v5901 = vmul.f32 %v4658, %v635
  %v5902 = vmul.f32 %v4661, %v637
  %v5903 = vmul.f32 %v4664, %v640
  %v5904 = vmul.f32 %v4667, %v642
  %v5905 = vmul.f32 %v4670, %v645
  %v5906 = vmul.f32 %v4673, %v647
  %v5907 = vmul.f32 %v4676, %v650
  %v5908 = vmul.f32 %v4679, %v652
  %v5909 = vmul.f32 %v4682, %v655
  %v5910 = vmul.f32 %v4685, %v657
  %v5911 = vmul.f32 %v4688, %v660
  %v5912 = vmul.f32 %v4691, %v662
  %v5913 = vadd.f32 %v5881, %v5897
  %v5914 = vadd.f32 %v5882, %v5898
  %v5915 = vadd.f32 %v5883, %v5899
  %v5916 = vadd.f32 %v5884, %v5900
  %v5917 = vadd.f32 %v5885, %v5901
  %v5918 = vadd.f32 %v5886, %v5902
  %v5919 = vadd.f32 %v5887, %v5903
  %v5920 = vadd.f32 %v5888, %v5904
  %v5921 = vadd.f32 %v5889, %v5905
  %v5922 = vadd.f32 %v5890, %v5906
  %v5923 = vadd.f32 %v5891, %v5907
  %v5924 = vadd.f32 %v5892, %v5908
  %v5925 = vadd.f32 %v5893, %v5909
  %v5926 = vadd.f32 %v5894, %v5910
  %v5927 = vadd.f32 %v5895, %v5911
  %v5928 = vadd.f32 %v5896, %v5912
  %v5929 = vadd.f32 %v5913, %v4947
  %v5930 = vadd.f32 %v5914, %v4950
  %v5931 = vadd.f32 %v5915, %v4953
  %v5932 = vadd.f32 %v5916, %v4956
  %v5933 = vadd.f32 %v5917, %v4959
  %v5934 = vadd.f32 %v5918, %v4962
  %v5935 = vadd.f32 %v5919, %v4965
  %v5936 = vadd.f32 %v5920, %v4968
  %v5937 = vadd.f32 %v5921, %v4971
  %v5938 = vadd.f32 %v5922, %v4974
  %v5939 = vadd.f32 %v5923, %v4977
  %v5940 = vadd.f32 %v5924, %v4980
  %v5941 = vadd.f32 %v5925, %v4983
  %v5942 = vadd.f32 %v5926, %v4986
  %v5943 = vadd.f32 %v5927, %v4989
  %v5944 = vadd.f32 %v5928, %v4992
  %5945 = vst.msk [vmem:[%s5 + $0x80] sm:$0xff] %vm3332, %v5929
  %5946 = vst.msk [vmem:[%s5 + $0x88] sm:$0xff] %vm3332, %v5930
  %5947 = vst.msk [vmem:[%s5 + $0x90] sm:$0xff] %vm3332, %v5931
  %5948 = vst.msk [vmem:[%s5 + $0x98] sm:$0xff] %vm3332, %v5932
  %5949 = vst.msk [vmem:[%s5 + $0xa0] sm:$0xff] %vm3332, %v5933
  %5950 = vst.msk [vmem:[%s5 + $0xa8] sm:$0xff] %vm3332, %v5934
  %5951 = vst.msk [vmem:[%s5 + $0xb0] sm:$0xff] %vm3332, %v5935
  %5952 = vst.msk [vmem:[%s5 + $0xb8] sm:$0xff] %vm3332, %v5936
  %5953 = vst.msk [vmem:[%s5 + $0xc0] sm:$0xff] %vm3332, %v5937
  %5954 = vst.msk [vmem:[%s5 + $0xc8] sm:$0xff] %vm3332, %v5938
  %5955 = vst.msk [vmem:[%s5 + $0xd0] sm:$0xff] %vm3332, %v5939
  %5956 = vst.msk [vmem:[%s5 + $0xd8] sm:$0xff] %vm3332, %v5940
  %5957 = vst.msk [vmem:[%s5 + $0xe0] sm:$0xff] %vm3332, %v5941
  %5958 = vst.msk [vmem:[%s5 + $0xe8] sm:$0xff] %vm3332, %v5942
  %5959 = vst.msk [vmem:[%s5 + $0xf0] sm:$0xff] %vm3332, %v5943
  %5960 = vst.msk [vmem:[%s5 + $0xf8] sm:$0xff] %vm3332, %v5944
  %v5961 = vmul.f32 %v5095, %v545
  %v5962 = vmul.f32 %v5098, %v547
  %v5963 = vmul.f32 %v5101, %v550
  %v5964 = vmul.f32 %v5104, %v552
  %v5965 = vmul.f32 %v5107, %v555
  %v5966 = vmul.f32 %v5110, %v557
  %v5967 = vmul.f32 %v5113, %v560
  %v5968 = vmul.f32 %v5116, %v562
  %v5969 = vmul.f32 %v5119, %v565
  %v5970 = vmul.f32 %v5122, %v567
  %v5971 = vmul.f32 %v5125, %v570
  %v5972 = vmul.f32 %v5128, %v572
  %v5973 = vmul.f32 %v5131, %v575
  %v5974 = vmul.f32 %v5134, %v577
  %v5975 = vmul.f32 %v5137, %v580
  %v5976 = vmul.f32 %v5140, %v582
  %v5977 = vmul.f32 %v5243, %v585
  %v5978 = vmul.f32 %v5246, %v587
  %v5979 = vmul.f32 %v5249, %v590
  %v5980 = vmul.f32 %v5252, %v592
  %v5981 = vmul.f32 %v5255, %v595
  %v5982 = vmul.f32 %v5258, %v597
  %v5983 = vmul.f32 %v5261, %v600
  %v5984 = vmul.f32 %v5264, %v602
  %v5985 = vmul.f32 %v5267, %v605
  %v5986 = vmul.f32 %v5270, %v607
  %v5987 = vmul.f32 %v5273, %v610
  %v5988 = vmul.f32 %v5276, %v612
  %v5989 = vmul.f32 %v5279, %v615
  %v5990 = vmul.f32 %v5282, %v617
  %v5991 = vmul.f32 %v5285, %v620
  %v5992 = vmul.f32 %v5288, %v622
  %v5993 = vadd.f32 %v5961, %v5977
  %v5994 = vadd.f32 %v5962, %v5978
  %v5995 = vadd.f32 %v5963, %v5979
  %v5996 = vadd.f32 %v5964, %v5980
  %v5997 = vadd.f32 %v5965, %v5981
  %v5998 = vadd.f32 %v5966, %v5982
  %v5999 = vadd.f32 %v5967, %v5983
  %v6000 = vadd.f32 %v5968, %v5984
  %v6001 = vadd.f32 %v5969, %v5985
  %v6002 = vadd.f32 %v5970, %v5986
  %v6003 = vadd.f32 %v5971, %v5987
  %v6004 = vadd.f32 %v5972, %v5988
  %v6005 = vadd.f32 %v5973, %v5989
  %v6006 = vadd.f32 %v5974, %v5990
  %v6007 = vadd.f32 %v5975, %v5991
  %v6008 = vadd.f32 %v5976, %v5992
  %v6009 = vmul.f32 %v5389, %v625
  %v6010 = vmul.f32 %v5392, %v627
  %v6011 = vmul.f32 %v5395, %v630
  %v6012 = vmul.f32 %v5398, %v632
  %v6013 = vmul.f32 %v5401, %v635
  %v6014 = vmul.f32 %v5404, %v637
  %v6015 = vmul.f32 %v5407, %v640
  %v6016 = vmul.f32 %v5410, %v642
  %v6017 = vmul.f32 %v5413, %v645
  %v6018 = vmul.f32 %v5416, %v647
  %v6019 = vmul.f32 %v5419, %v650
  %v6020 = vmul.f32 %v5422, %v652
  %v6021 = vmul.f32 %v5425, %v655
  %v6022 = vmul.f32 %v5428, %v657
  %v6023 = vmul.f32 %v5431, %v660
  %v6024 = vmul.f32 %v5434, %v662
  %v6025 = vadd.f32 %v5993, %v6009
  %v6026 = vadd.f32 %v5994, %v6010
  %v6027 = vadd.f32 %v5995, %v6011
  %v6028 = vadd.f32 %v5996, %v6012
  %v6029 = vadd.f32 %v5997, %v6013
  %v6030 = vadd.f32 %v5998, %v6014
  %v6031 = vadd.f32 %v5999, %v6015
  %v6032 = vadd.f32 %v6000, %v6016
  %v6033 = vadd.f32 %v6001, %v6017
  %v6034 = vadd.f32 %v6002, %v6018
  %v6035 = vadd.f32 %v6003, %v6019
  %v6036 = vadd.f32 %v6004, %v6020
  %v6037 = vadd.f32 %v6005, %v6021
  %v6038 = vadd.f32 %v6006, %v6022
  %v6039 = vadd.f32 %v6007, %v6023
  %v6040 = vadd.f32 %v6008, %v6024
  %v6041 = vadd.f32 %v6025, %v5690
  %v6042 = vadd.f32 %v6026, %v5693
  %v6043 = vadd.f32 %v6027, %v5696
  %v6044 = vadd.f32 %v6028, %v5699
  %v6045 = vadd.f32 %v6029, %v5702
  %v6046 = vadd.f32 %v6030, %v5705
  %v6047 = vadd.f32 %v6031, %v5708
  %v6048 = vadd.f32 %v6032, %v5711
  %v6049 = vadd.f32 %v6033, %v5714
  %v6050 = vadd.f32 %v6034, %v5717
  %v6051 = vadd.f32 %v6035, %v5720
  %v6052 = vadd.f32 %v6036, %v5723
  %v6053 = vadd.f32 %v6037, %v5726
  %v6054 = vadd.f32 %v6038, %v5729
  %v6055 = vadd.f32 %v6039, %v5732
  %v6056 = vadd.f32 %v6040, %v5735
  %6057 = vst.msk [vmem:[%s5 + $0x100] sm:$0xff] %vm3332, %v6041
  %6058 = vst.msk [vmem:[%s5 + $0x108] sm:$0xff] %vm3332, %v6042
  %6059 = vst.msk [vmem:[%s5 + $0x110] sm:$0xff] %vm3332, %v6043
  %6060 = vst.msk [vmem:[%s5 + $0x118] sm:$0xff] %vm3332, %v6044
  %6061 = vst.msk [vmem:[%s5 + $0x120] sm:$0xff] %vm3332, %v6045
  %6062 = vst.msk [vmem:[%s5 + $0x128] sm:$0xff] %vm3332, %v6046
  %6063 = vst.msk [vmem:[%s5 + $0x130] sm:$0xff] %vm3332, %v6047
  %6064 = vst.msk [vmem:[%s5 + $0x138] sm:$0xff] %vm3332, %v6048
  %6065 = vst.msk [vmem:[%s5 + $0x140] sm:$0xff] %vm3332, %v6049
  %6066 = vst.msk [vmem:[%s5 + $0x148] sm:$0xff] %vm3332, %v6050
  %6067 = vst.msk [vmem:[%s5 + $0x150] sm:$0xff] %vm3332, %v6051
  %6068 = vst.msk [vmem:[%s5 + $0x158] sm:$0xff] %vm3332, %v6052
  %6069 = vst.msk [vmem:[%s5 + $0x160] sm:$0xff] %vm3332, %v6053
  %6070 = vst.msk [vmem:[%s5 + $0x168] sm:$0xff] %vm3332, %v6054
  %6071 = vst.msk [vmem:[%s5 + $0x170] sm:$0xff] %vm3332, %v6055
  %6072 = vst.msk [vmem:[%s5 + $0x178] sm:$0xff] %vm3332, %v6056
  // Predicated region
  $region22: #{tpu_custom_call.1} parent=0 // pred_check
    _
  $region23: #{tpu_custom_call.1} parent=0 // pred_check_branch
    %6074 = sbr.rel (0) target = $region25
  $region24: #{tpu_custom_call.1} parent=0 // pred_region
    _
  $region25: #{tpu_custom_call.1} parent=0 // pred_fallthru
    _
  // Predicated region
  $region26: #{tpu_custom_call.1} parent=0 // pred_check
    _
  $region27: #{tpu_custom_call.1} parent=0 // pred_check_branch
    %6076 = sbr.rel (0) target = $region29
  $region28: #{tpu_custom_call.1} parent=0 // pred_region
    _
  $region29: #{tpu_custom_call.1} parent=0 // pred_fallthru
    _
  // Predicated region
  $region30: #{tpu_custom_call.1} parent=0 // pred_check
    _
  $region31: #{tpu_custom_call.1} parent=0 // pred_check_branch
    %6078 = sbr.rel (0) target = $region33
  $region32: #{tpu_custom_call.1} parent=0 // pred_region
    _
  $region33: #{tpu_custom_call.1} parent=0 // pred_fallthru
    _
  // Predicated region
  $region34: #{tpu_custom_call.1} parent=0 // pred_check
    _
  $region35: #{tpu_custom_call.1} parent=0 // pred_check_branch
    %6080 = sbr.rel (0) target = $region37
  $region36: #{tpu_custom_call.1} parent=0 // pred_region
    _
  $region37: #{tpu_custom_call.1} parent=0 // pred_fallthru
    _

</llo_original>
